<compile_context>
chip_gen: v6e
topology: v6e:2x2x1
jax: 0.10.0
libtpu: 0.0.40
codegen_flags: <defaults>
</compile_context>

<pallas_src>
import jax
import jax.numpy as jnp
from jax.experimental import pallas as pl
from jax.experimental.pallas import tpu as pltpu

CFG = dict(in_c=16, out_c=16, n_groups=4, n_heads=4, n_samples=9,
           mlp_ratio=2.0, dcn_groups=8, pred_res_flow=True)


def _round_up(x, m):
    return ((x + m - 1) // m) * m


# ----------------------------------------------------------------------------
# Pallas kernel: query_blender + DeformAttn + Mlp (fused, token-tiled)
# ----------------------------------------------------------------------------
def attn_blender_mlp_pallas(qcat_tok, kv_tok, ap, n_heads, tn_max=512):
    """Fused query_blender -> DeformAttn -> Mlp(+residual) over flattened tokens.

    qcat_tok : (NT, 3C)    channels-last query concat, NT = B*fh*fw tokens
    kv_tok   : (S, NT, C)  sampled K/V tokens, S = 2*n_samples
    returns  : (Cout, NT)  lane-dense (tokens on the 128-lane axis)
    """
    NT, C3 = qcat_tok.shape
    S, _, C = kv_tok.shape
    Cout = ap['wo'].shape[1]
    hidden = ap['w1'].shape[1]
    D = C // n_heads
    scale = float(D) ** -0.5
    bw = max(C, Cout, hidden)

    # ---- trace-time weight folding / fusion (mathematically exact) --------
    # query_blender 1x1 conv folded into the q projection; attention scale
    # folded into the fused q weights.
    wq_f = ((ap['wbl'] @ ap['wq']) * scale).astype(jnp.bfloat16)          # (3C, C)
    bq_f = (ap['bbl'] @ ap['wq'] + ap['bq']) * scale                      # (1, C)
    # k / v projections fused into a single matmul.  bk has no effect (softmax
    # over S is invariant to a per-(token,head) constant shift); bv commutes
    # with the attention average (weights sum to 1) and folds into bo.
    wkv = jnp.concatenate([ap['wk'], ap['wv']], axis=1).astype(jnp.bfloat16)  # (C, 2C)
    bo_f = ap['bv'] @ ap['wo'] + ap['bo']                                 # (1, Cout)
    wo = ap['wo'].astype(jnp.bfloat16)
    w1 = ap['w1'].astype(jnp.bfloat16)
    w2 = ap['w2'].astype(jnp.bfloat16)

    def _pad_b(b):
        return jnp.pad(b.astype(jnp.float32), ((0, 0), (0, bw - b.shape[1])))

    bias_pack = jnp.concatenate(
        [_pad_b(bq_f), _pad_b(bo_f), _pad_b(ap['b1']), _pad_b(ap['b2'])], axis=0)

    # Block-diagonal head-pooling matrix: hsel[c', c] = 1 iff same head.
    head = jnp.arange(C, dtype=jnp.int32) // D
    hsel = (head[:, None] == head[None, :]).astype(jnp.float32)           # (C, C)

    # ---- token tiling (batch folded into the token axis) -------------------
    TN = min(tn_max, _round_up(NT, 128))          # multiple of 128
    NT_pad = _round_up(NT, TN)
    qcat_p = jnp.pad(qcat_tok, ((0, NT_pad - NT), (0, 0))).astype(jnp.bfloat16)
    kv_p = jnp.pad(kv_tok, ((0, 0), (0, NT_pad - NT), (0, 0))).astype(jnp.bfloat16)

    def kernel(q_ref, kv_ref, wq_r, wkv_r, wo_r, w1_r, w2_r, hsel_r, bias_r, o_ref):
        f32 = jnp.float32
        bq = bias_r[0:1, 0:C]
        bo = bias_r[1:2, 0:Cout]
        b1 = bias_r[2:3, 0:hidden]
        b2 = bias_r[3:4, 0:Cout]

        # fused query_blender + q projection (scale pre-folded): (TN,3C)@(3C,C)
        q = jnp.dot(q_ref[...], wq_r[...], preferred_element_type=f32) + bq

        # fused k/v projection: (S*TN, C) @ (C, 2C)
        kvp = jnp.dot(kv_ref[...].reshape(S * TN, C), wkv_r[...],
                      preferred_element_type=f32).reshape(S, TN, 2 * C)
        k = kvp[:, :, 0:C]
        v = kvp[:, :, C:2 * C]

        # Multi-head softmax attention over the S sampled positions,
        # vectorised across heads: per-head logits are pooled inside the
        # contiguous D-lane head groups via a block-diagonal matmul and
        # broadcast back to all C lanes, so no per-head slicing / concat.
        qk = q[None, :, :] * k                                            # (S, TN, C)
        logits = jnp.dot(qk.reshape(S * TN, C), hsel_r[...],
                         preferred_element_type=f32).reshape(S, TN, C)
        m = jnp.max(logits, axis=0, keepdims=True)
        p = jnp.exp(logits - m)
        inv = pl.reciprocal(jnp.sum(p, axis=0, keepdims=True), approx=True)
        ctx = jnp.sum((p * inv) * v, axis=0)                              # (TN, C)

        attn_out = jnp.dot(ctx.astype(jnp.bfloat16), wo_r[...],
                           preferred_element_type=f32) + bo
        h1 = jax.nn.gelu(jnp.dot(attn_out.astype(jnp.bfloat16), w1_r[...],
                                 preferred_element_type=f32) + b1,
                         approximate=True)
        mlp_out = jnp.dot(h1.astype(jnp.bfloat16), w2_r[...],
                          preferred_element_type=f32) + b2
        # lane-dense store: tokens on the 128-lane axis (Cout is only 16).
        o_ref[...] = (attn_out + mlp_out).T

    weights = [wq_f, wkv, wo, w1, w2, hsel, bias_pack]
    w_specs = [pl.BlockSpec(w.shape, lambda t, _n=w.ndim: (0,) * _n) for w in weights]

    out = pl.pallas_call(
        kernel,
        out_shape=jax.ShapeDtypeStruct((Cout, NT_pad), jnp.float32),
        grid=(NT_pad // TN,),
        in_specs=[pl.BlockSpec((TN, C3), lambda t: (t, 0)),
                  pl.BlockSpec((S, TN, C), lambda t: (0, t, 0))] + w_specs,
        out_specs=pl.BlockSpec((Cout, TN), lambda t: (0, t)),
        compiler_params=pltpu.CompilerParams(
            dimension_semantics=("parallel",),
            vmem_limit_bytes=48 * 1024 * 1024),
    )(qcat_p, kv_p, *weights)
    return out[:, :NT]


# ----------------------------------------------------------------------------
# Plain-JAX glue (NCHW, matching PyTorch semantics)
# ----------------------------------------------------------------------------
def conv2d(x, w, b, stride=1, padding=1):
    y = jax.lax.conv_general_dilated(
        x, w, (stride, stride), [(padding, padding), (padding, padding)],
        dimension_numbers=('NCHW', 'OIHW', 'NCHW'))
    return y + b[None, :, None, None]


def conv_transpose2d(x, w, b, stride=2, pad=1):
    # PyTorch ConvTranspose2d weight layout: (Cin, Cout, kh, kw)
    kh = w.shape[2]
    w_t = jnp.flip(w, axis=(2, 3)).transpose(1, 0, 2, 3)   # (Cout, Cin, kh, kw)
    p = kh - 1 - pad
    y = jax.lax.conv_general_dilated(
        x, w_t, (1, 1), [(p, p), (p, p)], lhs_dilation=(stride, stride),
        dimension_numbers=('NCHW', 'OIHW', 'NCHW'))
    return y + b[None, :, None, None]


def resize2x(x):
    B, C, H, W = x.shape
    return jax.image.resize(x, (B, C, 2 * H, 2 * W), method='bilinear')


def bilinear_sample_nchw(img, y, x):
    """Zero-padded bilinear sampling at pixel coordinates. img:(B,C,H,W), y/x:(B,*S)."""
    B, C, H, W = img.shape
    samp_shape = y.shape[1:]
    y = y.reshape(B, -1)
    x = x.reshape(B, -1)
    y0 = jnp.floor(y)
    x0 = jnp.floor(x)
    wy1 = y - y0
    wx1 = x - x0
    img_flat = img.reshape(B, C, H * W)

    def tap(yc, xc, w):
        valid = (yc >= 0) & (yc <= H - 1) & (xc >= 0) & (xc <= W - 1)
        yi = jnp.clip(yc, 0, H - 1).astype(jnp.int32)
        xi = jnp.clip(xc, 0, W - 1).astype(jnp.int32)
        idx = (yi * W + xi)[:, None, :]
        vals = jnp.take_along_axis(
            img_flat, jnp.broadcast_to(idx, (B, C, idx.shape[-1])), axis=2)
        return vals * (w * valid)[:, None, :]

    out = (tap(y0, x0, (1 - wy1) * (1 - wx1)) + tap(y0, x0 + 1, (1 - wy1) * wx1)
           + tap(y0 + 1, x0, wy1 * (1 - wx1)) + tap(y0 + 1, x0 + 1, wy1 * wx1))
    return out.reshape((B, C) + samp_shape)


def bwarp(x, flow):
    """Backward warp x by optical flow (flow[:,0]=dx, flow[:,1]=dy), align_corners=True."""
    B, C, H, W = x.shape
    xx = jnp.arange(W, dtype=jnp.float32)[None, None, :]
    yy = jnp.arange(H, dtype=jnp.float32)[None, :, None]
    sx = xx + flow[:, 0]
    sy = yy + flow[:, 1]
    return bilinear_sample_nchw(x, sy, sx)


def res_block(p, x, side):
    out = jax.nn.relu(conv2d(x, p['c1w'], p['c1b']))
    s = jax.nn.relu(conv2d(out[:, -side:], p['c2w'], p['c2b']))
    out = jnp.concatenate([out[:, :-side], s], axis=1)
    out = jax.nn.relu(conv2d(out, p['c3w'], p['c3b']))
    s = jax.nn.relu(conv2d(out[:, -side:], p['c4w'], p['c4b']))
    out = jnp.concatenate([out[:, :-side], s], axis=1)
    out = conv2d(out, p['c5w'], p['c5b'])
    return jax.nn.relu(x + out)


def conv_res_feat(p, x, side):
    x = jax.nn.relu(conv2d(x, p['c1w'], p['c1b']))
    x = jax.nn.relu(conv2d(x, p['c2w'], p['c2b']))
    return res_block(p['rb'], x, side)


def deform_conv2d(x, offset, mask, weight, bias, stride=1, pad=1):
    """Mirrors torchvision.ops.deform_conv2d (modulated, grouped, zero padding)."""
    B, Cin, H, W = x.shape
    Cout, cin_g, kh, kw = weight.shape
    n_w_grps = Cin // cin_g
    K = kh * kw
    n_off_grps = offset.shape[1] // (2 * K)
    cg_off = Cin // n_off_grps

    off = offset.reshape(B, n_off_grps, K, 2, H, W)
    dy = off[:, :, :, 0]                                   # (B, Goff, K, H, W)
    dx = off[:, :, :, 1]
    m = mask.reshape(B, n_off_grps, K, H, W)

    ky = jnp.repeat(jnp.arange(kh), kw).astype(jnp.float32)   # (K,)
    kx = jnp.tile(jnp.arange(kw), kh).astype(jnp.float32)
    hh = jnp.arange(H, dtype=jnp.float32) * stride - pad
    ww = jnp.arange(W, dtype=jnp.float32) * stride - pad
    base_y = hh[None, :, None] + ky[:, None, None]             # (K, H, W)
    base_x = ww[None, None, :] + kx[:, None, None]
    sy = base_y[None, None] + dy                               # (B, Goff, K, H, W)
    sx = base_x[None, None] + dx

    x_g = x.reshape(B * n_off_grps, cg_off, H, W)
    vals = bilinear_sample_nchw(x_g,
                                sy.reshape(B * n_off_grps, K, H, W),
                                sx.reshape(B * n_off_grps, K, H, W))
    vals = vals.reshape(B, n_off_grps, cg_off, K, H, W) * m[:, :, None]
    vals = vals.reshape(B, n_w_grps, cin_g, K, H, W)
    w_g = weight.reshape(n_w_grps, Cout // n_w_grps, cin_g, K)
    out = jnp.einsum('gock,bgckhw->bgohw', w_g, vals).reshape(B, Cout, H, W)
    return out + bias[None, :, None, None]


def dcn_given_offset(x, offset, mask, weight, bias):
    b, _, fh, fw = x.shape
    off = jnp.flip(jnp.transpose(offset, (0, 2, 1, 3, 4)), axis=1).reshape(b, -1, fh, fw)
    m = jax.nn.sigmoid(mask)
    return deform_conv2d(x, off, m, weight, bias, stride=1, pad=1)


def get_ref_feats(feat, flow, G, NS):
    b, c, fh, fw = feat.shape
    gc = c // G
    feat_g = feat.reshape(b * G, gc, fh, fw)
    xx = jnp.broadcast_to(jnp.linspace(-1.0, 1.0, fw).reshape(1, 1, 1, fw), (b, 1, fh, fw))
    yy = jnp.broadcast_to(jnp.linspace(-1.0, 1.0, fh).reshape(1, 1, fh, 1), (b, 1, fh, fw))
    grid = jnp.concatenate([xx, yy], axis=1)[:, None]                     # (b,1,2,fh,fw)
    # NOTE: asymmetric x/y normalization reproduced exactly as in the source model:
    #   x: flow/(fw-1)/2     y: flow/((fh-1)/2)
    flow_ = jnp.concatenate([flow[:, :, 0:1] / (fw - 1.0) / 2.0,
                             flow[:, :, 1:2] / ((fh - 1.0) / 2.0)], axis=2)
    grid_ = (grid + flow_).reshape(b * G, NS, 2, fh * fw).transpose(0, 1, 3, 2)
    px = (grid_[..., 0] + 1.0) * (fw - 1.0) / 2.0                         # align_corners=True
    py = (grid_[..., 1] + 1.0) * (fh - 1.0) / 2.0
    samples = bilinear_sample_nchw(feat_g, py, px)                        # (bG, gc, NS, HW)
    return samples.reshape(b, c, NS, fh * fw)


# ----------------------------------------------------------------------------
# Full forward
# ----------------------------------------------------------------------------
def forward(params, feat_t, feat0, feat1, ft0, ft1):
    C, G, NS = CFG['in_c'], CFG['n_groups'], CFG['n_samples']
    side = C // 2
    b, _, fh, fw = feat_t.shape
    GS = G * NS
    N = fh * fw

    def movement(feat_x, ftx):
        warped = bwarp(feat_x, ftx)
        return conv_res_feat(params['crf'],
                             jnp.concatenate([feat_t, warped, ftx], axis=1), side)

    def ref_coords_mask(ftx, mvf):
        o = conv2d(mvf, params['offm_w'], params['offm_b'], padding=1)   # zero-init conv
        res = 2.0 * jnp.tanh(o[:, :2 * GS])
        ref = res.reshape(b, GS, 2, fh, fw) + ftx[:, None]
        return ref, o[:, 2 * GS:]

    mv0 = movement(feat0, ft0)
    ref0, mask0 = ref_coords_mask(ft0, mv0)
    mv1 = movement(feat1, ft1)
    ref1, mask1 = ref_coords_mask(ft1, mv1)

    dcn0 = dcn_given_offset(feat0, ref0, mask0, params['dcn_w'], params['dcn_b'])
    dcn1 = dcn_given_offset(feat1, ref1, mask1, params['dcn_w'], params['dcn_b'])

    kv0 = get_ref_feats(feat0, ref0, G, NS)              # (b, C, NS, N)
    kv1 = get_ref_feats(feat1, ref1, G, NS)
    kv = jnp.concatenate([kv0, kv1], axis=2)             # (b, C, 2*NS, N)

    qcat = jnp.concatenate([dcn0, feat_t, dcn1], axis=1)                  # (b, 3C, fh, fw)
    # batch folded into a single token axis (b*N tokens), channels last
    qcat_tok = qcat.transpose(0, 2, 3, 1).reshape(b * N, 3 * C)
    kv_tok = kv.transpose(2, 0, 3, 1).reshape(2 * NS, b * N, C)           # (S, b*N, C)

    out_tok = attn_blender_mlp_pallas(qcat_tok, kv_tok, params['attn'], CFG['n_heads'])
    out = out_tok.reshape(CFG['out_c'], b, fh, fw).transpose(1, 0, 2, 3)

    if CFG['pred_res_flow']:
        res_ft0 = conv_transpose2d(mv0, params['flow_w'], params['flow_b'])
        up_ft0 = res_ft0 + 2.0 * resize2x(ft0)
        res_ft1 = conv_transpose2d(mv1, params['flow_w'], params['flow_b'])
        up_ft1 = res_ft1 + 2.0 * resize2x(ft1)
        return out, up_ft0, up_ft1
    return out


# ----------------------------------------------------------------------------
# Deterministic parameter initialization (matches module __init__ shapes)
# ----------------------------------------------------------------------------
def init_params(key):
    C, Co = CFG['in_c'], CFG['out_c']
    G, NS = CFG['n_groups'], CFG['n_samples']
    side = C // 2
    hidden = int(Co * CFG['mlp_ratio'])
    GS = G * NS
    keys = iter(jax.random.split(key, 32))

    def w(shape, scale=0.05):
        return scale * jax.random.normal(next(keys), shape, jnp.float32)

    return {
        'crf': {
            'c1w': w((2 * C, 2 * C + 2, 3, 3)), 'c1b': jnp.zeros((2 * C,)),
            'c2w': w((C, 2 * C, 3, 3)), 'c2b': jnp.zeros((C,)),
            'rb': {
                'c1w': w((C, C, 3, 3)), 'c1b': jnp.zeros((C,)),
                'c2w': w((side, side, 3, 3)), 'c2b': jnp.zeros((side,)),
                'c3w': w((C, C, 3, 3)), 'c3b': jnp.zeros((C,)),
                'c4w': w((side, side, 3, 3)), 'c4b': jnp.zeros((side,)),
                'c5w': w((C, C, 3, 3)), 'c5b': jnp.zeros((C,)),
            },
        },
        # conv_res_offset_mask is zero-initialized by the module (_init_zero)
        'offm_w': jnp.zeros((GS * 3, C, 3, 3), jnp.float32),
        'offm_b': jnp.zeros((GS * 3,), jnp.float32),
        # ConvTranspose2d(in_c, 2, 4, 2, 1): weight layout (Cin, Cout, kh, kw)
        'flow_w': w((C, 2, 4, 4)), 'flow_b': jnp.zeros((2,)),
        # DeformableConv2dGivenOffset.regular_conv: Conv2d(in_c//8, out_c, 3)
        'dcn_w': w((Co, C // CFG['dcn_groups'], 3, 3)), 'dcn_b': jnp.zeros((Co,)),
        'attn': {
            'wbl': w((3 * C, C)), 'bbl': jnp.zeros((1, C)),      # query_blender (1x1)
            'wq': w((C, C)), 'bq': jnp.zeros((1, C)),
            'wk': w((C, C)), 'bk': jnp.zeros((1, C)),
            'wv': w((C, C)), 'bv': jnp.zeros((1, C)),
            'wo': w((C, Co)), 'bo': jnp.zeros((1, Co)),
            'w1': w((Co, hidden)), 'b1': jnp.zeros((1, hidden)),
            'w2': w((hidden, Co)), 'b2': jnp.zeros((1, Co)),
        },
    }


if __name__ == "__main__":
    B, fh, fw = 2, 8, 8
    C = CFG['in_c']
    key = jax.random.PRNGKey(0)
    k1, k2, k3, k4, k5 = jax.random.split(key, 5)
    feat_t = jax.random.normal(k1, (B, C, fh, fw), jnp.float32)
    feat0 = jax.random.normal(k2, (B, C, fh, fw), jnp.float32)
    feat1 = jax.random.normal(k3, (B, C, fh, fw), jnp.float32)
    ft0 = 1.5 * jax.random.normal(k4, (B, 2, fh, fw), jnp.float32)
    ft1 = 1.5 * jax.random.normal(k5, (B, 2, fh, fw), jnp.float32)

    params = init_params(jax.random.PRNGKey(42))

    fwd = jax.jit(forward)
    out, up_ft0, up_ft1 = fwd(params, feat_t, feat0, feat1, ft0, ft1)
    jax.block_until_ready((out, up_ft0, up_ft1))

    assert out.shape == (B, CFG['out_c'], fh, fw)
    assert up_ft0.shape == (B, 2, 2 * fh, 2 * fw)
    assert up_ft1.shape == (B, 2, 2 * fh, 2 * fw)
    assert jnp.all(jnp.isfinite(out)) and jnp.all(jnp.isfinite(up_ft0)) and jnp.all(jnp.isfinite(up_ft1))
    print("KERNEL_OK")
</pallas_src>

<mosaic_0001>
module attributes {stable_mosaic.version = 11 : i64} {
  func.func @kernel(%arg0: i32, %arg1: memref<128x48xbf16, #tpu.memory_space<vmem>>, %arg2: memref<18x128x16xbf16, #tpu.memory_space<vmem>>, %arg3: memref<48x16xbf16, #tpu.memory_space<vmem>>, %arg4: memref<16x32xbf16, #tpu.memory_space<vmem>>, %arg5: memref<16x16xbf16, #tpu.memory_space<vmem>>, %arg6: memref<16x32xbf16, #tpu.memory_space<vmem>>, %arg7: memref<32x16xbf16, #tpu.memory_space<vmem>>, %arg8: memref<16x16xf32, #tpu.memory_space<vmem>>, %arg9: memref<4x32xf32, #tpu.memory_space<vmem>>, %arg10: memref<16x128xf32, #tpu.memory_space<vmem>>) attributes {dimension_semantics = [#tpu.dimension_semantics<parallel>], iteration_bounds = array<i64: 1>, scalar_prefetch = 0 : i64, scratch_operands = 0 : i64, tpu.core_type = #tpu.core_type<tc>, window_params = [{transform_indices = @transform_0, window_bounds = array<i64: 128, 48>}, {transform_indices = @transform_1, window_bounds = array<i64: 18, 128, 16>}, {pipeline_mode = #tpu.pipeline_mode<synchronous>, transform_indices = @transform_2, window_bounds = array<i64: 48, 16>}, {pipeline_mode = #tpu.pipeline_mode<synchronous>, transform_indices = @transform_3, window_bounds = array<i64: 16, 32>}, {pipeline_mode = #tpu.pipeline_mode<synchronous>, transform_indices = @transform_4, window_bounds = array<i64: 16, 16>}, {pipeline_mode = #tpu.pipeline_mode<synchronous>, transform_indices = @transform_5, window_bounds = array<i64: 16, 32>}, {pipeline_mode = #tpu.pipeline_mode<synchronous>, transform_indices = @transform_6, window_bounds = array<i64: 32, 16>}, {pipeline_mode = #tpu.pipeline_mode<synchronous>, transform_indices = @transform_7, window_bounds = array<i64: 16, 16>}, {pipeline_mode = #tpu.pipeline_mode<synchronous>, transform_indices = @transform_8, window_bounds = array<i64: 4, 32>}, {transform_indices = @transform_9, window_bounds = array<i64: 16, 128>}]} {
    %c0 = arith.constant 0 : index
    %c0_0 = arith.constant 0 : index
    %0 = vector.load %arg9[%c0, %c0_0] : memref<4x32xf32, #tpu.memory_space<vmem>>, vector<1x16xf32>
    %c1 = arith.constant 1 : index
    %c0_1 = arith.constant 0 : index
    %1 = vector.load %arg9[%c1, %c0_1] : memref<4x32xf32, #tpu.memory_space<vmem>>, vector<1x16xf32>
    %c2 = arith.constant 2 : index
    %c0_2 = arith.constant 0 : index
    %2 = vector.load %arg9[%c2, %c0_2] : memref<4x32xf32, #tpu.memory_space<vmem>>, vector<1x32xf32>
    %c3 = arith.constant 3 : index
    %c0_3 = arith.constant 0 : index
    %3 = vector.load %arg9[%c3, %c0_3] : memref<4x32xf32, #tpu.memory_space<vmem>>, vector<1x16xf32>
    %c0_4 = arith.constant 0 : index
    %c0_5 = arith.constant 0 : index
    %4 = vector.load %arg1[%c0_4, %c0_5] : memref<128x48xbf16, #tpu.memory_space<vmem>>, vector<128x48xbf16>
    %c0_6 = arith.constant 0 : index
    %c0_7 = arith.constant 0 : index
    %5 = vector.load %arg3[%c0_6, %c0_7] : memref<48x16xbf16, #tpu.memory_space<vmem>>, vector<48x16xbf16>
    %cst = arith.constant dense<0.000000e+00> : vector<128x16xf32>
    %6 = tpu.matmul %4, %5, %cst {dimension_numbers = #tpu.dot_dimension_numbers<[1], [0], [0], [1], [0, 0, 1, 1], [], []>} : vector<128x48xbf16>, vector<48x16xbf16>, vector<128x16xf32> -> vector<128x16xf32>
    %7 = vector.broadcast %0 : vector<1x16xf32> to vector<128x16xf32>
    %8 = arith.addf %6, %7 : vector<128x16xf32>
    %c0_8 = arith.constant 0 : index
    %c0_9 = arith.constant 0 : index
    %c0_10 = arith.constant 0 : index
    %9 = vector.load %arg2[%c0_8, %c0_9, %c0_10] : memref<18x128x16xbf16, #tpu.memory_space<vmem>>, vector<18x128x16xbf16>
    %10 = vector.shape_cast %9 : vector<18x128x16xbf16> to vector<2304x16xbf16>
    %c0_11 = arith.constant 0 : index
    %c0_12 = arith.constant 0 : index
    %11 = vector.load %arg4[%c0_11, %c0_12] : memref<16x32xbf16, #tpu.memory_space<vmem>>, vector<16x32xbf16>
    %cst_13 = arith.constant dense<0.000000e+00> : vector<2304x32xf32>
    %12 = tpu.matmul %10, %11, %cst_13 {dimension_numbers = #tpu.dot_dimension_numbers<[1], [0], [0], [1], [0, 0, 1, 1], [], []>} : vector<2304x16xbf16>, vector<16x32xbf16>, vector<2304x32xf32> -> vector<2304x32xf32>
    %13 = vector.shape_cast %12 : vector<2304x32xf32> to vector<18x128x32xf32>
    %14 = vector.extract_strided_slice %13 {offsets = [0, 0, 0], sizes = [18, 128, 16], strides = [1, 1, 1]} : vector<18x128x32xf32> to vector<18x128x16xf32>
    %15 = vector.extract_strided_slice %13 {offsets = [0, 0, 16], sizes = [18, 128, 16], strides = [1, 1, 1]} : vector<18x128x32xf32> to vector<18x128x16xf32>
    %16 = vector.shape_cast %8 : vector<128x16xf32> to vector<1x128x16xf32>
    %17 = vector.broadcast %16 : vector<1x128x16xf32> to vector<18x128x16xf32>
    %18 = arith.mulf %17, %14 : vector<18x128x16xf32>
    %19 = vector.shape_cast %18 : vector<18x128x16xf32> to vector<2304x16xf32>
    %c0_14 = arith.constant 0 : index
    %c0_15 = arith.constant 0 : index
    %20 = vector.load %arg8[%c0_14, %c0_15] : memref<16x16xf32, #tpu.memory_space<vmem>>, vector<16x16xf32>
    %cst_16 = arith.constant dense<0.000000e+00> : vector<2304x16xf32>
    %21 = tpu.matmul %19, %20, %cst_16 {dimension_numbers = #tpu.dot_dimension_numbers<[1], [0], [0], [1], [0, 0, 1, 1], [], []>} : vector<2304x16xf32>, vector<16x16xf32>, vector<2304x16xf32> -> vector<2304x16xf32>
    %22 = vector.shape_cast %21 : vector<2304x16xf32> to vector<18x128x16xf32>
    %cst_17 = arith.constant dense<0xFF800000> : vector<128x16xf32>
    %23 = vector.multi_reduction <maximumf>, %22, %cst_17 [0] : vector<18x128x16xf32> to vector<128x16xf32>
    %24 = vector.shape_cast %23 : vector<128x16xf32> to vector<1x128x16xf32>
    %25 = vector.broadcast %24 : vector<1x128x16xf32> to vector<18x128x16xf32>
    %26 = arith.subf %22, %25 : vector<18x128x16xf32>
    %27 = math.exp %26 : vector<18x128x16xf32>
    %cst_18 = arith.constant dense<0.000000e+00> : vector<128x16xf32>
    %28 = vector.multi_reduction <add>, %27, %cst_18 [0] : vector<18x128x16xf32> to vector<128x16xf32>
    %29 = vector.shape_cast %28 : vector<128x16xf32> to vector<1x128x16xf32>
    %30 = tpu.reciprocal %29 {approx = true} : vector<1x128x16xf32> -> vector<1x128x16xf32>
    %31 = vector.broadcast %30 : vector<1x128x16xf32> to vector<18x128x16xf32>
    %32 = arith.mulf %27, %31 : vector<18x128x16xf32>
    %33 = arith.mulf %32, %15 : vector<18x128x16xf32>
    %cst_19 = arith.constant dense<0.000000e+00> : vector<128x16xf32>
    %34 = vector.multi_reduction <add>, %33, %cst_19 [0] : vector<18x128x16xf32> to vector<128x16xf32>
    %35 = arith.truncf %34 : vector<128x16xf32> to vector<128x16xbf16>
    %c0_20 = arith.constant 0 : index
    %c0_21 = arith.constant 0 : index
    %36 = vector.load %arg5[%c0_20, %c0_21] : memref<16x16xbf16, #tpu.memory_space<vmem>>, vector<16x16xbf16>
    %cst_22 = arith.constant dense<0.000000e+00> : vector<128x16xf32>
    %37 = tpu.matmul %35, %36, %cst_22 {dimension_numbers = #tpu.dot_dimension_numbers<[1], [0], [0], [1], [0, 0, 1, 1], [], []>} : vector<128x16xbf16>, vector<16x16xbf16>, vector<128x16xf32> -> vector<128x16xf32>
    %38 = vector.broadcast %1 : vector<1x16xf32> to vector<128x16xf32>
    %39 = arith.addf %37, %38 : vector<128x16xf32>
    %40 = arith.truncf %39 : vector<128x16xf32> to vector<128x16xbf16>
    %c0_23 = arith.constant 0 : index
    %c0_24 = arith.constant 0 : index
    %41 = vector.load %arg6[%c0_23, %c0_24] : memref<16x32xbf16, #tpu.memory_space<vmem>>, vector<16x32xbf16>
    %cst_25 = arith.constant dense<0.000000e+00> : vector<128x32xf32>
    %42 = tpu.matmul %40, %41, %cst_25 {dimension_numbers = #tpu.dot_dimension_numbers<[1], [0], [0], [1], [0, 0, 1, 1], [], []>} : vector<128x16xbf16>, vector<16x32xbf16>, vector<128x32xf32> -> vector<128x32xf32>
    %43 = vector.broadcast %2 : vector<1x32xf32> to vector<128x32xf32>
    %44 = arith.addf %42, %43 : vector<128x32xf32>
    %45 = arith.mulf %44, %44 : vector<128x32xf32>
    %46 = arith.mulf %44, %45 : vector<128x32xf32>
    %cst_26 = arith.constant 4.471500e-02 : f32
    %47 = vector.broadcast %cst_26 : f32 to vector<128x32xf32>
    %48 = arith.mulf %47, %46 : vector<128x32xf32>
    %49 = arith.addf %44, %48 : vector<128x32xf32>
    %cst_27 = arith.constant 0.797884583 : f32
    %50 = vector.broadcast %cst_27 : f32 to vector<128x32xf32>
    %51 = arith.mulf %50, %49 : vector<128x32xf32>
    %52 = math.tanh %51 : vector<128x32xf32>
    %cst_28 = arith.constant 1.000000e+00 : f32
    %53 = vector.broadcast %cst_28 : f32 to vector<128x32xf32>
    %54 = arith.addf %53, %52 : vector<128x32xf32>
    %cst_29 = arith.constant 5.000000e-01 : f32
    %55 = vector.broadcast %cst_29 : f32 to vector<128x32xf32>
    %56 = arith.mulf %55, %54 : vector<128x32xf32>
    %57 = arith.mulf %44, %56 : vector<128x32xf32>
    %58 = arith.truncf %57 : vector<128x32xf32> to vector<128x32xbf16>
    %c0_30 = arith.constant 0 : index
    %c0_31 = arith.constant 0 : index
    %59 = vector.load %arg7[%c0_30, %c0_31] : memref<32x16xbf16, #tpu.memory_space<vmem>>, vector<32x16xbf16>
    %cst_32 = arith.constant dense<0.000000e+00> : vector<128x16xf32>
    %60 = tpu.matmul %58, %59, %cst_32 {dimension_numbers = #tpu.dot_dimension_numbers<[1], [0], [0], [1], [0, 0, 1, 1], [], []>} : vector<128x32xbf16>, vector<32x16xbf16>, vector<128x16xf32> -> vector<128x16xf32>
    %61 = vector.broadcast %3 : vector<1x16xf32> to vector<128x16xf32>
    %62 = arith.addf %60, %61 : vector<128x16xf32>
    %63 = arith.addf %39, %62 : vector<128x16xf32>
    %64 = tpu.transpose %63, [1, 0] : vector<128x16xf32> -> vector<16x128xf32>
    %c0_33 = arith.constant 0 : index
    %c0_34 = arith.constant 0 : index
    %65 = vector.load %arg10[%c0_33, %c0_34] : memref<16x128xf32, #tpu.memory_space<vmem>>, vector<16x128xf32>
    tpu.vector_store %arg10[%c0_33, %c0_34], %64 {strides = array<i32>} : memref<16x128xf32, #tpu.memory_space<vmem>>, vector<16x128xf32>,
    return
  }
  func.func @transform_0(%arg0: i32) -> (i32, i32) {
    %c0_i32 = arith.constant 0 : i32
    %c0_i32_0 = arith.constant 0 : i32
    return %arg0, %c0_i32 : i32, i32
  }
  func.func @transform_1(%arg0: i32) -> (i32, i32, i32) {
    %c0_i32 = arith.constant 0 : i32
    %c0_i32_0 = arith.constant 0 : i32
    %c0_i32_1 = arith.constant 0 : i32
    return %c0_i32, %arg0, %c0_i32_0 : i32, i32, i32
  }
  func.func @transform_2(%arg0: i32) -> (i32, i32) {
    %c0_i32 = arith.constant 0 : i32
    %c0_i32_0 = arith.constant 0 : i32
    %c0_i32_1 = arith.constant 0 : i32
    return %c0_i32, %c0_i32_0 : i32, i32
  }
  func.func @transform_3(%arg0: i32) -> (i32, i32) {
    %c0_i32 = arith.constant 0 : i32
    %c0_i32_0 = arith.constant 0 : i32
    %c0_i32_1 = arith.constant 0 : i32
    return %c0_i32, %c0_i32_0 : i32, i32
  }
  func.func @transform_4(%arg0: i32) -> (i32, i32) {
    %c0_i32 = arith.constant 0 : i32
    %c0_i32_0 = arith.constant 0 : i32
    %c0_i32_1 = arith.constant 0 : i32
    return %c0_i32, %c0_i32_0 : i32, i32
  }
  func.func @transform_5(%arg0: i32) -> (i32, i32) {
    %c0_i32 = arith.constant 0 : i32
    %c0_i32_0 = arith.constant 0 : i32
    %c0_i32_1 = arith.constant 0 : i32
    return %c0_i32, %c0_i32_0 : i32, i32
  }
  func.func @transform_6(%arg0: i32) -> (i32, i32) {
    %c0_i32 = arith.constant 0 : i32
    %c0_i32_0 = arith.constant 0 : i32
    %c0_i32_1 = arith.constant 0 : i32
    return %c0_i32, %c0_i32_0 : i32, i32
  }
  func.func @transform_7(%arg0: i32) -> (i32, i32) {
    %c0_i32 = arith.constant 0 : i32
    %c0_i32_0 = arith.constant 0 : i32
    %c0_i32_1 = arith.constant 0 : i32
    return %c0_i32, %c0_i32_0 : i32, i32
  }
  func.func @transform_8(%arg0: i32) -> (i32, i32) {
    %c0_i32 = arith.constant 0 : i32
    %c0_i32_0 = arith.constant 0 : i32
    %c0_i32_1 = arith.constant 0 : i32
    return %c0_i32, %c0_i32_0 : i32, i32
  }
  func.func @transform_9(%arg0: i32) -> (i32, i32) {
    %c0_i32 = arith.constant 0 : i32
    %c0_i32_0 = arith.constant 0 : i32
    return %c0_i32, %arg0 : i32, i32
  }
}

</mosaic_0001>

<llo_original>
// kernel: forward.1
$region0: #{forward.1}
  #allocation0 [shape = 'u32[]', space=smem, size = 0x4, offset = 0x4, fixed_abs, tag = 'smem constant byte address 0x4 - core index']
  #allocation1 [shape = 'u32[144,128]{1,0:T(1,128)}', space=vmem, size = 0x12000, scoped, tag = 'internal scratch']
  %s0 = inlined_call_operand.vmem [shape: bf16[128,48], index: 0, kind: input, shape index: {}]
  %s1 = inlined_call_operand.vmem [shape: bf16[18,128,16], index: 1, kind: input, shape index: {}]
  %s2 = inlined_call_operand.vmem [shape: bf16[48,16], index: 2, kind: input, shape index: {}]
  %s3 = inlined_call_operand.vmem [shape: bf16[16,32], index: 3, kind: input, shape index: {}]
  %s4 = inlined_call_operand.vmem [shape: bf16[16,16], index: 4, kind: input, shape index: {}]
  %s5 = inlined_call_operand.vmem [shape: bf16[16,32], index: 5, kind: input, shape index: {}]
  %s6 = inlined_call_operand.vmem [shape: bf16[32,16], index: 6, kind: input, shape index: {}]
  %s7 = inlined_call_operand.vmem [shape: f32[16,16], index: 7, kind: input, shape index: {}]
  %s8 = inlined_call_operand.vmem [shape: f32[4,32], index: 8, kind: input, shape index: {}]
  %s9 = inlined_call_operand.vmem [shape: f32[16,128], index: 9, kind: output, shape index: {}]
  %s10 = sld [smem:[#allocation0]]
  $region46: #{forward.1} parent=0
    _
  %s12 = ssub.s32 1, %s10
  %s13 = scalar_select 0, %s12, %s10
  // Predicated region
  $region2: #{forward.1} parent=0 // pred_check
    _
  $region3: #{forward.1} parent=0 // pred_check_branch
    %15 = sbr.rel (0) target = $region5
  $region4: #{forward.1} parent=0 // pred_region
    _
  $region5: #{forward.1} parent=0 // pred_fallthru
    _
  // Predicated region
  $region6: #{forward.1} parent=0 // pred_check
    _
  $region7: #{forward.1} parent=0 // pred_check_branch
    %17 = sbr.rel (0) target = $region9
  $region8: #{forward.1} parent=0 // pred_region
    _
  $region9: #{forward.1} parent=0 // pred_fallthru
    _
  // Predicated region
  $region10: #{forward.1} parent=0 // pred_check
    _
  $region11: #{forward.1} parent=0 // pred_check_branch
    %19 = sbr.rel (0) target = $region13
  $region12: #{forward.1} parent=0 // pred_region
    _
  $region13: #{forward.1} parent=0 // pred_fallthru
    _
  // Predicated region
  $region14: #{forward.1} parent=0 // pred_check
    _
  $region15: #{forward.1} parent=0 // pred_check_branch
    %21 = sbr.rel (0) target = $region17
  $region16: #{forward.1} parent=0 // pred_region
    _
  $region17: #{forward.1} parent=0 // pred_fallthru
    _
  // Predicated region
  $region18: #{forward.1} parent=0 // pred_check
    _
  $region19: #{forward.1} parent=0 // pred_check_branch
    %23 = sbr.rel (0) target = $region21
  $region20: #{forward.1} parent=0 // pred_region
    _
  $region21: #{forward.1} parent=0 // pred_fallthru
    _
  // Predicated region
  $region22: #{forward.1} parent=0 // pred_check
    _
  $region23: #{forward.1} parent=0 // pred_check_branch
    %25 = sbr.rel (0) target = $region25
  $region24: #{forward.1} parent=0 // pred_region
    _
  $region25: #{forward.1} parent=0 // pred_fallthru
    _
  // Predicated region
  $region26: #{forward.1} parent=0 // pred_check
    _
  $region27: #{forward.1} parent=0 // pred_check_branch
    %27 = sbr.rel (0) target = $region29
  $region28: #{forward.1} parent=0 // pred_region
    _
  $region29: #{forward.1} parent=0 // pred_fallthru
    _
  // Predicated region
  $region30: #{forward.1} parent=0 // pred_check
    _
  $region31: #{forward.1} parent=0 // pred_check_branch
    %29 = sbr.rel (0) target = $region33
  $region32: #{forward.1} parent=0 // pred_region
    _
  $region33: #{forward.1} parent=0 // pred_fallthru
    _
  // Predicated region
  $region34: #{forward.1} parent=0 // pred_check
    _
  $region35: #{forward.1} parent=0 // pred_check_branch
    %31 = sbr.rel (0) target = $region37
  $region36: #{forward.1} parent=0 // pred_region
    _
  $region37: #{forward.1} parent=0 // pred_fallthru
    _
  %v33 = vld [vmem:[%s8] sm:$0x1]
  %v34 = vld [vmem:[%s8 + $0x1] sm:$0x1]
  %v35 = vld [vmem:[%s8 + $0x2] sm:$0x1]
  %v36 = vld [vmem:[%s8 + $0x3] sm:$0x1]
  %v37 = vld [vmem:[%s0] sm:$0xf]
  %v38 = vld [vmem:[%s0 + $0x4] sm:$0xf]
  %v39 = vld [vmem:[%s0 + $0x8] sm:$0xf]
  %v40 = vld [vmem:[%s0 + $0xc] sm:$0xf]
  %v41 = vld [vmem:[%s0 + $0x10] sm:$0xf]
  %v42 = vld [vmem:[%s0 + $0x14] sm:$0xf]
  %v43 = vld [vmem:[%s0 + $0x18] sm:$0xf]
  %v44 = vld [vmem:[%s0 + $0x1c] sm:$0xf]
  %v45 = vld [vmem:[%s0 + $0x20] sm:$0xf]
  %v46 = vld [vmem:[%s0 + $0x24] sm:$0xf]
  %v47 = vld [vmem:[%s0 + $0x28] sm:$0xf]
  %v48 = vld [vmem:[%s0 + $0x2c] sm:$0xf]
  %v49 = vld [vmem:[%s0 + $0x30] sm:$0xf]
  %v50 = vld [vmem:[%s0 + $0x34] sm:$0xf]
  %v51 = vld [vmem:[%s0 + $0x38] sm:$0xf]
  %v52 = vld [vmem:[%s0 + $0x3c] sm:$0xf]
  %v53 = vld [vmem:[%s2] sm:$0xf]
  %v54 = vld [vmem:[%s2 + $0x4] sm:$0xf]
  %v55 = vld [vmem:[%s2 + $0x8] sm:$0xf]
  %v56 = vld [vmem:[%s2 + $0xc] sm:$0xf]
  %v57 = vld [vmem:[%s2 + $0x10] sm:$0xf]
  %v58 = vld [vmem:[%s2 + $0x14] sm:$0xf]
  %v59 = vlaneseq
  %v60 = vshrl.u32 %v59, 7
  %v61 = vsub.s32 0, %v60
  %v62 = vrot.slane %v33, %v61
  %v79 = vunpack.c.l.b16 %v37
  %v80 = vunpack.c.l.b16 %v38
  %v81 = vunpack.c.l.b16 %v39
  %v82 = vunpack.c.l.b16 %v40
  %v83 = vunpack.c.l.b16 %v41
  %v84 = vunpack.c.l.b16 %v42
  %v85 = vunpack.c.l.b16 %v43
  %v86 = vunpack.c.l.b16 %v44
  %v87 = vunpack.c.l.b16 %v45
  %v88 = vunpack.c.l.b16 %v46
  %v89 = vunpack.c.l.b16 %v47
  %v90 = vunpack.c.l.b16 %v48
  %v91 = vunpack.c.l.b16 %v49
  %v92 = vunpack.c.l.b16 %v50
  %v93 = vunpack.c.l.b16 %v51
  %v94 = vunpack.c.l.b16 %v52
  %v95 = vpack.c.b16 %v80, %v79
  %v96 = vpack.c.b16 %v82, %v81
  %v97 = vpack.c.b16 %v84, %v83
  %v98 = vpack.c.b16 %v86, %v85
  %v99 = vpack.c.b16 %v88, %v87
  %v100 = vpack.c.b16 %v90, %v89
  %v101 = vpack.c.b16 %v92, %v91
  %v102 = vpack.c.b16 %v94, %v93
  %v109 = vunpack.c.l.b16 %v53
  %v110 = vunpack.c.l.b16 %v54
  %v111 = vunpack.c.l.b16 %v55
  %v112 = vunpack.c.l.b16 %v56
  %v113 = vunpack.c.l.b16 %v57
  %v114 = vunpack.c.l.b16 %v58
  %v115 = vpack.c.b16 %v110, %v109
  %v116 = vpack.c.b16 %v112, %v111
  %v117 = vpack.c.b16 %v114, %v113
  %vm121 = vcmask 392192
  %v123 = vsel %vm121, %v95, 0
  %v126 = vsel %vm121, %v96, 0
  %v129 = vsel %vm121, %v97, 0
  %v132 = vsel %vm121, %v98, 0
  %v135 = vsel %vm121, %v99, 0
  %v138 = vsel %vm121, %v100, 0
  %v141 = vsel %vm121, %v101, 0
  %v144 = vsel %vm121, %v102, 0
  %146 = vmatprep.subr.bf16.mxu0 0
  %147 = vmatpush1.bf16.msra.mxu0 0
  %148 = vmatprep.subr.bf16.mxu0 0
  %149 = vmatpush1.bf16.msra.mxu0 0
  %150 = vmatprep.subr.bf16.mxu0 0
  %151 = vmatpush1.bf16.msra.mxu0 0
  %152 = vmatprep.subr.bf16.mxu0 0
  %153 = vmatpush1.bf16.msra.mxu0 0
  %154 = vmatprep.subr.bf16.mxu0 0
  %155 = vmatpush1.bf16.msra.mxu0 0
  %156 = vmatprep.subr.bf16.mxu0 0
  %157 = vmatpush1.bf16.msra.mxu0 %v117
  %158 = vmatprep.subr.bf16.mxu0 0
  %159 = vmatpush1.bf16.msra.mxu0 %v116
  %160 = vmatprep.subr.bf16.mxu0 0
  %161 = vmatpush1.bf16.msra.mxu0 %v115
  %162 = vmatprep.subr.bf16.mxu0 0
  %163 = vmatpush2.bf16.msra.mxu0 0
  %164 = vmatprep.subr.bf16.mxu0 0
  %165 = vmatpush2.bf16.msra.mxu0 0
  %166 = vmatprep.subr.bf16.mxu0 0
  %167 = vmatpush2.bf16.msra.mxu0 0
  %168 = vmatprep.subr.bf16.mxu0 0
  %169 = vmatpush2.bf16.msra.mxu0 0
  %170 = vmatprep.subr.bf16.mxu0 0
  %171 = vmatpush2.bf16.msra.mxu0 0
  %172 = vmatprep.subr.bf16.mxu0 0
  %173 = vmatpush2.bf16.msra.mxu0 0
  %174 = vmatprep.subr.bf16.mxu0 0
  %175 = vmatpush2.bf16.msra.mxu0 0
  %176 = vmatprep.subr.bf16.mxu0 0
  %177 = vmatpush2.bf16.msra.mxu0 0
  %178 = vmatprep.mubr.bf16.mxu0 0
  %179 = vmatmul.mubr.bf16.gmra.mxu0 %v123
  %v180 = vpop.f32.mrf.mxu0
  %v181 = vadd.f32 %v62, %v180
  %v182 = vpop.f32.mrf.mxu0
  %v183 = vpop.f32.mrf.mxu0
  %v184 = vadd.f32 %v62, %v183
  %v185 = vpop.f32.mrf.mxu0
  %186 = vmatprep.mubr.bf16.mxu0 0
  %187 = vmatmul.mubr.bf16.gmra.mxu0 %v126
  %v188 = vpop.f32.mrf.mxu0
  %v189 = vadd.f32 %v62, %v188
  %v190 = vpop.f32.mrf.mxu0
  %v191 = vpop.f32.mrf.mxu0
  %v192 = vadd.f32 %v62, %v191
  %v193 = vpop.f32.mrf.mxu0
  %194 = vmatprep.mubr.bf16.mxu0 0
  %195 = vmatmul.mubr.bf16.gmra.mxu0 %v129
  %v196 = vpop.f32.mrf.mxu0
  %v197 = vadd.f32 %v62, %v196
  %v198 = vpop.f32.mrf.mxu0
  %v199 = vpop.f32.mrf.mxu0
  %v200 = vadd.f32 %v62, %v199
  %v201 = vpop.f32.mrf.mxu0
  %202 = vmatprep.mubr.bf16.mxu0 0
  %203 = vmatmul.mubr.bf16.gmra.mxu0 %v132
  %v204 = vpop.f32.mrf.mxu0
  %v205 = vadd.f32 %v62, %v204
  %v206 = vpop.f32.mrf.mxu0
  %v207 = vpop.f32.mrf.mxu0
  %v208 = vadd.f32 %v62, %v207
  %v209 = vpop.f32.mrf.mxu0
  %210 = vmatprep.mubr.bf16.mxu0 0
  %211 = vmatmul.mubr.bf16.gmra.mxu0 %v135
  %v212 = vpop.f32.mrf.mxu0
  %v213 = vadd.f32 %v62, %v212
  %v214 = vpop.f32.mrf.mxu0
  %v215 = vpop.f32.mrf.mxu0
  %v216 = vadd.f32 %v62, %v215
  %v217 = vpop.f32.mrf.mxu0
  %218 = vmatprep.mubr.bf16.mxu0 0
  %219 = vmatmul.mubr.bf16.gmra.mxu0 %v138
  %v220 = vpop.f32.mrf.mxu0
  %v221 = vadd.f32 %v62, %v220
  %v222 = vpop.f32.mrf.mxu0
  %v223 = vpop.f32.mrf.mxu0
  %v224 = vadd.f32 %v62, %v223
  %v225 = vpop.f32.mrf.mxu0
  %226 = vmatprep.mubr.bf16.mxu0 0
  %227 = vmatmul.mubr.bf16.gmra.mxu0 %v141
  %v228 = vpop.f32.mrf.mxu0
  %v229 = vadd.f32 %v62, %v228
  %v230 = vpop.f32.mrf.mxu0
  %v231 = vpop.f32.mrf.mxu0
  %v232 = vadd.f32 %v62, %v231
  %v233 = vpop.f32.mrf.mxu0
  %234 = vmatprep.mubr.bf16.mxu0 0
  %235 = vmatmul.mubr.bf16.gmra.mxu0 %v144
  %v236 = vpop.f32.mrf.mxu0
  %v237 = vadd.f32 %v62, %v236
  %v238 = vpop.f32.mrf.mxu0
  %v239 = vpop.f32.mrf.mxu0
  %v240 = vadd.f32 %v62, %v239
  %v241 = vpop.f32.mrf.mxu0
  %242 = vdwg.mxu0
  %v243 = vld [vmem:[%s1] sm:$0xf]
  %v244 = vld [vmem:[%s1 + $0x4] sm:$0xf]
  %v245 = vld [vmem:[%s1 + $0x8] sm:$0xf]
  %v246 = vld [vmem:[%s1 + $0xc] sm:$0xf]
  %v247 = vld [vmem:[%s1 + $0x10] sm:$0xf]
  %v248 = vld [vmem:[%s1 + $0x14] sm:$0xf]
  %v249 = vld [vmem:[%s1 + $0x18] sm:$0xf]
  %v250 = vld [vmem:[%s1 + $0x1c] sm:$0xf]
  %v251 = vld [vmem:[%s1 + $0x20] sm:$0xf]
  %v252 = vld [vmem:[%s1 + $0x24] sm:$0xf]
  %v253 = vld [vmem:[%s1 + $0x28] sm:$0xf]
  %v254 = vld [vmem:[%s1 + $0x2c] sm:$0xf]
  %v255 = vld [vmem:[%s1 + $0x30] sm:$0xf]
  %v256 = vld [vmem:[%s1 + $0x34] sm:$0xf]
  %v257 = vld [vmem:[%s1 + $0x38] sm:$0xf]
  %v258 = vld [vmem:[%s1 + $0x3c] sm:$0xf]
  %v259 = vld [vmem:[%s1 + $0x40] sm:$0xf]
  %v260 = vld [vmem:[%s1 + $0x44] sm:$0xf]
  %v261 = vld [vmem:[%s1 + $0x48] sm:$0xf]
  %v262 = vld [vmem:[%s1 + $0x4c] sm:$0xf]
  %v263 = vld [vmem:[%s1 + $0x50] sm:$0xf]
  %v264 = vld [vmem:[%s1 + $0x54] sm:$0xf]
  %v265 = vld [vmem:[%s1 + $0x58] sm:$0xf]
  %v266 = vld [vmem:[%s1 + $0x5c] sm:$0xf]
  %v267 = vld [vmem:[%s1 + $0x60] sm:$0xf]
  %v268 = vld [vmem:[%s1 + $0x64] sm:$0xf]
  %v269 = vld [vmem:[%s1 + $0x68] sm:$0xf]
  %v270 = vld [vmem:[%s1 + $0x6c] sm:$0xf]
  %v271 = vld [vmem:[%s1 + $0x70] sm:$0xf]
  %v272 = vld [vmem:[%s1 + $0x74] sm:$0xf]
  %v273 = vld [vmem:[%s1 + $0x78] sm:$0xf]
  %v274 = vld [vmem:[%s1 + $0x7c] sm:$0xf]
  %v275 = vld [vmem:[%s1 + $0x80] sm:$0xf]
  %v276 = vld [vmem:[%s1 + $0x84] sm:$0xf]
  %v277 = vld [vmem:[%s1 + $0x88] sm:$0xf]
  %v278 = vld [vmem:[%s1 + $0x8c] sm:$0xf]
  %v279 = vld [vmem:[%s1 + $0x90] sm:$0xf]
  %v280 = vld [vmem:[%s1 + $0x94] sm:$0xf]
  %v281 = vld [vmem:[%s1 + $0x98] sm:$0xf]
  %v282 = vld [vmem:[%s1 + $0x9c] sm:$0xf]
  %v283 = vld [vmem:[%s1 + $0xa0] sm:$0xf]
  %v284 = vld [vmem:[%s1 + $0xa4] sm:$0xf]
  %v285 = vld [vmem:[%s1 + $0xa8] sm:$0xf]
  %v286 = vld [vmem:[%s1 + $0xac] sm:$0xf]
  %v287 = vld [vmem:[%s1 + $0xb0] sm:$0xf]
  %v288 = vld [vmem:[%s1 + $0xb4] sm:$0xf]
  %v289 = vld [vmem:[%s1 + $0xb8] sm:$0xf]
  %v290 = vld [vmem:[%s1 + $0xbc] sm:$0xf]
  %v291 = vld [vmem:[%s1 + $0xc0] sm:$0xf]
  %v292 = vld [vmem:[%s1 + $0xc4] sm:$0xf]
  %v293 = vld [vmem:[%s1 + $0xc8] sm:$0xf]
  %v294 = vld [vmem:[%s1 + $0xcc] sm:$0xf]
  %v295 = vld [vmem:[%s1 + $0xd0] sm:$0xf]
  %v296 = vld [vmem:[%s1 + $0xd4] sm:$0xf]
  %v297 = vld [vmem:[%s1 + $0xd8] sm:$0xf]
  %v298 = vld [vmem:[%s1 + $0xdc] sm:$0xf]
  %v299 = vld [vmem:[%s1 + $0xe0] sm:$0xf]
  %v300 = vld [vmem:[%s1 + $0xe4] sm:$0xf]
  %v301 = vld [vmem:[%s1 + $0xe8] sm:$0xf]
  %v302 = vld [vmem:[%s1 + $0xec] sm:$0xf]
  %v303 = vld [vmem:[%s1 + $0xf0] sm:$0xf]
  %v304 = vld [vmem:[%s1 + $0xf4] sm:$0xf]
  %v305 = vld [vmem:[%s1 + $0xf8] sm:$0xf]
  %v306 = vld [vmem:[%s1 + $0xfc] sm:$0xf]
  %v307 = vld [vmem:[%s1 + $0x100] sm:$0xf]
  %v308 = vld [vmem:[%s1 + $0x104] sm:$0xf]
  %v309 = vld [vmem:[%s1 + $0x108] sm:$0xf]
  %v310 = vld [vmem:[%s1 + $0x10c] sm:$0xf]
  %v311 = vld [vmem:[%s1 + $0x110] sm:$0xf]
  %v312 = vld [vmem:[%s1 + $0x114] sm:$0xf]
  %v313 = vld [vmem:[%s1 + $0x118] sm:$0xf]
  %v314 = vld [vmem:[%s1 + $0x11c] sm:$0xf]
  %v315 = vld [vmem:[%s1 + $0x120] sm:$0xf]
  %v316 = vld [vmem:[%s1 + $0x124] sm:$0xf]
  %v317 = vld [vmem:[%s1 + $0x128] sm:$0xf]
  %v318 = vld [vmem:[%s1 + $0x12c] sm:$0xf]
  %v319 = vld [vmem:[%s1 + $0x130] sm:$0xf]
  %v320 = vld [vmem:[%s1 + $0x134] sm:$0xf]
  %v321 = vld [vmem:[%s1 + $0x138] sm:$0xf]
  %v322 = vld [vmem:[%s1 + $0x13c] sm:$0xf]
  %v323 = vld [vmem:[%s1 + $0x140] sm:$0xf]
  %v324 = vld [vmem:[%s1 + $0x144] sm:$0xf]
  %v325 = vld [vmem:[%s1 + $0x148] sm:$0xf]
  %v326 = vld [vmem:[%s1 + $0x14c] sm:$0xf]
  %v327 = vld [vmem:[%s1 + $0x150] sm:$0xf]
  %v328 = vld [vmem:[%s1 + $0x154] sm:$0xf]
  %v329 = vld [vmem:[%s1 + $0x158] sm:$0xf]
  %v330 = vld [vmem:[%s1 + $0x15c] sm:$0xf]
  %v331 = vld [vmem:[%s1 + $0x160] sm:$0xf]
  %v332 = vld [vmem:[%s1 + $0x164] sm:$0xf]
  %v333 = vld [vmem:[%s1 + $0x168] sm:$0xf]
  %v334 = vld [vmem:[%s1 + $0x16c] sm:$0xf]
  %v335 = vld [vmem:[%s1 + $0x170] sm:$0xf]
  %v336 = vld [vmem:[%s1 + $0x174] sm:$0xf]
  %v337 = vld [vmem:[%s1 + $0x178] sm:$0xf]
  %v338 = vld [vmem:[%s1 + $0x17c] sm:$0xf]
  %v339 = vld [vmem:[%s1 + $0x180] sm:$0xf]
  %v340 = vld [vmem:[%s1 + $0x184] sm:$0xf]
  %v341 = vld [vmem:[%s1 + $0x188] sm:$0xf]
  %v342 = vld [vmem:[%s1 + $0x18c] sm:$0xf]
  %v343 = vld [vmem:[%s1 + $0x190] sm:$0xf]
  %v344 = vld [vmem:[%s1 + $0x194] sm:$0xf]
  %v345 = vld [vmem:[%s1 + $0x198] sm:$0xf]
  %v346 = vld [vmem:[%s1 + $0x19c] sm:$0xf]
  %v347 = vld [vmem:[%s1 + $0x1a0] sm:$0xf]
  %v348 = vld [vmem:[%s1 + $0x1a4] sm:$0xf]
  %v349 = vld [vmem:[%s1 + $0x1a8] sm:$0xf]
  %v350 = vld [vmem:[%s1 + $0x1ac] sm:$0xf]
  %v351 = vld [vmem:[%s1 + $0x1b0] sm:$0xf]
  %v352 = vld [vmem:[%s1 + $0x1b4] sm:$0xf]
  %v353 = vld [vmem:[%s1 + $0x1b8] sm:$0xf]
  %v354 = vld [vmem:[%s1 + $0x1bc] sm:$0xf]
  %v355 = vld [vmem:[%s1 + $0x1c0] sm:$0xf]
  %v356 = vld [vmem:[%s1 + $0x1c4] sm:$0xf]
  %v357 = vld [vmem:[%s1 + $0x1c8] sm:$0xf]
  %v358 = vld [vmem:[%s1 + $0x1cc] sm:$0xf]
  %v359 = vld [vmem:[%s1 + $0x1d0] sm:$0xf]
  %v360 = vld [vmem:[%s1 + $0x1d4] sm:$0xf]
  %v361 = vld [vmem:[%s1 + $0x1d8] sm:$0xf]
  %v362 = vld [vmem:[%s1 + $0x1dc] sm:$0xf]
  %v363 = vld [vmem:[%s1 + $0x1e0] sm:$0xf]
  %v364 = vld [vmem:[%s1 + $0x1e4] sm:$0xf]
  %v365 = vld [vmem:[%s1 + $0x1e8] sm:$0xf]
  %v366 = vld [vmem:[%s1 + $0x1ec] sm:$0xf]
  %v367 = vld [vmem:[%s1 + $0x1f0] sm:$0xf]
  %v368 = vld [vmem:[%s1 + $0x1f4] sm:$0xf]
  %v369 = vld [vmem:[%s1 + $0x1f8] sm:$0xf]
  %v370 = vld [vmem:[%s1 + $0x1fc] sm:$0xf]
  %v371 = vld [vmem:[%s1 + $0x200] sm:$0xf]
  %v372 = vld [vmem:[%s1 + $0x204] sm:$0xf]
  %v373 = vld [vmem:[%s1 + $0x208] sm:$0xf]
  %v374 = vld [vmem:[%s1 + $0x20c] sm:$0xf]
  %v375 = vld [vmem:[%s1 + $0x210] sm:$0xf]
  %v376 = vld [vmem:[%s1 + $0x214] sm:$0xf]
  %v377 = vld [vmem:[%s1 + $0x218] sm:$0xf]
  %v378 = vld [vmem:[%s1 + $0x21c] sm:$0xf]
  %v379 = vld [vmem:[%s1 + $0x220] sm:$0xf]
  %v380 = vld [vmem:[%s1 + $0x224] sm:$0xf]
  %v381 = vld [vmem:[%s1 + $0x228] sm:$0xf]
  %v382 = vld [vmem:[%s1 + $0x22c] sm:$0xf]
  %v383 = vld [vmem:[%s1 + $0x230] sm:$0xf]
  %v384 = vld [vmem:[%s1 + $0x234] sm:$0xf]
  %v385 = vld [vmem:[%s1 + $0x238] sm:$0xf]
  %v386 = vld [vmem:[%s1 + $0x23c] sm:$0xf]
  %v387 = vld [vmem:[%s1 + $0x240] sm:$0xf]
  %v388 = vld [vmem:[%s1 + $0x244] sm:$0xf]
  %v389 = vld [vmem:[%s1 + $0x248] sm:$0xf]
  %v390 = vld [vmem:[%s1 + $0x24c] sm:$0xf]
  %v391 = vld [vmem:[%s1 + $0x250] sm:$0xf]
  %v392 = vld [vmem:[%s1 + $0x254] sm:$0xf]
  %v393 = vld [vmem:[%s1 + $0x258] sm:$0xf]
  %v394 = vld [vmem:[%s1 + $0x25c] sm:$0xf]
  %v395 = vld [vmem:[%s1 + $0x260] sm:$0xf]
  %v396 = vld [vmem:[%s1 + $0x264] sm:$0xf]
  %v397 = vld [vmem:[%s1 + $0x268] sm:$0xf]
  %v398 = vld [vmem:[%s1 + $0x26c] sm:$0xf]
  %v399 = vld [vmem:[%s1 + $0x270] sm:$0xf]
  %v400 = vld [vmem:[%s1 + $0x274] sm:$0xf]
  %v401 = vld [vmem:[%s1 + $0x278] sm:$0xf]
  %v402 = vld [vmem:[%s1 + $0x27c] sm:$0xf]
  %v403 = vld [vmem:[%s1 + $0x280] sm:$0xf]
  %v404 = vld [vmem:[%s1 + $0x284] sm:$0xf]
  %v405 = vld [vmem:[%s1 + $0x288] sm:$0xf]
  %v406 = vld [vmem:[%s1 + $0x28c] sm:$0xf]
  %v407 = vld [vmem:[%s1 + $0x290] sm:$0xf]
  %v408 = vld [vmem:[%s1 + $0x294] sm:$0xf]
  %v409 = vld [vmem:[%s1 + $0x298] sm:$0xf]
  %v410 = vld [vmem:[%s1 + $0x29c] sm:$0xf]
  %v411 = vld [vmem:[%s1 + $0x2a0] sm:$0xf]
  %v412 = vld [vmem:[%s1 + $0x2a4] sm:$0xf]
  %v413 = vld [vmem:[%s1 + $0x2a8] sm:$0xf]
  %v414 = vld [vmem:[%s1 + $0x2ac] sm:$0xf]
  %v415 = vld [vmem:[%s1 + $0x2b0] sm:$0xf]
  %v416 = vld [vmem:[%s1 + $0x2b4] sm:$0xf]
  %v417 = vld [vmem:[%s1 + $0x2b8] sm:$0xf]
  %v418 = vld [vmem:[%s1 + $0x2bc] sm:$0xf]
  %v419 = vld [vmem:[%s1 + $0x2c0] sm:$0xf]
  %v420 = vld [vmem:[%s1 + $0x2c4] sm:$0xf]
  %v421 = vld [vmem:[%s1 + $0x2c8] sm:$0xf]
  %v422 = vld [vmem:[%s1 + $0x2cc] sm:$0xf]
  %v423 = vld [vmem:[%s1 + $0x2d0] sm:$0xf]
  %v424 = vld [vmem:[%s1 + $0x2d4] sm:$0xf]
  %v425 = vld [vmem:[%s1 + $0x2d8] sm:$0xf]
  %v426 = vld [vmem:[%s1 + $0x2dc] sm:$0xf]
  %v427 = vld [vmem:[%s1 + $0x2e0] sm:$0xf]
  %v428 = vld [vmem:[%s1 + $0x2e4] sm:$0xf]
  %v429 = vld [vmem:[%s1 + $0x2e8] sm:$0xf]
  %v430 = vld [vmem:[%s1 + $0x2ec] sm:$0xf]
  %v431 = vld [vmem:[%s1 + $0x2f0] sm:$0xf]
  %v432 = vld [vmem:[%s1 + $0x2f4] sm:$0xf]
  %v433 = vld [vmem:[%s1 + $0x2f8] sm:$0xf]
  %v434 = vld [vmem:[%s1 + $0x2fc] sm:$0xf]
  %v435 = vld [vmem:[%s1 + $0x300] sm:$0xf]
  %v436 = vld [vmem:[%s1 + $0x304] sm:$0xf]
  %v437 = vld [vmem:[%s1 + $0x308] sm:$0xf]
  %v438 = vld [vmem:[%s1 + $0x30c] sm:$0xf]
  %v439 = vld [vmem:[%s1 + $0x310] sm:$0xf]
  %v440 = vld [vmem:[%s1 + $0x314] sm:$0xf]
  %v441 = vld [vmem:[%s1 + $0x318] sm:$0xf]
  %v442 = vld [vmem:[%s1 + $0x31c] sm:$0xf]
  %v443 = vld [vmem:[%s1 + $0x320] sm:$0xf]
  %v444 = vld [vmem:[%s1 + $0x324] sm:$0xf]
  %v445 = vld [vmem:[%s1 + $0x328] sm:$0xf]
  %v446 = vld [vmem:[%s1 + $0x32c] sm:$0xf]
  %v447 = vld [vmem:[%s1 + $0x330] sm:$0xf]
  %v448 = vld [vmem:[%s1 + $0x334] sm:$0xf]
  %v449 = vld [vmem:[%s1 + $0x338] sm:$0xf]
  %v450 = vld [vmem:[%s1 + $0x33c] sm:$0xf]
  %v451 = vld [vmem:[%s1 + $0x340] sm:$0xf]
  %v452 = vld [vmem:[%s1 + $0x344] sm:$0xf]
  %v453 = vld [vmem:[%s1 + $0x348] sm:$0xf]
  %v454 = vld [vmem:[%s1 + $0x34c] sm:$0xf]
  %v455 = vld [vmem:[%s1 + $0x350] sm:$0xf]
  %v456 = vld [vmem:[%s1 + $0x354] sm:$0xf]
  %v457 = vld [vmem:[%s1 + $0x358] sm:$0xf]
  %v458 = vld [vmem:[%s1 + $0x35c] sm:$0xf]
  %v459 = vld [vmem:[%s1 + $0x360] sm:$0xf]
  %v460 = vld [vmem:[%s1 + $0x364] sm:$0xf]
  %v461 = vld [vmem:[%s1 + $0x368] sm:$0xf]
  %v462 = vld [vmem:[%s1 + $0x36c] sm:$0xf]
  %v463 = vld [vmem:[%s1 + $0x370] sm:$0xf]
  %v464 = vld [vmem:[%s1 + $0x374] sm:$0xf]
  %v465 = vld [vmem:[%s1 + $0x378] sm:$0xf]
  %v466 = vld [vmem:[%s1 + $0x37c] sm:$0xf]
  %v467 = vld [vmem:[%s1 + $0x380] sm:$0xf]
  %v468 = vld [vmem:[%s1 + $0x384] sm:$0xf]
  %v469 = vld [vmem:[%s1 + $0x388] sm:$0xf]
  %v470 = vld [vmem:[%s1 + $0x38c] sm:$0xf]
  %v471 = vld [vmem:[%s1 + $0x390] sm:$0xf]
  %v472 = vld [vmem:[%s1 + $0x394] sm:$0xf]
  %v473 = vld [vmem:[%s1 + $0x398] sm:$0xf]
  %v474 = vld [vmem:[%s1 + $0x39c] sm:$0xf]
  %v475 = vld [vmem:[%s1 + $0x3a0] sm:$0xf]
  %v476 = vld [vmem:[%s1 + $0x3a4] sm:$0xf]
  %v477 = vld [vmem:[%s1 + $0x3a8] sm:$0xf]
  %v478 = vld [vmem:[%s1 + $0x3ac] sm:$0xf]
  %v479 = vld [vmem:[%s1 + $0x3b0] sm:$0xf]
  %v480 = vld [vmem:[%s1 + $0x3b4] sm:$0xf]
  %v481 = vld [vmem:[%s1 + $0x3b8] sm:$0xf]
  %v482 = vld [vmem:[%s1 + $0x3bc] sm:$0xf]
  %v483 = vld [vmem:[%s1 + $0x3c0] sm:$0xf]
  %v484 = vld [vmem:[%s1 + $0x3c4] sm:$0xf]
  %v485 = vld [vmem:[%s1 + $0x3c8] sm:$0xf]
  %v486 = vld [vmem:[%s1 + $0x3cc] sm:$0xf]
  %v487 = vld [vmem:[%s1 + $0x3d0] sm:$0xf]
  %v488 = vld [vmem:[%s1 + $0x3d4] sm:$0xf]
  %v489 = vld [vmem:[%s1 + $0x3d8] sm:$0xf]
  %v490 = vld [vmem:[%s1 + $0x3dc] sm:$0xf]
  %v491 = vld [vmem:[%s1 + $0x3e0] sm:$0xf]
  %v492 = vld [vmem:[%s1 + $0x3e4] sm:$0xf]
  %v493 = vld [vmem:[%s1 + $0x3e8] sm:$0xf]
  %v494 = vld [vmem:[%s1 + $0x3ec] sm:$0xf]
  %v495 = vld [vmem:[%s1 + $0x3f0] sm:$0xf]
  %v496 = vld [vmem:[%s1 + $0x3f4] sm:$0xf]
  %v497 = vld [vmem:[%s1 + $0x3f8] sm:$0xf]
  %v498 = vld [vmem:[%s1 + $0x3fc] sm:$0xf]
  %v499 = vld [vmem:[%s1 + $0x400] sm:$0xf]
  %v500 = vld [vmem:[%s1 + $0x404] sm:$0xf]
  %v501 = vld [vmem:[%s1 + $0x408] sm:$0xf]
  %v502 = vld [vmem:[%s1 + $0x40c] sm:$0xf]
  %v503 = vld [vmem:[%s1 + $0x410] sm:$0xf]
  %v504 = vld [vmem:[%s1 + $0x414] sm:$0xf]
  %v505 = vld [vmem:[%s1 + $0x418] sm:$0xf]
  %v506 = vld [vmem:[%s1 + $0x41c] sm:$0xf]
  %v507 = vld [vmem:[%s1 + $0x420] sm:$0xf]
  %v508 = vld [vmem:[%s1 + $0x424] sm:$0xf]
  %v509 = vld [vmem:[%s1 + $0x428] sm:$0xf]
  %v510 = vld [vmem:[%s1 + $0x42c] sm:$0xf]
  %v511 = vld [vmem:[%s1 + $0x430] sm:$0xf]
  %v512 = vld [vmem:[%s1 + $0x434] sm:$0xf]
  %v513 = vld [vmem:[%s1 + $0x438] sm:$0xf]
  %v514 = vld [vmem:[%s1 + $0x43c] sm:$0xf]
  %v515 = vld [vmem:[%s1 + $0x440] sm:$0xf]
  %v516 = vld [vmem:[%s1 + $0x444] sm:$0xf]
  %v517 = vld [vmem:[%s1 + $0x448] sm:$0xf]
  %v518 = vld [vmem:[%s1 + $0x44c] sm:$0xf]
  %v519 = vld [vmem:[%s1 + $0x450] sm:$0xf]
  %v520 = vld [vmem:[%s1 + $0x454] sm:$0xf]
  %v521 = vld [vmem:[%s1 + $0x458] sm:$0xf]
  %v522 = vld [vmem:[%s1 + $0x45c] sm:$0xf]
  %v523 = vld [vmem:[%s1 + $0x460] sm:$0xf]
  %v524 = vld [vmem:[%s1 + $0x464] sm:$0xf]
  %v525 = vld [vmem:[%s1 + $0x468] sm:$0xf]
  %v526 = vld [vmem:[%s1 + $0x46c] sm:$0xf]
  %v527 = vld [vmem:[%s1 + $0x470] sm:$0xf]
  %v528 = vld [vmem:[%s1 + $0x474] sm:$0xf]
  %v529 = vld [vmem:[%s1 + $0x478] sm:$0xf]
  %v530 = vld [vmem:[%s1 + $0x47c] sm:$0xf]
  %v531 = vld [vmem:[%s3] sm:$0xf]
  %v532 = vld [vmem:[%s3 + $0x4] sm:$0xf]
  %v821 = vunpack.c.l.b16 %v243
  %v822 = vunpack.c.l.b16 %v244
  %v823 = vunpack.c.l.b16 %v245
  %v824 = vunpack.c.l.b16 %v246
  %v825 = vunpack.c.l.b16 %v247
  %v826 = vunpack.c.l.b16 %v248
  %v827 = vunpack.c.l.b16 %v249
  %v828 = vunpack.c.l.b16 %v250
  %v829 = vunpack.c.l.b16 %v251
  %v830 = vunpack.c.l.b16 %v252
  %v831 = vunpack.c.l.b16 %v253
  %v832 = vunpack.c.l.b16 %v254
  %v833 = vunpack.c.l.b16 %v255
  %v834 = vunpack.c.l.b16 %v256
  %v835 = vunpack.c.l.b16 %v257
  %v836 = vunpack.c.l.b16 %v258
  %v837 = vunpack.c.l.b16 %v259
  %v838 = vunpack.c.l.b16 %v260
  %v839 = vunpack.c.l.b16 %v261
  %v840 = vunpack.c.l.b16 %v262
  %v841 = vunpack.c.l.b16 %v263
  %v842 = vunpack.c.l.b16 %v264
  %v843 = vunpack.c.l.b16 %v265
  %v844 = vunpack.c.l.b16 %v266
  %v845 = vunpack.c.l.b16 %v267
  %v846 = vunpack.c.l.b16 %v268
  %v847 = vunpack.c.l.b16 %v269
  %v848 = vunpack.c.l.b16 %v270
  %v849 = vunpack.c.l.b16 %v271
  %v850 = vunpack.c.l.b16 %v272
  %v851 = vunpack.c.l.b16 %v273
  %v852 = vunpack.c.l.b16 %v274
  %v853 = vunpack.c.l.b16 %v275
  %v854 = vunpack.c.l.b16 %v276
  %v855 = vunpack.c.l.b16 %v277
  %v856 = vunpack.c.l.b16 %v278
  %v857 = vunpack.c.l.b16 %v279
  %v858 = vunpack.c.l.b16 %v280
  %v859 = vunpack.c.l.b16 %v281
  %v860 = vunpack.c.l.b16 %v282
  %v861 = vunpack.c.l.b16 %v283
  %v862 = vunpack.c.l.b16 %v284
  %v863 = vunpack.c.l.b16 %v285
  %v864 = vunpack.c.l.b16 %v286
  %v865 = vunpack.c.l.b16 %v287
  %v866 = vunpack.c.l.b16 %v288
  %v867 = vunpack.c.l.b16 %v289
  %v868 = vunpack.c.l.b16 %v290
  %v869 = vunpack.c.l.b16 %v291
  %v870 = vunpack.c.l.b16 %v292
  %v871 = vunpack.c.l.b16 %v293
  %v872 = vunpack.c.l.b16 %v294
  %v873 = vunpack.c.l.b16 %v295
  %v874 = vunpack.c.l.b16 %v296
  %v875 = vunpack.c.l.b16 %v297
  %v876 = vunpack.c.l.b16 %v298
  %v877 = vunpack.c.l.b16 %v299
  %v878 = vunpack.c.l.b16 %v300
  %v879 = vunpack.c.l.b16 %v301
  %v880 = vunpack.c.l.b16 %v302
  %v881 = vunpack.c.l.b16 %v303
  %v882 = vunpack.c.l.b16 %v304
  %v883 = vunpack.c.l.b16 %v305
  %v884 = vunpack.c.l.b16 %v306
  %v885 = vunpack.c.l.b16 %v307
  %v886 = vunpack.c.l.b16 %v308
  %v887 = vunpack.c.l.b16 %v309
  %v888 = vunpack.c.l.b16 %v310
  %v889 = vunpack.c.l.b16 %v311
  %v890 = vunpack.c.l.b16 %v312
  %v891 = vunpack.c.l.b16 %v313
  %v892 = vunpack.c.l.b16 %v314
  %v893 = vunpack.c.l.b16 %v315
  %v894 = vunpack.c.l.b16 %v316
  %v895 = vunpack.c.l.b16 %v317
  %v896 = vunpack.c.l.b16 %v318
  %v897 = vunpack.c.l.b16 %v319
  %v898 = vunpack.c.l.b16 %v320
  %v899 = vunpack.c.l.b16 %v321
  %v900 = vunpack.c.l.b16 %v322
  %v901 = vunpack.c.l.b16 %v323
  %v902 = vunpack.c.l.b16 %v324
  %v903 = vunpack.c.l.b16 %v325
  %v904 = vunpack.c.l.b16 %v326
  %v905 = vunpack.c.l.b16 %v327
  %v906 = vunpack.c.l.b16 %v328
  %v907 = vunpack.c.l.b16 %v329
  %v908 = vunpack.c.l.b16 %v330
  %v909 = vunpack.c.l.b16 %v331
  %v910 = vunpack.c.l.b16 %v332
  %v911 = vunpack.c.l.b16 %v333
  %v912 = vunpack.c.l.b16 %v334
  %v913 = vunpack.c.l.b16 %v335
  %v914 = vunpack.c.l.b16 %v336
  %v915 = vunpack.c.l.b16 %v337
  %v916 = vunpack.c.l.b16 %v338
  %v917 = vunpack.c.l.b16 %v339
  %v918 = vunpack.c.l.b16 %v340
  %v919 = vunpack.c.l.b16 %v341
  %v920 = vunpack.c.l.b16 %v342
  %v921 = vunpack.c.l.b16 %v343
  %v922 = vunpack.c.l.b16 %v344
  %v923 = vunpack.c.l.b16 %v345
  %v924 = vunpack.c.l.b16 %v346
  %v925 = vunpack.c.l.b16 %v347
  %v926 = vunpack.c.l.b16 %v348
  %v927 = vunpack.c.l.b16 %v349
  %v928 = vunpack.c.l.b16 %v350
  %v929 = vunpack.c.l.b16 %v351
  %v930 = vunpack.c.l.b16 %v352
  %v931 = vunpack.c.l.b16 %v353
  %v932 = vunpack.c.l.b16 %v354
  %v933 = vunpack.c.l.b16 %v355
  %v934 = vunpack.c.l.b16 %v356
  %v935 = vunpack.c.l.b16 %v357
  %v936 = vunpack.c.l.b16 %v358
  %v937 = vunpack.c.l.b16 %v359
  %v938 = vunpack.c.l.b16 %v360
  %v939 = vunpack.c.l.b16 %v361
  %v940 = vunpack.c.l.b16 %v362
  %v941 = vunpack.c.l.b16 %v363
  %v942 = vunpack.c.l.b16 %v364
  %v943 = vunpack.c.l.b16 %v365
  %v944 = vunpack.c.l.b16 %v366
  %v945 = vunpack.c.l.b16 %v367
  %v946 = vunpack.c.l.b16 %v368
  %v947 = vunpack.c.l.b16 %v369
  %v948 = vunpack.c.l.b16 %v370
  %v949 = vunpack.c.l.b16 %v371
  %v950 = vunpack.c.l.b16 %v372
  %v951 = vunpack.c.l.b16 %v373
  %v952 = vunpack.c.l.b16 %v374
  %v953 = vunpack.c.l.b16 %v375
  %v954 = vunpack.c.l.b16 %v376
  %v955 = vunpack.c.l.b16 %v377
  %v956 = vunpack.c.l.b16 %v378
  %v957 = vunpack.c.l.b16 %v379
  %v958 = vunpack.c.l.b16 %v380
  %v959 = vunpack.c.l.b16 %v381
  %v960 = vunpack.c.l.b16 %v382
  %v961 = vunpack.c.l.b16 %v383
  %v962 = vunpack.c.l.b16 %v384
  %v963 = vunpack.c.l.b16 %v385
  %v964 = vunpack.c.l.b16 %v386
  %v965 = vunpack.c.l.b16 %v387
  %v966 = vunpack.c.l.b16 %v388
  %v967 = vunpack.c.l.b16 %v389
  %v968 = vunpack.c.l.b16 %v390
  %v969 = vunpack.c.l.b16 %v391
  %v970 = vunpack.c.l.b16 %v392
  %v971 = vunpack.c.l.b16 %v393
  %v972 = vunpack.c.l.b16 %v394
  %v973 = vunpack.c.l.b16 %v395
  %v974 = vunpack.c.l.b16 %v396
  %v975 = vunpack.c.l.b16 %v397
  %v976 = vunpack.c.l.b16 %v398
  %v977 = vunpack.c.l.b16 %v399
  %v978 = vunpack.c.l.b16 %v400
  %v979 = vunpack.c.l.b16 %v401
  %v980 = vunpack.c.l.b16 %v402
  %v981 = vunpack.c.l.b16 %v403
  %v982 = vunpack.c.l.b16 %v404
  %v983 = vunpack.c.l.b16 %v405
  %v984 = vunpack.c.l.b16 %v406
  %v985 = vunpack.c.l.b16 %v407
  %v986 = vunpack.c.l.b16 %v408
  %v987 = vunpack.c.l.b16 %v409
  %v988 = vunpack.c.l.b16 %v410
  %v989 = vunpack.c.l.b16 %v411
  %v990 = vunpack.c.l.b16 %v412
  %v991 = vunpack.c.l.b16 %v413
  %v992 = vunpack.c.l.b16 %v414
  %v993 = vunpack.c.l.b16 %v415
  %v994 = vunpack.c.l.b16 %v416
  %v995 = vunpack.c.l.b16 %v417
  %v996 = vunpack.c.l.b16 %v418
  %v997 = vunpack.c.l.b16 %v419
  %v998 = vunpack.c.l.b16 %v420
  %v999 = vunpack.c.l.b16 %v421
  %v1000 = vunpack.c.l.b16 %v422
  %v1001 = vunpack.c.l.b16 %v423
  %v1002 = vunpack.c.l.b16 %v424
  %v1003 = vunpack.c.l.b16 %v425
  %v1004 = vunpack.c.l.b16 %v426
  %v1005 = vunpack.c.l.b16 %v427
  %v1006 = vunpack.c.l.b16 %v428
  %v1007 = vunpack.c.l.b16 %v429
  %v1008 = vunpack.c.l.b16 %v430
  %v1009 = vunpack.c.l.b16 %v431
  %v1010 = vunpack.c.l.b16 %v432
  %v1011 = vunpack.c.l.b16 %v433
  %v1012 = vunpack.c.l.b16 %v434
  %v1013 = vunpack.c.l.b16 %v435
  %v1014 = vunpack.c.l.b16 %v436
  %v1015 = vunpack.c.l.b16 %v437
  %v1016 = vunpack.c.l.b16 %v438
  %v1017 = vunpack.c.l.b16 %v439
  %v1018 = vunpack.c.l.b16 %v440
  %v1019 = vunpack.c.l.b16 %v441
  %v1020 = vunpack.c.l.b16 %v442
  %v1021 = vunpack.c.l.b16 %v443
  %v1022 = vunpack.c.l.b16 %v444
  %v1023 = vunpack.c.l.b16 %v445
  %v1024 = vunpack.c.l.b16 %v446
  %v1025 = vunpack.c.l.b16 %v447
  %v1026 = vunpack.c.l.b16 %v448
  %v1027 = vunpack.c.l.b16 %v449
  %v1028 = vunpack.c.l.b16 %v450
  %v1029 = vunpack.c.l.b16 %v451
  %v1030 = vunpack.c.l.b16 %v452
  %v1031 = vunpack.c.l.b16 %v453
  %v1032 = vunpack.c.l.b16 %v454
  %v1033 = vunpack.c.l.b16 %v455
  %v1034 = vunpack.c.l.b16 %v456
  %v1035 = vunpack.c.l.b16 %v457
  %v1036 = vunpack.c.l.b16 %v458
  %v1037 = vunpack.c.l.b16 %v459
  %v1038 = vunpack.c.l.b16 %v460
  %v1039 = vunpack.c.l.b16 %v461
  %v1040 = vunpack.c.l.b16 %v462
  %v1041 = vunpack.c.l.b16 %v463
  %v1042 = vunpack.c.l.b16 %v464
  %v1043 = vunpack.c.l.b16 %v465
  %v1044 = vunpack.c.l.b16 %v466
  %v1045 = vunpack.c.l.b16 %v467
  %v1046 = vunpack.c.l.b16 %v468
  %v1047 = vunpack.c.l.b16 %v469
  %v1048 = vunpack.c.l.b16 %v470
  %v1049 = vunpack.c.l.b16 %v471
  %v1050 = vunpack.c.l.b16 %v472
  %v1051 = vunpack.c.l.b16 %v473
  %v1052 = vunpack.c.l.b16 %v474
  %v1053 = vunpack.c.l.b16 %v475
  %v1054 = vunpack.c.l.b16 %v476
  %v1055 = vunpack.c.l.b16 %v477
  %v1056 = vunpack.c.l.b16 %v478
  %v1057 = vunpack.c.l.b16 %v479
  %v1058 = vunpack.c.l.b16 %v480
  %v1059 = vunpack.c.l.b16 %v481
  %v1060 = vunpack.c.l.b16 %v482
  %v1061 = vunpack.c.l.b16 %v483
  %v1062 = vunpack.c.l.b16 %v484
  %v1063 = vunpack.c.l.b16 %v485
  %v1064 = vunpack.c.l.b16 %v486
  %v1065 = vunpack.c.l.b16 %v487
  %v1066 = vunpack.c.l.b16 %v488
  %v1067 = vunpack.c.l.b16 %v489
  %v1068 = vunpack.c.l.b16 %v490
  %v1069 = vunpack.c.l.b16 %v491
  %v1070 = vunpack.c.l.b16 %v492
  %v1071 = vunpack.c.l.b16 %v493
  %v1072 = vunpack.c.l.b16 %v494
  %v1073 = vunpack.c.l.b16 %v495
  %v1074 = vunpack.c.l.b16 %v496
  %v1075 = vunpack.c.l.b16 %v497
  %v1076 = vunpack.c.l.b16 %v498
  %v1077 = vunpack.c.l.b16 %v499
  %v1078 = vunpack.c.l.b16 %v500
  %v1079 = vunpack.c.l.b16 %v501
  %v1080 = vunpack.c.l.b16 %v502
  %v1081 = vunpack.c.l.b16 %v503
  %v1082 = vunpack.c.l.b16 %v504
  %v1083 = vunpack.c.l.b16 %v505
  %v1084 = vunpack.c.l.b16 %v506
  %v1085 = vunpack.c.l.b16 %v507
  %v1086 = vunpack.c.l.b16 %v508
  %v1087 = vunpack.c.l.b16 %v509
  %v1088 = vunpack.c.l.b16 %v510
  %v1089 = vunpack.c.l.b16 %v511
  %v1090 = vunpack.c.l.b16 %v512
  %v1091 = vunpack.c.l.b16 %v513
  %v1092 = vunpack.c.l.b16 %v514
  %v1093 = vunpack.c.l.b16 %v515
  %v1094 = vunpack.c.l.b16 %v516
  %v1095 = vunpack.c.l.b16 %v517
  %v1096 = vunpack.c.l.b16 %v518
  %v1097 = vunpack.c.l.b16 %v519
  %v1098 = vunpack.c.l.b16 %v520
  %v1099 = vunpack.c.l.b16 %v521
  %v1100 = vunpack.c.l.b16 %v522
  %v1101 = vunpack.c.l.b16 %v523
  %v1102 = vunpack.c.l.b16 %v524
  %v1103 = vunpack.c.l.b16 %v525
  %v1104 = vunpack.c.l.b16 %v526
  %v1105 = vunpack.c.l.b16 %v527
  %v1106 = vunpack.c.l.b16 %v528
  %v1107 = vunpack.c.l.b16 %v529
  %v1108 = vunpack.c.l.b16 %v530
  %v1109 = vpack.c.b16 %v822, %v821
  %v1110 = vpack.c.b16 %v824, %v823
  %v1111 = vpack.c.b16 %v826, %v825
  %v1112 = vpack.c.b16 %v828, %v827
  %v1113 = vpack.c.b16 %v830, %v829
  %v1114 = vpack.c.b16 %v832, %v831
  %v1115 = vpack.c.b16 %v834, %v833
  %v1116 = vpack.c.b16 %v836, %v835
  %v1117 = vpack.c.b16 %v838, %v837
  %v1118 = vpack.c.b16 %v840, %v839
  %v1119 = vpack.c.b16 %v842, %v841
  %v1120 = vpack.c.b16 %v844, %v843
  %v1121 = vpack.c.b16 %v846, %v845
  %v1122 = vpack.c.b16 %v848, %v847
  %v1123 = vpack.c.b16 %v850, %v849
  %v1124 = vpack.c.b16 %v852, %v851
  %v1125 = vpack.c.b16 %v854, %v853
  %v1126 = vpack.c.b16 %v856, %v855
  %v1127 = vpack.c.b16 %v858, %v857
  %v1128 = vpack.c.b16 %v860, %v859
  %v1129 = vpack.c.b16 %v862, %v861
  %v1130 = vpack.c.b16 %v864, %v863
  %v1131 = vpack.c.b16 %v866, %v865
  %v1132 = vpack.c.b16 %v868, %v867
  %v1133 = vpack.c.b16 %v870, %v869
  %v1134 = vpack.c.b16 %v872, %v871
  %v1135 = vpack.c.b16 %v874, %v873
  %v1136 = vpack.c.b16 %v876, %v875
  %v1137 = vpack.c.b16 %v878, %v877
  %v1138 = vpack.c.b16 %v880, %v879
  %v1139 = vpack.c.b16 %v882, %v881
  %v1140 = vpack.c.b16 %v884, %v883
  %v1141 = vpack.c.b16 %v886, %v885
  %v1142 = vpack.c.b16 %v888, %v887
  %v1143 = vpack.c.b16 %v890, %v889
  %v1144 = vpack.c.b16 %v892, %v891
  %v1145 = vpack.c.b16 %v894, %v893
  %v1146 = vpack.c.b16 %v896, %v895
  %v1147 = vpack.c.b16 %v898, %v897
  %v1148 = vpack.c.b16 %v900, %v899
  %v1149 = vpack.c.b16 %v902, %v901
  %v1150 = vpack.c.b16 %v904, %v903
  %v1151 = vpack.c.b16 %v906, %v905
  %v1152 = vpack.c.b16 %v908, %v907
  %v1153 = vpack.c.b16 %v910, %v909
  %v1154 = vpack.c.b16 %v912, %v911
  %v1155 = vpack.c.b16 %v914, %v913
  %v1156 = vpack.c.b16 %v916, %v915
  %v1157 = vpack.c.b16 %v918, %v917
  %v1158 = vpack.c.b16 %v920, %v919
  %v1159 = vpack.c.b16 %v922, %v921
  %v1160 = vpack.c.b16 %v924, %v923
  %v1161 = vpack.c.b16 %v926, %v925
  %v1162 = vpack.c.b16 %v928, %v927
  %v1163 = vpack.c.b16 %v930, %v929
  %v1164 = vpack.c.b16 %v932, %v931
  %v1165 = vpack.c.b16 %v934, %v933
  %v1166 = vpack.c.b16 %v936, %v935
  %v1167 = vpack.c.b16 %v938, %v937
  %v1168 = vpack.c.b16 %v940, %v939
  %v1169 = vpack.c.b16 %v942, %v941
  %v1170 = vpack.c.b16 %v944, %v943
  %v1171 = vpack.c.b16 %v946, %v945
  %v1172 = vpack.c.b16 %v948, %v947
  %v1173 = vpack.c.b16 %v950, %v949
  %v1174 = vpack.c.b16 %v952, %v951
  %v1175 = vpack.c.b16 %v954, %v953
  %v1176 = vpack.c.b16 %v956, %v955
  %v1177 = vpack.c.b16 %v958, %v957
  %v1178 = vpack.c.b16 %v960, %v959
  %v1179 = vpack.c.b16 %v962, %v961
  %v1180 = vpack.c.b16 %v964, %v963
  %v1181 = vpack.c.b16 %v966, %v965
  %v1182 = vpack.c.b16 %v968, %v967
  %v1183 = vpack.c.b16 %v970, %v969
  %v1184 = vpack.c.b16 %v972, %v971
  %v1185 = vpack.c.b16 %v974, %v973
  %v1186 = vpack.c.b16 %v976, %v975
  %v1187 = vpack.c.b16 %v978, %v977
  %v1188 = vpack.c.b16 %v980, %v979
  %v1189 = vpack.c.b16 %v982, %v981
  %v1190 = vpack.c.b16 %v984, %v983
  %v1191 = vpack.c.b16 %v986, %v985
  %v1192 = vpack.c.b16 %v988, %v987
  %v1193 = vpack.c.b16 %v990, %v989
  %v1194 = vpack.c.b16 %v992, %v991
  %v1195 = vpack.c.b16 %v994, %v993
  %v1196 = vpack.c.b16 %v996, %v995
  %v1197 = vpack.c.b16 %v998, %v997
  %v1198 = vpack.c.b16 %v1000, %v999
  %v1199 = vpack.c.b16 %v1002, %v1001
  %v1200 = vpack.c.b16 %v1004, %v1003
  %v1201 = vpack.c.b16 %v1006, %v1005
  %v1202 = vpack.c.b16 %v1008, %v1007
  %v1203 = vpack.c.b16 %v1010, %v1009
  %v1204 = vpack.c.b16 %v1012, %v1011
  %v1205 = vpack.c.b16 %v1014, %v1013
  %v1206 = vpack.c.b16 %v1016, %v1015
  %v1207 = vpack.c.b16 %v1018, %v1017
  %v1208 = vpack.c.b16 %v1020, %v1019
  %v1209 = vpack.c.b16 %v1022, %v1021
  %v1210 = vpack.c.b16 %v1024, %v1023
  %v1211 = vpack.c.b16 %v1026, %v1025
  %v1212 = vpack.c.b16 %v1028, %v1027
  %v1213 = vpack.c.b16 %v1030, %v1029
  %v1214 = vpack.c.b16 %v1032, %v1031
  %v1215 = vpack.c.b16 %v1034, %v1033
  %v1216 = vpack.c.b16 %v1036, %v1035
  %v1217 = vpack.c.b16 %v1038, %v1037
  %v1218 = vpack.c.b16 %v1040, %v1039
  %v1219 = vpack.c.b16 %v1042, %v1041
  %v1220 = vpack.c.b16 %v1044, %v1043
  %v1221 = vpack.c.b16 %v1046, %v1045
  %v1222 = vpack.c.b16 %v1048, %v1047
  %v1223 = vpack.c.b16 %v1050, %v1049
  %v1224 = vpack.c.b16 %v1052, %v1051
  %v1225 = vpack.c.b16 %v1054, %v1053
  %v1226 = vpack.c.b16 %v1056, %v1055
  %v1227 = vpack.c.b16 %v1058, %v1057
  %v1228 = vpack.c.b16 %v1060, %v1059
  %v1229 = vpack.c.b16 %v1062, %v1061
  %v1230 = vpack.c.b16 %v1064, %v1063
  %v1231 = vpack.c.b16 %v1066, %v1065
  %v1232 = vpack.c.b16 %v1068, %v1067
  %v1233 = vpack.c.b16 %v1070, %v1069
  %v1234 = vpack.c.b16 %v1072, %v1071
  %v1235 = vpack.c.b16 %v1074, %v1073
  %v1236 = vpack.c.b16 %v1076, %v1075
  %v1237 = vpack.c.b16 %v1078, %v1077
  %v1238 = vpack.c.b16 %v1080, %v1079
  %v1239 = vpack.c.b16 %v1082, %v1081
  %v1240 = vpack.c.b16 %v1084, %v1083
  %v1241 = vpack.c.b16 %v1086, %v1085
  %v1242 = vpack.c.b16 %v1088, %v1087
  %v1243 = vpack.c.b16 %v1090, %v1089
  %v1244 = vpack.c.b16 %v1092, %v1091
  %v1245 = vpack.c.b16 %v1094, %v1093
  %v1246 = vpack.c.b16 %v1096, %v1095
  %v1247 = vpack.c.b16 %v1098, %v1097
  %v1248 = vpack.c.b16 %v1100, %v1099
  %v1249 = vpack.c.b16 %v1102, %v1101
  %v1250 = vpack.c.b16 %v1104, %v1103
  %v1251 = vpack.c.b16 %v1106, %v1105
  %v1252 = vpack.c.b16 %v1108, %v1107
  %v1255 = vunpack.c.l.b16 %v531
  %v1256 = vunpack.c.l.b16 %v532
  %v1257 = vpack.c.b16 %v1256, %v1255
  %vm1259 = vcmask 130048
  %v1261 = vsel %vm1259, %v1109, 0
  %v1264 = vsel %vm1259, %v1110, 0
  %v1267 = vsel %vm1259, %v1111, 0
  %v1270 = vsel %vm1259, %v1112, 0
  %v1273 = vsel %vm1259, %v1113, 0
  %v1276 = vsel %vm1259, %v1114, 0
  %v1279 = vsel %vm1259, %v1115, 0
  %v1282 = vsel %vm1259, %v1116, 0
  %v1285 = vsel %vm1259, %v1117, 0
  %v1288 = vsel %vm1259, %v1118, 0
  %v1291 = vsel %vm1259, %v1119, 0
  %v1294 = vsel %vm1259, %v1120, 0
  %v1297 = vsel %vm1259, %v1121, 0
  %v1300 = vsel %vm1259, %v1122, 0
  %v1303 = vsel %vm1259, %v1123, 0
  %v1306 = vsel %vm1259, %v1124, 0
  %v1309 = vsel %vm1259, %v1125, 0
  %v1312 = vsel %vm1259, %v1126, 0
  %v1315 = vsel %vm1259, %v1127, 0
  %v1318 = vsel %vm1259, %v1128, 0
  %v1321 = vsel %vm1259, %v1129, 0
  %v1324 = vsel %vm1259, %v1130, 0
  %v1327 = vsel %vm1259, %v1131, 0
  %v1330 = vsel %vm1259, %v1132, 0
  %v1333 = vsel %vm1259, %v1133, 0
  %v1336 = vsel %vm1259, %v1134, 0
  %v1339 = vsel %vm1259, %v1135, 0
  %v1342 = vsel %vm1259, %v1136, 0
  %v1345 = vsel %vm1259, %v1137, 0
  %v1348 = vsel %vm1259, %v1138, 0
  %v1351 = vsel %vm1259, %v1139, 0
  %v1354 = vsel %vm1259, %v1140, 0
  %v1357 = vsel %vm1259, %v1141, 0
  %v1360 = vsel %vm1259, %v1142, 0
  %v1363 = vsel %vm1259, %v1143, 0
  %v1366 = vsel %vm1259, %v1144, 0
  %v1369 = vsel %vm1259, %v1145, 0
  %v1372 = vsel %vm1259, %v1146, 0
  %v1375 = vsel %vm1259, %v1147, 0
  %v1378 = vsel %vm1259, %v1148, 0
  %v1381 = vsel %vm1259, %v1149, 0
  %v1384 = vsel %vm1259, %v1150, 0
  %v1387 = vsel %vm1259, %v1151, 0
  %v1390 = vsel %vm1259, %v1152, 0
  %v1393 = vsel %vm1259, %v1153, 0
  %v1396 = vsel %vm1259, %v1154, 0
  %v1399 = vsel %vm1259, %v1155, 0
  %v1402 = vsel %vm1259, %v1156, 0
  %v1405 = vsel %vm1259, %v1157, 0
  %v1408 = vsel %vm1259, %v1158, 0
  %v1411 = vsel %vm1259, %v1159, 0
  %v1414 = vsel %vm1259, %v1160, 0
  %v1417 = vsel %vm1259, %v1161, 0
  %v1420 = vsel %vm1259, %v1162, 0
  %v1423 = vsel %vm1259, %v1163, 0
  %v1426 = vsel %vm1259, %v1164, 0
  %v1429 = vsel %vm1259, %v1165, 0
  %v1432 = vsel %vm1259, %v1166, 0
  %v1435 = vsel %vm1259, %v1167, 0
  %v1438 = vsel %vm1259, %v1168, 0
  %v1441 = vsel %vm1259, %v1169, 0
  %v1444 = vsel %vm1259, %v1170, 0
  %v1447 = vsel %vm1259, %v1171, 0
  %v1450 = vsel %vm1259, %v1172, 0
  %v1453 = vsel %vm1259, %v1173, 0
  %v1456 = vsel %vm1259, %v1174, 0
  %v1459 = vsel %vm1259, %v1175, 0
  %v1462 = vsel %vm1259, %v1176, 0
  %v1465 = vsel %vm1259, %v1177, 0
  %v1468 = vsel %vm1259, %v1178, 0
  %v1471 = vsel %vm1259, %v1179, 0
  %v1474 = vsel %vm1259, %v1180, 0
  %v1477 = vsel %vm1259, %v1181, 0
  %v1480 = vsel %vm1259, %v1182, 0
  %v1483 = vsel %vm1259, %v1183, 0
  %v1486 = vsel %vm1259, %v1184, 0
  %v1489 = vsel %vm1259, %v1185, 0
  %v1492 = vsel %vm1259, %v1186, 0
  %v1495 = vsel %vm1259, %v1187, 0
  %v1498 = vsel %vm1259, %v1188, 0
  %v1501 = vsel %vm1259, %v1189, 0
  %v1504 = vsel %vm1259, %v1190, 0
  %v1507 = vsel %vm1259, %v1191, 0
  %v1510 = vsel %vm1259, %v1192, 0
  %v1513 = vsel %vm1259, %v1193, 0
  %v1516 = vsel %vm1259, %v1194, 0
  %v1519 = vsel %vm1259, %v1195, 0
  %v1522 = vsel %vm1259, %v1196, 0
  %v1525 = vsel %vm1259, %v1197, 0
  %v1528 = vsel %vm1259, %v1198, 0
  %v1531 = vsel %vm1259, %v1199, 0
  %v1534 = vsel %vm1259, %v1200, 0
  %v1537 = vsel %vm1259, %v1201, 0
  %v1540 = vsel %vm1259, %v1202, 0
  %v1543 = vsel %vm1259, %v1203, 0
  %v1546 = vsel %vm1259, %v1204, 0
  %v1549 = vsel %vm1259, %v1205, 0
  %v1552 = vsel %vm1259, %v1206, 0
  %v1555 = vsel %vm1259, %v1207, 0
  %v1558 = vsel %vm1259, %v1208, 0
  %v1561 = vsel %vm1259, %v1209, 0
  %v1564 = vsel %vm1259, %v1210, 0
  %v1567 = vsel %vm1259, %v1211, 0
  %v1570 = vsel %vm1259, %v1212, 0
  %v1573 = vsel %vm1259, %v1213, 0
  %v1576 = vsel %vm1259, %v1214, 0
  %v1579 = vsel %vm1259, %v1215, 0
  %v1582 = vsel %vm1259, %v1216, 0
  %v1585 = vsel %vm1259, %v1217, 0
  %v1588 = vsel %vm1259, %v1218, 0
  %v1591 = vsel %vm1259, %v1219, 0
  %v1594 = vsel %vm1259, %v1220, 0
  %v1597 = vsel %vm1259, %v1221, 0
  %v1600 = vsel %vm1259, %v1222, 0
  %v1603 = vsel %vm1259, %v1223, 0
  %v1606 = vsel %vm1259, %v1224, 0
  %v1609 = vsel %vm1259, %v1225, 0
  %v1612 = vsel %vm1259, %v1226, 0
  %v1615 = vsel %vm1259, %v1227, 0
  %v1618 = vsel %vm1259, %v1228, 0
  %v1621 = vsel %vm1259, %v1229, 0
  %v1624 = vsel %vm1259, %v1230, 0
  %v1627 = vsel %vm1259, %v1231, 0
  %v1630 = vsel %vm1259, %v1232, 0
  %v1633 = vsel %vm1259, %v1233, 0
  %v1636 = vsel %vm1259, %v1234, 0
  %v1639 = vsel %vm1259, %v1235, 0
  %v1642 = vsel %vm1259, %v1236, 0
  %v1645 = vsel %vm1259, %v1237, 0
  %v1648 = vsel %vm1259, %v1238, 0
  %v1651 = vsel %vm1259, %v1239, 0
  %v1654 = vsel %vm1259, %v1240, 0
  %v1657 = vsel %vm1259, %v1241, 0
  %v1660 = vsel %vm1259, %v1242, 0
  %v1663 = vsel %vm1259, %v1243, 0
  %v1666 = vsel %vm1259, %v1244, 0
  %v1669 = vsel %vm1259, %v1245, 0
  %v1672 = vsel %vm1259, %v1246, 0
  %v1675 = vsel %vm1259, %v1247, 0
  %v1678 = vsel %vm1259, %v1248, 0
  %v1681 = vsel %vm1259, %v1249, 0
  %v1684 = vsel %vm1259, %v1250, 0
  %v1687 = vsel %vm1259, %v1251, 0
  %v1690 = vsel %vm1259, %v1252, 0
  %1692 = vmatprep.subr.bf16.mxu0 0
  %1693 = vmatpush1.bf16.msra.mxu0 0
  %1694 = vmatprep.subr.bf16.mxu0 0
  %1695 = vmatpush1.bf16.msra.mxu0 0
  %1696 = vmatprep.subr.bf16.mxu0 0
  %1697 = vmatpush1.bf16.msra.mxu0 0
  %1698 = vmatprep.subr.bf16.mxu0 0
  %1699 = vmatpush1.bf16.msra.mxu0 0
  %1700 = vmatprep.subr.bf16.mxu0 0
  %1701 = vmatpush1.bf16.msra.mxu0 0
  %1702 = vmatprep.subr.bf16.mxu0 0
  %1703 = vmatpush1.bf16.msra.mxu0 0
  %1704 = vmatprep.subr.bf16.mxu0 0
  %1705 = vmatpush1.bf16.msra.mxu0 0
  %1706 = vmatprep.subr.bf16.mxu0 0
  %1707 = vmatpush1.bf16.msra.mxu0 %v1257
  %1708 = vmatprep.subr.bf16.mxu0 0
  %1709 = vmatpush2.bf16.msra.mxu0 0
  %1710 = vmatprep.subr.bf16.mxu0 0
  %1711 = vmatpush2.bf16.msra.mxu0 0
  %1712 = vmatprep.subr.bf16.mxu0 0
  %1713 = vmatpush2.bf16.msra.mxu0 0
  %1714 = vmatprep.subr.bf16.mxu0 0
  %1715 = vmatpush2.bf16.msra.mxu0 0
  %1716 = vmatprep.subr.bf16.mxu0 0
  %1717 = vmatpush2.bf16.msra.mxu0 0
  %1718 = vmatprep.subr.bf16.mxu0 0
  %1719 = vmatpush2.bf16.msra.mxu0 0
  %1720 = vmatprep.subr.bf16.mxu0 0
  %1721 = vmatpush2.bf16.msra.mxu0 0
  %1722 = vmatprep.subr.bf16.mxu0 0
  %1723 = vmatpush2.bf16.msra.mxu0 0
  %1724 = vmatprep.mubr.bf16.mxu0 0
  %1725 = vmatmul.mubr.bf16.gmra.mxu0 %v1261
  %v1726 = vpop.f32.mrf.mxu0
  %v1727 = vadd.f32 0.0, %v1726
  %v1728 = vpop.f32.mrf.mxu0
  %v1729 = vpop.f32.mrf.mxu0
  %v1730 = vadd.f32 0.0, %v1729
  %v1731 = vpop.f32.mrf.mxu0
  %1732 = vmatprep.mubr.bf16.mxu0 0
  %1733 = vmatmul.mubr.bf16.gmra.mxu0 %v1264
  %v1734 = vpop.f32.mrf.mxu0
  %v1735 = vadd.f32 0.0, %v1734
  %v1736 = vpop.f32.mrf.mxu0
  %v1737 = vpop.f32.mrf.mxu0
  %v1738 = vadd.f32 0.0, %v1737
  %v1739 = vpop.f32.mrf.mxu0
  %1740 = vmatprep.mubr.bf16.mxu0 0
  %1741 = vmatmul.mubr.bf16.gmra.mxu0 %v1267
  %v1742 = vpop.f32.mrf.mxu0
  %v1743 = vadd.f32 0.0, %v1742
  %v1744 = vpop.f32.mrf.mxu0
  %v1745 = vpop.f32.mrf.mxu0
  %v1746 = vadd.f32 0.0, %v1745
  %v1747 = vpop.f32.mrf.mxu0
  %1748 = vmatprep.mubr.bf16.mxu0 0
  %1749 = vmatmul.mubr.bf16.gmra.mxu0 %v1270
  %v1750 = vpop.f32.mrf.mxu0
  %v1751 = vadd.f32 0.0, %v1750
  %v1752 = vpop.f32.mrf.mxu0
  %v1753 = vpop.f32.mrf.mxu0
  %v1754 = vadd.f32 0.0, %v1753
  %v1755 = vpop.f32.mrf.mxu0
  %1756 = vmatprep.mubr.bf16.mxu0 0
  %1757 = vmatmul.mubr.bf16.gmra.mxu0 %v1273
  %v1758 = vpop.f32.mrf.mxu0
  %v1759 = vadd.f32 0.0, %v1758
  %v1760 = vpop.f32.mrf.mxu0
  %v1761 = vpop.f32.mrf.mxu0
  %v1762 = vadd.f32 0.0, %v1761
  %v1763 = vpop.f32.mrf.mxu0
  %1764 = vmatprep.mubr.bf16.mxu0 0
  %1765 = vmatmul.mubr.bf16.gmra.mxu0 %v1276
  %v1766 = vpop.f32.mrf.mxu0
  %v1767 = vadd.f32 0.0, %v1766
  %v1768 = vpop.f32.mrf.mxu0
  %v1769 = vpop.f32.mrf.mxu0
  %v1770 = vadd.f32 0.0, %v1769
  %v1771 = vpop.f32.mrf.mxu0
  %1772 = vmatprep.mubr.bf16.mxu0 0
  %1773 = vmatmul.mubr.bf16.gmra.mxu0 %v1279
  %v1774 = vpop.f32.mrf.mxu0
  %v1775 = vadd.f32 0.0, %v1774
  %v1776 = vpop.f32.mrf.mxu0
  %v1777 = vpop.f32.mrf.mxu0
  %v1778 = vadd.f32 0.0, %v1777
  %v1779 = vpop.f32.mrf.mxu0
  %1780 = vmatprep.mubr.bf16.mxu0 0
  %1781 = vmatmul.mubr.bf16.gmra.mxu0 %v1282
  %v1782 = vpop.f32.mrf.mxu0
  %v1783 = vadd.f32 0.0, %v1782
  %v1784 = vpop.f32.mrf.mxu0
  %v1785 = vpop.f32.mrf.mxu0
  %v1786 = vadd.f32 0.0, %v1785
  %v1787 = vpop.f32.mrf.mxu0
  %1788 = vmatprep.mubr.bf16.mxu0 0
  %1789 = vmatmul.mubr.bf16.gmra.mxu0 %v1285
  %v1790 = vpop.f32.mrf.mxu0
  %v1791 = vadd.f32 0.0, %v1790
  %v1792 = vpop.f32.mrf.mxu0
  %v1793 = vpop.f32.mrf.mxu0
  %v1794 = vadd.f32 0.0, %v1793
  %v1795 = vpop.f32.mrf.mxu0
  %1796 = vmatprep.mubr.bf16.mxu0 0
  %1797 = vmatmul.mubr.bf16.gmra.mxu0 %v1288
  %v1798 = vpop.f32.mrf.mxu0
  %v1799 = vadd.f32 0.0, %v1798
  %v1800 = vpop.f32.mrf.mxu0
  %v1801 = vpop.f32.mrf.mxu0
  %v1802 = vadd.f32 0.0, %v1801
  %v1803 = vpop.f32.mrf.mxu0
  %1804 = vmatprep.mubr.bf16.mxu0 0
  %1805 = vmatmul.mubr.bf16.gmra.mxu0 %v1291
  %v1806 = vpop.f32.mrf.mxu0
  %v1807 = vadd.f32 0.0, %v1806
  %v1808 = vpop.f32.mrf.mxu0
  %v1809 = vpop.f32.mrf.mxu0
  %v1810 = vadd.f32 0.0, %v1809
  %v1811 = vpop.f32.mrf.mxu0
  %1812 = vmatprep.mubr.bf16.mxu0 0
  %1813 = vmatmul.mubr.bf16.gmra.mxu0 %v1294
  %v1814 = vpop.f32.mrf.mxu0
  %v1815 = vadd.f32 0.0, %v1814
  %v1816 = vpop.f32.mrf.mxu0
  %v1817 = vpop.f32.mrf.mxu0
  %v1818 = vadd.f32 0.0, %v1817
  %v1819 = vpop.f32.mrf.mxu0
  %1820 = vmatprep.mubr.bf16.mxu0 0
  %1821 = vmatmul.mubr.bf16.gmra.mxu0 %v1297
  %v1822 = vpop.f32.mrf.mxu0
  %v1823 = vadd.f32 0.0, %v1822
  %v1824 = vpop.f32.mrf.mxu0
  %v1825 = vpop.f32.mrf.mxu0
  %v1826 = vadd.f32 0.0, %v1825
  %v1827 = vpop.f32.mrf.mxu0
  %1828 = vmatprep.mubr.bf16.mxu0 0
  %1829 = vmatmul.mubr.bf16.gmra.mxu0 %v1300
  %v1830 = vpop.f32.mrf.mxu0
  %v1831 = vadd.f32 0.0, %v1830
  %v1832 = vpop.f32.mrf.mxu0
  %v1833 = vpop.f32.mrf.mxu0
  %v1834 = vadd.f32 0.0, %v1833
  %v1835 = vpop.f32.mrf.mxu0
  %1836 = vmatprep.mubr.bf16.mxu0 0
  %1837 = vmatmul.mubr.bf16.gmra.mxu0 %v1303
  %v1838 = vpop.f32.mrf.mxu0
  %v1839 = vadd.f32 0.0, %v1838
  %v1840 = vpop.f32.mrf.mxu0
  %v1841 = vpop.f32.mrf.mxu0
  %v1842 = vadd.f32 0.0, %v1841
  %v1843 = vpop.f32.mrf.mxu0
  %1844 = vmatprep.mubr.bf16.mxu0 0
  %1845 = vmatmul.mubr.bf16.gmra.mxu0 %v1306
  %v1846 = vpop.f32.mrf.mxu0
  %v1847 = vadd.f32 0.0, %v1846
  %v1848 = vpop.f32.mrf.mxu0
  %v1849 = vpop.f32.mrf.mxu0
  %v1850 = vadd.f32 0.0, %v1849
  %v1851 = vpop.f32.mrf.mxu0
  %1852 = vmatprep.mubr.bf16.mxu0 0
  %1853 = vmatmul.mubr.bf16.gmra.mxu0 %v1309
  %v1854 = vpop.f32.mrf.mxu0
  %v1855 = vadd.f32 0.0, %v1854
  %v1856 = vpop.f32.mrf.mxu0
  %v1857 = vpop.f32.mrf.mxu0
  %v1858 = vadd.f32 0.0, %v1857
  %v1859 = vpop.f32.mrf.mxu0
  %1860 = vmatprep.mubr.bf16.mxu0 0
  %1861 = vmatmul.mubr.bf16.gmra.mxu0 %v1312
  %v1862 = vpop.f32.mrf.mxu0
  %v1863 = vadd.f32 0.0, %v1862
  %v1864 = vpop.f32.mrf.mxu0
  %v1865 = vpop.f32.mrf.mxu0
  %v1866 = vadd.f32 0.0, %v1865
  %v1867 = vpop.f32.mrf.mxu0
  %1868 = vmatprep.mubr.bf16.mxu0 0
  %1869 = vmatmul.mubr.bf16.gmra.mxu0 %v1315
  %v1870 = vpop.f32.mrf.mxu0
  %v1871 = vadd.f32 0.0, %v1870
  %v1872 = vpop.f32.mrf.mxu0
  %v1873 = vpop.f32.mrf.mxu0
  %v1874 = vadd.f32 0.0, %v1873
  %v1875 = vpop.f32.mrf.mxu0
  %1876 = vmatprep.mubr.bf16.mxu0 0
  %1877 = vmatmul.mubr.bf16.gmra.mxu0 %v1318
  %v1878 = vpop.f32.mrf.mxu0
  %v1879 = vadd.f32 0.0, %v1878
  %v1880 = vpop.f32.mrf.mxu0
  %v1881 = vpop.f32.mrf.mxu0
  %v1882 = vadd.f32 0.0, %v1881
  %v1883 = vpop.f32.mrf.mxu0
  %1884 = vmatprep.mubr.bf16.mxu0 0
  %1885 = vmatmul.mubr.bf16.gmra.mxu0 %v1321
  %v1886 = vpop.f32.mrf.mxu0
  %v1887 = vadd.f32 0.0, %v1886
  %v1888 = vpop.f32.mrf.mxu0
  %v1889 = vpop.f32.mrf.mxu0
  %v1890 = vadd.f32 0.0, %v1889
  %v1891 = vpop.f32.mrf.mxu0
  %1892 = vmatprep.mubr.bf16.mxu0 0
  %1893 = vmatmul.mubr.bf16.gmra.mxu0 %v1324
  %v1894 = vpop.f32.mrf.mxu0
  %v1895 = vadd.f32 0.0, %v1894
  %v1896 = vpop.f32.mrf.mxu0
  %v1897 = vpop.f32.mrf.mxu0
  %v1898 = vadd.f32 0.0, %v1897
  %v1899 = vpop.f32.mrf.mxu0
  %1900 = vmatprep.mubr.bf16.mxu0 0
  %1901 = vmatmul.mubr.bf16.gmra.mxu0 %v1327
  %v1902 = vpop.f32.mrf.mxu0
  %v1903 = vadd.f32 0.0, %v1902
  %v1904 = vpop.f32.mrf.mxu0
  %v1905 = vpop.f32.mrf.mxu0
  %v1906 = vadd.f32 0.0, %v1905
  %v1907 = vpop.f32.mrf.mxu0
  %1908 = vmatprep.mubr.bf16.mxu0 0
  %1909 = vmatmul.mubr.bf16.gmra.mxu0 %v1330
  %v1910 = vpop.f32.mrf.mxu0
  %v1911 = vadd.f32 0.0, %v1910
  %v1912 = vpop.f32.mrf.mxu0
  %v1913 = vpop.f32.mrf.mxu0
  %v1914 = vadd.f32 0.0, %v1913
  %v1915 = vpop.f32.mrf.mxu0
  %1916 = vmatprep.mubr.bf16.mxu0 0
  %1917 = vmatmul.mubr.bf16.gmra.mxu0 %v1333
  %v1918 = vpop.f32.mrf.mxu0
  %v1919 = vadd.f32 0.0, %v1918
  %v1920 = vpop.f32.mrf.mxu0
  %v1921 = vpop.f32.mrf.mxu0
  %v1922 = vadd.f32 0.0, %v1921
  %v1923 = vpop.f32.mrf.mxu0
  %1924 = vmatprep.mubr.bf16.mxu0 0
  %1925 = vmatmul.mubr.bf16.gmra.mxu0 %v1336
  %v1926 = vpop.f32.mrf.mxu0
  %v1927 = vadd.f32 0.0, %v1926
  %v1928 = vpop.f32.mrf.mxu0
  %v1929 = vpop.f32.mrf.mxu0
  %v1930 = vadd.f32 0.0, %v1929
  %v1931 = vpop.f32.mrf.mxu0
  %1932 = vmatprep.mubr.bf16.mxu0 0
  %1933 = vmatmul.mubr.bf16.gmra.mxu0 %v1339
  %v1934 = vpop.f32.mrf.mxu0
  %v1935 = vadd.f32 0.0, %v1934
  %v1936 = vpop.f32.mrf.mxu0
  %v1937 = vpop.f32.mrf.mxu0
  %v1938 = vadd.f32 0.0, %v1937
  %v1939 = vpop.f32.mrf.mxu0
  %1940 = vmatprep.mubr.bf16.mxu0 0
  %1941 = vmatmul.mubr.bf16.gmra.mxu0 %v1342
  %v1942 = vpop.f32.mrf.mxu0
  %v1943 = vadd.f32 0.0, %v1942
  %v1944 = vpop.f32.mrf.mxu0
  %v1945 = vpop.f32.mrf.mxu0
  %v1946 = vadd.f32 0.0, %v1945
  %v1947 = vpop.f32.mrf.mxu0
  %1948 = vmatprep.mubr.bf16.mxu0 0
  %1949 = vmatmul.mubr.bf16.gmra.mxu0 %v1345
  %v1950 = vpop.f32.mrf.mxu0
  %v1951 = vadd.f32 0.0, %v1950
  %v1952 = vpop.f32.mrf.mxu0
  %v1953 = vpop.f32.mrf.mxu0
  %v1954 = vadd.f32 0.0, %v1953
  %v1955 = vpop.f32.mrf.mxu0
  %1956 = vmatprep.mubr.bf16.mxu0 0
  %1957 = vmatmul.mubr.bf16.gmra.mxu0 %v1348
  %v1958 = vpop.f32.mrf.mxu0
  %v1959 = vadd.f32 0.0, %v1958
  %v1960 = vpop.f32.mrf.mxu0
  %v1961 = vpop.f32.mrf.mxu0
  %v1962 = vadd.f32 0.0, %v1961
  %v1963 = vpop.f32.mrf.mxu0
  %1964 = vmatprep.mubr.bf16.mxu0 0
  %1965 = vmatmul.mubr.bf16.gmra.mxu0 %v1351
  %v1966 = vpop.f32.mrf.mxu0
  %v1967 = vadd.f32 0.0, %v1966
  %v1968 = vpop.f32.mrf.mxu0
  %v1969 = vpop.f32.mrf.mxu0
  %v1970 = vadd.f32 0.0, %v1969
  %v1971 = vpop.f32.mrf.mxu0
  %1972 = vmatprep.mubr.bf16.mxu0 0
  %1973 = vmatmul.mubr.bf16.gmra.mxu0 %v1354
  %v1974 = vpop.f32.mrf.mxu0
  %v1975 = vadd.f32 0.0, %v1974
  %v1976 = vpop.f32.mrf.mxu0
  %v1977 = vpop.f32.mrf.mxu0
  %v1978 = vadd.f32 0.0, %v1977
  %v1979 = vpop.f32.mrf.mxu0
  %1980 = vmatprep.mubr.bf16.mxu0 0
  %1981 = vmatmul.mubr.bf16.gmra.mxu0 %v1357
  %v1982 = vpop.f32.mrf.mxu0
  %v1983 = vadd.f32 0.0, %v1982
  %v1984 = vpop.f32.mrf.mxu0
  %v1985 = vpop.f32.mrf.mxu0
  %v1986 = vadd.f32 0.0, %v1985
  %v1987 = vpop.f32.mrf.mxu0
  %1988 = vmatprep.mubr.bf16.mxu0 0
  %1989 = vmatmul.mubr.bf16.gmra.mxu0 %v1360
  %v1990 = vpop.f32.mrf.mxu0
  %v1991 = vadd.f32 0.0, %v1990
  %v1992 = vpop.f32.mrf.mxu0
  %v1993 = vpop.f32.mrf.mxu0
  %v1994 = vadd.f32 0.0, %v1993
  %v1995 = vpop.f32.mrf.mxu0
  %1996 = vmatprep.mubr.bf16.mxu0 0
  %1997 = vmatmul.mubr.bf16.gmra.mxu0 %v1363
  %v1998 = vpop.f32.mrf.mxu0
  %v1999 = vadd.f32 0.0, %v1998
  %v2000 = vpop.f32.mrf.mxu0
  %v2001 = vpop.f32.mrf.mxu0
  %v2002 = vadd.f32 0.0, %v2001
  %v2003 = vpop.f32.mrf.mxu0
  %2004 = vmatprep.mubr.bf16.mxu0 0
  %2005 = vmatmul.mubr.bf16.gmra.mxu0 %v1366
  %v2006 = vpop.f32.mrf.mxu0
  %v2007 = vadd.f32 0.0, %v2006
  %v2008 = vpop.f32.mrf.mxu0
  %v2009 = vpop.f32.mrf.mxu0
  %v2010 = vadd.f32 0.0, %v2009
  %v2011 = vpop.f32.mrf.mxu0
  %2012 = vmatprep.mubr.bf16.mxu0 0
  %2013 = vmatmul.mubr.bf16.gmra.mxu0 %v1369
  %v2014 = vpop.f32.mrf.mxu0
  %v2015 = vadd.f32 0.0, %v2014
  %v2016 = vpop.f32.mrf.mxu0
  %v2017 = vpop.f32.mrf.mxu0
  %v2018 = vadd.f32 0.0, %v2017
  %v2019 = vpop.f32.mrf.mxu0
  %2020 = vmatprep.mubr.bf16.mxu0 0
  %2021 = vmatmul.mubr.bf16.gmra.mxu0 %v1372
  %v2022 = vpop.f32.mrf.mxu0
  %v2023 = vadd.f32 0.0, %v2022
  %v2024 = vpop.f32.mrf.mxu0
  %v2025 = vpop.f32.mrf.mxu0
  %v2026 = vadd.f32 0.0, %v2025
  %v2027 = vpop.f32.mrf.mxu0
  %2028 = vmatprep.mubr.bf16.mxu0 0
  %2029 = vmatmul.mubr.bf16.gmra.mxu0 %v1375
  %v2030 = vpop.f32.mrf.mxu0
  %v2031 = vadd.f32 0.0, %v2030
  %v2032 = vpop.f32.mrf.mxu0
  %v2033 = vpop.f32.mrf.mxu0
  %v2034 = vadd.f32 0.0, %v2033
  %v2035 = vpop.f32.mrf.mxu0
  %2036 = vmatprep.mubr.bf16.mxu0 0
  %2037 = vmatmul.mubr.bf16.gmra.mxu0 %v1378
  %v2038 = vpop.f32.mrf.mxu0
  %v2039 = vadd.f32 0.0, %v2038
  %v2040 = vpop.f32.mrf.mxu0
  %v2041 = vpop.f32.mrf.mxu0
  %v2042 = vadd.f32 0.0, %v2041
  %v2043 = vpop.f32.mrf.mxu0
  %2044 = vmatprep.mubr.bf16.mxu0 0
  %2045 = vmatmul.mubr.bf16.gmra.mxu0 %v1381
  %v2046 = vpop.f32.mrf.mxu0
  %v2047 = vadd.f32 0.0, %v2046
  %v2048 = vpop.f32.mrf.mxu0
  %v2049 = vpop.f32.mrf.mxu0
  %v2050 = vadd.f32 0.0, %v2049
  %v2051 = vpop.f32.mrf.mxu0
  %2052 = vmatprep.mubr.bf16.mxu0 0
  %2053 = vmatmul.mubr.bf16.gmra.mxu0 %v1384
  %v2054 = vpop.f32.mrf.mxu0
  %v2055 = vadd.f32 0.0, %v2054
  %v2056 = vpop.f32.mrf.mxu0
  %v2057 = vpop.f32.mrf.mxu0
  %v2058 = vadd.f32 0.0, %v2057
  %v2059 = vpop.f32.mrf.mxu0
  %2060 = vmatprep.mubr.bf16.mxu0 0
  %2061 = vmatmul.mubr.bf16.gmra.mxu0 %v1387
  %v2062 = vpop.f32.mrf.mxu0
  %v2063 = vadd.f32 0.0, %v2062
  %v2064 = vpop.f32.mrf.mxu0
  %v2065 = vpop.f32.mrf.mxu0
  %v2066 = vadd.f32 0.0, %v2065
  %v2067 = vpop.f32.mrf.mxu0
  %2068 = vmatprep.mubr.bf16.mxu0 0
  %2069 = vmatmul.mubr.bf16.gmra.mxu0 %v1390
  %v2070 = vpop.f32.mrf.mxu0
  %v2071 = vadd.f32 0.0, %v2070
  %v2072 = vpop.f32.mrf.mxu0
  %v2073 = vpop.f32.mrf.mxu0
  %v2074 = vadd.f32 0.0, %v2073
  %v2075 = vpop.f32.mrf.mxu0
  %2076 = vmatprep.mubr.bf16.mxu0 0
  %2077 = vmatmul.mubr.bf16.gmra.mxu0 %v1393
  %v2078 = vpop.f32.mrf.mxu0
  %v2079 = vadd.f32 0.0, %v2078
  %v2080 = vpop.f32.mrf.mxu0
  %v2081 = vpop.f32.mrf.mxu0
  %v2082 = vadd.f32 0.0, %v2081
  %v2083 = vpop.f32.mrf.mxu0
  %2084 = vmatprep.mubr.bf16.mxu0 0
  %2085 = vmatmul.mubr.bf16.gmra.mxu0 %v1396
  %v2086 = vpop.f32.mrf.mxu0
  %v2087 = vadd.f32 0.0, %v2086
  %v2088 = vpop.f32.mrf.mxu0
  %v2089 = vpop.f32.mrf.mxu0
  %v2090 = vadd.f32 0.0, %v2089
  %v2091 = vpop.f32.mrf.mxu0
  %2092 = vmatprep.mubr.bf16.mxu0 0
  %2093 = vmatmul.mubr.bf16.gmra.mxu0 %v1399
  %v2094 = vpop.f32.mrf.mxu0
  %v2095 = vadd.f32 0.0, %v2094
  %v2096 = vpop.f32.mrf.mxu0
  %v2097 = vpop.f32.mrf.mxu0
  %v2098 = vadd.f32 0.0, %v2097
  %v2099 = vpop.f32.mrf.mxu0
  %2100 = vmatprep.mubr.bf16.mxu0 0
  %2101 = vmatmul.mubr.bf16.gmra.mxu0 %v1402
  %v2102 = vpop.f32.mrf.mxu0
  %v2103 = vadd.f32 0.0, %v2102
  %v2104 = vpop.f32.mrf.mxu0
  %v2105 = vpop.f32.mrf.mxu0
  %v2106 = vadd.f32 0.0, %v2105
  %v2107 = vpop.f32.mrf.mxu0
  %2108 = vmatprep.mubr.bf16.mxu0 0
  %2109 = vmatmul.mubr.bf16.gmra.mxu0 %v1405
  %v2110 = vpop.f32.mrf.mxu0
  %v2111 = vadd.f32 0.0, %v2110
  %v2112 = vpop.f32.mrf.mxu0
  %v2113 = vpop.f32.mrf.mxu0
  %v2114 = vadd.f32 0.0, %v2113
  %v2115 = vpop.f32.mrf.mxu0
  %2116 = vmatprep.mubr.bf16.mxu0 0
  %2117 = vmatmul.mubr.bf16.gmra.mxu0 %v1408
  %v2118 = vpop.f32.mrf.mxu0
  %v2119 = vadd.f32 0.0, %v2118
  %v2120 = vpop.f32.mrf.mxu0
  %v2121 = vpop.f32.mrf.mxu0
  %v2122 = vadd.f32 0.0, %v2121
  %v2123 = vpop.f32.mrf.mxu0
  %2124 = vmatprep.mubr.bf16.mxu0 0
  %2125 = vmatmul.mubr.bf16.gmra.mxu0 %v1411
  %v2126 = vpop.f32.mrf.mxu0
  %v2127 = vadd.f32 0.0, %v2126
  %v2128 = vpop.f32.mrf.mxu0
  %v2129 = vpop.f32.mrf.mxu0
  %v2130 = vadd.f32 0.0, %v2129
  %v2131 = vpop.f32.mrf.mxu0
  %2132 = vmatprep.mubr.bf16.mxu0 0
  %2133 = vmatmul.mubr.bf16.gmra.mxu0 %v1414
  %v2134 = vpop.f32.mrf.mxu0
  %v2135 = vadd.f32 0.0, %v2134
  %v2136 = vpop.f32.mrf.mxu0
  %v2137 = vpop.f32.mrf.mxu0
  %v2138 = vadd.f32 0.0, %v2137
  %v2139 = vpop.f32.mrf.mxu0
  %2140 = vmatprep.mubr.bf16.mxu0 0
  %2141 = vmatmul.mubr.bf16.gmra.mxu0 %v1417
  %v2142 = vpop.f32.mrf.mxu0
  %v2143 = vadd.f32 0.0, %v2142
  %v2144 = vpop.f32.mrf.mxu0
  %v2145 = vpop.f32.mrf.mxu0
  %v2146 = vadd.f32 0.0, %v2145
  %v2147 = vpop.f32.mrf.mxu0
  %2148 = vmatprep.mubr.bf16.mxu0 0
  %2149 = vmatmul.mubr.bf16.gmra.mxu0 %v1420
  %v2150 = vpop.f32.mrf.mxu0
  %v2151 = vadd.f32 0.0, %v2150
  %v2152 = vpop.f32.mrf.mxu0
  %v2153 = vpop.f32.mrf.mxu0
  %v2154 = vadd.f32 0.0, %v2153
  %v2155 = vpop.f32.mrf.mxu0
  %2156 = vmatprep.mubr.bf16.mxu0 0
  %2157 = vmatmul.mubr.bf16.gmra.mxu0 %v1423
  %v2158 = vpop.f32.mrf.mxu0
  %v2159 = vadd.f32 0.0, %v2158
  %v2160 = vpop.f32.mrf.mxu0
  %v2161 = vpop.f32.mrf.mxu0
  %v2162 = vadd.f32 0.0, %v2161
  %v2163 = vpop.f32.mrf.mxu0
  %2164 = vmatprep.mubr.bf16.mxu0 0
  %2165 = vmatmul.mubr.bf16.gmra.mxu0 %v1426
  %v2166 = vpop.f32.mrf.mxu0
  %v2167 = vadd.f32 0.0, %v2166
  %v2168 = vpop.f32.mrf.mxu0
  %v2169 = vpop.f32.mrf.mxu0
  %v2170 = vadd.f32 0.0, %v2169
  %v2171 = vpop.f32.mrf.mxu0
  %2172 = vmatprep.mubr.bf16.mxu0 0
  %2173 = vmatmul.mubr.bf16.gmra.mxu0 %v1429
  %v2174 = vpop.f32.mrf.mxu0
  %v2175 = vadd.f32 0.0, %v2174
  %v2176 = vpop.f32.mrf.mxu0
  %v2177 = vpop.f32.mrf.mxu0
  %v2178 = vadd.f32 0.0, %v2177
  %v2179 = vpop.f32.mrf.mxu0
  %2180 = vmatprep.mubr.bf16.mxu0 0
  %2181 = vmatmul.mubr.bf16.gmra.mxu0 %v1432
  %v2182 = vpop.f32.mrf.mxu0
  %v2183 = vadd.f32 0.0, %v2182
  %v2184 = vpop.f32.mrf.mxu0
  %v2185 = vpop.f32.mrf.mxu0
  %v2186 = vadd.f32 0.0, %v2185
  %v2187 = vpop.f32.mrf.mxu0
  %2188 = vmatprep.mubr.bf16.mxu0 0
  %2189 = vmatmul.mubr.bf16.gmra.mxu0 %v1435
  %v2190 = vpop.f32.mrf.mxu0
  %v2191 = vadd.f32 0.0, %v2190
  %v2192 = vpop.f32.mrf.mxu0
  %v2193 = vpop.f32.mrf.mxu0
  %v2194 = vadd.f32 0.0, %v2193
  %v2195 = vpop.f32.mrf.mxu0
  %2196 = vmatprep.mubr.bf16.mxu0 0
  %2197 = vmatmul.mubr.bf16.gmra.mxu0 %v1438
  %v2198 = vpop.f32.mrf.mxu0
  %v2199 = vadd.f32 0.0, %v2198
  %v2200 = vpop.f32.mrf.mxu0
  %v2201 = vpop.f32.mrf.mxu0
  %v2202 = vadd.f32 0.0, %v2201
  %v2203 = vpop.f32.mrf.mxu0
  %2204 = vmatprep.mubr.bf16.mxu0 0
  %2205 = vmatmul.mubr.bf16.gmra.mxu0 %v1441
  %v2206 = vpop.f32.mrf.mxu0
  %v2207 = vadd.f32 0.0, %v2206
  %v2208 = vpop.f32.mrf.mxu0
  %v2209 = vpop.f32.mrf.mxu0
  %v2210 = vadd.f32 0.0, %v2209
  %v2211 = vpop.f32.mrf.mxu0
  %2212 = vmatprep.mubr.bf16.mxu0 0
  %2213 = vmatmul.mubr.bf16.gmra.mxu0 %v1444
  %v2214 = vpop.f32.mrf.mxu0
  %v2215 = vadd.f32 0.0, %v2214
  %v2216 = vpop.f32.mrf.mxu0
  %v2217 = vpop.f32.mrf.mxu0
  %v2218 = vadd.f32 0.0, %v2217
  %v2219 = vpop.f32.mrf.mxu0
  %2220 = vmatprep.mubr.bf16.mxu0 0
  %2221 = vmatmul.mubr.bf16.gmra.mxu0 %v1447
  %v2222 = vpop.f32.mrf.mxu0
  %v2223 = vadd.f32 0.0, %v2222
  %v2224 = vpop.f32.mrf.mxu0
  %v2225 = vpop.f32.mrf.mxu0
  %v2226 = vadd.f32 0.0, %v2225
  %v2227 = vpop.f32.mrf.mxu0
  %2228 = vmatprep.mubr.bf16.mxu0 0
  %2229 = vmatmul.mubr.bf16.gmra.mxu0 %v1450
  %v2230 = vpop.f32.mrf.mxu0
  %v2231 = vadd.f32 0.0, %v2230
  %v2232 = vpop.f32.mrf.mxu0
  %v2233 = vpop.f32.mrf.mxu0
  %v2234 = vadd.f32 0.0, %v2233
  %v2235 = vpop.f32.mrf.mxu0
  %2236 = vmatprep.mubr.bf16.mxu0 0
  %2237 = vmatmul.mubr.bf16.gmra.mxu0 %v1453
  %v2238 = vpop.f32.mrf.mxu0
  %v2239 = vadd.f32 0.0, %v2238
  %v2240 = vpop.f32.mrf.mxu0
  %v2241 = vpop.f32.mrf.mxu0
  %v2242 = vadd.f32 0.0, %v2241
  %v2243 = vpop.f32.mrf.mxu0
  %2244 = vmatprep.mubr.bf16.mxu0 0
  %2245 = vmatmul.mubr.bf16.gmra.mxu0 %v1456
  %v2246 = vpop.f32.mrf.mxu0
  %v2247 = vadd.f32 0.0, %v2246
  %v2248 = vpop.f32.mrf.mxu0
  %v2249 = vpop.f32.mrf.mxu0
  %v2250 = vadd.f32 0.0, %v2249
  %v2251 = vpop.f32.mrf.mxu0
  %2252 = vmatprep.mubr.bf16.mxu0 0
  %2253 = vmatmul.mubr.bf16.gmra.mxu0 %v1459
  %v2254 = vpop.f32.mrf.mxu0
  %v2255 = vadd.f32 0.0, %v2254
  %v2256 = vpop.f32.mrf.mxu0
  %v2257 = vpop.f32.mrf.mxu0
  %v2258 = vadd.f32 0.0, %v2257
  %v2259 = vpop.f32.mrf.mxu0
  %2260 = vmatprep.mubr.bf16.mxu0 0
  %2261 = vmatmul.mubr.bf16.gmra.mxu0 %v1462
  %v2262 = vpop.f32.mrf.mxu0
  %v2263 = vadd.f32 0.0, %v2262
  %v2264 = vpop.f32.mrf.mxu0
  %v2265 = vpop.f32.mrf.mxu0
  %v2266 = vadd.f32 0.0, %v2265
  %v2267 = vpop.f32.mrf.mxu0
  %2268 = vmatprep.mubr.bf16.mxu0 0
  %2269 = vmatmul.mubr.bf16.gmra.mxu0 %v1465
  %v2270 = vpop.f32.mrf.mxu0
  %v2271 = vadd.f32 0.0, %v2270
  %v2272 = vpop.f32.mrf.mxu0
  %v2273 = vpop.f32.mrf.mxu0
  %v2274 = vadd.f32 0.0, %v2273
  %v2275 = vpop.f32.mrf.mxu0
  %2276 = vmatprep.mubr.bf16.mxu0 0
  %2277 = vmatmul.mubr.bf16.gmra.mxu0 %v1468
  %v2278 = vpop.f32.mrf.mxu0
  %v2279 = vadd.f32 0.0, %v2278
  %v2280 = vpop.f32.mrf.mxu0
  %v2281 = vpop.f32.mrf.mxu0
  %v2282 = vadd.f32 0.0, %v2281
  %v2283 = vpop.f32.mrf.mxu0
  %2284 = vmatprep.mubr.bf16.mxu0 0
  %2285 = vmatmul.mubr.bf16.gmra.mxu0 %v1471
  %v2286 = vpop.f32.mrf.mxu0
  %v2287 = vadd.f32 0.0, %v2286
  %v2288 = vpop.f32.mrf.mxu0
  %v2289 = vpop.f32.mrf.mxu0
  %v2290 = vadd.f32 0.0, %v2289
  %v2291 = vpop.f32.mrf.mxu0
  %2292 = vmatprep.mubr.bf16.mxu0 0
  %2293 = vmatmul.mubr.bf16.gmra.mxu0 %v1474
  %v2294 = vpop.f32.mrf.mxu0
  %v2295 = vadd.f32 0.0, %v2294
  %v2296 = vpop.f32.mrf.mxu0
  %v2297 = vpop.f32.mrf.mxu0
  %v2298 = vadd.f32 0.0, %v2297
  %v2299 = vpop.f32.mrf.mxu0
  %2300 = vmatprep.mubr.bf16.mxu0 0
  %2301 = vmatmul.mubr.bf16.gmra.mxu0 %v1477
  %v2302 = vpop.f32.mrf.mxu0
  %v2303 = vadd.f32 0.0, %v2302
  %v2304 = vpop.f32.mrf.mxu0
  %v2305 = vpop.f32.mrf.mxu0
  %v2306 = vadd.f32 0.0, %v2305
  %v2307 = vpop.f32.mrf.mxu0
  %2308 = vmatprep.mubr.bf16.mxu0 0
  %2309 = vmatmul.mubr.bf16.gmra.mxu0 %v1480
  %v2310 = vpop.f32.mrf.mxu0
  %v2311 = vadd.f32 0.0, %v2310
  %v2312 = vpop.f32.mrf.mxu0
  %v2313 = vpop.f32.mrf.mxu0
  %v2314 = vadd.f32 0.0, %v2313
  %v2315 = vpop.f32.mrf.mxu0
  %2316 = vmatprep.mubr.bf16.mxu0 0
  %2317 = vmatmul.mubr.bf16.gmra.mxu0 %v1483
  %v2318 = vpop.f32.mrf.mxu0
  %v2319 = vadd.f32 0.0, %v2318
  %v2320 = vpop.f32.mrf.mxu0
  %v2321 = vpop.f32.mrf.mxu0
  %v2322 = vadd.f32 0.0, %v2321
  %v2323 = vpop.f32.mrf.mxu0
  %2324 = vmatprep.mubr.bf16.mxu0 0
  %2325 = vmatmul.mubr.bf16.gmra.mxu0 %v1486
  %v2326 = vpop.f32.mrf.mxu0
  %v2327 = vadd.f32 0.0, %v2326
  %v2328 = vpop.f32.mrf.mxu0
  %v2329 = vpop.f32.mrf.mxu0
  %v2330 = vadd.f32 0.0, %v2329
  %v2331 = vpop.f32.mrf.mxu0
  %2332 = vmatprep.mubr.bf16.mxu0 0
  %2333 = vmatmul.mubr.bf16.gmra.mxu0 %v1489
  %v2334 = vpop.f32.mrf.mxu0
  %v2335 = vadd.f32 0.0, %v2334
  %v2336 = vpop.f32.mrf.mxu0
  %v2337 = vpop.f32.mrf.mxu0
  %v2338 = vadd.f32 0.0, %v2337
  %v2339 = vpop.f32.mrf.mxu0
  %2340 = vmatprep.mubr.bf16.mxu0 0
  %2341 = vmatmul.mubr.bf16.gmra.mxu0 %v1492
  %v2342 = vpop.f32.mrf.mxu0
  %v2343 = vadd.f32 0.0, %v2342
  %v2344 = vpop.f32.mrf.mxu0
  %v2345 = vpop.f32.mrf.mxu0
  %v2346 = vadd.f32 0.0, %v2345
  %v2347 = vpop.f32.mrf.mxu0
  %2348 = vmatprep.mubr.bf16.mxu0 0
  %2349 = vmatmul.mubr.bf16.gmra.mxu0 %v1495
  %v2350 = vpop.f32.mrf.mxu0
  %v2351 = vadd.f32 0.0, %v2350
  %v2352 = vpop.f32.mrf.mxu0
  %v2353 = vpop.f32.mrf.mxu0
  %v2354 = vadd.f32 0.0, %v2353
  %v2355 = vpop.f32.mrf.mxu0
  %2356 = vmatprep.mubr.bf16.mxu0 0
  %2357 = vmatmul.mubr.bf16.gmra.mxu0 %v1498
  %v2358 = vpop.f32.mrf.mxu0
  %v2359 = vadd.f32 0.0, %v2358
  %v2360 = vpop.f32.mrf.mxu0
  %v2361 = vpop.f32.mrf.mxu0
  %v2362 = vadd.f32 0.0, %v2361
  %v2363 = vpop.f32.mrf.mxu0
  %2364 = vmatprep.mubr.bf16.mxu0 0
  %2365 = vmatmul.mubr.bf16.gmra.mxu0 %v1501
  %v2366 = vpop.f32.mrf.mxu0
  %v2367 = vadd.f32 0.0, %v2366
  %v2368 = vpop.f32.mrf.mxu0
  %v2369 = vpop.f32.mrf.mxu0
  %v2370 = vadd.f32 0.0, %v2369
  %v2371 = vpop.f32.mrf.mxu0
  %2372 = vmatprep.mubr.bf16.mxu0 0
  %2373 = vmatmul.mubr.bf16.gmra.mxu0 %v1504
  %v2374 = vpop.f32.mrf.mxu0
  %v2375 = vadd.f32 0.0, %v2374
  %v2376 = vpop.f32.mrf.mxu0
  %v2377 = vpop.f32.mrf.mxu0
  %v2378 = vadd.f32 0.0, %v2377
  %v2379 = vpop.f32.mrf.mxu0
  %2380 = vmatprep.mubr.bf16.mxu0 0
  %2381 = vmatmul.mubr.bf16.gmra.mxu0 %v1507
  %v2382 = vpop.f32.mrf.mxu0
  %v2383 = vadd.f32 0.0, %v2382
  %v2384 = vpop.f32.mrf.mxu0
  %v2385 = vpop.f32.mrf.mxu0
  %v2386 = vadd.f32 0.0, %v2385
  %v2387 = vpop.f32.mrf.mxu0
  %2388 = vmatprep.mubr.bf16.mxu0 0
  %2389 = vmatmul.mubr.bf16.gmra.mxu0 %v1510
  %v2390 = vpop.f32.mrf.mxu0
  %v2391 = vadd.f32 0.0, %v2390
  %v2392 = vpop.f32.mrf.mxu0
  %v2393 = vpop.f32.mrf.mxu0
  %v2394 = vadd.f32 0.0, %v2393
  %v2395 = vpop.f32.mrf.mxu0
  %2396 = vmatprep.mubr.bf16.mxu0 0
  %2397 = vmatmul.mubr.bf16.gmra.mxu0 %v1513
  %v2398 = vpop.f32.mrf.mxu0
  %v2399 = vadd.f32 0.0, %v2398
  %v2400 = vpop.f32.mrf.mxu0
  %v2401 = vpop.f32.mrf.mxu0
  %v2402 = vadd.f32 0.0, %v2401
  %v2403 = vpop.f32.mrf.mxu0
  %2404 = vmatprep.mubr.bf16.mxu0 0
  %2405 = vmatmul.mubr.bf16.gmra.mxu0 %v1516
  %v2406 = vpop.f32.mrf.mxu0
  %v2407 = vadd.f32 0.0, %v2406
  %v2408 = vpop.f32.mrf.mxu0
  %v2409 = vpop.f32.mrf.mxu0
  %v2410 = vadd.f32 0.0, %v2409
  %v2411 = vpop.f32.mrf.mxu0
  %2412 = vmatprep.mubr.bf16.mxu0 0
  %2413 = vmatmul.mubr.bf16.gmra.mxu0 %v1519
  %v2414 = vpop.f32.mrf.mxu0
  %v2415 = vadd.f32 0.0, %v2414
  %v2416 = vpop.f32.mrf.mxu0
  %v2417 = vpop.f32.mrf.mxu0
  %v2418 = vadd.f32 0.0, %v2417
  %v2419 = vpop.f32.mrf.mxu0
  %2420 = vmatprep.mubr.bf16.mxu0 0
  %2421 = vmatmul.mubr.bf16.gmra.mxu0 %v1522
  %v2422 = vpop.f32.mrf.mxu0
  %v2423 = vadd.f32 0.0, %v2422
  %v2424 = vpop.f32.mrf.mxu0
  %v2425 = vpop.f32.mrf.mxu0
  %v2426 = vadd.f32 0.0, %v2425
  %v2427 = vpop.f32.mrf.mxu0
  %2428 = vmatprep.mubr.bf16.mxu0 0
  %2429 = vmatmul.mubr.bf16.gmra.mxu0 %v1525
  %v2430 = vpop.f32.mrf.mxu0
  %v2431 = vadd.f32 0.0, %v2430
  %v2432 = vpop.f32.mrf.mxu0
  %v2433 = vpop.f32.mrf.mxu0
  %v2434 = vadd.f32 0.0, %v2433
  %v2435 = vpop.f32.mrf.mxu0
  %2436 = vmatprep.mubr.bf16.mxu0 0
  %2437 = vmatmul.mubr.bf16.gmra.mxu0 %v1528
  %v2438 = vpop.f32.mrf.mxu0
  %v2439 = vadd.f32 0.0, %v2438
  %v2440 = vpop.f32.mrf.mxu0
  %v2441 = vpop.f32.mrf.mxu0
  %v2442 = vadd.f32 0.0, %v2441
  %v2443 = vpop.f32.mrf.mxu0
  %2444 = vmatprep.mubr.bf16.mxu0 0
  %2445 = vmatmul.mubr.bf16.gmra.mxu0 %v1531
  %v2446 = vpop.f32.mrf.mxu0
  %v2447 = vadd.f32 0.0, %v2446
  %v2448 = vpop.f32.mrf.mxu0
  %v2449 = vpop.f32.mrf.mxu0
  %v2450 = vadd.f32 0.0, %v2449
  %v2451 = vpop.f32.mrf.mxu0
  %2452 = vmatprep.mubr.bf16.mxu0 0
  %2453 = vmatmul.mubr.bf16.gmra.mxu0 %v1534
  %v2454 = vpop.f32.mrf.mxu0
  %v2455 = vadd.f32 0.0, %v2454
  %v2456 = vpop.f32.mrf.mxu0
  %v2457 = vpop.f32.mrf.mxu0
  %v2458 = vadd.f32 0.0, %v2457
  %v2459 = vpop.f32.mrf.mxu0
  %2460 = vmatprep.mubr.bf16.mxu0 0
  %2461 = vmatmul.mubr.bf16.gmra.mxu0 %v1537
  %v2462 = vpop.f32.mrf.mxu0
  %v2463 = vadd.f32 0.0, %v2462
  %v2464 = vpop.f32.mrf.mxu0
  %v2465 = vpop.f32.mrf.mxu0
  %v2466 = vadd.f32 0.0, %v2465
  %v2467 = vpop.f32.mrf.mxu0
  %2468 = vmatprep.mubr.bf16.mxu0 0
  %2469 = vmatmul.mubr.bf16.gmra.mxu0 %v1540
  %v2470 = vpop.f32.mrf.mxu0
  %v2471 = vadd.f32 0.0, %v2470
  %v2472 = vpop.f32.mrf.mxu0
  %v2473 = vpop.f32.mrf.mxu0
  %v2474 = vadd.f32 0.0, %v2473
  %v2475 = vpop.f32.mrf.mxu0
  %2476 = vmatprep.mubr.bf16.mxu0 0
  %2477 = vmatmul.mubr.bf16.gmra.mxu0 %v1543
  %v2478 = vpop.f32.mrf.mxu0
  %v2479 = vadd.f32 0.0, %v2478
  %v2480 = vpop.f32.mrf.mxu0
  %v2481 = vpop.f32.mrf.mxu0
  %v2482 = vadd.f32 0.0, %v2481
  %v2483 = vpop.f32.mrf.mxu0
  %2484 = vmatprep.mubr.bf16.mxu0 0
  %2485 = vmatmul.mubr.bf16.gmra.mxu0 %v1546
  %v2486 = vpop.f32.mrf.mxu0
  %v2487 = vadd.f32 0.0, %v2486
  %v2488 = vpop.f32.mrf.mxu0
  %v2489 = vpop.f32.mrf.mxu0
  %v2490 = vadd.f32 0.0, %v2489
  %v2491 = vpop.f32.mrf.mxu0
  %2492 = vmatprep.mubr.bf16.mxu0 0
  %2493 = vmatmul.mubr.bf16.gmra.mxu0 %v1549
  %v2494 = vpop.f32.mrf.mxu0
  %v2495 = vadd.f32 0.0, %v2494
  %v2496 = vpop.f32.mrf.mxu0
  %v2497 = vpop.f32.mrf.mxu0
  %v2498 = vadd.f32 0.0, %v2497
  %v2499 = vpop.f32.mrf.mxu0
  %2500 = vmatprep.mubr.bf16.mxu0 0
  %2501 = vmatmul.mubr.bf16.gmra.mxu0 %v1552
  %v2502 = vpop.f32.mrf.mxu0
  %v2503 = vadd.f32 0.0, %v2502
  %v2504 = vpop.f32.mrf.mxu0
  %v2505 = vpop.f32.mrf.mxu0
  %v2506 = vadd.f32 0.0, %v2505
  %v2507 = vpop.f32.mrf.mxu0
  %2508 = vmatprep.mubr.bf16.mxu0 0
  %2509 = vmatmul.mubr.bf16.gmra.mxu0 %v1555
  %v2510 = vpop.f32.mrf.mxu0
  %v2511 = vadd.f32 0.0, %v2510
  %v2512 = vpop.f32.mrf.mxu0
  %v2513 = vpop.f32.mrf.mxu0
  %v2514 = vadd.f32 0.0, %v2513
  %v2515 = vpop.f32.mrf.mxu0
  %2516 = vmatprep.mubr.bf16.mxu0 0
  %2517 = vmatmul.mubr.bf16.gmra.mxu0 %v1558
  %v2518 = vpop.f32.mrf.mxu0
  %v2519 = vadd.f32 0.0, %v2518
  %v2520 = vpop.f32.mrf.mxu0
  %v2521 = vpop.f32.mrf.mxu0
  %v2522 = vadd.f32 0.0, %v2521
  %v2523 = vpop.f32.mrf.mxu0
  %2524 = vmatprep.mubr.bf16.mxu0 0
  %2525 = vmatmul.mubr.bf16.gmra.mxu0 %v1561
  %v2526 = vpop.f32.mrf.mxu0
  %v2527 = vadd.f32 0.0, %v2526
  %v2528 = vpop.f32.mrf.mxu0
  %v2529 = vpop.f32.mrf.mxu0
  %v2530 = vadd.f32 0.0, %v2529
  %v2531 = vpop.f32.mrf.mxu0
  %2532 = vmatprep.mubr.bf16.mxu0 0
  %2533 = vmatmul.mubr.bf16.gmra.mxu0 %v1564
  %v2534 = vpop.f32.mrf.mxu0
  %v2535 = vadd.f32 0.0, %v2534
  %v2536 = vpop.f32.mrf.mxu0
  %v2537 = vpop.f32.mrf.mxu0
  %v2538 = vadd.f32 0.0, %v2537
  %v2539 = vpop.f32.mrf.mxu0
  %2540 = vmatprep.mubr.bf16.mxu0 0
  %2541 = vmatmul.mubr.bf16.gmra.mxu0 %v1567
  %v2542 = vpop.f32.mrf.mxu0
  %v2543 = vadd.f32 0.0, %v2542
  %v2544 = vpop.f32.mrf.mxu0
  %v2545 = vpop.f32.mrf.mxu0
  %v2546 = vadd.f32 0.0, %v2545
  %v2547 = vpop.f32.mrf.mxu0
  %2548 = vmatprep.mubr.bf16.mxu0 0
  %2549 = vmatmul.mubr.bf16.gmra.mxu0 %v1570
  %v2550 = vpop.f32.mrf.mxu0
  %v2551 = vadd.f32 0.0, %v2550
  %v2552 = vpop.f32.mrf.mxu0
  %v2553 = vpop.f32.mrf.mxu0
  %v2554 = vadd.f32 0.0, %v2553
  %v2555 = vpop.f32.mrf.mxu0
  %2556 = vmatprep.mubr.bf16.mxu0 0
  %2557 = vmatmul.mubr.bf16.gmra.mxu0 %v1573
  %v2558 = vpop.f32.mrf.mxu0
  %v2559 = vadd.f32 0.0, %v2558
  %v2560 = vpop.f32.mrf.mxu0
  %v2561 = vpop.f32.mrf.mxu0
  %v2562 = vadd.f32 0.0, %v2561
  %v2563 = vpop.f32.mrf.mxu0
  %2564 = vmatprep.mubr.bf16.mxu0 0
  %2565 = vmatmul.mubr.bf16.gmra.mxu0 %v1576
  %v2566 = vpop.f32.mrf.mxu0
  %v2567 = vadd.f32 0.0, %v2566
  %v2568 = vpop.f32.mrf.mxu0
  %v2569 = vpop.f32.mrf.mxu0
  %v2570 = vadd.f32 0.0, %v2569
  %v2571 = vpop.f32.mrf.mxu0
  %2572 = vmatprep.mubr.bf16.mxu0 0
  %2573 = vmatmul.mubr.bf16.gmra.mxu0 %v1579
  %v2574 = vpop.f32.mrf.mxu0
  %v2575 = vadd.f32 0.0, %v2574
  %v2576 = vpop.f32.mrf.mxu0
  %v2577 = vpop.f32.mrf.mxu0
  %v2578 = vadd.f32 0.0, %v2577
  %v2579 = vpop.f32.mrf.mxu0
  %2580 = vmatprep.mubr.bf16.mxu0 0
  %2581 = vmatmul.mubr.bf16.gmra.mxu0 %v1582
  %v2582 = vpop.f32.mrf.mxu0
  %v2583 = vadd.f32 0.0, %v2582
  %v2584 = vpop.f32.mrf.mxu0
  %v2585 = vpop.f32.mrf.mxu0
  %v2586 = vadd.f32 0.0, %v2585
  %v2587 = vpop.f32.mrf.mxu0
  %2588 = vmatprep.mubr.bf16.mxu0 0
  %2589 = vmatmul.mubr.bf16.gmra.mxu0 %v1585
  %v2590 = vpop.f32.mrf.mxu0
  %v2591 = vadd.f32 0.0, %v2590
  %v2592 = vpop.f32.mrf.mxu0
  %v2593 = vpop.f32.mrf.mxu0
  %v2594 = vadd.f32 0.0, %v2593
  %v2595 = vpop.f32.mrf.mxu0
  %2596 = vmatprep.mubr.bf16.mxu0 0
  %2597 = vmatmul.mubr.bf16.gmra.mxu0 %v1588
  %v2598 = vpop.f32.mrf.mxu0
  %v2599 = vadd.f32 0.0, %v2598
  %v2600 = vpop.f32.mrf.mxu0
  %v2601 = vpop.f32.mrf.mxu0
  %v2602 = vadd.f32 0.0, %v2601
  %v2603 = vpop.f32.mrf.mxu0
  %2604 = vmatprep.mubr.bf16.mxu0 0
  %2605 = vmatmul.mubr.bf16.gmra.mxu0 %v1591
  %v2606 = vpop.f32.mrf.mxu0
  %v2607 = vadd.f32 0.0, %v2606
  %v2608 = vpop.f32.mrf.mxu0
  %v2609 = vpop.f32.mrf.mxu0
  %v2610 = vadd.f32 0.0, %v2609
  %v2611 = vpop.f32.mrf.mxu0
  %2612 = vmatprep.mubr.bf16.mxu0 0
  %2613 = vmatmul.mubr.bf16.gmra.mxu0 %v1594
  %v2614 = vpop.f32.mrf.mxu0
  %v2615 = vadd.f32 0.0, %v2614
  %v2616 = vpop.f32.mrf.mxu0
  %v2617 = vpop.f32.mrf.mxu0
  %v2618 = vadd.f32 0.0, %v2617
  %v2619 = vpop.f32.mrf.mxu0
  %2620 = vmatprep.mubr.bf16.mxu0 0
  %2621 = vmatmul.mubr.bf16.gmra.mxu0 %v1597
  %v2622 = vpop.f32.mrf.mxu0
  %v2623 = vadd.f32 0.0, %v2622
  %v2624 = vpop.f32.mrf.mxu0
  %v2625 = vpop.f32.mrf.mxu0
  %v2626 = vadd.f32 0.0, %v2625
  %v2627 = vpop.f32.mrf.mxu0
  %2628 = vmatprep.mubr.bf16.mxu0 0
  %2629 = vmatmul.mubr.bf16.gmra.mxu0 %v1600
  %v2630 = vpop.f32.mrf.mxu0
  %v2631 = vadd.f32 0.0, %v2630
  %v2632 = vpop.f32.mrf.mxu0
  %v2633 = vpop.f32.mrf.mxu0
  %v2634 = vadd.f32 0.0, %v2633
  %v2635 = vpop.f32.mrf.mxu0
  %2636 = vmatprep.mubr.bf16.mxu0 0
  %2637 = vmatmul.mubr.bf16.gmra.mxu0 %v1603
  %v2638 = vpop.f32.mrf.mxu0
  %v2639 = vadd.f32 0.0, %v2638
  %v2640 = vpop.f32.mrf.mxu0
  %v2641 = vpop.f32.mrf.mxu0
  %v2642 = vadd.f32 0.0, %v2641
  %v2643 = vpop.f32.mrf.mxu0
  %2644 = vmatprep.mubr.bf16.mxu0 0
  %2645 = vmatmul.mubr.bf16.gmra.mxu0 %v1606
  %v2646 = vpop.f32.mrf.mxu0
  %v2647 = vadd.f32 0.0, %v2646
  %v2648 = vpop.f32.mrf.mxu0
  %v2649 = vpop.f32.mrf.mxu0
  %v2650 = vadd.f32 0.0, %v2649
  %v2651 = vpop.f32.mrf.mxu0
  %2652 = vmatprep.mubr.bf16.mxu0 0
  %2653 = vmatmul.mubr.bf16.gmra.mxu0 %v1609
  %v2654 = vpop.f32.mrf.mxu0
  %v2655 = vadd.f32 0.0, %v2654
  %v2656 = vpop.f32.mrf.mxu0
  %v2657 = vpop.f32.mrf.mxu0
  %v2658 = vadd.f32 0.0, %v2657
  %v2659 = vpop.f32.mrf.mxu0
  %2660 = vmatprep.mubr.bf16.mxu0 0
  %2661 = vmatmul.mubr.bf16.gmra.mxu0 %v1612
  %v2662 = vpop.f32.mrf.mxu0
  %v2663 = vadd.f32 0.0, %v2662
  %v2664 = vpop.f32.mrf.mxu0
  %v2665 = vpop.f32.mrf.mxu0
  %v2666 = vadd.f32 0.0, %v2665
  %v2667 = vpop.f32.mrf.mxu0
  %2668 = vmatprep.mubr.bf16.mxu0 0
  %2669 = vmatmul.mubr.bf16.gmra.mxu0 %v1615
  %v2670 = vpop.f32.mrf.mxu0
  %v2671 = vadd.f32 0.0, %v2670
  %v2672 = vpop.f32.mrf.mxu0
  %v2673 = vpop.f32.mrf.mxu0
  %v2674 = vadd.f32 0.0, %v2673
  %v2675 = vpop.f32.mrf.mxu0
  %2676 = vmatprep.mubr.bf16.mxu0 0
  %2677 = vmatmul.mubr.bf16.gmra.mxu0 %v1618
  %v2678 = vpop.f32.mrf.mxu0
  %v2679 = vadd.f32 0.0, %v2678
  %v2680 = vpop.f32.mrf.mxu0
  %v2681 = vpop.f32.mrf.mxu0
  %v2682 = vadd.f32 0.0, %v2681
  %v2683 = vpop.f32.mrf.mxu0
  %2684 = vmatprep.mubr.bf16.mxu0 0
  %2685 = vmatmul.mubr.bf16.gmra.mxu0 %v1621
  %v2686 = vpop.f32.mrf.mxu0
  %v2687 = vadd.f32 0.0, %v2686
  %v2688 = vpop.f32.mrf.mxu0
  %v2689 = vpop.f32.mrf.mxu0
  %v2690 = vadd.f32 0.0, %v2689
  %v2691 = vpop.f32.mrf.mxu0
  %2692 = vmatprep.mubr.bf16.mxu0 0
  %2693 = vmatmul.mubr.bf16.gmra.mxu0 %v1624
  %v2694 = vpop.f32.mrf.mxu0
  %v2695 = vadd.f32 0.0, %v2694
  %v2696 = vpop.f32.mrf.mxu0
  %v2697 = vpop.f32.mrf.mxu0
  %v2698 = vadd.f32 0.0, %v2697
  %v2699 = vpop.f32.mrf.mxu0
  %2700 = vmatprep.mubr.bf16.mxu0 0
  %2701 = vmatmul.mubr.bf16.gmra.mxu0 %v1627
  %v2702 = vpop.f32.mrf.mxu0
  %v2703 = vadd.f32 0.0, %v2702
  %v2704 = vpop.f32.mrf.mxu0
  %v2705 = vpop.f32.mrf.mxu0
  %v2706 = vadd.f32 0.0, %v2705
  %v2707 = vpop.f32.mrf.mxu0
  %2708 = vmatprep.mubr.bf16.mxu0 0
  %2709 = vmatmul.mubr.bf16.gmra.mxu0 %v1630
  %v2710 = vpop.f32.mrf.mxu0
  %v2711 = vadd.f32 0.0, %v2710
  %v2712 = vpop.f32.mrf.mxu0
  %v2713 = vpop.f32.mrf.mxu0
  %v2714 = vadd.f32 0.0, %v2713
  %v2715 = vpop.f32.mrf.mxu0
  %2716 = vmatprep.mubr.bf16.mxu0 0
  %2717 = vmatmul.mubr.bf16.gmra.mxu0 %v1633
  %v2718 = vpop.f32.mrf.mxu0
  %v2719 = vadd.f32 0.0, %v2718
  %v2720 = vpop.f32.mrf.mxu0
  %v2721 = vpop.f32.mrf.mxu0
  %v2722 = vadd.f32 0.0, %v2721
  %v2723 = vpop.f32.mrf.mxu0
  %2724 = vmatprep.mubr.bf16.mxu0 0
  %2725 = vmatmul.mubr.bf16.gmra.mxu0 %v1636
  %v2726 = vpop.f32.mrf.mxu0
  %v2727 = vadd.f32 0.0, %v2726
  %v2728 = vpop.f32.mrf.mxu0
  %v2729 = vpop.f32.mrf.mxu0
  %v2730 = vadd.f32 0.0, %v2729
  %v2731 = vpop.f32.mrf.mxu0
  %2732 = vmatprep.mubr.bf16.mxu0 0
  %2733 = vmatmul.mubr.bf16.gmra.mxu0 %v1639
  %v2734 = vpop.f32.mrf.mxu0
  %v2735 = vadd.f32 0.0, %v2734
  %v2736 = vpop.f32.mrf.mxu0
  %v2737 = vpop.f32.mrf.mxu0
  %v2738 = vadd.f32 0.0, %v2737
  %v2739 = vpop.f32.mrf.mxu0
  %2740 = vmatprep.mubr.bf16.mxu0 0
  %2741 = vmatmul.mubr.bf16.gmra.mxu0 %v1642
  %v2742 = vpop.f32.mrf.mxu0
  %v2743 = vadd.f32 0.0, %v2742
  %v2744 = vpop.f32.mrf.mxu0
  %v2745 = vpop.f32.mrf.mxu0
  %v2746 = vadd.f32 0.0, %v2745
  %v2747 = vpop.f32.mrf.mxu0
  %2748 = vmatprep.mubr.bf16.mxu0 0
  %2749 = vmatmul.mubr.bf16.gmra.mxu0 %v1645
  %v2750 = vpop.f32.mrf.mxu0
  %v2751 = vadd.f32 0.0, %v2750
  %v2752 = vpop.f32.mrf.mxu0
  %v2753 = vpop.f32.mrf.mxu0
  %v2754 = vadd.f32 0.0, %v2753
  %v2755 = vpop.f32.mrf.mxu0
  %2756 = vmatprep.mubr.bf16.mxu0 0
  %2757 = vmatmul.mubr.bf16.gmra.mxu0 %v1648
  %v2758 = vpop.f32.mrf.mxu0
  %v2759 = vadd.f32 0.0, %v2758
  %v2760 = vpop.f32.mrf.mxu0
  %v2761 = vpop.f32.mrf.mxu0
  %v2762 = vadd.f32 0.0, %v2761
  %v2763 = vpop.f32.mrf.mxu0
  %2764 = vmatprep.mubr.bf16.mxu0 0
  %2765 = vmatmul.mubr.bf16.gmra.mxu0 %v1651
  %v2766 = vpop.f32.mrf.mxu0
  %v2767 = vadd.f32 0.0, %v2766
  %v2768 = vpop.f32.mrf.mxu0
  %v2769 = vpop.f32.mrf.mxu0
  %v2770 = vadd.f32 0.0, %v2769
  %v2771 = vpop.f32.mrf.mxu0
  %2772 = vmatprep.mubr.bf16.mxu0 0
  %2773 = vmatmul.mubr.bf16.gmra.mxu0 %v1654
  %v2774 = vpop.f32.mrf.mxu0
  %v2775 = vadd.f32 0.0, %v2774
  %v2776 = vpop.f32.mrf.mxu0
  %v2777 = vpop.f32.mrf.mxu0
  %v2778 = vadd.f32 0.0, %v2777
  %v2779 = vpop.f32.mrf.mxu0
  %2780 = vmatprep.mubr.bf16.mxu0 0
  %2781 = vmatmul.mubr.bf16.gmra.mxu0 %v1657
  %v2782 = vpop.f32.mrf.mxu0
  %v2783 = vadd.f32 0.0, %v2782
  %v2784 = vpop.f32.mrf.mxu0
  %v2785 = vpop.f32.mrf.mxu0
  %v2786 = vadd.f32 0.0, %v2785
  %v2787 = vpop.f32.mrf.mxu0
  %2788 = vmatprep.mubr.bf16.mxu0 0
  %2789 = vmatmul.mubr.bf16.gmra.mxu0 %v1660
  %v2790 = vpop.f32.mrf.mxu0
  %v2791 = vadd.f32 0.0, %v2790
  %v2792 = vpop.f32.mrf.mxu0
  %v2793 = vpop.f32.mrf.mxu0
  %v2794 = vadd.f32 0.0, %v2793
  %v2795 = vpop.f32.mrf.mxu0
  %2796 = vmatprep.mubr.bf16.mxu0 0
  %2797 = vmatmul.mubr.bf16.gmra.mxu0 %v1663
  %v2798 = vpop.f32.mrf.mxu0
  %v2799 = vadd.f32 0.0, %v2798
  %v2800 = vpop.f32.mrf.mxu0
  %v2801 = vpop.f32.mrf.mxu0
  %v2802 = vadd.f32 0.0, %v2801
  %v2803 = vpop.f32.mrf.mxu0
  %2804 = vmatprep.mubr.bf16.mxu0 0
  %2805 = vmatmul.mubr.bf16.gmra.mxu0 %v1666
  %v2806 = vpop.f32.mrf.mxu0
  %v2807 = vadd.f32 0.0, %v2806
  %v2808 = vpop.f32.mrf.mxu0
  %v2809 = vpop.f32.mrf.mxu0
  %v2810 = vadd.f32 0.0, %v2809
  %v2811 = vpop.f32.mrf.mxu0
  %2812 = vmatprep.mubr.bf16.mxu0 0
  %2813 = vmatmul.mubr.bf16.gmra.mxu0 %v1669
  %v2814 = vpop.f32.mrf.mxu0
  %v2815 = vadd.f32 0.0, %v2814
  %v2816 = vpop.f32.mrf.mxu0
  %v2817 = vpop.f32.mrf.mxu0
  %v2818 = vadd.f32 0.0, %v2817
  %v2819 = vpop.f32.mrf.mxu0
  %2820 = vmatprep.mubr.bf16.mxu0 0
  %2821 = vmatmul.mubr.bf16.gmra.mxu0 %v1672
  %v2822 = vpop.f32.mrf.mxu0
  %v2823 = vadd.f32 0.0, %v2822
  %v2824 = vpop.f32.mrf.mxu0
  %v2825 = vpop.f32.mrf.mxu0
  %v2826 = vadd.f32 0.0, %v2825
  %v2827 = vpop.f32.mrf.mxu0
  %2828 = vmatprep.mubr.bf16.mxu0 0
  %2829 = vmatmul.mubr.bf16.gmra.mxu0 %v1675
  %v2830 = vpop.f32.mrf.mxu0
  %v2831 = vadd.f32 0.0, %v2830
  %v2832 = vpop.f32.mrf.mxu0
  %v2833 = vpop.f32.mrf.mxu0
  %v2834 = vadd.f32 0.0, %v2833
  %v2835 = vpop.f32.mrf.mxu0
  %2836 = vmatprep.mubr.bf16.mxu0 0
  %2837 = vmatmul.mubr.bf16.gmra.mxu0 %v1678
  %v2838 = vpop.f32.mrf.mxu0
  %v2839 = vadd.f32 0.0, %v2838
  %v2840 = vpop.f32.mrf.mxu0
  %v2841 = vpop.f32.mrf.mxu0
  %v2842 = vadd.f32 0.0, %v2841
  %v2843 = vpop.f32.mrf.mxu0
  %2844 = vmatprep.mubr.bf16.mxu0 0
  %2845 = vmatmul.mubr.bf16.gmra.mxu0 %v1681
  %v2846 = vpop.f32.mrf.mxu0
  %v2847 = vadd.f32 0.0, %v2846
  %v2848 = vpop.f32.mrf.mxu0
  %v2849 = vpop.f32.mrf.mxu0
  %v2850 = vadd.f32 0.0, %v2849
  %v2851 = vpop.f32.mrf.mxu0
  %2852 = vmatprep.mubr.bf16.mxu0 0
  %2853 = vmatmul.mubr.bf16.gmra.mxu0 %v1684
  %v2854 = vpop.f32.mrf.mxu0
  %v2855 = vadd.f32 0.0, %v2854
  %v2856 = vpop.f32.mrf.mxu0
  %v2857 = vpop.f32.mrf.mxu0
  %v2858 = vadd.f32 0.0, %v2857
  %v2859 = vpop.f32.mrf.mxu0
  %2860 = vmatprep.mubr.bf16.mxu0 0
  %2861 = vmatmul.mubr.bf16.gmra.mxu0 %v1687
  %v2862 = vpop.f32.mrf.mxu0
  %v2863 = vadd.f32 0.0, %v2862
  %v2864 = vpop.f32.mrf.mxu0
  %v2865 = vpop.f32.mrf.mxu0
  %v2866 = vadd.f32 0.0, %v2865
  %v2867 = vpop.f32.mrf.mxu0
  %2868 = vmatprep.mubr.bf16.mxu0 0
  %2869 = vmatmul.mubr.bf16.gmra.mxu0 %v1690
  %v2870 = vpop.f32.mrf.mxu0
  %v2871 = vadd.f32 0.0, %v2870
  %v2872 = vpop.f32.mrf.mxu0
  %v2873 = vpop.f32.mrf.mxu0
  %v2874 = vadd.f32 0.0, %v2873
  %v2875 = vpop.f32.mrf.mxu0
  %2876 = vdwg.mxu0
  %v2877 = vmul.f32 %v181, %v1727
  %v2878 = vmul.f32 %v184, %v1730
  %v2879 = vmul.f32 %v189, %v1735
  %v2880 = vmul.f32 %v192, %v1738
  %v2881 = vmul.f32 %v197, %v1743
  %v2882 = vmul.f32 %v200, %v1746
  %v2883 = vmul.f32 %v205, %v1751
  %v2884 = vmul.f32 %v208, %v1754
  %v2885 = vmul.f32 %v213, %v1759
  %v2886 = vmul.f32 %v216, %v1762
  %v2887 = vmul.f32 %v221, %v1767
  %v2888 = vmul.f32 %v224, %v1770
  %v2889 = vmul.f32 %v229, %v1775
  %v2890 = vmul.f32 %v232, %v1778
  %v2891 = vmul.f32 %v237, %v1783
  %v2892 = vmul.f32 %v240, %v1786
  %v2893 = vmul.f32 %v181, %v1791
  %v2894 = vmul.f32 %v184, %v1794
  %v2895 = vmul.f32 %v189, %v1799
  %v2896 = vmul.f32 %v192, %v1802
  %v2897 = vmul.f32 %v197, %v1807
  %v2898 = vmul.f32 %v200, %v1810
  %v2899 = vmul.f32 %v205, %v1815
  %v2900 = vmul.f32 %v208, %v1818
  %v2901 = vmul.f32 %v213, %v1823
  %v2902 = vmul.f32 %v216, %v1826
  %v2903 = vmul.f32 %v221, %v1831
  %v2904 = vmul.f32 %v224, %v1834
  %v2905 = vmul.f32 %v229, %v1839
  %v2906 = vmul.f32 %v232, %v1842
  %v2907 = vmul.f32 %v237, %v1847
  %v2908 = vmul.f32 %v240, %v1850
  %v2909 = vmul.f32 %v181, %v1855
  %v2910 = vmul.f32 %v184, %v1858
  %v2911 = vmul.f32 %v189, %v1863
  %v2912 = vmul.f32 %v192, %v1866
  %v2913 = vmul.f32 %v197, %v1871
  %v2914 = vmul.f32 %v200, %v1874
  %v2915 = vmul.f32 %v205, %v1879
  %v2916 = vmul.f32 %v208, %v1882
  %v2917 = vmul.f32 %v213, %v1887
  %v2918 = vmul.f32 %v216, %v1890
  %v2919 = vmul.f32 %v221, %v1895
  %v2920 = vmul.f32 %v224, %v1898
  %v2921 = vmul.f32 %v229, %v1903
  %v2922 = vmul.f32 %v232, %v1906
  %v2923 = vmul.f32 %v237, %v1911
  %v2924 = vmul.f32 %v240, %v1914
  %v2925 = vmul.f32 %v181, %v1919
  %v2926 = vmul.f32 %v184, %v1922
  %v2927 = vmul.f32 %v189, %v1927
  %v2928 = vmul.f32 %v192, %v1930
  %v2929 = vmul.f32 %v197, %v1935
  %v2930 = vmul.f32 %v200, %v1938
  %v2931 = vmul.f32 %v205, %v1943
  %v2932 = vmul.f32 %v208, %v1946
  %v2933 = vmul.f32 %v213, %v1951
  %v2934 = vmul.f32 %v216, %v1954
  %v2935 = vmul.f32 %v221, %v1959
  %v2936 = vmul.f32 %v224, %v1962
  %v2937 = vmul.f32 %v229, %v1967
  %v2938 = vmul.f32 %v232, %v1970
  %v2939 = vmul.f32 %v237, %v1975
  %v2940 = vmul.f32 %v240, %v1978
  %v2941 = vmul.f32 %v181, %v1983
  %v2942 = vmul.f32 %v184, %v1986
  %v2943 = vmul.f32 %v189, %v1991
  %v2944 = vmul.f32 %v192, %v1994
  %v2945 = vmul.f32 %v197, %v1999
  %v2946 = vmul.f32 %v200, %v2002
  %v2947 = vmul.f32 %v205, %v2007
  %v2948 = vmul.f32 %v208, %v2010
  %v2949 = vmul.f32 %v213, %v2015
  %v2950 = vmul.f32 %v216, %v2018
  %v2951 = vmul.f32 %v221, %v2023
  %v2952 = vmul.f32 %v224, %v2026
  %v2953 = vmul.f32 %v229, %v2031
  %v2954 = vmul.f32 %v232, %v2034
  %v2955 = vmul.f32 %v237, %v2039
  %v2956 = vmul.f32 %v240, %v2042
  %v2957 = vmul.f32 %v181, %v2047
  %v2958 = vmul.f32 %v184, %v2050
  %v2959 = vmul.f32 %v189, %v2055
  %v2960 = vmul.f32 %v192, %v2058
  %v2961 = vmul.f32 %v197, %v2063
  %v2962 = vmul.f32 %v200, %v2066
  %v2963 = vmul.f32 %v205, %v2071
  %v2964 = vmul.f32 %v208, %v2074
  %v2965 = vmul.f32 %v213, %v2079
  %v2966 = vmul.f32 %v216, %v2082
  %v2967 = vmul.f32 %v221, %v2087
  %v2968 = vmul.f32 %v224, %v2090
  %v2969 = vmul.f32 %v229, %v2095
  %v2970 = vmul.f32 %v232, %v2098
  %v2971 = vmul.f32 %v237, %v2103
  %v2972 = vmul.f32 %v240, %v2106
  %v2973 = vmul.f32 %v181, %v2111
  %v2974 = vmul.f32 %v184, %v2114
  %v2975 = vmul.f32 %v189, %v2119
  %v2976 = vmul.f32 %v192, %v2122
  %v2977 = vmul.f32 %v197, %v2127
  %v2978 = vmul.f32 %v200, %v2130
  %v2979 = vmul.f32 %v205, %v2135
  %v2980 = vmul.f32 %v208, %v2138
  %v2981 = vmul.f32 %v213, %v2143
  %v2982 = vmul.f32 %v216, %v2146
  %v2983 = vmul.f32 %v221, %v2151
  %v2984 = vmul.f32 %v224, %v2154
  %v2985 = vmul.f32 %v229, %v2159
  %v2986 = vmul.f32 %v232, %v2162
  %v2987 = vmul.f32 %v237, %v2167
  %v2988 = vmul.f32 %v240, %v2170
  %v2989 = vmul.f32 %v181, %v2175
  %v2990 = vmul.f32 %v184, %v2178
  %v2991 = vmul.f32 %v189, %v2183
  %v2992 = vmul.f32 %v192, %v2186
  %v2993 = vmul.f32 %v197, %v2191
  %v2994 = vmul.f32 %v200, %v2194
  %v2995 = vmul.f32 %v205, %v2199
  %v2996 = vmul.f32 %v208, %v2202
  %v2997 = vmul.f32 %v213, %v2207
  %v2998 = vmul.f32 %v216, %v2210
  %v2999 = vmul.f32 %v221, %v2215
  %v3000 = vmul.f32 %v224, %v2218
  %v3001 = vmul.f32 %v229, %v2223
  %v3002 = vmul.f32 %v232, %v2226
  %v3003 = vmul.f32 %v237, %v2231
  %v3004 = vmul.f32 %v240, %v2234
  %v3005 = vmul.f32 %v181, %v2239
  %v3006 = vmul.f32 %v184, %v2242
  %v3007 = vmul.f32 %v189, %v2247
  %v3008 = vmul.f32 %v192, %v2250
  %v3009 = vmul.f32 %v197, %v2255
  %v3010 = vmul.f32 %v200, %v2258
  %v3011 = vmul.f32 %v205, %v2263
  %v3012 = vmul.f32 %v208, %v2266
  %v3013 = vmul.f32 %v213, %v2271
  %v3014 = vmul.f32 %v216, %v2274
  %v3015 = vmul.f32 %v221, %v2279
  %v3016 = vmul.f32 %v224, %v2282
  %v3017 = vmul.f32 %v229, %v2287
  %v3018 = vmul.f32 %v232, %v2290
  %v3019 = vmul.f32 %v237, %v2295
  %v3020 = vmul.f32 %v240, %v2298
  %v3021 = vmul.f32 %v181, %v2303
  %v3022 = vmul.f32 %v184, %v2306
  %v3023 = vmul.f32 %v189, %v2311
  %v3024 = vmul.f32 %v192, %v2314
  %v3025 = vmul.f32 %v197, %v2319
  %v3026 = vmul.f32 %v200, %v2322
  %v3027 = vmul.f32 %v205, %v2327
  %v3028 = vmul.f32 %v208, %v2330
  %v3029 = vmul.f32 %v213, %v2335
  %v3030 = vmul.f32 %v216, %v2338
  %v3031 = vmul.f32 %v221, %v2343
  %v3032 = vmul.f32 %v224, %v2346
  %v3033 = vmul.f32 %v229, %v2351
  %v3034 = vmul.f32 %v232, %v2354
  %v3035 = vmul.f32 %v237, %v2359
  %v3036 = vmul.f32 %v240, %v2362
  %v3037 = vmul.f32 %v181, %v2367
  %v3038 = vmul.f32 %v184, %v2370
  %v3039 = vmul.f32 %v189, %v2375
  %v3040 = vmul.f32 %v192, %v2378
  %v3041 = vmul.f32 %v197, %v2383
  %v3042 = vmul.f32 %v200, %v2386
  %v3043 = vmul.f32 %v205, %v2391
  %v3044 = vmul.f32 %v208, %v2394
  %v3045 = vmul.f32 %v213, %v2399
  %v3046 = vmul.f32 %v216, %v2402
  %v3047 = vmul.f32 %v221, %v2407
  %v3048 = vmul.f32 %v224, %v2410
  %v3049 = vmul.f32 %v229, %v2415
  %v3050 = vmul.f32 %v232, %v2418
  %v3051 = vmul.f32 %v237, %v2423
  %v3052 = vmul.f32 %v240, %v2426
  %v3053 = vmul.f32 %v181, %v2431
  %v3054 = vmul.f32 %v184, %v2434
  %v3055 = vmul.f32 %v189, %v2439
  %v3056 = vmul.f32 %v192, %v2442
  %v3057 = vmul.f32 %v197, %v2447
  %v3058 = vmul.f32 %v200, %v2450
  %v3059 = vmul.f32 %v205, %v2455
  %v3060 = vmul.f32 %v208, %v2458
  %v3061 = vmul.f32 %v213, %v2463
  %v3062 = vmul.f32 %v216, %v2466
  %v3063 = vmul.f32 %v221, %v2471
  %v3064 = vmul.f32 %v224, %v2474
  %v3065 = vmul.f32 %v229, %v2479
  %v3066 = vmul.f32 %v232, %v2482
  %v3067 = vmul.f32 %v237, %v2487
  %v3068 = vmul.f32 %v240, %v2490
  %v3069 = vmul.f32 %v181, %v2495
  %v3070 = vmul.f32 %v184, %v2498
  %v3071 = vmul.f32 %v189, %v2503
  %v3072 = vmul.f32 %v192, %v2506
  %v3073 = vmul.f32 %v197, %v2511
  %v3074 = vmul.f32 %v200, %v2514
  %v3075 = vmul.f32 %v205, %v2519
  %v3076 = vmul.f32 %v208, %v2522
  %v3077 = vmul.f32 %v213, %v2527
  %v3078 = vmul.f32 %v216, %v2530
  %v3079 = vmul.f32 %v221, %v2535
  %v3080 = vmul.f32 %v224, %v2538
  %v3081 = vmul.f32 %v229, %v2543
  %v3082 = vmul.f32 %v232, %v2546
  %v3083 = vmul.f32 %v237, %v2551
  %v3084 = vmul.f32 %v240, %v2554
  %v3085 = vmul.f32 %v181, %v2559
  %v3086 = vmul.f32 %v184, %v2562
  %v3087 = vmul.f32 %v189, %v2567
  %v3088 = vmul.f32 %v192, %v2570
  %v3089 = vmul.f32 %v197, %v2575
  %v3090 = vmul.f32 %v200, %v2578
  %v3091 = vmul.f32 %v205, %v2583
  %v3092 = vmul.f32 %v208, %v2586
  %v3093 = vmul.f32 %v213, %v2591
  %v3094 = vmul.f32 %v216, %v2594
  %v3095 = vmul.f32 %v221, %v2599
  %v3096 = vmul.f32 %v224, %v2602
  %v3097 = vmul.f32 %v229, %v2607
  %v3098 = vmul.f32 %v232, %v2610
  %v3099 = vmul.f32 %v237, %v2615
  %v3100 = vmul.f32 %v240, %v2618
  %v3101 = vmul.f32 %v181, %v2623
  %v3102 = vmul.f32 %v184, %v2626
  %v3103 = vmul.f32 %v189, %v2631
  %v3104 = vmul.f32 %v192, %v2634
  %v3105 = vmul.f32 %v197, %v2639
  %v3106 = vmul.f32 %v200, %v2642
  %v3107 = vmul.f32 %v205, %v2647
  %v3108 = vmul.f32 %v208, %v2650
  %v3109 = vmul.f32 %v213, %v2655
  %v3110 = vmul.f32 %v216, %v2658
  %v3111 = vmul.f32 %v221, %v2663
  %v3112 = vmul.f32 %v224, %v2666
  %v3113 = vmul.f32 %v229, %v2671
  %v3114 = vmul.f32 %v232, %v2674
  %v3115 = vmul.f32 %v237, %v2679
  %v3116 = vmul.f32 %v240, %v2682
  %v3117 = vmul.f32 %v181, %v2687
  %v3118 = vmul.f32 %v184, %v2690
  %v3119 = vmul.f32 %v189, %v2695
  %v3120 = vmul.f32 %v192, %v2698
  %v3121 = vmul.f32 %v197, %v2703
  %v3122 = vmul.f32 %v200, %v2706
  %v3123 = vmul.f32 %v205, %v2711
  %v3124 = vmul.f32 %v208, %v2714
  %v3125 = vmul.f32 %v213, %v2719
  %v3126 = vmul.f32 %v216, %v2722
  %v3127 = vmul.f32 %v221, %v2727
  %v3128 = vmul.f32 %v224, %v2730
  %v3129 = vmul.f32 %v229, %v2735
  %v3130 = vmul.f32 %v232, %v2738
  %v3131 = vmul.f32 %v237, %v2743
  %v3132 = vmul.f32 %v240, %v2746
  %v3133 = vmul.f32 %v181, %v2751
  %v3134 = vmul.f32 %v184, %v2754
  %v3135 = vmul.f32 %v189, %v2759
  %v3136 = vmul.f32 %v192, %v2762
  %v3137 = vmul.f32 %v197, %v2767
  %v3138 = vmul.f32 %v200, %v2770
  %v3139 = vmul.f32 %v205, %v2775
  %v3140 = vmul.f32 %v208, %v2778
  %v3141 = vmul.f32 %v213, %v2783
  %v3142 = vmul.f32 %v216, %v2786
  %v3143 = vmul.f32 %v221, %v2791
  %v3144 = vmul.f32 %v224, %v2794
  %v3145 = vmul.f32 %v229, %v2799
  %v3146 = vmul.f32 %v232, %v2802
  %v3147 = vmul.f32 %v237, %v2807
  %v3148 = vmul.f32 %v240, %v2810
  %v3149 = vmul.f32 %v181, %v2815
  %v3150 = vmul.f32 %v184, %v2818
  %v3151 = vmul.f32 %v189, %v2823
  %v3152 = vmul.f32 %v192, %v2826
  %v3153 = vmul.f32 %v197, %v2831
  %v3154 = vmul.f32 %v200, %v2834
  %v3155 = vmul.f32 %v205, %v2839
  %v3156 = vmul.f32 %v208, %v2842
  %v3157 = vmul.f32 %v213, %v2847
  %v3158 = vmul.f32 %v216, %v2850
  %v3159 = vmul.f32 %v221, %v2855
  %v3160 = vmul.f32 %v224, %v2858
  %v3161 = vmul.f32 %v229, %v2863
  %v3162 = vmul.f32 %v232, %v2866
  %v3163 = vmul.f32 %v237, %v2871
  %v3164 = vmul.f32 %v240, %v2874
  %v3165 = vld [vmem:[%s7] sm:$0xff]
  %v3166 = vld [vmem:[%s7 + $0x8] sm:$0xff]
  %v3168 = vsel %vm1259, %v2877, 0
  %v3171 = vsel %vm1259, %v2878, 0
  %v3174 = vsel %vm1259, %v2879, 0
  %v3177 = vsel %vm1259, %v2880, 0
  %v3180 = vsel %vm1259, %v2881, 0
  %v3183 = vsel %vm1259, %v2882, 0
  %v3186 = vsel %vm1259, %v2883, 0
  %v3189 = vsel %vm1259, %v2884, 0
  %v3192 = vsel %vm1259, %v2885, 0
  %v3195 = vsel %vm1259, %v2886, 0
  %v3198 = vsel %vm1259, %v2887, 0
  %v3201 = vsel %vm1259, %v2888, 0
  %v3204 = vsel %vm1259, %v2889, 0
  %v3207 = vsel %vm1259, %v2890, 0
  %v3210 = vsel %vm1259, %v2891, 0
  %v3213 = vsel %vm1259, %v2892, 0
  %v3216 = vsel %vm1259, %v2893, 0
  %v3219 = vsel %vm1259, %v2894, 0
  %v3222 = vsel %vm1259, %v2895, 0
  %v3225 = vsel %vm1259, %v2896, 0
  %v3228 = vsel %vm1259, %v2897, 0
  %v3231 = vsel %vm1259, %v2898, 0
  %v3234 = vsel %vm1259, %v2899, 0
  %v3237 = vsel %vm1259, %v2900, 0
  %v3240 = vsel %vm1259, %v2901, 0
  %v3243 = vsel %vm1259, %v2902, 0
  %v3246 = vsel %vm1259, %v2903, 0
  %v3249 = vsel %vm1259, %v2904, 0
  %v3252 = vsel %vm1259, %v2905, 0
  %v3255 = vsel %vm1259, %v2906, 0
  %v3258 = vsel %vm1259, %v2907, 0
  %v3261 = vsel %vm1259, %v2908, 0
  %v3264 = vsel %vm1259, %v2909, 0
  %v3267 = vsel %vm1259, %v2910, 0
  %v3270 = vsel %vm1259, %v2911, 0
  %v3273 = vsel %vm1259, %v2912, 0
  %v3276 = vsel %vm1259, %v2913, 0
  %v3279 = vsel %vm1259, %v2914, 0
  %v3282 = vsel %vm1259, %v2915, 0
  %v3285 = vsel %vm1259, %v2916, 0
  %v3288 = vsel %vm1259, %v2917, 0
  %v3291 = vsel %vm1259, %v2918, 0
  %v3294 = vsel %vm1259, %v2919, 0
  %v3297 = vsel %vm1259, %v2920, 0
  %v3300 = vsel %vm1259, %v2921, 0
  %v3303 = vsel %vm1259, %v2922, 0
  %v3306 = vsel %vm1259, %v2923, 0
  %v3309 = vsel %vm1259, %v2924, 0
  %v3312 = vsel %vm1259, %v2925, 0
  %v3315 = vsel %vm1259, %v2926, 0
  %v3318 = vsel %vm1259, %v2927, 0
  %v3321 = vsel %vm1259, %v2928, 0
  %v3324 = vsel %vm1259, %v2929, 0
  %v3327 = vsel %vm1259, %v2930, 0
  %v3330 = vsel %vm1259, %v2931, 0
  %v3333 = vsel %vm1259, %v2932, 0
  %v3336 = vsel %vm1259, %v2933, 0
  %v3339 = vsel %vm1259, %v2934, 0
  %v3342 = vsel %vm1259, %v2935, 0
  %v3345 = vsel %vm1259, %v2936, 0
  %v3348 = vsel %vm1259, %v2937, 0
  %v3351 = vsel %vm1259, %v2938, 0
  %v3354 = vsel %vm1259, %v2939, 0
  %v3357 = vsel %vm1259, %v2940, 0
  %v3360 = vsel %vm1259, %v2941, 0
  %v3363 = vsel %vm1259, %v2942, 0
  %v3366 = vsel %vm1259, %v2943, 0
  %v3369 = vsel %vm1259, %v2944, 0
  %v3372 = vsel %vm1259, %v2945, 0
  %v3375 = vsel %vm1259, %v2946, 0
  %v3378 = vsel %vm1259, %v2947, 0
  %v3381 = vsel %vm1259, %v2948, 0
  %v3384 = vsel %vm1259, %v2949, 0
  %v3387 = vsel %vm1259, %v2950, 0
  %v3390 = vsel %vm1259, %v2951, 0
  %v3393 = vsel %vm1259, %v2952, 0
  %v3396 = vsel %vm1259, %v2953, 0
  %v3399 = vsel %vm1259, %v2954, 0
  %v3402 = vsel %vm1259, %v2955, 0
  %v3405 = vsel %vm1259, %v2956, 0
  %v3408 = vsel %vm1259, %v2957, 0
  %v3411 = vsel %vm1259, %v2958, 0
  %v3414 = vsel %vm1259, %v2959, 0
  %v3417 = vsel %vm1259, %v2960, 0
  %v3420 = vsel %vm1259, %v2961, 0
  %v3423 = vsel %vm1259, %v2962, 0
  %v3426 = vsel %vm1259, %v2963, 0
  %v3429 = vsel %vm1259, %v2964, 0
  %v3432 = vsel %vm1259, %v2965, 0
  %v3435 = vsel %vm1259, %v2966, 0
  %v3438 = vsel %vm1259, %v2967, 0
  %v3441 = vsel %vm1259, %v2968, 0
  %v3444 = vsel %vm1259, %v2969, 0
  %v3447 = vsel %vm1259, %v2970, 0
  %v3450 = vsel %vm1259, %v2971, 0
  %v3453 = vsel %vm1259, %v2972, 0
  %v3456 = vsel %vm1259, %v2973, 0
  %v3459 = vsel %vm1259, %v2974, 0
  %v3462 = vsel %vm1259, %v2975, 0
  %v3465 = vsel %vm1259, %v2976, 0
  %v3468 = vsel %vm1259, %v2977, 0
  %v3471 = vsel %vm1259, %v2978, 0
  %v3474 = vsel %vm1259, %v2979, 0
  %v3477 = vsel %vm1259, %v2980, 0
  %v3480 = vsel %vm1259, %v2981, 0
  %v3483 = vsel %vm1259, %v2982, 0
  %v3486 = vsel %vm1259, %v2983, 0
  %v3489 = vsel %vm1259, %v2984, 0
  %v3492 = vsel %vm1259, %v2985, 0
  %v3495 = vsel %vm1259, %v2986, 0
  %v3498 = vsel %vm1259, %v2987, 0
  %v3501 = vsel %vm1259, %v2988, 0
  %v3504 = vsel %vm1259, %v2989, 0
  %v3507 = vsel %vm1259, %v2990, 0
  %v3510 = vsel %vm1259, %v2991, 0
  %v3513 = vsel %vm1259, %v2992, 0
  %v3516 = vsel %vm1259, %v2993, 0
  %v3519 = vsel %vm1259, %v2994, 0
  %v3522 = vsel %vm1259, %v2995, 0
  %v3525 = vsel %vm1259, %v2996, 0
  %v3528 = vsel %vm1259, %v2997, 0
  %v3531 = vsel %vm1259, %v2998, 0
  %v3534 = vsel %vm1259, %v2999, 0
  %v3537 = vsel %vm1259, %v3000, 0
  %v3540 = vsel %vm1259, %v3001, 0
  %v3543 = vsel %vm1259, %v3002, 0
  %v3546 = vsel %vm1259, %v3003, 0
  %v3549 = vsel %vm1259, %v3004, 0
  %v3552 = vsel %vm1259, %v3005, 0
  %v3555 = vsel %vm1259, %v3006, 0
  %v3558 = vsel %vm1259, %v3007, 0
  %v3561 = vsel %vm1259, %v3008, 0
  %v3564 = vsel %vm1259, %v3009, 0
  %v3567 = vsel %vm1259, %v3010, 0
  %v3570 = vsel %vm1259, %v3011, 0
  %v3573 = vsel %vm1259, %v3012, 0
  %v3576 = vsel %vm1259, %v3013, 0
  %v3579 = vsel %vm1259, %v3014, 0
  %v3582 = vsel %vm1259, %v3015, 0
  %v3585 = vsel %vm1259, %v3016, 0
  %v3588 = vsel %vm1259, %v3017, 0
  %v3591 = vsel %vm1259, %v3018, 0
  %v3594 = vsel %vm1259, %v3019, 0
  %v3597 = vsel %vm1259, %v3020, 0
  %v3600 = vsel %vm1259, %v3021, 0
  %v3603 = vsel %vm1259, %v3022, 0
  %v3606 = vsel %vm1259, %v3023, 0
  %v3609 = vsel %vm1259, %v3024, 0
  %v3612 = vsel %vm1259, %v3025, 0
  %v3615 = vsel %vm1259, %v3026, 0
  %v3618 = vsel %vm1259, %v3027, 0
  %v3621 = vsel %vm1259, %v3028, 0
  %v3624 = vsel %vm1259, %v3029, 0
  %v3627 = vsel %vm1259, %v3030, 0
  %v3630 = vsel %vm1259, %v3031, 0
  %v3633 = vsel %vm1259, %v3032, 0
  %v3636 = vsel %vm1259, %v3033, 0
  %v3639 = vsel %vm1259, %v3034, 0
  %v3642 = vsel %vm1259, %v3035, 0
  %v3645 = vsel %vm1259, %v3036, 0
  %v3648 = vsel %vm1259, %v3037, 0
  %v3651 = vsel %vm1259, %v3038, 0
  %v3654 = vsel %vm1259, %v3039, 0
  %v3657 = vsel %vm1259, %v3040, 0
  %v3660 = vsel %vm1259, %v3041, 0
  %v3663 = vsel %vm1259, %v3042, 0
  %v3666 = vsel %vm1259, %v3043, 0
  %v3669 = vsel %vm1259, %v3044, 0
  %v3672 = vsel %vm1259, %v3045, 0
  %v3675 = vsel %vm1259, %v3046, 0
  %v3678 = vsel %vm1259, %v3047, 0
  %v3681 = vsel %vm1259, %v3048, 0
  %v3684 = vsel %vm1259, %v3049, 0
  %v3687 = vsel %vm1259, %v3050, 0
  %v3690 = vsel %vm1259, %v3051, 0
  %v3693 = vsel %vm1259, %v3052, 0
  %v3696 = vsel %vm1259, %v3053, 0
  %v3699 = vsel %vm1259, %v3054, 0
  %v3702 = vsel %vm1259, %v3055, 0
  %v3705 = vsel %vm1259, %v3056, 0
  %v3708 = vsel %vm1259, %v3057, 0
  %v3711 = vsel %vm1259, %v3058, 0
  %v3714 = vsel %vm1259, %v3059, 0
  %v3717 = vsel %vm1259, %v3060, 0
  %v3720 = vsel %vm1259, %v3061, 0
  %v3723 = vsel %vm1259, %v3062, 0
  %v3726 = vsel %vm1259, %v3063, 0
  %v3729 = vsel %vm1259, %v3064, 0
  %v3732 = vsel %vm1259, %v3065, 0
  %v3735 = vsel %vm1259, %v3066, 0
  %v3738 = vsel %vm1259, %v3067, 0
  %v3741 = vsel %vm1259, %v3068, 0
  %v3744 = vsel %vm1259, %v3069, 0
  %v3747 = vsel %vm1259, %v3070, 0
  %v3750 = vsel %vm1259, %v3071, 0
  %v3753 = vsel %vm1259, %v3072, 0
  %v3756 = vsel %vm1259, %v3073, 0
  %v3759 = vsel %vm1259, %v3074, 0
  %v3762 = vsel %vm1259, %v3075, 0
  %v3765 = vsel %vm1259, %v3076, 0
  %v3768 = vsel %vm1259, %v3077, 0
  %v3771 = vsel %vm1259, %v3078, 0
  %v3774 = vsel %vm1259, %v3079, 0
  %v3777 = vsel %vm1259, %v3080, 0
  %v3780 = vsel %vm1259, %v3081, 0
  %v3783 = vsel %vm1259, %v3082, 0
  %v3786 = vsel %vm1259, %v3083, 0
  %v3789 = vsel %vm1259, %v3084, 0
  %v3792 = vsel %vm1259, %v3085, 0
  %v3795 = vsel %vm1259, %v3086, 0
  %v3798 = vsel %vm1259, %v3087, 0
  %v3801 = vsel %vm1259, %v3088, 0
  %v3804 = vsel %vm1259, %v3089, 0
  %v3807 = vsel %vm1259, %v3090, 0
  %v3810 = vsel %vm1259, %v3091, 0
  %v3813 = vsel %vm1259, %v3092, 0
  %v3816 = vsel %vm1259, %v3093, 0
  %v3819 = vsel %vm1259, %v3094, 0
  %v3822 = vsel %vm1259, %v3095, 0
  %v3825 = vsel %vm1259, %v3096, 0
  %v3828 = vsel %vm1259, %v3097, 0
  %v3831 = vsel %vm1259, %v3098, 0
  %v3834 = vsel %vm1259, %v3099, 0
  %v3837 = vsel %vm1259, %v3100, 0
  %v3840 = vsel %vm1259, %v3101, 0
  %v3843 = vsel %vm1259, %v3102, 0
  %v3846 = vsel %vm1259, %v3103, 0
  %v3849 = vsel %vm1259, %v3104, 0
  %v3852 = vsel %vm1259, %v3105, 0
  %v3855 = vsel %vm1259, %v3106, 0
  %v3858 = vsel %vm1259, %v3107, 0
  %v3861 = vsel %vm1259, %v3108, 0
  %v3864 = vsel %vm1259, %v3109, 0
  %v3867 = vsel %vm1259, %v3110, 0
  %v3870 = vsel %vm1259, %v3111, 0
  %v3873 = vsel %vm1259, %v3112, 0
  %v3876 = vsel %vm1259, %v3113, 0
  %v3879 = vsel %vm1259, %v3114, 0
  %v3882 = vsel %vm1259, %v3115, 0
  %v3885 = vsel %vm1259, %v3116, 0
  %v3888 = vsel %vm1259, %v3117, 0
  %v3891 = vsel %vm1259, %v3118, 0
  %v3894 = vsel %vm1259, %v3119, 0
  %v3897 = vsel %vm1259, %v3120, 0
  %v3900 = vsel %vm1259, %v3121, 0
  %v3903 = vsel %vm1259, %v3122, 0
  %v3906 = vsel %vm1259, %v3123, 0
  %v3909 = vsel %vm1259, %v3124, 0
  %v3912 = vsel %vm1259, %v3125, 0
  %v3915 = vsel %vm1259, %v3126, 0
  %v3918 = vsel %vm1259, %v3127, 0
  %v3921 = vsel %vm1259, %v3128, 0
  %v3924 = vsel %vm1259, %v3129, 0
  %v3927 = vsel %vm1259, %v3130, 0
  %v3930 = vsel %vm1259, %v3131, 0
  %v3933 = vsel %vm1259, %v3132, 0
  %v3936 = vsel %vm1259, %v3133, 0
  %v3939 = vsel %vm1259, %v3134, 0
  %v3942 = vsel %vm1259, %v3135, 0
  %v3945 = vsel %vm1259, %v3136, 0
  %v3948 = vsel %vm1259, %v3137, 0
  %v3951 = vsel %vm1259, %v3138, 0
  %v3954 = vsel %vm1259, %v3139, 0
  %v3957 = vsel %vm1259, %v3140, 0
  %v3960 = vsel %vm1259, %v3141, 0
  %v3963 = vsel %vm1259, %v3142, 0
  %v3966 = vsel %vm1259, %v3143, 0
  %v3969 = vsel %vm1259, %v3144, 0
  %v3972 = vsel %vm1259, %v3145, 0
  %v3975 = vsel %vm1259, %v3146, 0
  %v3978 = vsel %vm1259, %v3147, 0
  %v3981 = vsel %vm1259, %v3148, 0
  %v3984 = vsel %vm1259, %v3149, 0
  %v3987 = vsel %vm1259, %v3150, 0
  %v3990 = vsel %vm1259, %v3151, 0
  %v3993 = vsel %vm1259, %v3152, 0
  %v3996 = vsel %vm1259, %v3153, 0
  %v3999 = vsel %vm1259, %v3154, 0
  %v4002 = vsel %vm1259, %v3155, 0
  %v4005 = vsel %vm1259, %v3156, 0
  %v4008 = vsel %vm1259, %v3157, 0
  %v4011 = vsel %vm1259, %v3158, 0
  %v4014 = vsel %vm1259, %v3159, 0
  %v4017 = vsel %vm1259, %v3160, 0
  %v4020 = vsel %vm1259, %v3161, 0
  %v4023 = vsel %vm1259, %v3162, 0
  %v4026 = vsel %vm1259, %v3163, 0
  %v4029 = vsel %vm1259, %v3164, 0
  %4031 = vmatprep.subr.mxu0 0.0
  %4032 = vmatpush1.msra.mxu0 0.0
  %4033 = vmatprep.subr.mxu0 0.0
  %4034 = vmatpush1.msra.mxu0 0.0
  %4035 = vmatprep.subr.mxu0 0.0
  %4036 = vmatpush1.msra.mxu0 0.0
  %4037 = vmatprep.subr.mxu0 0.0
  %4038 = vmatpush1.msra.mxu0 0.0
  %4039 = vmatprep.subr.mxu0 0.0
  %4040 = vmatpush1.msra.mxu0 0.0
  %4041 = vmatprep.subr.mxu0 0.0
  %4042 = vmatpush1.msra.mxu0 0.0
  %4043 = vmatprep.subr.mxu0 0.0
  %4044 = vmatpush1.msra.mxu0 0.0
  %4045 = vmatprep.subr.mxu0 0.0
  %4046 = vmatpush1.msra.mxu0 0.0
  %4047 = vmatprep.subr.mxu0 0.0
  %4048 = vmatpush1.msra.mxu0 0.0
  %4049 = vmatprep.subr.mxu0 0.0
  %4050 = vmatpush1.msra.mxu0 0.0
  %4051 = vmatprep.subr.mxu0 0.0
  %4052 = vmatpush1.msra.mxu0 0.0
  %4053 = vmatprep.subr.mxu0 0.0
  %4054 = vmatpush1.msra.mxu0 0.0
  %4055 = vmatprep.subr.mxu0 0.0
  %4056 = vmatpush1.msra.mxu0 0.0
  %4057 = vmatprep.subr.mxu0 0.0
  %4058 = vmatpush1.msra.mxu0 0.0
  %4059 = vmatprep.subr.mxu0 0.0
  %4060 = vmatpush1.msra.mxu0 %v3166
  %4061 = vmatprep.subr.mxu0 0.0
  %4062 = vmatpush1.msra.mxu0 %v3165
  %4063 = vmatprep.subr.mxu0 0.0
  %4064 = vmatpush2.msra.mxu0 0.0
  %4065 = vmatprep.subr.mxu0 0.0
  %4066 = vmatpush2.msra.mxu0 0.0
  %4067 = vmatprep.subr.mxu0 0.0
  %4068 = vmatpush2.msra.mxu0 0.0
  %4069 = vmatprep.subr.mxu0 0.0
  %4070 = vmatpush2.msra.mxu0 0.0
  %4071 = vmatprep.subr.mxu0 0.0
  %4072 = vmatpush2.msra.mxu0 0.0
  %4073 = vmatprep.subr.mxu0 0.0
  %4074 = vmatpush2.msra.mxu0 0.0
  %4075 = vmatprep.subr.mxu0 0.0
  %4076 = vmatpush2.msra.mxu0 0.0
  %4077 = vmatprep.subr.mxu0 0.0
  %4078 = vmatpush2.msra.mxu0 0.0
  %4079 = vmatprep.subr.mxu0 0.0
  %4080 = vmatpush2.msra.mxu0 0.0
  %4081 = vmatprep.subr.mxu0 0.0
  %4082 = vmatpush2.msra.mxu0 0.0
  %4083 = vmatprep.subr.mxu0 0.0
  %4084 = vmatpush2.msra.mxu0 0.0
  %4085 = vmatprep.subr.mxu0 0.0
  %4086 = vmatpush2.msra.mxu0 0.0
  %4087 = vmatprep.subr.mxu0 0.0
  %4088 = vmatpush2.msra.mxu0 0.0
  %4089 = vmatprep.subr.mxu0 0.0
  %4090 = vmatpush2.msra.mxu0 0.0
  %4091 = vmatprep.subr.mxu0 0.0
  %4092 = vmatpush2.msra.mxu0 0.0
  %4093 = vmatprep.subr.mxu0 0.0
  %4094 = vmatpush2.msra.mxu0 0.0
  %4095 = vmatprep.mubr.f32.mxu0 0.0
  %4096 = vmatmul.mubr.f32.gmra.mxu0 %v3168
  %v4097 = vpop.f32.mrf.mxu0
  %v4098 = vadd.f32 0.0, %v4097
  %v4099 = vpop.f32.mrf.mxu0
  %4100 = vmatprep.mubr.f32.mxu0 0.0
  %4101 = vmatmul.mubr.f32.gmra.mxu0 %v3171
  %v4102 = vpop.f32.mrf.mxu0
  %v4103 = vadd.f32 0.0, %v4102
  %v4104 = vpop.f32.mrf.mxu0
  %4105 = vmatprep.mubr.f32.mxu0 0.0
  %4106 = vmatmul.mubr.f32.gmra.mxu0 %v3174
  %v4107 = vpop.f32.mrf.mxu0
  %v4108 = vadd.f32 0.0, %v4107
  %v4109 = vpop.f32.mrf.mxu0
  %4110 = vmatprep.mubr.f32.mxu0 0.0
  %4111 = vmatmul.mubr.f32.gmra.mxu0 %v3177
  %v4112 = vpop.f32.mrf.mxu0
  %v4113 = vadd.f32 0.0, %v4112
  %v4114 = vpop.f32.mrf.mxu0
  %4115 = vmatprep.mubr.f32.mxu0 0.0
  %4116 = vmatmul.mubr.f32.gmra.mxu0 %v3180
  %v4117 = vpop.f32.mrf.mxu0
  %v4118 = vadd.f32 0.0, %v4117
  %v4119 = vpop.f32.mrf.mxu0
  %4120 = vmatprep.mubr.f32.mxu0 0.0
  %4121 = vmatmul.mubr.f32.gmra.mxu0 %v3183
  %v4122 = vpop.f32.mrf.mxu0
  %v4123 = vadd.f32 0.0, %v4122
  %v4124 = vpop.f32.mrf.mxu0
  %4125 = vmatprep.mubr.f32.mxu0 0.0
  %4126 = vmatmul.mubr.f32.gmra.mxu0 %v3186
  %v4127 = vpop.f32.mrf.mxu0
  %v4128 = vadd.f32 0.0, %v4127
  %v4129 = vpop.f32.mrf.mxu0
  %4130 = vmatprep.mubr.f32.mxu0 0.0
  %4131 = vmatmul.mubr.f32.gmra.mxu0 %v3189
  %v4132 = vpop.f32.mrf.mxu0
  %v4133 = vadd.f32 0.0, %v4132
  %v4134 = vpop.f32.mrf.mxu0
  %4135 = vmatprep.mubr.f32.mxu0 0.0
  %4136 = vmatmul.mubr.f32.gmra.mxu0 %v3192
  %v4137 = vpop.f32.mrf.mxu0
  %v4138 = vadd.f32 0.0, %v4137
  %v4139 = vpop.f32.mrf.mxu0
  %4140 = vmatprep.mubr.f32.mxu0 0.0
  %4141 = vmatmul.mubr.f32.gmra.mxu0 %v3195
  %v4142 = vpop.f32.mrf.mxu0
  %v4143 = vadd.f32 0.0, %v4142
  %v4144 = vpop.f32.mrf.mxu0
  %4145 = vmatprep.mubr.f32.mxu0 0.0
  %4146 = vmatmul.mubr.f32.gmra.mxu0 %v3198
  %v4147 = vpop.f32.mrf.mxu0
  %v4148 = vadd.f32 0.0, %v4147
  %v4149 = vpop.f32.mrf.mxu0
  %4150 = vmatprep.mubr.f32.mxu0 0.0
  %4151 = vmatmul.mubr.f32.gmra.mxu0 %v3201
  %v4152 = vpop.f32.mrf.mxu0
  %v4153 = vadd.f32 0.0, %v4152
  %v4154 = vpop.f32.mrf.mxu0
  %4155 = vmatprep.mubr.f32.mxu0 0.0
  %4156 = vmatmul.mubr.f32.gmra.mxu0 %v3204
  %v4157 = vpop.f32.mrf.mxu0
  %v4158 = vadd.f32 0.0, %v4157
  %v4159 = vpop.f32.mrf.mxu0
  %4160 = vmatprep.mubr.f32.mxu0 0.0
  %4161 = vmatmul.mubr.f32.gmra.mxu0 %v3207
  %v4162 = vpop.f32.mrf.mxu0
  %v4163 = vadd.f32 0.0, %v4162
  %v4164 = vpop.f32.mrf.mxu0
  %4165 = vmatprep.mubr.f32.mxu0 0.0
  %4166 = vmatmul.mubr.f32.gmra.mxu0 %v3210
  %v4167 = vpop.f32.mrf.mxu0
  %v4168 = vadd.f32 0.0, %v4167
  %v4169 = vpop.f32.mrf.mxu0
  %4170 = vmatprep.mubr.f32.mxu0 0.0
  %4171 = vmatmul.mubr.f32.gmra.mxu0 %v3213
  %v4172 = vpop.f32.mrf.mxu0
  %v4173 = vadd.f32 0.0, %v4172
  %v4174 = vpop.f32.mrf.mxu0
  %4175 = vmatprep.mubr.f32.mxu0 0.0
  %4176 = vmatmul.mubr.f32.gmra.mxu0 %v3216
  %v4177 = vpop.f32.mrf.mxu0
  %v4178 = vadd.f32 0.0, %v4177
  %v4179 = vpop.f32.mrf.mxu0
  %4180 = vmatprep.mubr.f32.mxu0 0.0
  %4181 = vmatmul.mubr.f32.gmra.mxu0 %v3219
  %v4182 = vpop.f32.mrf.mxu0
  %v4183 = vadd.f32 0.0, %v4182
  %v4184 = vpop.f32.mrf.mxu0
  %4185 = vmatprep.mubr.f32.mxu0 0.0
  %4186 = vmatmul.mubr.f32.gmra.mxu0 %v3222
  %v4187 = vpop.f32.mrf.mxu0
  %v4188 = vadd.f32 0.0, %v4187
  %v4189 = vpop.f32.mrf.mxu0
  %4190 = vmatprep.mubr.f32.mxu0 0.0
  %4191 = vmatmul.mubr.f32.gmra.mxu0 %v3225
  %v4192 = vpop.f32.mrf.mxu0
  %v4193 = vadd.f32 0.0, %v4192
  %v4194 = vpop.f32.mrf.mxu0
  %4195 = vmatprep.mubr.f32.mxu0 0.0
  %4196 = vmatmul.mubr.f32.gmra.mxu0 %v3228
  %v4197 = vpop.f32.mrf.mxu0
  %v4198 = vadd.f32 0.0, %v4197
  %v4199 = vpop.f32.mrf.mxu0
  %4200 = vmatprep.mubr.f32.mxu0 0.0
  %4201 = vmatmul.mubr.f32.gmra.mxu0 %v3231
  %v4202 = vpop.f32.mrf.mxu0
  %v4203 = vadd.f32 0.0, %v4202
  %v4204 = vpop.f32.mrf.mxu0
  %4205 = vmatprep.mubr.f32.mxu0 0.0
  %4206 = vmatmul.mubr.f32.gmra.mxu0 %v3234
  %v4207 = vpop.f32.mrf.mxu0
  %v4208 = vadd.f32 0.0, %v4207
  %v4209 = vpop.f32.mrf.mxu0
  %4210 = vmatprep.mubr.f32.mxu0 0.0
  %4211 = vmatmul.mubr.f32.gmra.mxu0 %v3237
  %v4212 = vpop.f32.mrf.mxu0
  %v4213 = vadd.f32 0.0, %v4212
  %v4214 = vpop.f32.mrf.mxu0
  %4215 = vmatprep.mubr.f32.mxu0 0.0
  %4216 = vmatmul.mubr.f32.gmra.mxu0 %v3240
  %v4217 = vpop.f32.mrf.mxu0
  %v4218 = vadd.f32 0.0, %v4217
  %v4219 = vpop.f32.mrf.mxu0
  %4220 = vmatprep.mubr.f32.mxu0 0.0
  %4221 = vmatmul.mubr.f32.gmra.mxu0 %v3243
  %v4222 = vpop.f32.mrf.mxu0
  %v4223 = vadd.f32 0.0, %v4222
  %v4224 = vpop.f32.mrf.mxu0
  %4225 = vmatprep.mubr.f32.mxu0 0.0
  %4226 = vmatmul.mubr.f32.gmra.mxu0 %v3246
  %v4227 = vpop.f32.mrf.mxu0
  %v4228 = vadd.f32 0.0, %v4227
  %v4229 = vpop.f32.mrf.mxu0
  %4230 = vmatprep.mubr.f32.mxu0 0.0
  %4231 = vmatmul.mubr.f32.gmra.mxu0 %v3249
  %v4232 = vpop.f32.mrf.mxu0
  %v4233 = vadd.f32 0.0, %v4232
  %v4234 = vpop.f32.mrf.mxu0
  %4235 = vmatprep.mubr.f32.mxu0 0.0
  %4236 = vmatmul.mubr.f32.gmra.mxu0 %v3252
  %v4237 = vpop.f32.mrf.mxu0
  %v4238 = vadd.f32 0.0, %v4237
  %v4239 = vpop.f32.mrf.mxu0
  %4240 = vmatprep.mubr.f32.mxu0 0.0
  %4241 = vmatmul.mubr.f32.gmra.mxu0 %v3255
  %v4242 = vpop.f32.mrf.mxu0
  %v4243 = vadd.f32 0.0, %v4242
  %v4244 = vpop.f32.mrf.mxu0
  %4245 = vmatprep.mubr.f32.mxu0 0.0
  %4246 = vmatmul.mubr.f32.gmra.mxu0 %v3258
  %v4247 = vpop.f32.mrf.mxu0
  %v4248 = vadd.f32 0.0, %v4247
  %v4249 = vpop.f32.mrf.mxu0
  %4250 = vmatprep.mubr.f32.mxu0 0.0
  %4251 = vmatmul.mubr.f32.gmra.mxu0 %v3261
  %v4252 = vpop.f32.mrf.mxu0
  %v4253 = vadd.f32 0.0, %v4252
  %v4254 = vpop.f32.mrf.mxu0
  %4255 = vmatprep.mubr.f32.mxu0 0.0
  %4256 = vmatmul.mubr.f32.gmra.mxu0 %v3264
  %v4257 = vpop.f32.mrf.mxu0
  %v4258 = vadd.f32 0.0, %v4257
  %v4259 = vpop.f32.mrf.mxu0
  %4260 = vmatprep.mubr.f32.mxu0 0.0
  %4261 = vmatmul.mubr.f32.gmra.mxu0 %v3267
  %v4262 = vpop.f32.mrf.mxu0
  %v4263 = vadd.f32 0.0, %v4262
  %v4264 = vpop.f32.mrf.mxu0
  %4265 = vmatprep.mubr.f32.mxu0 0.0
  %4266 = vmatmul.mubr.f32.gmra.mxu0 %v3270
  %v4267 = vpop.f32.mrf.mxu0
  %v4268 = vadd.f32 0.0, %v4267
  %v4269 = vpop.f32.mrf.mxu0
  %4270 = vmatprep.mubr.f32.mxu0 0.0
  %4271 = vmatmul.mubr.f32.gmra.mxu0 %v3273
  %v4272 = vpop.f32.mrf.mxu0
  %v4273 = vadd.f32 0.0, %v4272
  %v4274 = vpop.f32.mrf.mxu0
  %4275 = vmatprep.mubr.f32.mxu0 0.0
  %4276 = vmatmul.mubr.f32.gmra.mxu0 %v3276
  %v4277 = vpop.f32.mrf.mxu0
  %v4278 = vadd.f32 0.0, %v4277
  %v4279 = vpop.f32.mrf.mxu0
  %4280 = vmatprep.mubr.f32.mxu0 0.0
  %4281 = vmatmul.mubr.f32.gmra.mxu0 %v3279
  %v4282 = vpop.f32.mrf.mxu0
  %v4283 = vadd.f32 0.0, %v4282
  %v4284 = vpop.f32.mrf.mxu0
  %4285 = vmatprep.mubr.f32.mxu0 0.0
  %4286 = vmatmul.mubr.f32.gmra.mxu0 %v3282
  %v4287 = vpop.f32.mrf.mxu0
  %v4288 = vadd.f32 0.0, %v4287
  %v4289 = vpop.f32.mrf.mxu0
  %4290 = vmatprep.mubr.f32.mxu0 0.0
  %4291 = vmatmul.mubr.f32.gmra.mxu0 %v3285
  %v4292 = vpop.f32.mrf.mxu0
  %v4293 = vadd.f32 0.0, %v4292
  %v4294 = vpop.f32.mrf.mxu0
  %4295 = vmatprep.mubr.f32.mxu0 0.0
  %4296 = vmatmul.mubr.f32.gmra.mxu0 %v3288
  %v4297 = vpop.f32.mrf.mxu0
  %v4298 = vadd.f32 0.0, %v4297
  %v4299 = vpop.f32.mrf.mxu0
  %4300 = vmatprep.mubr.f32.mxu0 0.0
  %4301 = vmatmul.mubr.f32.gmra.mxu0 %v3291
  %v4302 = vpop.f32.mrf.mxu0
  %v4303 = vadd.f32 0.0, %v4302
  %v4304 = vpop.f32.mrf.mxu0
  %4305 = vmatprep.mubr.f32.mxu0 0.0
  %4306 = vmatmul.mubr.f32.gmra.mxu0 %v3294
  %v4307 = vpop.f32.mrf.mxu0
  %v4308 = vadd.f32 0.0, %v4307
  %v4309 = vpop.f32.mrf.mxu0
  %4310 = vmatprep.mubr.f32.mxu0 0.0
  %4311 = vmatmul.mubr.f32.gmra.mxu0 %v3297
  %v4312 = vpop.f32.mrf.mxu0
  %v4313 = vadd.f32 0.0, %v4312
  %v4314 = vpop.f32.mrf.mxu0
  %4315 = vmatprep.mubr.f32.mxu0 0.0
  %4316 = vmatmul.mubr.f32.gmra.mxu0 %v3300
  %v4317 = vpop.f32.mrf.mxu0
  %v4318 = vadd.f32 0.0, %v4317
  %v4319 = vpop.f32.mrf.mxu0
  %4320 = vmatprep.mubr.f32.mxu0 0.0
  %4321 = vmatmul.mubr.f32.gmra.mxu0 %v3303
  %v4322 = vpop.f32.mrf.mxu0
  %v4323 = vadd.f32 0.0, %v4322
  %v4324 = vpop.f32.mrf.mxu0
  %4325 = vmatprep.mubr.f32.mxu0 0.0
  %4326 = vmatmul.mubr.f32.gmra.mxu0 %v3306
  %v4327 = vpop.f32.mrf.mxu0
  %v4328 = vadd.f32 0.0, %v4327
  %v4329 = vpop.f32.mrf.mxu0
  %4330 = vmatprep.mubr.f32.mxu0 0.0
  %4331 = vmatmul.mubr.f32.gmra.mxu0 %v3309
  %v4332 = vpop.f32.mrf.mxu0
  %v4333 = vadd.f32 0.0, %v4332
  %v4334 = vpop.f32.mrf.mxu0
  %4335 = vmatprep.mubr.f32.mxu0 0.0
  %4336 = vmatmul.mubr.f32.gmra.mxu0 %v3312
  %v4337 = vpop.f32.mrf.mxu0
  %v4338 = vadd.f32 0.0, %v4337
  %v4339 = vpop.f32.mrf.mxu0
  %4340 = vmatprep.mubr.f32.mxu0 0.0
  %4341 = vmatmul.mubr.f32.gmra.mxu0 %v3315
  %v4342 = vpop.f32.mrf.mxu0
  %v4343 = vadd.f32 0.0, %v4342
  %v4344 = vpop.f32.mrf.mxu0
  %4345 = vmatprep.mubr.f32.mxu0 0.0
  %4346 = vmatmul.mubr.f32.gmra.mxu0 %v3318
  %v4347 = vpop.f32.mrf.mxu0
  %v4348 = vadd.f32 0.0, %v4347
  %v4349 = vpop.f32.mrf.mxu0
  %4350 = vmatprep.mubr.f32.mxu0 0.0
  %4351 = vmatmul.mubr.f32.gmra.mxu0 %v3321
  %v4352 = vpop.f32.mrf.mxu0
  %v4353 = vadd.f32 0.0, %v4352
  %v4354 = vpop.f32.mrf.mxu0
  %4355 = vmatprep.mubr.f32.mxu0 0.0
  %4356 = vmatmul.mubr.f32.gmra.mxu0 %v3324
  %v4357 = vpop.f32.mrf.mxu0
  %v4358 = vadd.f32 0.0, %v4357
  %v4359 = vpop.f32.mrf.mxu0
  %4360 = vmatprep.mubr.f32.mxu0 0.0
  %4361 = vmatmul.mubr.f32.gmra.mxu0 %v3327
  %v4362 = vpop.f32.mrf.mxu0
  %v4363 = vadd.f32 0.0, %v4362
  %v4364 = vpop.f32.mrf.mxu0
  %4365 = vmatprep.mubr.f32.mxu0 0.0
  %4366 = vmatmul.mubr.f32.gmra.mxu0 %v3330
  %v4367 = vpop.f32.mrf.mxu0
  %v4368 = vadd.f32 0.0, %v4367
  %v4369 = vpop.f32.mrf.mxu0
  %4370 = vmatprep.mubr.f32.mxu0 0.0
  %4371 = vmatmul.mubr.f32.gmra.mxu0 %v3333
  %v4372 = vpop.f32.mrf.mxu0
  %v4373 = vadd.f32 0.0, %v4372
  %v4374 = vpop.f32.mrf.mxu0
  %4375 = vmatprep.mubr.f32.mxu0 0.0
  %4376 = vmatmul.mubr.f32.gmra.mxu0 %v3336
  %v4377 = vpop.f32.mrf.mxu0
  %v4378 = vadd.f32 0.0, %v4377
  %v4379 = vpop.f32.mrf.mxu0
  %4380 = vmatprep.mubr.f32.mxu0 0.0
  %4381 = vmatmul.mubr.f32.gmra.mxu0 %v3339
  %v4382 = vpop.f32.mrf.mxu0
  %v4383 = vadd.f32 0.0, %v4382
  %v4384 = vpop.f32.mrf.mxu0
  %4385 = vmatprep.mubr.f32.mxu0 0.0
  %4386 = vmatmul.mubr.f32.gmra.mxu0 %v3342
  %v4387 = vpop.f32.mrf.mxu0
  %v4388 = vadd.f32 0.0, %v4387
  %v4389 = vpop.f32.mrf.mxu0
  %4390 = vmatprep.mubr.f32.mxu0 0.0
  %4391 = vmatmul.mubr.f32.gmra.mxu0 %v3345
  %v4392 = vpop.f32.mrf.mxu0
  %v4393 = vadd.f32 0.0, %v4392
  %v4394 = vpop.f32.mrf.mxu0
  %4395 = vmatprep.mubr.f32.mxu0 0.0
  %4396 = vmatmul.mubr.f32.gmra.mxu0 %v3348
  %v4397 = vpop.f32.mrf.mxu0
  %v4398 = vadd.f32 0.0, %v4397
  %v4399 = vpop.f32.mrf.mxu0
  %4400 = vmatprep.mubr.f32.mxu0 0.0
  %4401 = vmatmul.mubr.f32.gmra.mxu0 %v3351
  %v4402 = vpop.f32.mrf.mxu0
  %v4403 = vadd.f32 0.0, %v4402
  %v4404 = vpop.f32.mrf.mxu0
  %4405 = vmatprep.mubr.f32.mxu0 0.0
  %4406 = vmatmul.mubr.f32.gmra.mxu0 %v3354
  %v4407 = vpop.f32.mrf.mxu0
  %v4408 = vadd.f32 0.0, %v4407
  %v4409 = vpop.f32.mrf.mxu0
  %4410 = vmatprep.mubr.f32.mxu0 0.0
  %4411 = vmatmul.mubr.f32.gmra.mxu0 %v3357
  %v4412 = vpop.f32.mrf.mxu0
  %v4413 = vadd.f32 0.0, %v4412
  %v4414 = vpop.f32.mrf.mxu0
  %4415 = vmatprep.mubr.f32.mxu0 0.0
  %4416 = vmatmul.mubr.f32.gmra.mxu0 %v3360
  %v4417 = vpop.f32.mrf.mxu0
  %v4418 = vadd.f32 0.0, %v4417
  %v4419 = vpop.f32.mrf.mxu0
  %4420 = vmatprep.mubr.f32.mxu0 0.0
  %4421 = vmatmul.mubr.f32.gmra.mxu0 %v3363
  %v4422 = vpop.f32.mrf.mxu0
  %v4423 = vadd.f32 0.0, %v4422
  %v4424 = vpop.f32.mrf.mxu0
  %4425 = vmatprep.mubr.f32.mxu0 0.0
  %4426 = vmatmul.mubr.f32.gmra.mxu0 %v3366
  %v4427 = vpop.f32.mrf.mxu0
  %v4428 = vadd.f32 0.0, %v4427
  %v4429 = vpop.f32.mrf.mxu0
  %4430 = vmatprep.mubr.f32.mxu0 0.0
  %4431 = vmatmul.mubr.f32.gmra.mxu0 %v3369
  %v4432 = vpop.f32.mrf.mxu0
  %v4433 = vadd.f32 0.0, %v4432
  %v4434 = vpop.f32.mrf.mxu0
  %4435 = vmatprep.mubr.f32.mxu0 0.0
  %4436 = vmatmul.mubr.f32.gmra.mxu0 %v3372
  %v4437 = vpop.f32.mrf.mxu0
  %v4438 = vadd.f32 0.0, %v4437
  %v4439 = vpop.f32.mrf.mxu0
  %4440 = vmatprep.mubr.f32.mxu0 0.0
  %4441 = vmatmul.mubr.f32.gmra.mxu0 %v3375
  %v4442 = vpop.f32.mrf.mxu0
  %v4443 = vadd.f32 0.0, %v4442
  %v4444 = vpop.f32.mrf.mxu0
  %4445 = vmatprep.mubr.f32.mxu0 0.0
  %4446 = vmatmul.mubr.f32.gmra.mxu0 %v3378
  %v4447 = vpop.f32.mrf.mxu0
  %v4448 = vadd.f32 0.0, %v4447
  %v4449 = vpop.f32.mrf.mxu0
  %4450 = vmatprep.mubr.f32.mxu0 0.0
  %4451 = vmatmul.mubr.f32.gmra.mxu0 %v3381
  %v4452 = vpop.f32.mrf.mxu0
  %v4453 = vadd.f32 0.0, %v4452
  %v4454 = vpop.f32.mrf.mxu0
  %4455 = vmatprep.mubr.f32.mxu0 0.0
  %4456 = vmatmul.mubr.f32.gmra.mxu0 %v3384
  %v4457 = vpop.f32.mrf.mxu0
  %v4458 = vadd.f32 0.0, %v4457
  %v4459 = vpop.f32.mrf.mxu0
  %4460 = vmatprep.mubr.f32.mxu0 0.0
  %4461 = vmatmul.mubr.f32.gmra.mxu0 %v3387
  %v4462 = vpop.f32.mrf.mxu0
  %v4463 = vadd.f32 0.0, %v4462
  %v4464 = vpop.f32.mrf.mxu0
  %4465 = vmatprep.mubr.f32.mxu0 0.0
  %4466 = vmatmul.mubr.f32.gmra.mxu0 %v3390
  %v4467 = vpop.f32.mrf.mxu0
  %v4468 = vadd.f32 0.0, %v4467
  %v4469 = vpop.f32.mrf.mxu0
  %4470 = vmatprep.mubr.f32.mxu0 0.0
  %4471 = vmatmul.mubr.f32.gmra.mxu0 %v3393
  %v4472 = vpop.f32.mrf.mxu0
  %v4473 = vadd.f32 0.0, %v4472
  %v4474 = vpop.f32.mrf.mxu0
  %4475 = vmatprep.mubr.f32.mxu0 0.0
  %4476 = vmatmul.mubr.f32.gmra.mxu0 %v3396
  %v4477 = vpop.f32.mrf.mxu0
  %v4478 = vadd.f32 0.0, %v4477
  %v4479 = vpop.f32.mrf.mxu0
  %4480 = vmatprep.mubr.f32.mxu0 0.0
  %4481 = vmatmul.mubr.f32.gmra.mxu0 %v3399
  %v4482 = vpop.f32.mrf.mxu0
  %v4483 = vadd.f32 0.0, %v4482
  %v4484 = vpop.f32.mrf.mxu0
  %4485 = vmatprep.mubr.f32.mxu0 0.0
  %4486 = vmatmul.mubr.f32.gmra.mxu0 %v3402
  %v4487 = vpop.f32.mrf.mxu0
  %v4488 = vadd.f32 0.0, %v4487
  %v4489 = vpop.f32.mrf.mxu0
  %4490 = vmatprep.mubr.f32.mxu0 0.0
  %4491 = vmatmul.mubr.f32.gmra.mxu0 %v3405
  %v4492 = vpop.f32.mrf.mxu0
  %v4493 = vadd.f32 0.0, %v4492
  %v4494 = vpop.f32.mrf.mxu0
  %4495 = vmatprep.mubr.f32.mxu0 0.0
  %4496 = vmatmul.mubr.f32.gmra.mxu0 %v3408
  %v4497 = vpop.f32.mrf.mxu0
  %v4498 = vadd.f32 0.0, %v4497
  %v4499 = vpop.f32.mrf.mxu0
  %4500 = vmatprep.mubr.f32.mxu0 0.0
  %4501 = vmatmul.mubr.f32.gmra.mxu0 %v3411
  %v4502 = vpop.f32.mrf.mxu0
  %v4503 = vadd.f32 0.0, %v4502
  %v4504 = vpop.f32.mrf.mxu0
  %4505 = vmatprep.mubr.f32.mxu0 0.0
  %4506 = vmatmul.mubr.f32.gmra.mxu0 %v3414
  %v4507 = vpop.f32.mrf.mxu0
  %v4508 = vadd.f32 0.0, %v4507
  %v4509 = vpop.f32.mrf.mxu0
  %4510 = vmatprep.mubr.f32.mxu0 0.0
  %4511 = vmatmul.mubr.f32.gmra.mxu0 %v3417
  %v4512 = vpop.f32.mrf.mxu0
  %v4513 = vadd.f32 0.0, %v4512
  %v4514 = vpop.f32.mrf.mxu0
  %4515 = vmatprep.mubr.f32.mxu0 0.0
  %4516 = vmatmul.mubr.f32.gmra.mxu0 %v3420
  %v4517 = vpop.f32.mrf.mxu0
  %v4518 = vadd.f32 0.0, %v4517
  %v4519 = vpop.f32.mrf.mxu0
  %4520 = vmatprep.mubr.f32.mxu0 0.0
  %4521 = vmatmul.mubr.f32.gmra.mxu0 %v3423
  %v4522 = vpop.f32.mrf.mxu0
  %v4523 = vadd.f32 0.0, %v4522
  %v4524 = vpop.f32.mrf.mxu0
  %4525 = vmatprep.mubr.f32.mxu0 0.0
  %4526 = vmatmul.mubr.f32.gmra.mxu0 %v3426
  %v4527 = vpop.f32.mrf.mxu0
  %v4528 = vadd.f32 0.0, %v4527
  %v4529 = vpop.f32.mrf.mxu0
  %4530 = vmatprep.mubr.f32.mxu0 0.0
  %4531 = vmatmul.mubr.f32.gmra.mxu0 %v3429
  %v4532 = vpop.f32.mrf.mxu0
  %v4533 = vadd.f32 0.0, %v4532
  %v4534 = vpop.f32.mrf.mxu0
  %4535 = vmatprep.mubr.f32.mxu0 0.0
  %4536 = vmatmul.mubr.f32.gmra.mxu0 %v3432
  %v4537 = vpop.f32.mrf.mxu0
  %v4538 = vadd.f32 0.0, %v4537
  %v4539 = vpop.f32.mrf.mxu0
  %4540 = vmatprep.mubr.f32.mxu0 0.0
  %4541 = vmatmul.mubr.f32.gmra.mxu0 %v3435
  %v4542 = vpop.f32.mrf.mxu0
  %v4543 = vadd.f32 0.0, %v4542
  %v4544 = vpop.f32.mrf.mxu0
  %4545 = vmatprep.mubr.f32.mxu0 0.0
  %4546 = vmatmul.mubr.f32.gmra.mxu0 %v3438
  %v4547 = vpop.f32.mrf.mxu0
  %v4548 = vadd.f32 0.0, %v4547
  %v4549 = vpop.f32.mrf.mxu0
  %4550 = vmatprep.mubr.f32.mxu0 0.0
  %4551 = vmatmul.mubr.f32.gmra.mxu0 %v3441
  %v4552 = vpop.f32.mrf.mxu0
  %v4553 = vadd.f32 0.0, %v4552
  %v4554 = vpop.f32.mrf.mxu0
  %4555 = vmatprep.mubr.f32.mxu0 0.0
  %4556 = vmatmul.mubr.f32.gmra.mxu0 %v3444
  %v4557 = vpop.f32.mrf.mxu0
  %v4558 = vadd.f32 0.0, %v4557
  %v4559 = vpop.f32.mrf.mxu0
  %4560 = vmatprep.mubr.f32.mxu0 0.0
  %4561 = vmatmul.mubr.f32.gmra.mxu0 %v3447
  %v4562 = vpop.f32.mrf.mxu0
  %v4563 = vadd.f32 0.0, %v4562
  %v4564 = vpop.f32.mrf.mxu0
  %4565 = vmatprep.mubr.f32.mxu0 0.0
  %4566 = vmatmul.mubr.f32.gmra.mxu0 %v3450
  %v4567 = vpop.f32.mrf.mxu0
  %v4568 = vadd.f32 0.0, %v4567
  %v4569 = vpop.f32.mrf.mxu0
  %4570 = vmatprep.mubr.f32.mxu0 0.0
  %4571 = vmatmul.mubr.f32.gmra.mxu0 %v3453
  %v4572 = vpop.f32.mrf.mxu0
  %v4573 = vadd.f32 0.0, %v4572
  %v4574 = vpop.f32.mrf.mxu0
  %4575 = vmatprep.mubr.f32.mxu0 0.0
  %4576 = vmatmul.mubr.f32.gmra.mxu0 %v3456
  %v4577 = vpop.f32.mrf.mxu0
  %v4578 = vadd.f32 0.0, %v4577
  %v4579 = vpop.f32.mrf.mxu0
  %4580 = vmatprep.mubr.f32.mxu0 0.0
  %4581 = vmatmul.mubr.f32.gmra.mxu0 %v3459
  %v4582 = vpop.f32.mrf.mxu0
  %v4583 = vadd.f32 0.0, %v4582
  %v4584 = vpop.f32.mrf.mxu0
  %4585 = vmatprep.mubr.f32.mxu0 0.0
  %4586 = vmatmul.mubr.f32.gmra.mxu0 %v3462
  %v4587 = vpop.f32.mrf.mxu0
  %v4588 = vadd.f32 0.0, %v4587
  %v4589 = vpop.f32.mrf.mxu0
  %4590 = vmatprep.mubr.f32.mxu0 0.0
  %4591 = vmatmul.mubr.f32.gmra.mxu0 %v3465
  %v4592 = vpop.f32.mrf.mxu0
  %v4593 = vadd.f32 0.0, %v4592
  %v4594 = vpop.f32.mrf.mxu0
  %4595 = vmatprep.mubr.f32.mxu0 0.0
  %4596 = vmatmul.mubr.f32.gmra.mxu0 %v3468
  %v4597 = vpop.f32.mrf.mxu0
  %v4598 = vadd.f32 0.0, %v4597
  %v4599 = vpop.f32.mrf.mxu0
  %4600 = vmatprep.mubr.f32.mxu0 0.0
  %4601 = vmatmul.mubr.f32.gmra.mxu0 %v3471
  %v4602 = vpop.f32.mrf.mxu0
  %v4603 = vadd.f32 0.0, %v4602
  %v4604 = vpop.f32.mrf.mxu0
  %4605 = vmatprep.mubr.f32.mxu0 0.0
  %4606 = vmatmul.mubr.f32.gmra.mxu0 %v3474
  %v4607 = vpop.f32.mrf.mxu0
  %v4608 = vadd.f32 0.0, %v4607
  %v4609 = vpop.f32.mrf.mxu0
  %4610 = vmatprep.mubr.f32.mxu0 0.0
  %4611 = vmatmul.mubr.f32.gmra.mxu0 %v3477
  %v4612 = vpop.f32.mrf.mxu0
  %v4613 = vadd.f32 0.0, %v4612
  %v4614 = vpop.f32.mrf.mxu0
  %4615 = vmatprep.mubr.f32.mxu0 0.0
  %4616 = vmatmul.mubr.f32.gmra.mxu0 %v3480
  %v4617 = vpop.f32.mrf.mxu0
  %v4618 = vadd.f32 0.0, %v4617
  %v4619 = vpop.f32.mrf.mxu0
  %4620 = vmatprep.mubr.f32.mxu0 0.0
  %4621 = vmatmul.mubr.f32.gmra.mxu0 %v3483
  %v4622 = vpop.f32.mrf.mxu0
  %v4623 = vadd.f32 0.0, %v4622
  %v4624 = vpop.f32.mrf.mxu0
  %4625 = vmatprep.mubr.f32.mxu0 0.0
  %4626 = vmatmul.mubr.f32.gmra.mxu0 %v3486
  %v4627 = vpop.f32.mrf.mxu0
  %v4628 = vadd.f32 0.0, %v4627
  %v4629 = vpop.f32.mrf.mxu0
  %4630 = vmatprep.mubr.f32.mxu0 0.0
  %4631 = vmatmul.mubr.f32.gmra.mxu0 %v3489
  %v4632 = vpop.f32.mrf.mxu0
  %v4633 = vadd.f32 0.0, %v4632
  %v4634 = vpop.f32.mrf.mxu0
  %4635 = vmatprep.mubr.f32.mxu0 0.0
  %4636 = vmatmul.mubr.f32.gmra.mxu0 %v3492
  %v4637 = vpop.f32.mrf.mxu0
  %v4638 = vadd.f32 0.0, %v4637
  %v4639 = vpop.f32.mrf.mxu0
  %4640 = vmatprep.mubr.f32.mxu0 0.0
  %4641 = vmatmul.mubr.f32.gmra.mxu0 %v3495
  %v4642 = vpop.f32.mrf.mxu0
  %v4643 = vadd.f32 0.0, %v4642
  %v4644 = vpop.f32.mrf.mxu0
  %4645 = vmatprep.mubr.f32.mxu0 0.0
  %4646 = vmatmul.mubr.f32.gmra.mxu0 %v3498
  %v4647 = vpop.f32.mrf.mxu0
  %v4648 = vadd.f32 0.0, %v4647
  %v4649 = vpop.f32.mrf.mxu0
  %4650 = vmatprep.mubr.f32.mxu0 0.0
  %4651 = vmatmul.mubr.f32.gmra.mxu0 %v3501
  %v4652 = vpop.f32.mrf.mxu0
  %v4653 = vadd.f32 0.0, %v4652
  %v4654 = vpop.f32.mrf.mxu0
  %4655 = vmatprep.mubr.f32.mxu0 0.0
  %4656 = vmatmul.mubr.f32.gmra.mxu0 %v3504
  %v4657 = vpop.f32.mrf.mxu0
  %v4658 = vadd.f32 0.0, %v4657
  %v4659 = vpop.f32.mrf.mxu0
  %4660 = vmatprep.mubr.f32.mxu0 0.0
  %4661 = vmatmul.mubr.f32.gmra.mxu0 %v3507
  %v4662 = vpop.f32.mrf.mxu0
  %v4663 = vadd.f32 0.0, %v4662
  %v4664 = vpop.f32.mrf.mxu0
  %4665 = vmatprep.mubr.f32.mxu0 0.0
  %4666 = vmatmul.mubr.f32.gmra.mxu0 %v3510
  %v4667 = vpop.f32.mrf.mxu0
  %v4668 = vadd.f32 0.0, %v4667
  %v4669 = vpop.f32.mrf.mxu0
  %4670 = vmatprep.mubr.f32.mxu0 0.0
  %4671 = vmatmul.mubr.f32.gmra.mxu0 %v3513
  %v4672 = vpop.f32.mrf.mxu0
  %v4673 = vadd.f32 0.0, %v4672
  %v4674 = vpop.f32.mrf.mxu0
  %4675 = vmatprep.mubr.f32.mxu0 0.0
  %4676 = vmatmul.mubr.f32.gmra.mxu0 %v3516
  %v4677 = vpop.f32.mrf.mxu0
  %v4678 = vadd.f32 0.0, %v4677
  %v4679 = vpop.f32.mrf.mxu0
  %4680 = vmatprep.mubr.f32.mxu0 0.0
  %4681 = vmatmul.mubr.f32.gmra.mxu0 %v3519
  %v4682 = vpop.f32.mrf.mxu0
  %v4683 = vadd.f32 0.0, %v4682
  %v4684 = vpop.f32.mrf.mxu0
  %4685 = vmatprep.mubr.f32.mxu0 0.0
  %4686 = vmatmul.mubr.f32.gmra.mxu0 %v3522
  %v4687 = vpop.f32.mrf.mxu0
  %v4688 = vadd.f32 0.0, %v4687
  %v4689 = vpop.f32.mrf.mxu0
  %4690 = vmatprep.mubr.f32.mxu0 0.0
  %4691 = vmatmul.mubr.f32.gmra.mxu0 %v3525
  %v4692 = vpop.f32.mrf.mxu0
  %v4693 = vadd.f32 0.0, %v4692
  %v4694 = vpop.f32.mrf.mxu0
  %4695 = vmatprep.mubr.f32.mxu0 0.0
  %4696 = vmatmul.mubr.f32.gmra.mxu0 %v3528
  %v4697 = vpop.f32.mrf.mxu0
  %v4698 = vadd.f32 0.0, %v4697
  %v4699 = vpop.f32.mrf.mxu0
  %4700 = vmatprep.mubr.f32.mxu0 0.0
  %4701 = vmatmul.mubr.f32.gmra.mxu0 %v3531
  %v4702 = vpop.f32.mrf.mxu0
  %v4703 = vadd.f32 0.0, %v4702
  %v4704 = vpop.f32.mrf.mxu0
  %4705 = vmatprep.mubr.f32.mxu0 0.0
  %4706 = vmatmul.mubr.f32.gmra.mxu0 %v3534
  %v4707 = vpop.f32.mrf.mxu0
  %v4708 = vadd.f32 0.0, %v4707
  %v4709 = vpop.f32.mrf.mxu0
  %4710 = vmatprep.mubr.f32.mxu0 0.0
  %4711 = vmatmul.mubr.f32.gmra.mxu0 %v3537
  %v4712 = vpop.f32.mrf.mxu0
  %v4713 = vadd.f32 0.0, %v4712
  %v4714 = vpop.f32.mrf.mxu0
  %4715 = vmatprep.mubr.f32.mxu0 0.0
  %4716 = vmatmul.mubr.f32.gmra.mxu0 %v3540
  %v4717 = vpop.f32.mrf.mxu0
  %v4718 = vadd.f32 0.0, %v4717
  %v4719 = vpop.f32.mrf.mxu0
  %4720 = vmatprep.mubr.f32.mxu0 0.0
  %4721 = vmatmul.mubr.f32.gmra.mxu0 %v3543
  %v4722 = vpop.f32.mrf.mxu0
  %v4723 = vadd.f32 0.0, %v4722
  %v4724 = vpop.f32.mrf.mxu0
  %4725 = vmatprep.mubr.f32.mxu0 0.0
  %4726 = vmatmul.mubr.f32.gmra.mxu0 %v3546
  %v4727 = vpop.f32.mrf.mxu0
  %v4728 = vadd.f32 0.0, %v4727
  %v4729 = vpop.f32.mrf.mxu0
  %4730 = vmatprep.mubr.f32.mxu0 0.0
  %4731 = vmatmul.mubr.f32.gmra.mxu0 %v3549
  %v4732 = vpop.f32.mrf.mxu0
  %v4733 = vadd.f32 0.0, %v4732
  %v4734 = vpop.f32.mrf.mxu0
  %4735 = vmatprep.mubr.f32.mxu0 0.0
  %4736 = vmatmul.mubr.f32.gmra.mxu0 %v3552
  %v4737 = vpop.f32.mrf.mxu0
  %v4738 = vadd.f32 0.0, %v4737
  %v4739 = vpop.f32.mrf.mxu0
  %4740 = vmatprep.mubr.f32.mxu0 0.0
  %4741 = vmatmul.mubr.f32.gmra.mxu0 %v3555
  %v4742 = vpop.f32.mrf.mxu0
  %v4743 = vadd.f32 0.0, %v4742
  %v4744 = vpop.f32.mrf.mxu0
  %4745 = vmatprep.mubr.f32.mxu0 0.0
  %4746 = vmatmul.mubr.f32.gmra.mxu0 %v3558
  %v4747 = vpop.f32.mrf.mxu0
  %v4748 = vadd.f32 0.0, %v4747
  %v4749 = vpop.f32.mrf.mxu0
  %4750 = vmatprep.mubr.f32.mxu0 0.0
  %4751 = vmatmul.mubr.f32.gmra.mxu0 %v3561
  %v4752 = vpop.f32.mrf.mxu0
  %v4753 = vadd.f32 0.0, %v4752
  %v4754 = vpop.f32.mrf.mxu0
  %4755 = vmatprep.mubr.f32.mxu0 0.0
  %4756 = vmatmul.mubr.f32.gmra.mxu0 %v3564
  %v4757 = vpop.f32.mrf.mxu0
  %v4758 = vadd.f32 0.0, %v4757
  %v4759 = vpop.f32.mrf.mxu0
  %4760 = vmatprep.mubr.f32.mxu0 0.0
  %4761 = vmatmul.mubr.f32.gmra.mxu0 %v3567
  %v4762 = vpop.f32.mrf.mxu0
  %v4763 = vadd.f32 0.0, %v4762
  %v4764 = vpop.f32.mrf.mxu0
  %4765 = vmatprep.mubr.f32.mxu0 0.0
  %4766 = vmatmul.mubr.f32.gmra.mxu0 %v3570
  %v4767 = vpop.f32.mrf.mxu0
  %v4768 = vadd.f32 0.0, %v4767
  %v4769 = vpop.f32.mrf.mxu0
  %4770 = vmatprep.mubr.f32.mxu0 0.0
  %4771 = vmatmul.mubr.f32.gmra.mxu0 %v3573
  %v4772 = vpop.f32.mrf.mxu0
  %v4773 = vadd.f32 0.0, %v4772
  %v4774 = vpop.f32.mrf.mxu0
  %4775 = vmatprep.mubr.f32.mxu0 0.0
  %4776 = vmatmul.mubr.f32.gmra.mxu0 %v3576
  %v4777 = vpop.f32.mrf.mxu0
  %v4778 = vadd.f32 0.0, %v4777
  %v4779 = vpop.f32.mrf.mxu0
  %4780 = vmatprep.mubr.f32.mxu0 0.0
  %4781 = vmatmul.mubr.f32.gmra.mxu0 %v3579
  %v4782 = vpop.f32.mrf.mxu0
  %v4783 = vadd.f32 0.0, %v4782
  %v4784 = vpop.f32.mrf.mxu0
  %4785 = vmatprep.mubr.f32.mxu0 0.0
  %4786 = vmatmul.mubr.f32.gmra.mxu0 %v3582
  %v4787 = vpop.f32.mrf.mxu0
  %v4788 = vadd.f32 0.0, %v4787
  %v4789 = vpop.f32.mrf.mxu0
  %4790 = vmatprep.mubr.f32.mxu0 0.0
  %4791 = vmatmul.mubr.f32.gmra.mxu0 %v3585
  %v4792 = vpop.f32.mrf.mxu0
  %v4793 = vadd.f32 0.0, %v4792
  %v4794 = vpop.f32.mrf.mxu0
  %4795 = vmatprep.mubr.f32.mxu0 0.0
  %4796 = vmatmul.mubr.f32.gmra.mxu0 %v3588
  %v4797 = vpop.f32.mrf.mxu0
  %v4798 = vadd.f32 0.0, %v4797
  %v4799 = vpop.f32.mrf.mxu0
  %4800 = vmatprep.mubr.f32.mxu0 0.0
  %4801 = vmatmul.mubr.f32.gmra.mxu0 %v3591
  %v4802 = vpop.f32.mrf.mxu0
  %v4803 = vadd.f32 0.0, %v4802
  %v4804 = vpop.f32.mrf.mxu0
  %4805 = vmatprep.mubr.f32.mxu0 0.0
  %4806 = vmatmul.mubr.f32.gmra.mxu0 %v3594
  %v4807 = vpop.f32.mrf.mxu0
  %v4808 = vadd.f32 0.0, %v4807
  %v4809 = vpop.f32.mrf.mxu0
  %4810 = vmatprep.mubr.f32.mxu0 0.0
  %4811 = vmatmul.mubr.f32.gmra.mxu0 %v3597
  %v4812 = vpop.f32.mrf.mxu0
  %v4813 = vadd.f32 0.0, %v4812
  %v4814 = vpop.f32.mrf.mxu0
  %4815 = vmatprep.mubr.f32.mxu0 0.0
  %4816 = vmatmul.mubr.f32.gmra.mxu0 %v3600
  %v4817 = vpop.f32.mrf.mxu0
  %v4818 = vadd.f32 0.0, %v4817
  %v4819 = vpop.f32.mrf.mxu0
  %4820 = vmatprep.mubr.f32.mxu0 0.0
  %4821 = vmatmul.mubr.f32.gmra.mxu0 %v3603
  %v4822 = vpop.f32.mrf.mxu0
  %v4823 = vadd.f32 0.0, %v4822
  %v4824 = vpop.f32.mrf.mxu0
  %4825 = vmatprep.mubr.f32.mxu0 0.0
  %4826 = vmatmul.mubr.f32.gmra.mxu0 %v3606
  %v4827 = vpop.f32.mrf.mxu0
  %v4828 = vadd.f32 0.0, %v4827
  %v4829 = vpop.f32.mrf.mxu0
  %4830 = vmatprep.mubr.f32.mxu0 0.0
  %4831 = vmatmul.mubr.f32.gmra.mxu0 %v3609
  %v4832 = vpop.f32.mrf.mxu0
  %v4833 = vadd.f32 0.0, %v4832
  %v4834 = vpop.f32.mrf.mxu0
  %4835 = vmatprep.mubr.f32.mxu0 0.0
  %4836 = vmatmul.mubr.f32.gmra.mxu0 %v3612
  %v4837 = vpop.f32.mrf.mxu0
  %v4838 = vadd.f32 0.0, %v4837
  %v4839 = vpop.f32.mrf.mxu0
  %4840 = vmatprep.mubr.f32.mxu0 0.0
  %4841 = vmatmul.mubr.f32.gmra.mxu0 %v3615
  %v4842 = vpop.f32.mrf.mxu0
  %v4843 = vadd.f32 0.0, %v4842
  %v4844 = vpop.f32.mrf.mxu0
  %4845 = vmatprep.mubr.f32.mxu0 0.0
  %4846 = vmatmul.mubr.f32.gmra.mxu0 %v3618
  %v4847 = vpop.f32.mrf.mxu0
  %v4848 = vadd.f32 0.0, %v4847
  %v4849 = vpop.f32.mrf.mxu0
  %4850 = vmatprep.mubr.f32.mxu0 0.0
  %4851 = vmatmul.mubr.f32.gmra.mxu0 %v3621
  %v4852 = vpop.f32.mrf.mxu0
  %v4853 = vadd.f32 0.0, %v4852
  %v4854 = vpop.f32.mrf.mxu0
  %4855 = vmatprep.mubr.f32.mxu0 0.0
  %4856 = vmatmul.mubr.f32.gmra.mxu0 %v3624
  %v4857 = vpop.f32.mrf.mxu0
  %v4858 = vadd.f32 0.0, %v4857
  %v4859 = vpop.f32.mrf.mxu0
  %4860 = vmatprep.mubr.f32.mxu0 0.0
  %4861 = vmatmul.mubr.f32.gmra.mxu0 %v3627
  %v4862 = vpop.f32.mrf.mxu0
  %v4863 = vadd.f32 0.0, %v4862
  %v4864 = vpop.f32.mrf.mxu0
  %4865 = vmatprep.mubr.f32.mxu0 0.0
  %4866 = vmatmul.mubr.f32.gmra.mxu0 %v3630
  %v4867 = vpop.f32.mrf.mxu0
  %v4868 = vadd.f32 0.0, %v4867
  %v4869 = vpop.f32.mrf.mxu0
  %4870 = vmatprep.mubr.f32.mxu0 0.0
  %4871 = vmatmul.mubr.f32.gmra.mxu0 %v3633
  %v4872 = vpop.f32.mrf.mxu0
  %v4873 = vadd.f32 0.0, %v4872
  %v4874 = vpop.f32.mrf.mxu0
  %4875 = vmatprep.mubr.f32.mxu0 0.0
  %4876 = vmatmul.mubr.f32.gmra.mxu0 %v3636
  %v4877 = vpop.f32.mrf.mxu0
  %v4878 = vadd.f32 0.0, %v4877
  %v4879 = vpop.f32.mrf.mxu0
  %4880 = vmatprep.mubr.f32.mxu0 0.0
  %4881 = vmatmul.mubr.f32.gmra.mxu0 %v3639
  %v4882 = vpop.f32.mrf.mxu0
  %v4883 = vadd.f32 0.0, %v4882
  %v4884 = vpop.f32.mrf.mxu0
  %4885 = vmatprep.mubr.f32.mxu0 0.0
  %4886 = vmatmul.mubr.f32.gmra.mxu0 %v3642
  %v4887 = vpop.f32.mrf.mxu0
  %v4888 = vadd.f32 0.0, %v4887
  %v4889 = vpop.f32.mrf.mxu0
  %4890 = vmatprep.mubr.f32.mxu0 0.0
  %4891 = vmatmul.mubr.f32.gmra.mxu0 %v3645
  %v4892 = vpop.f32.mrf.mxu0
  %v4893 = vadd.f32 0.0, %v4892
  %v4894 = vpop.f32.mrf.mxu0
  %4895 = vmatprep.mubr.f32.mxu0 0.0
  %4896 = vmatmul.mubr.f32.gmra.mxu0 %v3648
  %v4897 = vpop.f32.mrf.mxu0
  %v4898 = vadd.f32 0.0, %v4897
  %v4899 = vpop.f32.mrf.mxu0
  %4900 = vmatprep.mubr.f32.mxu0 0.0
  %4901 = vmatmul.mubr.f32.gmra.mxu0 %v3651
  %v4902 = vpop.f32.mrf.mxu0
  %v4903 = vadd.f32 0.0, %v4902
  %v4904 = vpop.f32.mrf.mxu0
  %4905 = vmatprep.mubr.f32.mxu0 0.0
  %4906 = vmatmul.mubr.f32.gmra.mxu0 %v3654
  %v4907 = vpop.f32.mrf.mxu0
  %v4908 = vadd.f32 0.0, %v4907
  %v4909 = vpop.f32.mrf.mxu0
  %4910 = vmatprep.mubr.f32.mxu0 0.0
  %4911 = vmatmul.mubr.f32.gmra.mxu0 %v3657
  %v4912 = vpop.f32.mrf.mxu0
  %v4913 = vadd.f32 0.0, %v4912
  %v4914 = vpop.f32.mrf.mxu0
  %4915 = vmatprep.mubr.f32.mxu0 0.0
  %4916 = vmatmul.mubr.f32.gmra.mxu0 %v3660
  %v4917 = vpop.f32.mrf.mxu0
  %v4918 = vadd.f32 0.0, %v4917
  %v4919 = vpop.f32.mrf.mxu0
  %4920 = vmatprep.mubr.f32.mxu0 0.0
  %4921 = vmatmul.mubr.f32.gmra.mxu0 %v3663
  %v4922 = vpop.f32.mrf.mxu0
  %v4923 = vadd.f32 0.0, %v4922
  %v4924 = vpop.f32.mrf.mxu0
  %4925 = vmatprep.mubr.f32.mxu0 0.0
  %4926 = vmatmul.mubr.f32.gmra.mxu0 %v3666
  %v4927 = vpop.f32.mrf.mxu0
  %v4928 = vadd.f32 0.0, %v4927
  %v4929 = vpop.f32.mrf.mxu0
  %4930 = vmatprep.mubr.f32.mxu0 0.0
  %4931 = vmatmul.mubr.f32.gmra.mxu0 %v3669
  %v4932 = vpop.f32.mrf.mxu0
  %v4933 = vadd.f32 0.0, %v4932
  %v4934 = vpop.f32.mrf.mxu0
  %4935 = vmatprep.mubr.f32.mxu0 0.0
  %4936 = vmatmul.mubr.f32.gmra.mxu0 %v3672
  %v4937 = vpop.f32.mrf.mxu0
  %v4938 = vadd.f32 0.0, %v4937
  %v4939 = vpop.f32.mrf.mxu0
  %4940 = vmatprep.mubr.f32.mxu0 0.0
  %4941 = vmatmul.mubr.f32.gmra.mxu0 %v3675
  %v4942 = vpop.f32.mrf.mxu0
  %v4943 = vadd.f32 0.0, %v4942
  %v4944 = vpop.f32.mrf.mxu0
  %4945 = vmatprep.mubr.f32.mxu0 0.0
  %4946 = vmatmul.mubr.f32.gmra.mxu0 %v3678
  %v4947 = vpop.f32.mrf.mxu0
  %v4948 = vadd.f32 0.0, %v4947
  %v4949 = vpop.f32.mrf.mxu0
  %4950 = vmatprep.mubr.f32.mxu0 0.0
  %4951 = vmatmul.mubr.f32.gmra.mxu0 %v3681
  %v4952 = vpop.f32.mrf.mxu0
  %v4953 = vadd.f32 0.0, %v4952
  %v4954 = vpop.f32.mrf.mxu0
  %4955 = vmatprep.mubr.f32.mxu0 0.0
  %4956 = vmatmul.mubr.f32.gmra.mxu0 %v3684
  %v4957 = vpop.f32.mrf.mxu0
  %v4958 = vadd.f32 0.0, %v4957
  %v4959 = vpop.f32.mrf.mxu0
  %4960 = vmatprep.mubr.f32.mxu0 0.0
  %4961 = vmatmul.mubr.f32.gmra.mxu0 %v3687
  %v4962 = vpop.f32.mrf.mxu0
  %v4963 = vadd.f32 0.0, %v4962
  %v4964 = vpop.f32.mrf.mxu0
  %4965 = vmatprep.mubr.f32.mxu0 0.0
  %4966 = vmatmul.mubr.f32.gmra.mxu0 %v3690
  %v4967 = vpop.f32.mrf.mxu0
  %v4968 = vadd.f32 0.0, %v4967
  %v4969 = vpop.f32.mrf.mxu0
  %4970 = vmatprep.mubr.f32.mxu0 0.0
  %4971 = vmatmul.mubr.f32.gmra.mxu0 %v3693
  %v4972 = vpop.f32.mrf.mxu0
  %v4973 = vadd.f32 0.0, %v4972
  %v4974 = vpop.f32.mrf.mxu0
  %4975 = vmatprep.mubr.f32.mxu0 0.0
  %4976 = vmatmul.mubr.f32.gmra.mxu0 %v3696
  %v4977 = vpop.f32.mrf.mxu0
  %v4978 = vadd.f32 0.0, %v4977
  %v4979 = vpop.f32.mrf.mxu0
  %4980 = vmatprep.mubr.f32.mxu0 0.0
  %4981 = vmatmul.mubr.f32.gmra.mxu0 %v3699
  %v4982 = vpop.f32.mrf.mxu0
  %v4983 = vadd.f32 0.0, %v4982
  %v4984 = vpop.f32.mrf.mxu0
  %4985 = vmatprep.mubr.f32.mxu0 0.0
  %4986 = vmatmul.mubr.f32.gmra.mxu0 %v3702
  %v4987 = vpop.f32.mrf.mxu0
  %v4988 = vadd.f32 0.0, %v4987
  %v4989 = vpop.f32.mrf.mxu0
  %4990 = vmatprep.mubr.f32.mxu0 0.0
  %4991 = vmatmul.mubr.f32.gmra.mxu0 %v3705
  %v4992 = vpop.f32.mrf.mxu0
  %v4993 = vadd.f32 0.0, %v4992
  %v4994 = vpop.f32.mrf.mxu0
  %4995 = vmatprep.mubr.f32.mxu0 0.0
  %4996 = vmatmul.mubr.f32.gmra.mxu0 %v3708
  %v4997 = vpop.f32.mrf.mxu0
  %v4998 = vadd.f32 0.0, %v4997
  %v4999 = vpop.f32.mrf.mxu0
  %5000 = vmatprep.mubr.f32.mxu0 0.0
  %5001 = vmatmul.mubr.f32.gmra.mxu0 %v3711
  %v5002 = vpop.f32.mrf.mxu0
  %v5003 = vadd.f32 0.0, %v5002
  %v5004 = vpop.f32.mrf.mxu0
  %5005 = vmatprep.mubr.f32.mxu0 0.0
  %5006 = vmatmul.mubr.f32.gmra.mxu0 %v3714
  %v5007 = vpop.f32.mrf.mxu0
  %v5008 = vadd.f32 0.0, %v5007
  %v5009 = vpop.f32.mrf.mxu0
  %5010 = vmatprep.mubr.f32.mxu0 0.0
  %5011 = vmatmul.mubr.f32.gmra.mxu0 %v3717
  %v5012 = vpop.f32.mrf.mxu0
  %v5013 = vadd.f32 0.0, %v5012
  %v5014 = vpop.f32.mrf.mxu0
  %5015 = vmatprep.mubr.f32.mxu0 0.0
  %5016 = vmatmul.mubr.f32.gmra.mxu0 %v3720
  %v5017 = vpop.f32.mrf.mxu0
  %v5018 = vadd.f32 0.0, %v5017
  %v5019 = vpop.f32.mrf.mxu0
  %5020 = vmatprep.mubr.f32.mxu0 0.0
  %5021 = vmatmul.mubr.f32.gmra.mxu0 %v3723
  %v5022 = vpop.f32.mrf.mxu0
  %v5023 = vadd.f32 0.0, %v5022
  %v5024 = vpop.f32.mrf.mxu0
  %5025 = vmatprep.mubr.f32.mxu0 0.0
  %5026 = vmatmul.mubr.f32.gmra.mxu0 %v3726
  %v5027 = vpop.f32.mrf.mxu0
  %v5028 = vadd.f32 0.0, %v5027
  %v5029 = vpop.f32.mrf.mxu0
  %5030 = vmatprep.mubr.f32.mxu0 0.0
  %5031 = vmatmul.mubr.f32.gmra.mxu0 %v3729
  %v5032 = vpop.f32.mrf.mxu0
  %v5033 = vadd.f32 0.0, %v5032
  %v5034 = vpop.f32.mrf.mxu0
  %5035 = vmatprep.mubr.f32.mxu0 0.0
  %5036 = vmatmul.mubr.f32.gmra.mxu0 %v3732
  %v5037 = vpop.f32.mrf.mxu0
  %v5038 = vadd.f32 0.0, %v5037
  %v5039 = vpop.f32.mrf.mxu0
  %5040 = vmatprep.mubr.f32.mxu0 0.0
  %5041 = vmatmul.mubr.f32.gmra.mxu0 %v3735
  %v5042 = vpop.f32.mrf.mxu0
  %v5043 = vadd.f32 0.0, %v5042
  %v5044 = vpop.f32.mrf.mxu0
  %5045 = vmatprep.mubr.f32.mxu0 0.0
  %5046 = vmatmul.mubr.f32.gmra.mxu0 %v3738
  %v5047 = vpop.f32.mrf.mxu0
  %v5048 = vadd.f32 0.0, %v5047
  %v5049 = vpop.f32.mrf.mxu0
  %5050 = vmatprep.mubr.f32.mxu0 0.0
  %5051 = vmatmul.mubr.f32.gmra.mxu0 %v3741
  %v5052 = vpop.f32.mrf.mxu0
  %v5053 = vadd.f32 0.0, %v5052
  %v5054 = vpop.f32.mrf.mxu0
  %5055 = vmatprep.mubr.f32.mxu0 0.0
  %5056 = vmatmul.mubr.f32.gmra.mxu0 %v3744
  %v5057 = vpop.f32.mrf.mxu0
  %v5058 = vadd.f32 0.0, %v5057
  %v5059 = vpop.f32.mrf.mxu0
  %5060 = vmatprep.mubr.f32.mxu0 0.0
  %5061 = vmatmul.mubr.f32.gmra.mxu0 %v3747
  %v5062 = vpop.f32.mrf.mxu0
  %v5063 = vadd.f32 0.0, %v5062
  %v5064 = vpop.f32.mrf.mxu0
  %5065 = vmatprep.mubr.f32.mxu0 0.0
  %5066 = vmatmul.mubr.f32.gmra.mxu0 %v3750
  %v5067 = vpop.f32.mrf.mxu0
  %v5068 = vadd.f32 0.0, %v5067
  %v5069 = vpop.f32.mrf.mxu0
  %5070 = vmatprep.mubr.f32.mxu0 0.0
  %5071 = vmatmul.mubr.f32.gmra.mxu0 %v3753
  %v5072 = vpop.f32.mrf.mxu0
  %v5073 = vadd.f32 0.0, %v5072
  %v5074 = vpop.f32.mrf.mxu0
  %5075 = vmatprep.mubr.f32.mxu0 0.0
  %5076 = vmatmul.mubr.f32.gmra.mxu0 %v3756
  %v5077 = vpop.f32.mrf.mxu0
  %v5078 = vadd.f32 0.0, %v5077
  %v5079 = vpop.f32.mrf.mxu0
  %5080 = vmatprep.mubr.f32.mxu0 0.0
  %5081 = vmatmul.mubr.f32.gmra.mxu0 %v3759
  %v5082 = vpop.f32.mrf.mxu0
  %v5083 = vadd.f32 0.0, %v5082
  %v5084 = vpop.f32.mrf.mxu0
  %5085 = vmatprep.mubr.f32.mxu0 0.0
  %5086 = vmatmul.mubr.f32.gmra.mxu0 %v3762
  %v5087 = vpop.f32.mrf.mxu0
  %v5088 = vadd.f32 0.0, %v5087
  %v5089 = vpop.f32.mrf.mxu0
  %5090 = vmatprep.mubr.f32.mxu0 0.0
  %5091 = vmatmul.mubr.f32.gmra.mxu0 %v3765
  %v5092 = vpop.f32.mrf.mxu0
  %v5093 = vadd.f32 0.0, %v5092
  %v5094 = vpop.f32.mrf.mxu0
  %5095 = vmatprep.mubr.f32.mxu0 0.0
  %5096 = vmatmul.mubr.f32.gmra.mxu0 %v3768
  %v5097 = vpop.f32.mrf.mxu0
  %v5098 = vadd.f32 0.0, %v5097
  %v5099 = vpop.f32.mrf.mxu0
  %5100 = vmatprep.mubr.f32.mxu0 0.0
  %5101 = vmatmul.mubr.f32.gmra.mxu0 %v3771
  %v5102 = vpop.f32.mrf.mxu0
  %v5103 = vadd.f32 0.0, %v5102
  %v5104 = vpop.f32.mrf.mxu0
  %5105 = vmatprep.mubr.f32.mxu0 0.0
  %5106 = vmatmul.mubr.f32.gmra.mxu0 %v3774
  %v5107 = vpop.f32.mrf.mxu0
  %v5108 = vadd.f32 0.0, %v5107
  %v5109 = vpop.f32.mrf.mxu0
  %5110 = vmatprep.mubr.f32.mxu0 0.0
  %5111 = vmatmul.mubr.f32.gmra.mxu0 %v3777
  %v5112 = vpop.f32.mrf.mxu0
  %v5113 = vadd.f32 0.0, %v5112
  %v5114 = vpop.f32.mrf.mxu0
  %5115 = vmatprep.mubr.f32.mxu0 0.0
  %5116 = vmatmul.mubr.f32.gmra.mxu0 %v3780
  %v5117 = vpop.f32.mrf.mxu0
  %v5118 = vadd.f32 0.0, %v5117
  %v5119 = vpop.f32.mrf.mxu0
  %5120 = vmatprep.mubr.f32.mxu0 0.0
  %5121 = vmatmul.mubr.f32.gmra.mxu0 %v3783
  %v5122 = vpop.f32.mrf.mxu0
  %v5123 = vadd.f32 0.0, %v5122
  %v5124 = vpop.f32.mrf.mxu0
  %5125 = vmatprep.mubr.f32.mxu0 0.0
  %5126 = vmatmul.mubr.f32.gmra.mxu0 %v3786
  %v5127 = vpop.f32.mrf.mxu0
  %v5128 = vadd.f32 0.0, %v5127
  %v5129 = vpop.f32.mrf.mxu0
  %5130 = vmatprep.mubr.f32.mxu0 0.0
  %5131 = vmatmul.mubr.f32.gmra.mxu0 %v3789
  %v5132 = vpop.f32.mrf.mxu0
  %v5133 = vadd.f32 0.0, %v5132
  %v5134 = vpop.f32.mrf.mxu0
  %5135 = vmatprep.mubr.f32.mxu0 0.0
  %5136 = vmatmul.mubr.f32.gmra.mxu0 %v3792
  %v5137 = vpop.f32.mrf.mxu0
  %v5138 = vadd.f32 0.0, %v5137
  %v5139 = vpop.f32.mrf.mxu0
  %5140 = vmatprep.mubr.f32.mxu0 0.0
  %5141 = vmatmul.mubr.f32.gmra.mxu0 %v3795
  %v5142 = vpop.f32.mrf.mxu0
  %v5143 = vadd.f32 0.0, %v5142
  %v5144 = vpop.f32.mrf.mxu0
  %5145 = vmatprep.mubr.f32.mxu0 0.0
  %5146 = vmatmul.mubr.f32.gmra.mxu0 %v3798
  %v5147 = vpop.f32.mrf.mxu0
  %v5148 = vadd.f32 0.0, %v5147
  %v5149 = vpop.f32.mrf.mxu0
  %5150 = vmatprep.mubr.f32.mxu0 0.0
  %5151 = vmatmul.mubr.f32.gmra.mxu0 %v3801
  %v5152 = vpop.f32.mrf.mxu0
  %v5153 = vadd.f32 0.0, %v5152
  %v5154 = vpop.f32.mrf.mxu0
  %5155 = vmatprep.mubr.f32.mxu0 0.0
  %5156 = vmatmul.mubr.f32.gmra.mxu0 %v3804
  %v5157 = vpop.f32.mrf.mxu0
  %v5158 = vadd.f32 0.0, %v5157
  %v5159 = vpop.f32.mrf.mxu0
  %5160 = vmatprep.mubr.f32.mxu0 0.0
  %5161 = vmatmul.mubr.f32.gmra.mxu0 %v3807
  %v5162 = vpop.f32.mrf.mxu0
  %v5163 = vadd.f32 0.0, %v5162
  %v5164 = vpop.f32.mrf.mxu0
  %5165 = vmatprep.mubr.f32.mxu0 0.0
  %5166 = vmatmul.mubr.f32.gmra.mxu0 %v3810
  %v5167 = vpop.f32.mrf.mxu0
  %v5168 = vadd.f32 0.0, %v5167
  %v5169 = vpop.f32.mrf.mxu0
  %5170 = vmatprep.mubr.f32.mxu0 0.0
  %5171 = vmatmul.mubr.f32.gmra.mxu0 %v3813
  %v5172 = vpop.f32.mrf.mxu0
  %v5173 = vadd.f32 0.0, %v5172
  %v5174 = vpop.f32.mrf.mxu0
  %5175 = vmatprep.mubr.f32.mxu0 0.0
  %5176 = vmatmul.mubr.f32.gmra.mxu0 %v3816
  %v5177 = vpop.f32.mrf.mxu0
  %v5178 = vadd.f32 0.0, %v5177
  %v5179 = vpop.f32.mrf.mxu0
  %5180 = vmatprep.mubr.f32.mxu0 0.0
  %5181 = vmatmul.mubr.f32.gmra.mxu0 %v3819
  %v5182 = vpop.f32.mrf.mxu0
  %v5183 = vadd.f32 0.0, %v5182
  %v5184 = vpop.f32.mrf.mxu0
  %5185 = vmatprep.mubr.f32.mxu0 0.0
  %5186 = vmatmul.mubr.f32.gmra.mxu0 %v3822
  %v5187 = vpop.f32.mrf.mxu0
  %v5188 = vadd.f32 0.0, %v5187
  %v5189 = vpop.f32.mrf.mxu0
  %5190 = vmatprep.mubr.f32.mxu0 0.0
  %5191 = vmatmul.mubr.f32.gmra.mxu0 %v3825
  %v5192 = vpop.f32.mrf.mxu0
  %v5193 = vadd.f32 0.0, %v5192
  %v5194 = vpop.f32.mrf.mxu0
  %5195 = vmatprep.mubr.f32.mxu0 0.0
  %5196 = vmatmul.mubr.f32.gmra.mxu0 %v3828
  %v5197 = vpop.f32.mrf.mxu0
  %v5198 = vadd.f32 0.0, %v5197
  %v5199 = vpop.f32.mrf.mxu0
  %5200 = vmatprep.mubr.f32.mxu0 0.0
  %5201 = vmatmul.mubr.f32.gmra.mxu0 %v3831
  %v5202 = vpop.f32.mrf.mxu0
  %v5203 = vadd.f32 0.0, %v5202
  %v5204 = vpop.f32.mrf.mxu0
  %5205 = vmatprep.mubr.f32.mxu0 0.0
  %5206 = vmatmul.mubr.f32.gmra.mxu0 %v3834
  %v5207 = vpop.f32.mrf.mxu0
  %v5208 = vadd.f32 0.0, %v5207
  %v5209 = vpop.f32.mrf.mxu0
  %5210 = vmatprep.mubr.f32.mxu0 0.0
  %5211 = vmatmul.mubr.f32.gmra.mxu0 %v3837
  %v5212 = vpop.f32.mrf.mxu0
  %v5213 = vadd.f32 0.0, %v5212
  %v5214 = vpop.f32.mrf.mxu0
  %5215 = vmatprep.mubr.f32.mxu0 0.0
  %5216 = vmatmul.mubr.f32.gmra.mxu0 %v3840
  %v5217 = vpop.f32.mrf.mxu0
  %v5218 = vadd.f32 0.0, %v5217
  %v5219 = vpop.f32.mrf.mxu0
  %5220 = vmatprep.mubr.f32.mxu0 0.0
  %5221 = vmatmul.mubr.f32.gmra.mxu0 %v3843
  %v5222 = vpop.f32.mrf.mxu0
  %v5223 = vadd.f32 0.0, %v5222
  %v5224 = vpop.f32.mrf.mxu0
  %5225 = vmatprep.mubr.f32.mxu0 0.0
  %5226 = vmatmul.mubr.f32.gmra.mxu0 %v3846
  %v5227 = vpop.f32.mrf.mxu0
  %v5228 = vadd.f32 0.0, %v5227
  %v5229 = vpop.f32.mrf.mxu0
  %5230 = vmatprep.mubr.f32.mxu0 0.0
  %5231 = vmatmul.mubr.f32.gmra.mxu0 %v3849
  %v5232 = vpop.f32.mrf.mxu0
  %v5233 = vadd.f32 0.0, %v5232
  %v5234 = vpop.f32.mrf.mxu0
  %5235 = vmatprep.mubr.f32.mxu0 0.0
  %5236 = vmatmul.mubr.f32.gmra.mxu0 %v3852
  %v5237 = vpop.f32.mrf.mxu0
  %v5238 = vadd.f32 0.0, %v5237
  %v5239 = vpop.f32.mrf.mxu0
  %5240 = vmatprep.mubr.f32.mxu0 0.0
  %5241 = vmatmul.mubr.f32.gmra.mxu0 %v3855
  %v5242 = vpop.f32.mrf.mxu0
  %v5243 = vadd.f32 0.0, %v5242
  %v5244 = vpop.f32.mrf.mxu0
  %5245 = vmatprep.mubr.f32.mxu0 0.0
  %5246 = vmatmul.mubr.f32.gmra.mxu0 %v3858
  %v5247 = vpop.f32.mrf.mxu0
  %v5248 = vadd.f32 0.0, %v5247
  %v5249 = vpop.f32.mrf.mxu0
  %5250 = vmatprep.mubr.f32.mxu0 0.0
  %5251 = vmatmul.mubr.f32.gmra.mxu0 %v3861
  %v5252 = vpop.f32.mrf.mxu0
  %v5253 = vadd.f32 0.0, %v5252
  %v5254 = vpop.f32.mrf.mxu0
  %5255 = vmatprep.mubr.f32.mxu0 0.0
  %5256 = vmatmul.mubr.f32.gmra.mxu0 %v3864
  %v5257 = vpop.f32.mrf.mxu0
  %v5258 = vadd.f32 0.0, %v5257
  %v5259 = vpop.f32.mrf.mxu0
  %5260 = vmatprep.mubr.f32.mxu0 0.0
  %5261 = vmatmul.mubr.f32.gmra.mxu0 %v3867
  %v5262 = vpop.f32.mrf.mxu0
  %v5263 = vadd.f32 0.0, %v5262
  %v5264 = vpop.f32.mrf.mxu0
  %5265 = vmatprep.mubr.f32.mxu0 0.0
  %5266 = vmatmul.mubr.f32.gmra.mxu0 %v3870
  %v5267 = vpop.f32.mrf.mxu0
  %v5268 = vadd.f32 0.0, %v5267
  %v5269 = vpop.f32.mrf.mxu0
  %5270 = vmatprep.mubr.f32.mxu0 0.0
  %5271 = vmatmul.mubr.f32.gmra.mxu0 %v3873
  %v5272 = vpop.f32.mrf.mxu0
  %v5273 = vadd.f32 0.0, %v5272
  %v5274 = vpop.f32.mrf.mxu0
  %5275 = vmatprep.mubr.f32.mxu0 0.0
  %5276 = vmatmul.mubr.f32.gmra.mxu0 %v3876
  %v5277 = vpop.f32.mrf.mxu0
  %v5278 = vadd.f32 0.0, %v5277
  %v5279 = vpop.f32.mrf.mxu0
  %5280 = vmatprep.mubr.f32.mxu0 0.0
  %5281 = vmatmul.mubr.f32.gmra.mxu0 %v3879
  %v5282 = vpop.f32.mrf.mxu0
  %v5283 = vadd.f32 0.0, %v5282
  %v5284 = vpop.f32.mrf.mxu0
  %5285 = vmatprep.mubr.f32.mxu0 0.0
  %5286 = vmatmul.mubr.f32.gmra.mxu0 %v3882
  %v5287 = vpop.f32.mrf.mxu0
  %v5288 = vadd.f32 0.0, %v5287
  %v5289 = vpop.f32.mrf.mxu0
  %5290 = vmatprep.mubr.f32.mxu0 0.0
  %5291 = vmatmul.mubr.f32.gmra.mxu0 %v3885
  %v5292 = vpop.f32.mrf.mxu0
  %v5293 = vadd.f32 0.0, %v5292
  %v5294 = vpop.f32.mrf.mxu0
  %5295 = vmatprep.mubr.f32.mxu0 0.0
  %5296 = vmatmul.mubr.f32.gmra.mxu0 %v3888
  %v5297 = vpop.f32.mrf.mxu0
  %v5298 = vadd.f32 0.0, %v5297
  %v5299 = vpop.f32.mrf.mxu0
  %5300 = vmatprep.mubr.f32.mxu0 0.0
  %5301 = vmatmul.mubr.f32.gmra.mxu0 %v3891
  %v5302 = vpop.f32.mrf.mxu0
  %v5303 = vadd.f32 0.0, %v5302
  %v5304 = vpop.f32.mrf.mxu0
  %5305 = vmatprep.mubr.f32.mxu0 0.0
  %5306 = vmatmul.mubr.f32.gmra.mxu0 %v3894
  %v5307 = vpop.f32.mrf.mxu0
  %v5308 = vadd.f32 0.0, %v5307
  %v5309 = vpop.f32.mrf.mxu0
  %5310 = vmatprep.mubr.f32.mxu0 0.0
  %5311 = vmatmul.mubr.f32.gmra.mxu0 %v3897
  %v5312 = vpop.f32.mrf.mxu0
  %v5313 = vadd.f32 0.0, %v5312
  %v5314 = vpop.f32.mrf.mxu0
  %5315 = vmatprep.mubr.f32.mxu0 0.0
  %5316 = vmatmul.mubr.f32.gmra.mxu0 %v3900
  %v5317 = vpop.f32.mrf.mxu0
  %v5318 = vadd.f32 0.0, %v5317
  %v5319 = vpop.f32.mrf.mxu0
  %5320 = vmatprep.mubr.f32.mxu0 0.0
  %5321 = vmatmul.mubr.f32.gmra.mxu0 %v3903
  %v5322 = vpop.f32.mrf.mxu0
  %v5323 = vadd.f32 0.0, %v5322
  %v5324 = vpop.f32.mrf.mxu0
  %5325 = vmatprep.mubr.f32.mxu0 0.0
  %5326 = vmatmul.mubr.f32.gmra.mxu0 %v3906
  %v5327 = vpop.f32.mrf.mxu0
  %v5328 = vadd.f32 0.0, %v5327
  %v5329 = vpop.f32.mrf.mxu0
  %5330 = vmatprep.mubr.f32.mxu0 0.0
  %5331 = vmatmul.mubr.f32.gmra.mxu0 %v3909
  %v5332 = vpop.f32.mrf.mxu0
  %v5333 = vadd.f32 0.0, %v5332
  %v5334 = vpop.f32.mrf.mxu0
  %5335 = vmatprep.mubr.f32.mxu0 0.0
  %5336 = vmatmul.mubr.f32.gmra.mxu0 %v3912
  %v5337 = vpop.f32.mrf.mxu0
  %v5338 = vadd.f32 0.0, %v5337
  %v5339 = vpop.f32.mrf.mxu0
  %5340 = vmatprep.mubr.f32.mxu0 0.0
  %5341 = vmatmul.mubr.f32.gmra.mxu0 %v3915
  %v5342 = vpop.f32.mrf.mxu0
  %v5343 = vadd.f32 0.0, %v5342
  %v5344 = vpop.f32.mrf.mxu0
  %5345 = vmatprep.mubr.f32.mxu0 0.0
  %5346 = vmatmul.mubr.f32.gmra.mxu0 %v3918
  %v5347 = vpop.f32.mrf.mxu0
  %v5348 = vadd.f32 0.0, %v5347
  %v5349 = vpop.f32.mrf.mxu0
  %5350 = vmatprep.mubr.f32.mxu0 0.0
  %5351 = vmatmul.mubr.f32.gmra.mxu0 %v3921
  %v5352 = vpop.f32.mrf.mxu0
  %v5353 = vadd.f32 0.0, %v5352
  %v5354 = vpop.f32.mrf.mxu0
  %5355 = vmatprep.mubr.f32.mxu0 0.0
  %5356 = vmatmul.mubr.f32.gmra.mxu0 %v3924
  %v5357 = vpop.f32.mrf.mxu0
  %v5358 = vadd.f32 0.0, %v5357
  %v5359 = vpop.f32.mrf.mxu0
  %5360 = vmatprep.mubr.f32.mxu0 0.0
  %5361 = vmatmul.mubr.f32.gmra.mxu0 %v3927
  %v5362 = vpop.f32.mrf.mxu0
  %v5363 = vadd.f32 0.0, %v5362
  %v5364 = vpop.f32.mrf.mxu0
  %5365 = vmatprep.mubr.f32.mxu0 0.0
  %5366 = vmatmul.mubr.f32.gmra.mxu0 %v3930
  %v5367 = vpop.f32.mrf.mxu0
  %v5368 = vadd.f32 0.0, %v5367
  %v5369 = vpop.f32.mrf.mxu0
  %5370 = vmatprep.mubr.f32.mxu0 0.0
  %5371 = vmatmul.mubr.f32.gmra.mxu0 %v3933
  %v5372 = vpop.f32.mrf.mxu0
  %v5373 = vadd.f32 0.0, %v5372
  %v5374 = vpop.f32.mrf.mxu0
  %5375 = vmatprep.mubr.f32.mxu0 0.0
  %5376 = vmatmul.mubr.f32.gmra.mxu0 %v3936
  %v5377 = vpop.f32.mrf.mxu0
  %v5378 = vadd.f32 0.0, %v5377
  %v5379 = vpop.f32.mrf.mxu0
  %5380 = vmatprep.mubr.f32.mxu0 0.0
  %5381 = vmatmul.mubr.f32.gmra.mxu0 %v3939
  %v5382 = vpop.f32.mrf.mxu0
  %v5383 = vadd.f32 0.0, %v5382
  %v5384 = vpop.f32.mrf.mxu0
  %5385 = vmatprep.mubr.f32.mxu0 0.0
  %5386 = vmatmul.mubr.f32.gmra.mxu0 %v3942
  %v5387 = vpop.f32.mrf.mxu0
  %v5388 = vadd.f32 0.0, %v5387
  %v5389 = vpop.f32.mrf.mxu0
  %5390 = vmatprep.mubr.f32.mxu0 0.0
  %5391 = vmatmul.mubr.f32.gmra.mxu0 %v3945
  %v5392 = vpop.f32.mrf.mxu0
  %v5393 = vadd.f32 0.0, %v5392
  %v5394 = vpop.f32.mrf.mxu0
  %5395 = vmatprep.mubr.f32.mxu0 0.0
  %5396 = vmatmul.mubr.f32.gmra.mxu0 %v3948
  %v5397 = vpop.f32.mrf.mxu0
  %v5398 = vadd.f32 0.0, %v5397
  %v5399 = vpop.f32.mrf.mxu0
  %5400 = vmatprep.mubr.f32.mxu0 0.0
  %5401 = vmatmul.mubr.f32.gmra.mxu0 %v3951
  %v5402 = vpop.f32.mrf.mxu0
  %v5403 = vadd.f32 0.0, %v5402
  %v5404 = vpop.f32.mrf.mxu0
  %5405 = vmatprep.mubr.f32.mxu0 0.0
  %5406 = vmatmul.mubr.f32.gmra.mxu0 %v3954
  %v5407 = vpop.f32.mrf.mxu0
  %v5408 = vadd.f32 0.0, %v5407
  %v5409 = vpop.f32.mrf.mxu0
  %5410 = vmatprep.mubr.f32.mxu0 0.0
  %5411 = vmatmul.mubr.f32.gmra.mxu0 %v3957
  %v5412 = vpop.f32.mrf.mxu0
  %v5413 = vadd.f32 0.0, %v5412
  %v5414 = vpop.f32.mrf.mxu0
  %5415 = vmatprep.mubr.f32.mxu0 0.0
  %5416 = vmatmul.mubr.f32.gmra.mxu0 %v3960
  %v5417 = vpop.f32.mrf.mxu0
  %v5418 = vadd.f32 0.0, %v5417
  %v5419 = vpop.f32.mrf.mxu0
  %5420 = vmatprep.mubr.f32.mxu0 0.0
  %5421 = vmatmul.mubr.f32.gmra.mxu0 %v3963
  %v5422 = vpop.f32.mrf.mxu0
  %v5423 = vadd.f32 0.0, %v5422
  %v5424 = vpop.f32.mrf.mxu0
  %5425 = vmatprep.mubr.f32.mxu0 0.0
  %5426 = vmatmul.mubr.f32.gmra.mxu0 %v3966
  %v5427 = vpop.f32.mrf.mxu0
  %v5428 = vadd.f32 0.0, %v5427
  %v5429 = vpop.f32.mrf.mxu0
  %5430 = vmatprep.mubr.f32.mxu0 0.0
  %5431 = vmatmul.mubr.f32.gmra.mxu0 %v3969
  %v5432 = vpop.f32.mrf.mxu0
  %v5433 = vadd.f32 0.0, %v5432
  %v5434 = vpop.f32.mrf.mxu0
  %5435 = vmatprep.mubr.f32.mxu0 0.0
  %5436 = vmatmul.mubr.f32.gmra.mxu0 %v3972
  %v5437 = vpop.f32.mrf.mxu0
  %v5438 = vadd.f32 0.0, %v5437
  %v5439 = vpop.f32.mrf.mxu0
  %5440 = vmatprep.mubr.f32.mxu0 0.0
  %5441 = vmatmul.mubr.f32.gmra.mxu0 %v3975
  %v5442 = vpop.f32.mrf.mxu0
  %v5443 = vadd.f32 0.0, %v5442
  %v5444 = vpop.f32.mrf.mxu0
  %5445 = vmatprep.mubr.f32.mxu0 0.0
  %5446 = vmatmul.mubr.f32.gmra.mxu0 %v3978
  %v5447 = vpop.f32.mrf.mxu0
  %v5448 = vadd.f32 0.0, %v5447
  %v5449 = vpop.f32.mrf.mxu0
  %5450 = vmatprep.mubr.f32.mxu0 0.0
  %5451 = vmatmul.mubr.f32.gmra.mxu0 %v3981
  %v5452 = vpop.f32.mrf.mxu0
  %v5453 = vadd.f32 0.0, %v5452
  %v5454 = vpop.f32.mrf.mxu0
  %5455 = vmatprep.mubr.f32.mxu0 0.0
  %5456 = vmatmul.mubr.f32.gmra.mxu0 %v3984
  %v5457 = vpop.f32.mrf.mxu0
  %v5458 = vadd.f32 0.0, %v5457
  %v5459 = vpop.f32.mrf.mxu0
  %5460 = vmatprep.mubr.f32.mxu0 0.0
  %5461 = vmatmul.mubr.f32.gmra.mxu0 %v3987
  %v5462 = vpop.f32.mrf.mxu0
  %v5463 = vadd.f32 0.0, %v5462
  %v5464 = vpop.f32.mrf.mxu0
  %5465 = vmatprep.mubr.f32.mxu0 0.0
  %5466 = vmatmul.mubr.f32.gmra.mxu0 %v3990
  %v5467 = vpop.f32.mrf.mxu0
  %v5468 = vadd.f32 0.0, %v5467
  %v5469 = vpop.f32.mrf.mxu0
  %5470 = vmatprep.mubr.f32.mxu0 0.0
  %5471 = vmatmul.mubr.f32.gmra.mxu0 %v3993
  %v5472 = vpop.f32.mrf.mxu0
  %v5473 = vadd.f32 0.0, %v5472
  %v5474 = vpop.f32.mrf.mxu0
  %5475 = vmatprep.mubr.f32.mxu0 0.0
  %5476 = vmatmul.mubr.f32.gmra.mxu0 %v3996
  %v5477 = vpop.f32.mrf.mxu0
  %v5478 = vadd.f32 0.0, %v5477
  %v5479 = vpop.f32.mrf.mxu0
  %5480 = vmatprep.mubr.f32.mxu0 0.0
  %5481 = vmatmul.mubr.f32.gmra.mxu0 %v3999
  %v5482 = vpop.f32.mrf.mxu0
  %v5483 = vadd.f32 0.0, %v5482
  %v5484 = vpop.f32.mrf.mxu0
  %5485 = vmatprep.mubr.f32.mxu0 0.0
  %5486 = vmatmul.mubr.f32.gmra.mxu0 %v4002
  %v5487 = vpop.f32.mrf.mxu0
  %v5488 = vadd.f32 0.0, %v5487
  %v5489 = vpop.f32.mrf.mxu0
  %5490 = vmatprep.mubr.f32.mxu0 0.0
  %5491 = vmatmul.mubr.f32.gmra.mxu0 %v4005
  %v5492 = vpop.f32.mrf.mxu0
  %v5493 = vadd.f32 0.0, %v5492
  %v5494 = vpop.f32.mrf.mxu0
  %5495 = vmatprep.mubr.f32.mxu0 0.0
  %5496 = vmatmul.mubr.f32.gmra.mxu0 %v4008
  %v5497 = vpop.f32.mrf.mxu0
  %v5498 = vadd.f32 0.0, %v5497
  %v5499 = vpop.f32.mrf.mxu0
  %5500 = vmatprep.mubr.f32.mxu0 0.0
  %5501 = vmatmul.mubr.f32.gmra.mxu0 %v4011
  %v5502 = vpop.f32.mrf.mxu0
  %v5503 = vadd.f32 0.0, %v5502
  %v5504 = vpop.f32.mrf.mxu0
  %5505 = vmatprep.mubr.f32.mxu0 0.0
  %5506 = vmatmul.mubr.f32.gmra.mxu0 %v4014
  %v5507 = vpop.f32.mrf.mxu0
  %v5508 = vadd.f32 0.0, %v5507
  %v5509 = vpop.f32.mrf.mxu0
  %5510 = vmatprep.mubr.f32.mxu0 0.0
  %5511 = vmatmul.mubr.f32.gmra.mxu0 %v4017
  %v5512 = vpop.f32.mrf.mxu0
  %v5513 = vadd.f32 0.0, %v5512
  %v5514 = vpop.f32.mrf.mxu0
  %5515 = vmatprep.mubr.f32.mxu0 0.0
  %5516 = vmatmul.mubr.f32.gmra.mxu0 %v4020
  %v5517 = vpop.f32.mrf.mxu0
  %v5518 = vadd.f32 0.0, %v5517
  %v5519 = vpop.f32.mrf.mxu0
  %5520 = vmatprep.mubr.f32.mxu0 0.0
  %5521 = vmatmul.mubr.f32.gmra.mxu0 %v4023
  %v5522 = vpop.f32.mrf.mxu0
  %v5523 = vadd.f32 0.0, %v5522
  %v5524 = vpop.f32.mrf.mxu0
  %5525 = vmatprep.mubr.f32.mxu0 0.0
  %5526 = vmatmul.mubr.f32.gmra.mxu0 %v4026
  %v5527 = vpop.f32.mrf.mxu0
  %v5528 = vadd.f32 0.0, %v5527
  %v5529 = vpop.f32.mrf.mxu0
  %5530 = vmatprep.mubr.f32.mxu0 0.0
  %5531 = vmatmul.mubr.f32.gmra.mxu0 %v4029
  %v5532 = vpop.f32.mrf.mxu0
  %v5533 = vadd.f32 0.0, %v5532
  %v5534 = vpop.f32.mrf.mxu0
  %5535 = vdwg.mxu0
  %v5536 = vsel %vm1259, %v4098, -inf
  %v5537 = vsel %vm1259, %v4178, -inf
  %v5538 = vmax.f32 %v5536, %v5537
  %v5539 = vsel %vm1259, %v4258, -inf
  %v5540 = vmax.f32 %v5538, %v5539
  %v5541 = vsel %vm1259, %v4338, -inf
  %v5542 = vmax.f32 %v5540, %v5541
  %v5543 = vsel %vm1259, %v4418, -inf
  %v5544 = vmax.f32 %v5542, %v5543
  %v5545 = vsel %vm1259, %v4498, -inf
  %v5546 = vmax.f32 %v5544, %v5545
  %v5547 = vsel %vm1259, %v4578, -inf
  %v5548 = vmax.f32 %v5546, %v5547
  %v5549 = vsel %vm1259, %v4658, -inf
  %v5550 = vmax.f32 %v5548, %v5549
  %v5551 = vsel %vm1259, %v4738, -inf
  %v5552 = vmax.f32 %v5550, %v5551
  %v5553 = vsel %vm1259, %v4818, -inf
  %v5554 = vmax.f32 %v5552, %v5553
  %v5555 = vsel %vm1259, %v4898, -inf
  %v5556 = vmax.f32 %v5554, %v5555
  %v5557 = vsel %vm1259, %v4978, -inf
  %v5558 = vmax.f32 %v5556, %v5557
  %v5559 = vsel %vm1259, %v5058, -inf
  %v5560 = vmax.f32 %v5558, %v5559
  %v5561 = vsel %vm1259, %v5138, -inf
  %v5562 = vmax.f32 %v5560, %v5561
  %v5563 = vsel %vm1259, %v5218, -inf
  %v5564 = vmax.f32 %v5562, %v5563
  %v5565 = vsel %vm1259, %v5298, -inf
  %v5566 = vmax.f32 %v5564, %v5565
  %v5567 = vsel %vm1259, %v5378, -inf
  %v5568 = vmax.f32 %v5566, %v5567
  %v5569 = vsel %vm1259, %v5458, -inf
  %v5570 = vmax.f32 %v5568, %v5569
  %v5571 = vsel %vm1259, %v4103, -inf
  %v5572 = vsel %vm1259, %v4183, -inf
  %v5573 = vmax.f32 %v5571, %v5572
  %v5574 = vsel %vm1259, %v4263, -inf
  %v5575 = vmax.f32 %v5573, %v5574
  %v5576 = vsel %vm1259, %v4343, -inf
  %v5577 = vmax.f32 %v5575, %v5576
  %v5578 = vsel %vm1259, %v4423, -inf
  %v5579 = vmax.f32 %v5577, %v5578
  %v5580 = vsel %vm1259, %v4503, -inf
  %v5581 = vmax.f32 %v5579, %v5580
  %v5582 = vsel %vm1259, %v4583, -inf
  %v5583 = vmax.f32 %v5581, %v5582
  %v5584 = vsel %vm1259, %v4663, -inf
  %v5585 = vmax.f32 %v5583, %v5584
  %v5586 = vsel %vm1259, %v4743, -inf
  %v5587 = vmax.f32 %v5585, %v5586
  %v5588 = vsel %vm1259, %v4823, -inf
  %v5589 = vmax.f32 %v5587, %v5588
  %v5590 = vsel %vm1259, %v4903, -inf
  %v5591 = vmax.f32 %v5589, %v5590
  %v5592 = vsel %vm1259, %v4983, -inf
  %v5593 = vmax.f32 %v5591, %v5592
  %v5594 = vsel %vm1259, %v5063, -inf
  %v5595 = vmax.f32 %v5593, %v5594
  %v5596 = vsel %vm1259, %v5143, -inf
  %v5597 = vmax.f32 %v5595, %v5596
  %v5598 = vsel %vm1259, %v5223, -inf
  %v5599 = vmax.f32 %v5597, %v5598
  %v5600 = vsel %vm1259, %v5303, -inf
  %v5601 = vmax.f32 %v5599, %v5600
  %v5602 = vsel %vm1259, %v5383, -inf
  %v5603 = vmax.f32 %v5601, %v5602
  %v5604 = vsel %vm1259, %v5463, -inf
  %v5605 = vmax.f32 %v5603, %v5604
  %v5606 = vsel %vm1259, %v4108, -inf
  %v5607 = vsel %vm1259, %v4188, -inf
  %v5608 = vmax.f32 %v5606, %v5607
  %v5609 = vsel %vm1259, %v4268, -inf
  %v5610 = vmax.f32 %v5608, %v5609
  %v5611 = vsel %vm1259, %v4348, -inf
  %v5612 = vmax.f32 %v5610, %v5611
  %v5613 = vsel %vm1259, %v4428, -inf
  %v5614 = vmax.f32 %v5612, %v5613
  %v5615 = vsel %vm1259, %v4508, -inf
  %v5616 = vmax.f32 %v5614, %v5615
  %v5617 = vsel %vm1259, %v4588, -inf
  %v5618 = vmax.f32 %v5616, %v5617
  %v5619 = vsel %vm1259, %v4668, -inf
  %v5620 = vmax.f32 %v5618, %v5619
  %v5621 = vsel %vm1259, %v4748, -inf
  %v5622 = vmax.f32 %v5620, %v5621
  %v5623 = vsel %vm1259, %v4828, -inf
  %v5624 = vmax.f32 %v5622, %v5623
  %v5625 = vsel %vm1259, %v4908, -inf
  %v5626 = vmax.f32 %v5624, %v5625
  %v5627 = vsel %vm1259, %v4988, -inf
  %v5628 = vmax.f32 %v5626, %v5627
  %v5629 = vsel %vm1259, %v5068, -inf
  %v5630 = vmax.f32 %v5628, %v5629
  %v5631 = vsel %vm1259, %v5148, -inf
  %v5632 = vmax.f32 %v5630, %v5631
  %v5633 = vsel %vm1259, %v5228, -inf
  %v5634 = vmax.f32 %v5632, %v5633
  %v5635 = vsel %vm1259, %v5308, -inf
  %v5636 = vmax.f32 %v5634, %v5635
  %v5637 = vsel %vm1259, %v5388, -inf
  %v5638 = vmax.f32 %v5636, %v5637
  %v5639 = vsel %vm1259, %v5468, -inf
  %v5640 = vmax.f32 %v5638, %v5639
  %v5641 = vsel %vm1259, %v4113, -inf
  %v5642 = vsel %vm1259, %v4193, -inf
  %v5643 = vmax.f32 %v5641, %v5642
  %v5644 = vsel %vm1259, %v4273, -inf
  %v5645 = vmax.f32 %v5643, %v5644
  %v5646 = vsel %vm1259, %v4353, -inf
  %v5647 = vmax.f32 %v5645, %v5646
  %v5648 = vsel %vm1259, %v4433, -inf
  %v5649 = vmax.f32 %v5647, %v5648
  %v5650 = vsel %vm1259, %v4513, -inf
  %v5651 = vmax.f32 %v5649, %v5650
  %v5652 = vsel %vm1259, %v4593, -inf
  %v5653 = vmax.f32 %v5651, %v5652
  %v5654 = vsel %vm1259, %v4673, -inf
  %v5655 = vmax.f32 %v5653, %v5654
  %v5656 = vsel %vm1259, %v4753, -inf
  %v5657 = vmax.f32 %v5655, %v5656
  %v5658 = vsel %vm1259, %v4833, -inf
  %v5659 = vmax.f32 %v5657, %v5658
  %v5660 = vsel %vm1259, %v4913, -inf
  %v5661 = vmax.f32 %v5659, %v5660
  %v5662 = vsel %vm1259, %v4993, -inf
  %v5663 = vmax.f32 %v5661, %v5662
  %v5664 = vsel %vm1259, %v5073, -inf
  %v5665 = vmax.f32 %v5663, %v5664
  %v5666 = vsel %vm1259, %v5153, -inf
  %v5667 = vmax.f32 %v5665, %v5666
  %v5668 = vsel %vm1259, %v5233, -inf
  %v5669 = vmax.f32 %v5667, %v5668
  %v5670 = vsel %vm1259, %v5313, -inf
  %v5671 = vmax.f32 %v5669, %v5670
  %v5672 = vsel %vm1259, %v5393, -inf
  %v5673 = vmax.f32 %v5671, %v5672
  %v5674 = vsel %vm1259, %v5473, -inf
  %v5675 = vmax.f32 %v5673, %v5674
  %v5676 = vsel %vm1259, %v4118, -inf
  %v5677 = vsel %vm1259, %v4198, -inf
  %v5678 = vmax.f32 %v5676, %v5677
  %v5679 = vsel %vm1259, %v4278, -inf
  %v5680 = vmax.f32 %v5678, %v5679
  %v5681 = vsel %vm1259, %v4358, -inf
  %v5682 = vmax.f32 %v5680, %v5681
  %v5683 = vsel %vm1259, %v4438, -inf
  %v5684 = vmax.f32 %v5682, %v5683
  %v5685 = vsel %vm1259, %v4518, -inf
  %v5686 = vmax.f32 %v5684, %v5685
  %v5687 = vsel %vm1259, %v4598, -inf
  %v5688 = vmax.f32 %v5686, %v5687
  %v5689 = vsel %vm1259, %v4678, -inf
  %v5690 = vmax.f32 %v5688, %v5689
  %v5691 = vsel %vm1259, %v4758, -inf
  %v5692 = vmax.f32 %v5690, %v5691
  %v5693 = vsel %vm1259, %v4838, -inf
  %v5694 = vmax.f32 %v5692, %v5693
  %v5695 = vsel %vm1259, %v4918, -inf
  %v5696 = vmax.f32 %v5694, %v5695
  %v5697 = vsel %vm1259, %v4998, -inf
  %v5698 = vmax.f32 %v5696, %v5697
  %v5699 = vsel %vm1259, %v5078, -inf
  %v5700 = vmax.f32 %v5698, %v5699
  %v5701 = vsel %vm1259, %v5158, -inf
  %v5702 = vmax.f32 %v5700, %v5701
  %v5703 = vsel %vm1259, %v5238, -inf
  %v5704 = vmax.f32 %v5702, %v5703
  %v5705 = vsel %vm1259, %v5318, -inf
  %v5706 = vmax.f32 %v5704, %v5705
  %v5707 = vsel %vm1259, %v5398, -inf
  %v5708 = vmax.f32 %v5706, %v5707
  %v5709 = vsel %vm1259, %v5478, -inf
  %v5710 = vmax.f32 %v5708, %v5709
  %v5711 = vsel %vm1259, %v4123, -inf
  %v5712 = vsel %vm1259, %v4203, -inf
  %v5713 = vmax.f32 %v5711, %v5712
  %v5714 = vsel %vm1259, %v4283, -inf
  %v5715 = vmax.f32 %v5713, %v5714
  %v5716 = vsel %vm1259, %v4363, -inf
  %v5717 = vmax.f32 %v5715, %v5716
  %v5718 = vsel %vm1259, %v4443, -inf
  %v5719 = vmax.f32 %v5717, %v5718
  %v5720 = vsel %vm1259, %v4523, -inf
  %v5721 = vmax.f32 %v5719, %v5720
  %v5722 = vsel %vm1259, %v4603, -inf
  %v5723 = vmax.f32 %v5721, %v5722
  %v5724 = vsel %vm1259, %v4683, -inf
  %v5725 = vmax.f32 %v5723, %v5724
  %v5726 = vsel %vm1259, %v4763, -inf
  %v5727 = vmax.f32 %v5725, %v5726
  %v5728 = vsel %vm1259, %v4843, -inf
  %v5729 = vmax.f32 %v5727, %v5728
  %v5730 = vsel %vm1259, %v4923, -inf
  %v5731 = vmax.f32 %v5729, %v5730
  %v5732 = vsel %vm1259, %v5003, -inf
  %v5733 = vmax.f32 %v5731, %v5732
  %v5734 = vsel %vm1259, %v5083, -inf
  %v5735 = vmax.f32 %v5733, %v5734
  %v5736 = vsel %vm1259, %v5163, -inf
  %v5737 = vmax.f32 %v5735, %v5736
  %v5738 = vsel %vm1259, %v5243, -inf
  %v5739 = vmax.f32 %v5737, %v5738
  %v5740 = vsel %vm1259, %v5323, -inf
  %v5741 = vmax.f32 %v5739, %v5740
  %v5742 = vsel %vm1259, %v5403, -inf
  %v5743 = vmax.f32 %v5741, %v5742
  %v5744 = vsel %vm1259, %v5483, -inf
  %v5745 = vmax.f32 %v5743, %v5744
  %v5746 = vsel %vm1259, %v4128, -inf
  %v5747 = vsel %vm1259, %v4208, -inf
  %v5748 = vmax.f32 %v5746, %v5747
  %v5749 = vsel %vm1259, %v4288, -inf
  %v5750 = vmax.f32 %v5748, %v5749
  %v5751 = vsel %vm1259, %v4368, -inf
  %v5752 = vmax.f32 %v5750, %v5751
  %v5753 = vsel %vm1259, %v4448, -inf
  %v5754 = vmax.f32 %v5752, %v5753
  %v5755 = vsel %vm1259, %v4528, -inf
  %v5756 = vmax.f32 %v5754, %v5755
  %v5757 = vsel %vm1259, %v4608, -inf
  %v5758 = vmax.f32 %v5756, %v5757
  %v5759 = vsel %vm1259, %v4688, -inf
  %v5760 = vmax.f32 %v5758, %v5759
  %v5761 = vsel %vm1259, %v4768, -inf
  %v5762 = vmax.f32 %v5760, %v5761
  %v5763 = vsel %vm1259, %v4848, -inf
  %v5764 = vmax.f32 %v5762, %v5763
  %v5765 = vsel %vm1259, %v4928, -inf
  %v5766 = vmax.f32 %v5764, %v5765
  %v5767 = vsel %vm1259, %v5008, -inf
  %v5768 = vmax.f32 %v5766, %v5767
  %v5769 = vsel %vm1259, %v5088, -inf
  %v5770 = vmax.f32 %v5768, %v5769
  %v5771 = vsel %vm1259, %v5168, -inf
  %v5772 = vmax.f32 %v5770, %v5771
  %v5773 = vsel %vm1259, %v5248, -inf
  %v5774 = vmax.f32 %v5772, %v5773
  %v5775 = vsel %vm1259, %v5328, -inf
  %v5776 = vmax.f32 %v5774, %v5775
  %v5777 = vsel %vm1259, %v5408, -inf
  %v5778 = vmax.f32 %v5776, %v5777
  %v5779 = vsel %vm1259, %v5488, -inf
  %v5780 = vmax.f32 %v5778, %v5779
  %v5781 = vsel %vm1259, %v4133, -inf
  %v5782 = vsel %vm1259, %v4213, -inf
  %v5783 = vmax.f32 %v5781, %v5782
  %v5784 = vsel %vm1259, %v4293, -inf
  %v5785 = vmax.f32 %v5783, %v5784
  %v5786 = vsel %vm1259, %v4373, -inf
  %v5787 = vmax.f32 %v5785, %v5786
  %v5788 = vsel %vm1259, %v4453, -inf
  %v5789 = vmax.f32 %v5787, %v5788
  %v5790 = vsel %vm1259, %v4533, -inf
  %v5791 = vmax.f32 %v5789, %v5790
  %v5792 = vsel %vm1259, %v4613, -inf
  %v5793 = vmax.f32 %v5791, %v5792
  %v5794 = vsel %vm1259, %v4693, -inf
  %v5795 = vmax.f32 %v5793, %v5794
  %v5796 = vsel %vm1259, %v4773, -inf
  %v5797 = vmax.f32 %v5795, %v5796
  %v5798 = vsel %vm1259, %v4853, -inf
  %v5799 = vmax.f32 %v5797, %v5798
  %v5800 = vsel %vm1259, %v4933, -inf
  %v5801 = vmax.f32 %v5799, %v5800
  %v5802 = vsel %vm1259, %v5013, -inf
  %v5803 = vmax.f32 %v5801, %v5802
  %v5804 = vsel %vm1259, %v5093, -inf
  %v5805 = vmax.f32 %v5803, %v5804
  %v5806 = vsel %vm1259, %v5173, -inf
  %v5807 = vmax.f32 %v5805, %v5806
  %v5808 = vsel %vm1259, %v5253, -inf
  %v5809 = vmax.f32 %v5807, %v5808
  %v5810 = vsel %vm1259, %v5333, -inf
  %v5811 = vmax.f32 %v5809, %v5810
  %v5812 = vsel %vm1259, %v5413, -inf
  %v5813 = vmax.f32 %v5811, %v5812
  %v5814 = vsel %vm1259, %v5493, -inf
  %v5815 = vmax.f32 %v5813, %v5814
  %v5816 = vsel %vm1259, %v4138, -inf
  %v5817 = vsel %vm1259, %v4218, -inf
  %v5818 = vmax.f32 %v5816, %v5817
  %v5819 = vsel %vm1259, %v4298, -inf
  %v5820 = vmax.f32 %v5818, %v5819
  %v5821 = vsel %vm1259, %v4378, -inf
  %v5822 = vmax.f32 %v5820, %v5821
  %v5823 = vsel %vm1259, %v4458, -inf
  %v5824 = vmax.f32 %v5822, %v5823
  %v5825 = vsel %vm1259, %v4538, -inf
  %v5826 = vmax.f32 %v5824, %v5825
  %v5827 = vsel %vm1259, %v4618, -inf
  %v5828 = vmax.f32 %v5826, %v5827
  %v5829 = vsel %vm1259, %v4698, -inf
  %v5830 = vmax.f32 %v5828, %v5829
  %v5831 = vsel %vm1259, %v4778, -inf
  %v5832 = vmax.f32 %v5830, %v5831
  %v5833 = vsel %vm1259, %v4858, -inf
  %v5834 = vmax.f32 %v5832, %v5833
  %v5835 = vsel %vm1259, %v4938, -inf
  %v5836 = vmax.f32 %v5834, %v5835
  %v5837 = vsel %vm1259, %v5018, -inf
  %v5838 = vmax.f32 %v5836, %v5837
  %v5839 = vsel %vm1259, %v5098, -inf
  %v5840 = vmax.f32 %v5838, %v5839
  %v5841 = vsel %vm1259, %v5178, -inf
  %v5842 = vmax.f32 %v5840, %v5841
  %v5843 = vsel %vm1259, %v5258, -inf
  %v5844 = vmax.f32 %v5842, %v5843
  %v5845 = vsel %vm1259, %v5338, -inf
  %v5846 = vmax.f32 %v5844, %v5845
  %v5847 = vsel %vm1259, %v5418, -inf
  %v5848 = vmax.f32 %v5846, %v5847
  %v5849 = vsel %vm1259, %v5498, -inf
  %v5850 = vmax.f32 %v5848, %v5849
  %v5851 = vsel %vm1259, %v4143, -inf
  %v5852 = vsel %vm1259, %v4223, -inf
  %v5853 = vmax.f32 %v5851, %v5852
  %v5854 = vsel %vm1259, %v4303, -inf
  %v5855 = vmax.f32 %v5853, %v5854
  %v5856 = vsel %vm1259, %v4383, -inf
  %v5857 = vmax.f32 %v5855, %v5856
  %v5858 = vsel %vm1259, %v4463, -inf
  %v5859 = vmax.f32 %v5857, %v5858
  %v5860 = vsel %vm1259, %v4543, -inf
  %v5861 = vmax.f32 %v5859, %v5860
  %v5862 = vsel %vm1259, %v4623, -inf
  %v5863 = vmax.f32 %v5861, %v5862
  %v5864 = vsel %vm1259, %v4703, -inf
  %v5865 = vmax.f32 %v5863, %v5864
  %v5866 = vsel %vm1259, %v4783, -inf
  %v5867 = vmax.f32 %v5865, %v5866
  %v5868 = vsel %vm1259, %v4863, -inf
  %v5869 = vmax.f32 %v5867, %v5868
  %v5870 = vsel %vm1259, %v4943, -inf
  %v5871 = vmax.f32 %v5869, %v5870
  %v5872 = vsel %vm1259, %v5023, -inf
  %v5873 = vmax.f32 %v5871, %v5872
  %v5874 = vsel %vm1259, %v5103, -inf
  %v5875 = vmax.f32 %v5873, %v5874
  %v5876 = vsel %vm1259, %v5183, -inf
  %v5877 = vmax.f32 %v5875, %v5876
  %v5878 = vsel %vm1259, %v5263, -inf
  %v5879 = vmax.f32 %v5877, %v5878
  %v5880 = vsel %vm1259, %v5343, -inf
  %v5881 = vmax.f32 %v5879, %v5880
  %v5882 = vsel %vm1259, %v5423, -inf
  %v5883 = vmax.f32 %v5881, %v5882
  %v5884 = vsel %vm1259, %v5503, -inf
  %v5885 = vmax.f32 %v5883, %v5884
  %v5886 = vsel %vm1259, %v4148, -inf
  %v5887 = vsel %vm1259, %v4228, -inf
  %v5888 = vmax.f32 %v5886, %v5887
  %v5889 = vsel %vm1259, %v4308, -inf
  %v5890 = vmax.f32 %v5888, %v5889
  %v5891 = vsel %vm1259, %v4388, -inf
  %v5892 = vmax.f32 %v5890, %v5891
  %v5893 = vsel %vm1259, %v4468, -inf
  %v5894 = vmax.f32 %v5892, %v5893
  %v5895 = vsel %vm1259, %v4548, -inf
  %v5896 = vmax.f32 %v5894, %v5895
  %v5897 = vsel %vm1259, %v4628, -inf
  %v5898 = vmax.f32 %v5896, %v5897
  %v5899 = vsel %vm1259, %v4708, -inf
  %v5900 = vmax.f32 %v5898, %v5899
  %v5901 = vsel %vm1259, %v4788, -inf
  %v5902 = vmax.f32 %v5900, %v5901
  %v5903 = vsel %vm1259, %v4868, -inf
  %v5904 = vmax.f32 %v5902, %v5903
  %v5905 = vsel %vm1259, %v4948, -inf
  %v5906 = vmax.f32 %v5904, %v5905
  %v5907 = vsel %vm1259, %v5028, -inf
  %v5908 = vmax.f32 %v5906, %v5907
  %v5909 = vsel %vm1259, %v5108, -inf
  %v5910 = vmax.f32 %v5908, %v5909
  %v5911 = vsel %vm1259, %v5188, -inf
  %v5912 = vmax.f32 %v5910, %v5911
  %v5913 = vsel %vm1259, %v5268, -inf
  %v5914 = vmax.f32 %v5912, %v5913
  %v5915 = vsel %vm1259, %v5348, -inf
  %v5916 = vmax.f32 %v5914, %v5915
  %v5917 = vsel %vm1259, %v5428, -inf
  %v5918 = vmax.f32 %v5916, %v5917
  %v5919 = vsel %vm1259, %v5508, -inf
  %v5920 = vmax.f32 %v5918, %v5919
  %v5921 = vsel %vm1259, %v4153, -inf
  %v5922 = vsel %vm1259, %v4233, -inf
  %v5923 = vmax.f32 %v5921, %v5922
  %v5924 = vsel %vm1259, %v4313, -inf
  %v5925 = vmax.f32 %v5923, %v5924
  %v5926 = vsel %vm1259, %v4393, -inf
  %v5927 = vmax.f32 %v5925, %v5926
  %v5928 = vsel %vm1259, %v4473, -inf
  %v5929 = vmax.f32 %v5927, %v5928
  %v5930 = vsel %vm1259, %v4553, -inf
  %v5931 = vmax.f32 %v5929, %v5930
  %v5932 = vsel %vm1259, %v4633, -inf
  %v5933 = vmax.f32 %v5931, %v5932
  %v5934 = vsel %vm1259, %v4713, -inf
  %v5935 = vmax.f32 %v5933, %v5934
  %v5936 = vsel %vm1259, %v4793, -inf
  %v5937 = vmax.f32 %v5935, %v5936
  %v5938 = vsel %vm1259, %v4873, -inf
  %v5939 = vmax.f32 %v5937, %v5938
  %v5940 = vsel %vm1259, %v4953, -inf
  %v5941 = vmax.f32 %v5939, %v5940
  %v5942 = vsel %vm1259, %v5033, -inf
  %v5943 = vmax.f32 %v5941, %v5942
  %v5944 = vsel %vm1259, %v5113, -inf
  %v5945 = vmax.f32 %v5943, %v5944
  %v5946 = vsel %vm1259, %v5193, -inf
  %v5947 = vmax.f32 %v5945, %v5946
  %v5948 = vsel %vm1259, %v5273, -inf
  %v5949 = vmax.f32 %v5947, %v5948
  %v5950 = vsel %vm1259, %v5353, -inf
  %v5951 = vmax.f32 %v5949, %v5950
  %v5952 = vsel %vm1259, %v5433, -inf
  %v5953 = vmax.f32 %v5951, %v5952
  %v5954 = vsel %vm1259, %v5513, -inf
  %v5955 = vmax.f32 %v5953, %v5954
  %v5956 = vsel %vm1259, %v4158, -inf
  %v5957 = vsel %vm1259, %v4238, -inf
  %v5958 = vmax.f32 %v5956, %v5957
  %v5959 = vsel %vm1259, %v4318, -inf
  %v5960 = vmax.f32 %v5958, %v5959
  %v5961 = vsel %vm1259, %v4398, -inf
  %v5962 = vmax.f32 %v5960, %v5961
  %v5963 = vsel %vm1259, %v4478, -inf
  %v5964 = vmax.f32 %v5962, %v5963
  %v5965 = vsel %vm1259, %v4558, -inf
  %v5966 = vmax.f32 %v5964, %v5965
  %v5967 = vsel %vm1259, %v4638, -inf
  %v5968 = vmax.f32 %v5966, %v5967
  %v5969 = vsel %vm1259, %v4718, -inf
  %v5970 = vmax.f32 %v5968, %v5969
  %v5971 = vsel %vm1259, %v4798, -inf
  %v5972 = vmax.f32 %v5970, %v5971
  %v5973 = vsel %vm1259, %v4878, -inf
  %v5974 = vmax.f32 %v5972, %v5973
  %v5975 = vsel %vm1259, %v4958, -inf
  %v5976 = vmax.f32 %v5974, %v5975
  %v5977 = vsel %vm1259, %v5038, -inf
  %v5978 = vmax.f32 %v5976, %v5977
  %v5979 = vsel %vm1259, %v5118, -inf
  %v5980 = vmax.f32 %v5978, %v5979
  %v5981 = vsel %vm1259, %v5198, -inf
  %v5982 = vmax.f32 %v5980, %v5981
  %v5983 = vsel %vm1259, %v5278, -inf
  %v5984 = vmax.f32 %v5982, %v5983
  %v5985 = vsel %vm1259, %v5358, -inf
  %v5986 = vmax.f32 %v5984, %v5985
  %v5987 = vsel %vm1259, %v5438, -inf
  %v5988 = vmax.f32 %v5986, %v5987
  %v5989 = vsel %vm1259, %v5518, -inf
  %v5990 = vmax.f32 %v5988, %v5989
  %v5991 = vsel %vm1259, %v4163, -inf
  %v5992 = vsel %vm1259, %v4243, -inf
  %v5993 = vmax.f32 %v5991, %v5992
  %v5994 = vsel %vm1259, %v4323, -inf
  %v5995 = vmax.f32 %v5993, %v5994
  %v5996 = vsel %vm1259, %v4403, -inf
  %v5997 = vmax.f32 %v5995, %v5996
  %v5998 = vsel %vm1259, %v4483, -inf
  %v5999 = vmax.f32 %v5997, %v5998
  %v6000 = vsel %vm1259, %v4563, -inf
  %v6001 = vmax.f32 %v5999, %v6000
  %v6002 = vsel %vm1259, %v4643, -inf
  %v6003 = vmax.f32 %v6001, %v6002
  %v6004 = vsel %vm1259, %v4723, -inf
  %v6005 = vmax.f32 %v6003, %v6004
  %v6006 = vsel %vm1259, %v4803, -inf
  %v6007 = vmax.f32 %v6005, %v6006
  %v6008 = vsel %vm1259, %v4883, -inf
  %v6009 = vmax.f32 %v6007, %v6008
  %v6010 = vsel %vm1259, %v4963, -inf
  %v6011 = vmax.f32 %v6009, %v6010
  %v6012 = vsel %vm1259, %v5043, -inf
  %v6013 = vmax.f32 %v6011, %v6012
  %v6014 = vsel %vm1259, %v5123, -inf
  %v6015 = vmax.f32 %v6013, %v6014
  %v6016 = vsel %vm1259, %v5203, -inf
  %v6017 = vmax.f32 %v6015, %v6016
  %v6018 = vsel %vm1259, %v5283, -inf
  %v6019 = vmax.f32 %v6017, %v6018
  %v6020 = vsel %vm1259, %v5363, -inf
  %v6021 = vmax.f32 %v6019, %v6020
  %v6022 = vsel %vm1259, %v5443, -inf
  %v6023 = vmax.f32 %v6021, %v6022
  %v6024 = vsel %vm1259, %v5523, -inf
  %v6025 = vmax.f32 %v6023, %v6024
  %v6026 = vsel %vm1259, %v4168, -inf
  %v6027 = vsel %vm1259, %v4248, -inf
  %v6028 = vmax.f32 %v6026, %v6027
  %v6029 = vsel %vm1259, %v4328, -inf
  %v6030 = vmax.f32 %v6028, %v6029
  %v6031 = vsel %vm1259, %v4408, -inf
  %v6032 = vmax.f32 %v6030, %v6031
  %v6033 = vsel %vm1259, %v4488, -inf
  %v6034 = vmax.f32 %v6032, %v6033
  %v6035 = vsel %vm1259, %v4568, -inf
  %v6036 = vmax.f32 %v6034, %v6035
  %v6037 = vsel %vm1259, %v4648, -inf
  %v6038 = vmax.f32 %v6036, %v6037
  %v6039 = vsel %vm1259, %v4728, -inf
  %v6040 = vmax.f32 %v6038, %v6039
  %v6041 = vsel %vm1259, %v4808, -inf
  %v6042 = vmax.f32 %v6040, %v6041
  %v6043 = vsel %vm1259, %v4888, -inf
  %v6044 = vmax.f32 %v6042, %v6043
  %v6045 = vsel %vm1259, %v4968, -inf
  %v6046 = vmax.f32 %v6044, %v6045
  %v6047 = vsel %vm1259, %v5048, -inf
  %v6048 = vmax.f32 %v6046, %v6047
  %v6049 = vsel %vm1259, %v5128, -inf
  %v6050 = vmax.f32 %v6048, %v6049
  %v6051 = vsel %vm1259, %v5208, -inf
  %v6052 = vmax.f32 %v6050, %v6051
  %v6053 = vsel %vm1259, %v5288, -inf
  %v6054 = vmax.f32 %v6052, %v6053
  %v6055 = vsel %vm1259, %v5368, -inf
  %v6056 = vmax.f32 %v6054, %v6055
  %v6057 = vsel %vm1259, %v5448, -inf
  %v6058 = vmax.f32 %v6056, %v6057
  %v6059 = vsel %vm1259, %v5528, -inf
  %v6060 = vmax.f32 %v6058, %v6059
  %v6061 = vsel %vm1259, %v4173, -inf
  %v6062 = vsel %vm1259, %v4253, -inf
  %v6063 = vmax.f32 %v6061, %v6062
  %v6064 = vsel %vm1259, %v4333, -inf
  %v6065 = vmax.f32 %v6063, %v6064
  %v6066 = vsel %vm1259, %v4413, -inf
  %v6067 = vmax.f32 %v6065, %v6066
  %v6068 = vsel %vm1259, %v4493, -inf
  %v6069 = vmax.f32 %v6067, %v6068
  %v6070 = vsel %vm1259, %v4573, -inf
  %v6071 = vmax.f32 %v6069, %v6070
  %v6072 = vsel %vm1259, %v4653, -inf
  %v6073 = vmax.f32 %v6071, %v6072
  %v6074 = vsel %vm1259, %v4733, -inf
  %v6075 = vmax.f32 %v6073, %v6074
  %v6076 = vsel %vm1259, %v4813, -inf
  %v6077 = vmax.f32 %v6075, %v6076
  %v6078 = vsel %vm1259, %v4893, -inf
  %v6079 = vmax.f32 %v6077, %v6078
  %v6080 = vsel %vm1259, %v4973, -inf
  %v6081 = vmax.f32 %v6079, %v6080
  %v6082 = vsel %vm1259, %v5053, -inf
  %v6083 = vmax.f32 %v6081, %v6082
  %v6084 = vsel %vm1259, %v5133, -inf
  %v6085 = vmax.f32 %v6083, %v6084
  %v6086 = vsel %vm1259, %v5213, -inf
  %v6087 = vmax.f32 %v6085, %v6086
  %v6088 = vsel %vm1259, %v5293, -inf
  %v6089 = vmax.f32 %v6087, %v6088
  %v6090 = vsel %vm1259, %v5373, -inf
  %v6091 = vmax.f32 %v6089, %v6090
  %v6092 = vsel %vm1259, %v5453, -inf
  %v6093 = vmax.f32 %v6091, %v6092
  %v6094 = vsel %vm1259, %v5533, -inf
  %v6095 = vmax.f32 %v6093, %v6094
  %v6096 = vsub.f32 %v4098, %v5570
  %v6097 = vsub.f32 %v4103, %v5605
  %v6098 = vsub.f32 %v4108, %v5640
  %v6099 = vsub.f32 %v4113, %v5675
  %v6100 = vsub.f32 %v4118, %v5710
  %v6101 = vsub.f32 %v4123, %v5745
  %v6102 = vsub.f32 %v4128, %v5780
  %v6103 = vsub.f32 %v4133, %v5815
  %v6104 = vsub.f32 %v4138, %v5850
  %v6105 = vsub.f32 %v4143, %v5885
  %v6106 = vsub.f32 %v4148, %v5920
  %v6107 = vsub.f32 %v4153, %v5955
  %v6108 = vsub.f32 %v4158, %v5990
  %v6109 = vsub.f32 %v4163, %v6025
  %v6110 = vsub.f32 %v4168, %v6060
  %v6111 = vsub.f32 %v4173, %v6095
  %v6112 = vsub.f32 %v4178, %v5570
  %v6113 = vsub.f32 %v4183, %v5605
  %v6114 = vsub.f32 %v4188, %v5640
  %v6115 = vsub.f32 %v4193, %v5675
  %v6116 = vsub.f32 %v4198, %v5710
  %v6117 = vsub.f32 %v4203, %v5745
  %v6118 = vsub.f32 %v4208, %v5780
  %v6119 = vsub.f32 %v4213, %v5815
  %v6120 = vsub.f32 %v4218, %v5850
  %v6121 = vsub.f32 %v4223, %v5885
  %v6122 = vsub.f32 %v4228, %v5920
  %v6123 = vsub.f32 %v4233, %v5955
  %v6124 = vsub.f32 %v4238, %v5990
  %v6125 = vsub.f32 %v4243, %v6025
  %v6126 = vsub.f32 %v4248, %v6060
  %v6127 = vsub.f32 %v4253, %v6095
  %v6128 = vsub.f32 %v4258, %v5570
  %v6129 = vsub.f32 %v4263, %v5605
  %v6130 = vsub.f32 %v4268, %v5640
  %v6131 = vsub.f32 %v4273, %v5675
  %v6132 = vsub.f32 %v4278, %v5710
  %v6133 = vsub.f32 %v4283, %v5745
  %v6134 = vsub.f32 %v4288, %v5780
  %v6135 = vsub.f32 %v4293, %v5815
  %v6136 = vsub.f32 %v4298, %v5850
  %v6137 = vsub.f32 %v4303, %v5885
  %v6138 = vsub.f32 %v4308, %v5920
  %v6139 = vsub.f32 %v4313, %v5955
  %v6140 = vsub.f32 %v4318, %v5990
  %v6141 = vsub.f32 %v4323, %v6025
  %v6142 = vsub.f32 %v4328, %v6060
  %v6143 = vsub.f32 %v4333, %v6095
  %v6144 = vsub.f32 %v4338, %v5570
  %v6145 = vsub.f32 %v4343, %v5605
  %v6146 = vsub.f32 %v4348, %v5640
  %v6147 = vsub.f32 %v4353, %v5675
  %v6148 = vsub.f32 %v4358, %v5710
  %v6149 = vsub.f32 %v4363, %v5745
  %v6150 = vsub.f32 %v4368, %v5780
  %v6151 = vsub.f32 %v4373, %v5815
  %v6152 = vsub.f32 %v4378, %v5850
  %v6153 = vsub.f32 %v4383, %v5885
  %v6154 = vsub.f32 %v4388, %v5920
  %v6155 = vsub.f32 %v4393, %v5955
  %v6156 = vsub.f32 %v4398, %v5990
  %v6157 = vsub.f32 %v4403, %v6025
  %v6158 = vsub.f32 %v4408, %v6060
  %v6159 = vsub.f32 %v4413, %v6095
  %v6160 = vsub.f32 %v4418, %v5570
  %v6161 = vsub.f32 %v4423, %v5605
  %v6162 = vsub.f32 %v4428, %v5640
  %v6163 = vsub.f32 %v4433, %v5675
  %v6164 = vsub.f32 %v4438, %v5710
  %v6165 = vsub.f32 %v4443, %v5745
  %v6166 = vsub.f32 %v4448, %v5780
  %v6167 = vsub.f32 %v4453, %v5815
  %v6168 = vsub.f32 %v4458, %v5850
  %v6169 = vsub.f32 %v4463, %v5885
  %v6170 = vsub.f32 %v4468, %v5920
  %v6171 = vsub.f32 %v4473, %v5955
  %v6172 = vsub.f32 %v4478, %v5990
  %v6173 = vsub.f32 %v4483, %v6025
  %v6174 = vsub.f32 %v4488, %v6060
  %v6175 = vsub.f32 %v4493, %v6095
  %v6176 = vsub.f32 %v4498, %v5570
  %v6177 = vsub.f32 %v4503, %v5605
  %v6178 = vsub.f32 %v4508, %v5640
  %v6179 = vsub.f32 %v4513, %v5675
  %v6180 = vsub.f32 %v4518, %v5710
  %v6181 = vsub.f32 %v4523, %v5745
  %v6182 = vsub.f32 %v4528, %v5780
  %v6183 = vsub.f32 %v4533, %v5815
  %v6184 = vsub.f32 %v4538, %v5850
  %v6185 = vsub.f32 %v4543, %v5885
  %v6186 = vsub.f32 %v4548, %v5920
  %v6187 = vsub.f32 %v4553, %v5955
  %v6188 = vsub.f32 %v4558, %v5990
  %v6189 = vsub.f32 %v4563, %v6025
  %v6190 = vsub.f32 %v4568, %v6060
  %v6191 = vsub.f32 %v4573, %v6095
  %v6192 = vsub.f32 %v4578, %v5570
  %v6193 = vsub.f32 %v4583, %v5605
  %v6194 = vsub.f32 %v4588, %v5640
  %v6195 = vsub.f32 %v4593, %v5675
  %v6196 = vsub.f32 %v4598, %v5710
  %v6197 = vsub.f32 %v4603, %v5745
  %v6198 = vsub.f32 %v4608, %v5780
  %v6199 = vsub.f32 %v4613, %v5815
  %v6200 = vsub.f32 %v4618, %v5850
  %v6201 = vsub.f32 %v4623, %v5885
  %v6202 = vsub.f32 %v4628, %v5920
  %v6203 = vsub.f32 %v4633, %v5955
  %v6204 = vsub.f32 %v4638, %v5990
  %v6205 = vsub.f32 %v4643, %v6025
  %v6206 = vsub.f32 %v4648, %v6060
  %v6207 = vsub.f32 %v4653, %v6095
  %v6208 = vsub.f32 %v4658, %v5570
  %v6209 = vsub.f32 %v4663, %v5605
  %v6210 = vsub.f32 %v4668, %v5640
  %v6211 = vsub.f32 %v4673, %v5675
  %v6212 = vsub.f32 %v4678, %v5710
  %v6213 = vsub.f32 %v4683, %v5745
  %v6214 = vsub.f32 %v4688, %v5780
  %v6215 = vsub.f32 %v4693, %v5815
  %v6216 = vsub.f32 %v4698, %v5850
  %v6217 = vsub.f32 %v4703, %v5885
  %v6218 = vsub.f32 %v4708, %v5920
  %v6219 = vsub.f32 %v4713, %v5955
  %v6220 = vsub.f32 %v4718, %v5990
  %v6221 = vsub.f32 %v4723, %v6025
  %v6222 = vsub.f32 %v4728, %v6060
  %v6223 = vsub.f32 %v4733, %v6095
  %v6224 = vsub.f32 %v4738, %v5570
  %v6225 = vsub.f32 %v4743, %v5605
  %v6226 = vsub.f32 %v4748, %v5640
  %v6227 = vsub.f32 %v4753, %v5675
  %v6228 = vsub.f32 %v4758, %v5710
  %v6229 = vsub.f32 %v4763, %v5745
  %v6230 = vsub.f32 %v4768, %v5780
  %v6231 = vsub.f32 %v4773, %v5815
  %v6232 = vsub.f32 %v4778, %v5850
  %v6233 = vsub.f32 %v4783, %v5885
  %v6234 = vsub.f32 %v4788, %v5920
  %v6235 = vsub.f32 %v4793, %v5955
  %v6236 = vsub.f32 %v4798, %v5990
  %v6237 = vsub.f32 %v4803, %v6025
  %v6238 = vsub.f32 %v4808, %v6060
  %v6239 = vsub.f32 %v4813, %v6095
  %v6240 = vsub.f32 %v4818, %v5570
  %v6241 = vsub.f32 %v4823, %v5605
  %v6242 = vsub.f32 %v4828, %v5640
  %v6243 = vsub.f32 %v4833, %v5675
  %v6244 = vsub.f32 %v4838, %v5710
  %v6245 = vsub.f32 %v4843, %v5745
  %v6246 = vsub.f32 %v4848, %v5780
  %v6247 = vsub.f32 %v4853, %v5815
  %v6248 = vsub.f32 %v4858, %v5850
  %v6249 = vsub.f32 %v4863, %v5885
  %v6250 = vsub.f32 %v4868, %v5920
  %v6251 = vsub.f32 %v4873, %v5955
  %v6252 = vsub.f32 %v4878, %v5990
  %v6253 = vsub.f32 %v4883, %v6025
  %v6254 = vsub.f32 %v4888, %v6060
  %v6255 = vsub.f32 %v4893, %v6095
  %v6256 = vsub.f32 %v4898, %v5570
  %v6257 = vsub.f32 %v4903, %v5605
  %v6258 = vsub.f32 %v4908, %v5640
  %v6259 = vsub.f32 %v4913, %v5675
  %v6260 = vsub.f32 %v4918, %v5710
  %v6261 = vsub.f32 %v4923, %v5745
  %v6262 = vsub.f32 %v4928, %v5780
  %v6263 = vsub.f32 %v4933, %v5815
  %v6264 = vsub.f32 %v4938, %v5850
  %v6265 = vsub.f32 %v4943, %v5885
  %v6266 = vsub.f32 %v4948, %v5920
  %v6267 = vsub.f32 %v4953, %v5955
  %v6268 = vsub.f32 %v4958, %v5990
  %v6269 = vsub.f32 %v4963, %v6025
  %v6270 = vsub.f32 %v4968, %v6060
  %v6271 = vsub.f32 %v4973, %v6095
  %v6272 = vsub.f32 %v4978, %v5570
  %v6273 = vsub.f32 %v4983, %v5605
  %v6274 = vsub.f32 %v4988, %v5640
  %v6275 = vsub.f32 %v4993, %v5675
  %v6276 = vsub.f32 %v4998, %v5710
  %v6277 = vsub.f32 %v5003, %v5745
  %v6278 = vsub.f32 %v5008, %v5780
  %v6279 = vsub.f32 %v5013, %v5815
  %v6280 = vsub.f32 %v5018, %v5850
  %v6281 = vsub.f32 %v5023, %v5885
  %v6282 = vsub.f32 %v5028, %v5920
  %v6283 = vsub.f32 %v5033, %v5955
  %v6284 = vsub.f32 %v5038, %v5990
  %v6285 = vsub.f32 %v5043, %v6025
  %v6286 = vsub.f32 %v5048, %v6060
  %v6287 = vsub.f32 %v5053, %v6095
  %v6288 = vsub.f32 %v5058, %v5570
  %v6289 = vsub.f32 %v5063, %v5605
  %v6290 = vsub.f32 %v5068, %v5640
  %v6291 = vsub.f32 %v5073, %v5675
  %v6292 = vsub.f32 %v5078, %v5710
  %v6293 = vsub.f32 %v5083, %v5745
  %v6294 = vsub.f32 %v5088, %v5780
  %v6295 = vsub.f32 %v5093, %v5815
  %v6296 = vsub.f32 %v5098, %v5850
  %v6297 = vsub.f32 %v5103, %v5885
  %v6298 = vsub.f32 %v5108, %v5920
  %v6299 = vsub.f32 %v5113, %v5955
  %v6300 = vsub.f32 %v5118, %v5990
  %v6301 = vsub.f32 %v5123, %v6025
  %v6302 = vsub.f32 %v5128, %v6060
  %v6303 = vsub.f32 %v5133, %v6095
  %v6304 = vsub.f32 %v5138, %v5570
  %v6305 = vsub.f32 %v5143, %v5605
  %v6306 = vsub.f32 %v5148, %v5640
  %v6307 = vsub.f32 %v5153, %v5675
  %v6308 = vsub.f32 %v5158, %v5710
  %v6309 = vsub.f32 %v5163, %v5745
  %v6310 = vsub.f32 %v5168, %v5780
  %v6311 = vsub.f32 %v5173, %v5815
  %v6312 = vsub.f32 %v5178, %v5850
  %v6313 = vsub.f32 %v5183, %v5885
  %v6314 = vsub.f32 %v5188, %v5920
  %v6315 = vsub.f32 %v5193, %v5955
  %v6316 = vsub.f32 %v5198, %v5990
  %v6317 = vsub.f32 %v5203, %v6025
  %v6318 = vsub.f32 %v5208, %v6060
  %v6319 = vsub.f32 %v5213, %v6095
  %v6320 = vsub.f32 %v5218, %v5570
  %v6321 = vsub.f32 %v5223, %v5605
  %v6322 = vsub.f32 %v5228, %v5640
  %v6323 = vsub.f32 %v5233, %v5675
  %v6324 = vsub.f32 %v5238, %v5710
  %v6325 = vsub.f32 %v5243, %v5745
  %v6326 = vsub.f32 %v5248, %v5780
  %v6327 = vsub.f32 %v5253, %v5815
  %v6328 = vsub.f32 %v5258, %v5850
  %v6329 = vsub.f32 %v5263, %v5885
  %v6330 = vsub.f32 %v5268, %v5920
  %v6331 = vsub.f32 %v5273, %v5955
  %v6332 = vsub.f32 %v5278, %v5990
  %v6333 = vsub.f32 %v5283, %v6025
  %v6334 = vsub.f32 %v5288, %v6060
  %v6335 = vsub.f32 %v5293, %v6095
  %v6336 = vsub.f32 %v5298, %v5570
  %v6337 = vsub.f32 %v5303, %v5605
  %v6338 = vsub.f32 %v5308, %v5640
  %v6339 = vsub.f32 %v5313, %v5675
  %v6340 = vsub.f32 %v5318, %v5710
  %v6341 = vsub.f32 %v5323, %v5745
  %v6342 = vsub.f32 %v5328, %v5780
  %v6343 = vsub.f32 %v5333, %v5815
  %v6344 = vsub.f32 %v5338, %v5850
  %v6345 = vsub.f32 %v5343, %v5885
  %v6346 = vsub.f32 %v5348, %v5920
  %v6347 = vsub.f32 %v5353, %v5955
  %v6348 = vsub.f32 %v5358, %v5990
  %v6349 = vsub.f32 %v5363, %v6025
  %v6350 = vsub.f32 %v5368, %v6060
  %v6351 = vsub.f32 %v5373, %v6095
  %v6352 = vsub.f32 %v5378, %v5570
  %v6353 = vsub.f32 %v5383, %v5605
  %v6354 = vsub.f32 %v5388, %v5640
  %v6355 = vsub.f32 %v5393, %v5675
  %v6356 = vsub.f32 %v5398, %v5710
  %v6357 = vsub.f32 %v5403, %v5745
  %v6358 = vsub.f32 %v5408, %v5780
  %v6359 = vsub.f32 %v5413, %v5815
  %v6360 = vsub.f32 %v5418, %v5850
  %v6361 = vsub.f32 %v5423, %v5885
  %v6362 = vsub.f32 %v5428, %v5920
  %v6363 = vsub.f32 %v5433, %v5955
  %v6364 = vsub.f32 %v5438, %v5990
  %v6365 = vsub.f32 %v5443, %v6025
  %v6366 = vsub.f32 %v5448, %v6060
  %v6367 = vsub.f32 %v5453, %v6095
  %v6368 = vsub.f32 %v5458, %v5570
  %v6369 = vsub.f32 %v5463, %v5605
  %v6370 = vsub.f32 %v5468, %v5640
  %v6371 = vsub.f32 %v5473, %v5675
  %v6372 = vsub.f32 %v5478, %v5710
  %v6373 = vsub.f32 %v5483, %v5745
  %v6374 = vsub.f32 %v5488, %v5780
  %v6375 = vsub.f32 %v5493, %v5815
  %v6376 = vsub.f32 %v5498, %v5850
  %v6377 = vsub.f32 %v5503, %v5885
  %v6378 = vsub.f32 %v5508, %v5920
  %v6379 = vsub.f32 %v5513, %v5955
  %v6380 = vsub.f32 %v5518, %v5990
  %v6381 = vsub.f32 %v5523, %v6025
  %v6382 = vsub.f32 %v5528, %v6060
  %v6383 = vsub.f32 %v5533, %v6095
  %v6384 = vmul.f32 %v6096, 1.442695
  %v6385 = vpow.pop %v6384
  %v6386 = vmul.f32 %v6097, 1.442695
  %v6387 = vpow.pop %v6386
  %v6388 = vmul.f32 %v6098, 1.442695
  %v6389 = vpow.pop %v6388
  %v6390 = vmul.f32 %v6099, 1.442695
  %v6391 = vpow.pop %v6390
  %v6392 = vmul.f32 %v6100, 1.442695
  %v6393 = vpow.pop %v6392
  %v6394 = vmul.f32 %v6101, 1.442695
  %v6395 = vpow.pop %v6394
  %v6396 = vmul.f32 %v6102, 1.442695
  %v6397 = vpow.pop %v6396
  %v6398 = vmul.f32 %v6103, 1.442695
  %v6399 = vpow.pop %v6398
  %v6400 = vmul.f32 %v6104, 1.442695
  %v6401 = vpow.pop %v6400
  %v6402 = vmul.f32 %v6105, 1.442695
  %v6403 = vpow.pop %v6402
  %v6404 = vmul.f32 %v6106, 1.442695
  %v6405 = vpow.pop %v6404
  %v6406 = vmul.f32 %v6107, 1.442695
  %v6407 = vpow.pop %v6406
  %v6408 = vmul.f32 %v6108, 1.442695
  %v6409 = vpow.pop %v6408
  %v6410 = vmul.f32 %v6109, 1.442695
  %v6411 = vpow.pop %v6410
  %v6412 = vmul.f32 %v6110, 1.442695
  %v6413 = vpow.pop %v6412
  %v6414 = vmul.f32 %v6111, 1.442695
  %v6415 = vpow.pop %v6414
  %v6416 = vmul.f32 %v6112, 1.442695
  %v6417 = vpow.pop %v6416
  %v6418 = vmul.f32 %v6113, 1.442695
  %v6419 = vpow.pop %v6418
  %v6420 = vmul.f32 %v6114, 1.442695
  %v6421 = vpow.pop %v6420
  %v6422 = vmul.f32 %v6115, 1.442695
  %v6423 = vpow.pop %v6422
  %v6424 = vmul.f32 %v6116, 1.442695
  %v6425 = vpow.pop %v6424
  %v6426 = vmul.f32 %v6117, 1.442695
  %v6427 = vpow.pop %v6426
  %v6428 = vmul.f32 %v6118, 1.442695
  %v6429 = vpow.pop %v6428
  %v6430 = vmul.f32 %v6119, 1.442695
  %v6431 = vpow.pop %v6430
  %v6432 = vmul.f32 %v6120, 1.442695
  %v6433 = vpow.pop %v6432
  %v6434 = vmul.f32 %v6121, 1.442695
  %v6435 = vpow.pop %v6434
  %v6436 = vmul.f32 %v6122, 1.442695
  %v6437 = vpow.pop %v6436
  %v6438 = vmul.f32 %v6123, 1.442695
  %v6439 = vpow.pop %v6438
  %v6440 = vmul.f32 %v6124, 1.442695
  %v6441 = vpow.pop %v6440
  %v6442 = vmul.f32 %v6125, 1.442695
  %v6443 = vpow.pop %v6442
  %v6444 = vmul.f32 %v6126, 1.442695
  %v6445 = vpow.pop %v6444
  %v6446 = vmul.f32 %v6127, 1.442695
  %v6447 = vpow.pop %v6446
  %v6448 = vmul.f32 %v6128, 1.442695
  %v6449 = vpow.pop %v6448
  %v6450 = vmul.f32 %v6129, 1.442695
  %v6451 = vpow.pop %v6450
  %v6452 = vmul.f32 %v6130, 1.442695
  %v6453 = vpow.pop %v6452
  %v6454 = vmul.f32 %v6131, 1.442695
  %v6455 = vpow.pop %v6454
  %v6456 = vmul.f32 %v6132, 1.442695
  %v6457 = vpow.pop %v6456
  %v6458 = vmul.f32 %v6133, 1.442695
  %v6459 = vpow.pop %v6458
  %v6460 = vmul.f32 %v6134, 1.442695
  %v6461 = vpow.pop %v6460
  %v6462 = vmul.f32 %v6135, 1.442695
  %v6463 = vpow.pop %v6462
  %v6464 = vmul.f32 %v6136, 1.442695
  %v6465 = vpow.pop %v6464
  %v6466 = vmul.f32 %v6137, 1.442695
  %v6467 = vpow.pop %v6466
  %v6468 = vmul.f32 %v6138, 1.442695
  %v6469 = vpow.pop %v6468
  %v6470 = vmul.f32 %v6139, 1.442695
  %v6471 = vpow.pop %v6470
  %v6472 = vmul.f32 %v6140, 1.442695
  %v6473 = vpow.pop %v6472
  %v6474 = vmul.f32 %v6141, 1.442695
  %v6475 = vpow.pop %v6474
  %v6476 = vmul.f32 %v6142, 1.442695
  %v6477 = vpow.pop %v6476
  %v6478 = vmul.f32 %v6143, 1.442695
  %v6479 = vpow.pop %v6478
  %v6480 = vmul.f32 %v6144, 1.442695
  %v6481 = vpow.pop %v6480
  %v6482 = vmul.f32 %v6145, 1.442695
  %v6483 = vpow.pop %v6482
  %v6484 = vmul.f32 %v6146, 1.442695
  %v6485 = vpow.pop %v6484
  %v6486 = vmul.f32 %v6147, 1.442695
  %v6487 = vpow.pop %v6486
  %v6488 = vmul.f32 %v6148, 1.442695
  %v6489 = vpow.pop %v6488
  %v6490 = vmul.f32 %v6149, 1.442695
  %v6491 = vpow.pop %v6490
  %v6492 = vmul.f32 %v6150, 1.442695
  %v6493 = vpow.pop %v6492
  %v6494 = vmul.f32 %v6151, 1.442695
  %v6495 = vpow.pop %v6494
  %v6496 = vmul.f32 %v6152, 1.442695
  %v6497 = vpow.pop %v6496
  %v6498 = vmul.f32 %v6153, 1.442695
  %v6499 = vpow.pop %v6498
  %v6500 = vmul.f32 %v6154, 1.442695
  %v6501 = vpow.pop %v6500
  %v6502 = vmul.f32 %v6155, 1.442695
  %v6503 = vpow.pop %v6502
  %v6504 = vmul.f32 %v6156, 1.442695
  %v6505 = vpow.pop %v6504
  %v6506 = vmul.f32 %v6157, 1.442695
  %v6507 = vpow.pop %v6506
  %v6508 = vmul.f32 %v6158, 1.442695
  %v6509 = vpow.pop %v6508
  %v6510 = vmul.f32 %v6159, 1.442695
  %v6511 = vpow.pop %v6510
  %v6512 = vmul.f32 %v6160, 1.442695
  %v6513 = vpow.pop %v6512
  %v6514 = vmul.f32 %v6161, 1.442695
  %v6515 = vpow.pop %v6514
  %v6516 = vmul.f32 %v6162, 1.442695
  %v6517 = vpow.pop %v6516
  %v6518 = vmul.f32 %v6163, 1.442695
  %v6519 = vpow.pop %v6518
  %v6520 = vmul.f32 %v6164, 1.442695
  %v6521 = vpow.pop %v6520
  %v6522 = vmul.f32 %v6165, 1.442695
  %v6523 = vpow.pop %v6522
  %v6524 = vmul.f32 %v6166, 1.442695
  %v6525 = vpow.pop %v6524
  %v6526 = vmul.f32 %v6167, 1.442695
  %v6527 = vpow.pop %v6526
  %v6528 = vmul.f32 %v6168, 1.442695
  %v6529 = vpow.pop %v6528
  %v6530 = vmul.f32 %v6169, 1.442695
  %v6531 = vpow.pop %v6530
  %v6532 = vmul.f32 %v6170, 1.442695
  %v6533 = vpow.pop %v6532
  %v6534 = vmul.f32 %v6171, 1.442695
  %v6535 = vpow.pop %v6534
  %v6536 = vmul.f32 %v6172, 1.442695
  %v6537 = vpow.pop %v6536
  %v6538 = vmul.f32 %v6173, 1.442695
  %v6539 = vpow.pop %v6538
  %v6540 = vmul.f32 %v6174, 1.442695
  %v6541 = vpow.pop %v6540
  %v6542 = vmul.f32 %v6175, 1.442695
  %v6543 = vpow.pop %v6542
  %v6544 = vmul.f32 %v6176, 1.442695
  %v6545 = vpow.pop %v6544
  %v6546 = vmul.f32 %v6177, 1.442695
  %v6547 = vpow.pop %v6546
  %v6548 = vmul.f32 %v6178, 1.442695
  %v6549 = vpow.pop %v6548
  %v6550 = vmul.f32 %v6179, 1.442695
  %v6551 = vpow.pop %v6550
  %v6552 = vmul.f32 %v6180, 1.442695
  %v6553 = vpow.pop %v6552
  %v6554 = vmul.f32 %v6181, 1.442695
  %v6555 = vpow.pop %v6554
  %v6556 = vmul.f32 %v6182, 1.442695
  %v6557 = vpow.pop %v6556
  %v6558 = vmul.f32 %v6183, 1.442695
  %v6559 = vpow.pop %v6558
  %v6560 = vmul.f32 %v6184, 1.442695
  %v6561 = vpow.pop %v6560
  %v6562 = vmul.f32 %v6185, 1.442695
  %v6563 = vpow.pop %v6562
  %v6564 = vmul.f32 %v6186, 1.442695
  %v6565 = vpow.pop %v6564
  %v6566 = vmul.f32 %v6187, 1.442695
  %v6567 = vpow.pop %v6566
  %v6568 = vmul.f32 %v6188, 1.442695
  %v6569 = vpow.pop %v6568
  %v6570 = vmul.f32 %v6189, 1.442695
  %v6571 = vpow.pop %v6570
  %v6572 = vmul.f32 %v6190, 1.442695
  %v6573 = vpow.pop %v6572
  %v6574 = vmul.f32 %v6191, 1.442695
  %v6575 = vpow.pop %v6574
  %v6576 = vmul.f32 %v6192, 1.442695
  %v6577 = vpow.pop %v6576
  %v6578 = vmul.f32 %v6193, 1.442695
  %v6579 = vpow.pop %v6578
  %v6580 = vmul.f32 %v6194, 1.442695
  %v6581 = vpow.pop %v6580
  %v6582 = vmul.f32 %v6195, 1.442695
  %v6583 = vpow.pop %v6582
  %v6584 = vmul.f32 %v6196, 1.442695
  %v6585 = vpow.pop %v6584
  %v6586 = vmul.f32 %v6197, 1.442695
  %v6587 = vpow.pop %v6586
  %v6588 = vmul.f32 %v6198, 1.442695
  %v6589 = vpow.pop %v6588
  %v6590 = vmul.f32 %v6199, 1.442695
  %v6591 = vpow.pop %v6590
  %v6592 = vmul.f32 %v6200, 1.442695
  %v6593 = vpow.pop %v6592
  %v6594 = vmul.f32 %v6201, 1.442695
  %v6595 = vpow.pop %v6594
  %v6596 = vmul.f32 %v6202, 1.442695
  %v6597 = vpow.pop %v6596
  %v6598 = vmul.f32 %v6203, 1.442695
  %v6599 = vpow.pop %v6598
  %v6600 = vmul.f32 %v6204, 1.442695
  %v6601 = vpow.pop %v6600
  %v6602 = vmul.f32 %v6205, 1.442695
  %v6603 = vpow.pop %v6602
  %v6604 = vmul.f32 %v6206, 1.442695
  %v6605 = vpow.pop %v6604
  %v6606 = vmul.f32 %v6207, 1.442695
  %v6607 = vpow.pop %v6606
  %v6608 = vmul.f32 %v6208, 1.442695
  %v6609 = vpow.pop %v6608
  %v6610 = vmul.f32 %v6209, 1.442695
  %v6611 = vpow.pop %v6610
  %v6612 = vmul.f32 %v6210, 1.442695
  %v6613 = vpow.pop %v6612
  %v6614 = vmul.f32 %v6211, 1.442695
  %v6615 = vpow.pop %v6614
  %v6616 = vmul.f32 %v6212, 1.442695
  %v6617 = vpow.pop %v6616
  %v6618 = vmul.f32 %v6213, 1.442695
  %v6619 = vpow.pop %v6618
  %v6620 = vmul.f32 %v6214, 1.442695
  %v6621 = vpow.pop %v6620
  %v6622 = vmul.f32 %v6215, 1.442695
  %v6623 = vpow.pop %v6622
  %v6624 = vmul.f32 %v6216, 1.442695
  %v6625 = vpow.pop %v6624
  %v6626 = vmul.f32 %v6217, 1.442695
  %v6627 = vpow.pop %v6626
  %v6628 = vmul.f32 %v6218, 1.442695
  %v6629 = vpow.pop %v6628
  %v6630 = vmul.f32 %v6219, 1.442695
  %v6631 = vpow.pop %v6630
  %v6632 = vmul.f32 %v6220, 1.442695
  %v6633 = vpow.pop %v6632
  %v6634 = vmul.f32 %v6221, 1.442695
  %v6635 = vpow.pop %v6634
  %v6636 = vmul.f32 %v6222, 1.442695
  %v6637 = vpow.pop %v6636
  %v6638 = vmul.f32 %v6223, 1.442695
  %v6639 = vpow.pop %v6638
  %v6640 = vmul.f32 %v6224, 1.442695
  %v6641 = vpow.pop %v6640
  %v6642 = vmul.f32 %v6225, 1.442695
  %v6643 = vpow.pop %v6642
  %v6644 = vmul.f32 %v6226, 1.442695
  %v6645 = vpow.pop %v6644
  %v6646 = vmul.f32 %v6227, 1.442695
  %v6647 = vpow.pop %v6646
  %v6648 = vmul.f32 %v6228, 1.442695
  %v6649 = vpow.pop %v6648
  %v6650 = vmul.f32 %v6229, 1.442695
  %v6651 = vpow.pop %v6650
  %v6652 = vmul.f32 %v6230, 1.442695
  %v6653 = vpow.pop %v6652
  %v6654 = vmul.f32 %v6231, 1.442695
  %v6655 = vpow.pop %v6654
  %v6656 = vmul.f32 %v6232, 1.442695
  %v6657 = vpow.pop %v6656
  %v6658 = vmul.f32 %v6233, 1.442695
  %v6659 = vpow.pop %v6658
  %v6660 = vmul.f32 %v6234, 1.442695
  %v6661 = vpow.pop %v6660
  %v6662 = vmul.f32 %v6235, 1.442695
  %v6663 = vpow.pop %v6662
  %v6664 = vmul.f32 %v6236, 1.442695
  %v6665 = vpow.pop %v6664
  %v6666 = vmul.f32 %v6237, 1.442695
  %v6667 = vpow.pop %v6666
  %v6668 = vmul.f32 %v6238, 1.442695
  %v6669 = vpow.pop %v6668
  %v6670 = vmul.f32 %v6239, 1.442695
  %v6671 = vpow.pop %v6670
  %v6672 = vmul.f32 %v6240, 1.442695
  %v6673 = vpow.pop %v6672
  %v6674 = vmul.f32 %v6241, 1.442695
  %v6675 = vpow.pop %v6674
  %v6676 = vmul.f32 %v6242, 1.442695
  %v6677 = vpow.pop %v6676
  %v6678 = vmul.f32 %v6243, 1.442695
  %v6679 = vpow.pop %v6678
  %v6680 = vmul.f32 %v6244, 1.442695
  %v6681 = vpow.pop %v6680
  %v6682 = vmul.f32 %v6245, 1.442695
  %v6683 = vpow.pop %v6682
  %v6684 = vmul.f32 %v6246, 1.442695
  %v6685 = vpow.pop %v6684
  %v6686 = vmul.f32 %v6247, 1.442695
  %v6687 = vpow.pop %v6686
  %v6688 = vmul.f32 %v6248, 1.442695
  %v6689 = vpow.pop %v6688
  %v6690 = vmul.f32 %v6249, 1.442695
  %v6691 = vpow.pop %v6690
  %v6692 = vmul.f32 %v6250, 1.442695
  %v6693 = vpow.pop %v6692
  %v6694 = vmul.f32 %v6251, 1.442695
  %v6695 = vpow.pop %v6694
  %v6696 = vmul.f32 %v6252, 1.442695
  %v6697 = vpow.pop %v6696
  %v6698 = vmul.f32 %v6253, 1.442695
  %v6699 = vpow.pop %v6698
  %v6700 = vmul.f32 %v6254, 1.442695
  %v6701 = vpow.pop %v6700
  %v6702 = vmul.f32 %v6255, 1.442695
  %v6703 = vpow.pop %v6702
  %v6704 = vmul.f32 %v6256, 1.442695
  %v6705 = vpow.pop %v6704
  %v6706 = vmul.f32 %v6257, 1.442695
  %v6707 = vpow.pop %v6706
  %v6708 = vmul.f32 %v6258, 1.442695
  %v6709 = vpow.pop %v6708
  %v6710 = vmul.f32 %v6259, 1.442695
  %v6711 = vpow.pop %v6710
  %v6712 = vmul.f32 %v6260, 1.442695
  %v6713 = vpow.pop %v6712
  %v6714 = vmul.f32 %v6261, 1.442695
  %v6715 = vpow.pop %v6714
  %v6716 = vmul.f32 %v6262, 1.442695
  %v6717 = vpow.pop %v6716
  %v6718 = vmul.f32 %v6263, 1.442695
  %v6719 = vpow.pop %v6718
  %v6720 = vmul.f32 %v6264, 1.442695
  %v6721 = vpow.pop %v6720
  %v6722 = vmul.f32 %v6265, 1.442695
  %v6723 = vpow.pop %v6722
  %v6724 = vmul.f32 %v6266, 1.442695
  %v6725 = vpow.pop %v6724
  %v6726 = vmul.f32 %v6267, 1.442695
  %v6727 = vpow.pop %v6726
  %v6728 = vmul.f32 %v6268, 1.442695
  %v6729 = vpow.pop %v6728
  %v6730 = vmul.f32 %v6269, 1.442695
  %v6731 = vpow.pop %v6730
  %v6732 = vmul.f32 %v6270, 1.442695
  %v6733 = vpow.pop %v6732
  %v6734 = vmul.f32 %v6271, 1.442695
  %v6735 = vpow.pop %v6734
  %v6736 = vmul.f32 %v6272, 1.442695
  %v6737 = vpow.pop %v6736
  %v6738 = vmul.f32 %v6273, 1.442695
  %v6739 = vpow.pop %v6738
  %v6740 = vmul.f32 %v6274, 1.442695
  %v6741 = vpow.pop %v6740
  %v6742 = vmul.f32 %v6275, 1.442695
  %v6743 = vpow.pop %v6742
  %v6744 = vmul.f32 %v6276, 1.442695
  %v6745 = vpow.pop %v6744
  %v6746 = vmul.f32 %v6277, 1.442695
  %v6747 = vpow.pop %v6746
  %v6748 = vmul.f32 %v6278, 1.442695
  %v6749 = vpow.pop %v6748
  %v6750 = vmul.f32 %v6279, 1.442695
  %v6751 = vpow.pop %v6750
  %v6752 = vmul.f32 %v6280, 1.442695
  %v6753 = vpow.pop %v6752
  %v6754 = vmul.f32 %v6281, 1.442695
  %v6755 = vpow.pop %v6754
  %v6756 = vmul.f32 %v6282, 1.442695
  %v6757 = vpow.pop %v6756
  %v6758 = vmul.f32 %v6283, 1.442695
  %v6759 = vpow.pop %v6758
  %v6760 = vmul.f32 %v6284, 1.442695
  %v6761 = vpow.pop %v6760
  %v6762 = vmul.f32 %v6285, 1.442695
  %v6763 = vpow.pop %v6762
  %v6764 = vmul.f32 %v6286, 1.442695
  %v6765 = vpow.pop %v6764
  %v6766 = vmul.f32 %v6287, 1.442695
  %v6767 = vpow.pop %v6766
  %v6768 = vmul.f32 %v6288, 1.442695
  %v6769 = vpow.pop %v6768
  %v6770 = vmul.f32 %v6289, 1.442695
  %v6771 = vpow.pop %v6770
  %v6772 = vmul.f32 %v6290, 1.442695
  %v6773 = vpow.pop %v6772
  %v6774 = vmul.f32 %v6291, 1.442695
  %v6775 = vpow.pop %v6774
  %v6776 = vmul.f32 %v6292, 1.442695
  %v6777 = vpow.pop %v6776
  %v6778 = vmul.f32 %v6293, 1.442695
  %v6779 = vpow.pop %v6778
  %v6780 = vmul.f32 %v6294, 1.442695
  %v6781 = vpow.pop %v6780
  %v6782 = vmul.f32 %v6295, 1.442695
  %v6783 = vpow.pop %v6782
  %v6784 = vmul.f32 %v6296, 1.442695
  %v6785 = vpow.pop %v6784
  %v6786 = vmul.f32 %v6297, 1.442695
  %v6787 = vpow.pop %v6786
  %v6788 = vmul.f32 %v6298, 1.442695
  %v6789 = vpow.pop %v6788
  %v6790 = vmul.f32 %v6299, 1.442695
  %v6791 = vpow.pop %v6790
  %v6792 = vmul.f32 %v6300, 1.442695
  %v6793 = vpow.pop %v6792
  %v6794 = vmul.f32 %v6301, 1.442695
  %v6795 = vpow.pop %v6794
  %v6796 = vmul.f32 %v6302, 1.442695
  %v6797 = vpow.pop %v6796
  %v6798 = vmul.f32 %v6303, 1.442695
  %v6799 = vpow.pop %v6798
  %v6800 = vmul.f32 %v6304, 1.442695
  %v6801 = vpow.pop %v6800
  %v6802 = vmul.f32 %v6305, 1.442695
  %v6803 = vpow.pop %v6802
  %v6804 = vmul.f32 %v6306, 1.442695
  %v6805 = vpow.pop %v6804
  %v6806 = vmul.f32 %v6307, 1.442695
  %v6807 = vpow.pop %v6806
  %v6808 = vmul.f32 %v6308, 1.442695
  %v6809 = vpow.pop %v6808
  %v6810 = vmul.f32 %v6309, 1.442695
  %v6811 = vpow.pop %v6810
  %v6812 = vmul.f32 %v6310, 1.442695
  %v6813 = vpow.pop %v6812
  %v6814 = vmul.f32 %v6311, 1.442695
  %v6815 = vpow.pop %v6814
  %v6816 = vmul.f32 %v6312, 1.442695
  %v6817 = vpow.pop %v6816
  %v6818 = vmul.f32 %v6313, 1.442695
  %v6819 = vpow.pop %v6818
  %v6820 = vmul.f32 %v6314, 1.442695
  %v6821 = vpow.pop %v6820
  %v6822 = vmul.f32 %v6315, 1.442695
  %v6823 = vpow.pop %v6822
  %v6824 = vmul.f32 %v6316, 1.442695
  %v6825 = vpow.pop %v6824
  %v6826 = vmul.f32 %v6317, 1.442695
  %v6827 = vpow.pop %v6826
  %v6828 = vmul.f32 %v6318, 1.442695
  %v6829 = vpow.pop %v6828
  %v6830 = vmul.f32 %v6319, 1.442695
  %v6831 = vpow.pop %v6830
  %v6832 = vmul.f32 %v6320, 1.442695
  %v6833 = vpow.pop %v6832
  %v6834 = vmul.f32 %v6321, 1.442695
  %v6835 = vpow.pop %v6834
  %v6836 = vmul.f32 %v6322, 1.442695
  %v6837 = vpow.pop %v6836
  %v6838 = vmul.f32 %v6323, 1.442695
  %v6839 = vpow.pop %v6838
  %v6840 = vmul.f32 %v6324, 1.442695
  %v6841 = vpow.pop %v6840
  %v6842 = vmul.f32 %v6325, 1.442695
  %v6843 = vpow.pop %v6842
  %v6844 = vmul.f32 %v6326, 1.442695
  %v6845 = vpow.pop %v6844
  %v6846 = vmul.f32 %v6327, 1.442695
  %v6847 = vpow.pop %v6846
  %v6848 = vmul.f32 %v6328, 1.442695
  %v6849 = vpow.pop %v6848
  %v6850 = vmul.f32 %v6329, 1.442695
  %v6851 = vpow.pop %v6850
  %v6852 = vmul.f32 %v6330, 1.442695
  %v6853 = vpow.pop %v6852
  %v6854 = vmul.f32 %v6331, 1.442695
  %v6855 = vpow.pop %v6854
  %v6856 = vmul.f32 %v6332, 1.442695
  %v6857 = vpow.pop %v6856
  %v6858 = vmul.f32 %v6333, 1.442695
  %v6859 = vpow.pop %v6858
  %v6860 = vmul.f32 %v6334, 1.442695
  %v6861 = vpow.pop %v6860
  %v6862 = vmul.f32 %v6335, 1.442695
  %v6863 = vpow.pop %v6862
  %v6864 = vmul.f32 %v6336, 1.442695
  %v6865 = vpow.pop %v6864
  %v6866 = vmul.f32 %v6337, 1.442695
  %v6867 = vpow.pop %v6866
  %v6868 = vmul.f32 %v6338, 1.442695
  %v6869 = vpow.pop %v6868
  %v6870 = vmul.f32 %v6339, 1.442695
  %v6871 = vpow.pop %v6870
  %v6872 = vmul.f32 %v6340, 1.442695
  %v6873 = vpow.pop %v6872
  %v6874 = vmul.f32 %v6341, 1.442695
  %v6875 = vpow.pop %v6874
  %v6876 = vmul.f32 %v6342, 1.442695
  %v6877 = vpow.pop %v6876
  %v6878 = vmul.f32 %v6343, 1.442695
  %v6879 = vpow.pop %v6878
  %v6880 = vmul.f32 %v6344, 1.442695
  %v6881 = vpow.pop %v6880
  %v6882 = vmul.f32 %v6345, 1.442695
  %v6883 = vpow.pop %v6882
  %v6884 = vmul.f32 %v6346, 1.442695
  %v6885 = vpow.pop %v6884
  %v6886 = vmul.f32 %v6347, 1.442695
  %v6887 = vpow.pop %v6886
  %v6888 = vmul.f32 %v6348, 1.442695
  %v6889 = vpow.pop %v6888
  %v6890 = vmul.f32 %v6349, 1.442695
  %v6891 = vpow.pop %v6890
  %v6892 = vmul.f32 %v6350, 1.442695
  %v6893 = vpow.pop %v6892
  %v6894 = vmul.f32 %v6351, 1.442695
  %v6895 = vpow.pop %v6894
  %v6896 = vmul.f32 %v6352, 1.442695
  %v6897 = vpow.pop %v6896
  %v6898 = vmul.f32 %v6353, 1.442695
  %v6899 = vpow.pop %v6898
  %v6900 = vmul.f32 %v6354, 1.442695
  %v6901 = vpow.pop %v6900
  %v6902 = vmul.f32 %v6355, 1.442695
  %v6903 = vpow.pop %v6902
  %v6904 = vmul.f32 %v6356, 1.442695
  %v6905 = vpow.pop %v6904
  %v6906 = vmul.f32 %v6357, 1.442695
  %v6907 = vpow.pop %v6906
  %v6908 = vmul.f32 %v6358, 1.442695
  %v6909 = vpow.pop %v6908
  %v6910 = vmul.f32 %v6359, 1.442695
  %v6911 = vpow.pop %v6910
  %v6912 = vmul.f32 %v6360, 1.442695
  %v6913 = vpow.pop %v6912
  %v6914 = vmul.f32 %v6361, 1.442695
  %v6915 = vpow.pop %v6914
  %v6916 = vmul.f32 %v6362, 1.442695
  %v6917 = vpow.pop %v6916
  %v6918 = vmul.f32 %v6363, 1.442695
  %v6919 = vpow.pop %v6918
  %v6920 = vmul.f32 %v6364, 1.442695
  %v6921 = vpow.pop %v6920
  %v6922 = vmul.f32 %v6365, 1.442695
  %v6923 = vpow.pop %v6922
  %v6924 = vmul.f32 %v6366, 1.442695
  %v6925 = vpow.pop %v6924
  %v6926 = vmul.f32 %v6367, 1.442695
  %v6927 = vpow.pop %v6926
  %v6928 = vmul.f32 %v6368, 1.442695
  %v6929 = vpow.pop %v6928
  %v6930 = vmul.f32 %v6369, 1.442695
  %v6931 = vpow.pop %v6930
  %v6932 = vmul.f32 %v6370, 1.442695
  %v6933 = vpow.pop %v6932
  %v6934 = vmul.f32 %v6371, 1.442695
  %v6935 = vpow.pop %v6934
  %v6936 = vmul.f32 %v6372, 1.442695
  %v6937 = vpow.pop %v6936
  %v6938 = vmul.f32 %v6373, 1.442695
  %v6939 = vpow.pop %v6938
  %v6940 = vmul.f32 %v6374, 1.442695
  %v6941 = vpow.pop %v6940
  %v6942 = vmul.f32 %v6375, 1.442695
  %v6943 = vpow.pop %v6942
  %v6944 = vmul.f32 %v6376, 1.442695
  %v6945 = vpow.pop %v6944
  %v6946 = vmul.f32 %v6377, 1.442695
  %v6947 = vpow.pop %v6946
  %v6948 = vmul.f32 %v6378, 1.442695
  %v6949 = vpow.pop %v6948
  %v6950 = vmul.f32 %v6379, 1.442695
  %v6951 = vpow.pop %v6950
  %v6952 = vmul.f32 %v6380, 1.442695
  %v6953 = vpow.pop %v6952
  %v6954 = vmul.f32 %v6381, 1.442695
  %v6955 = vpow.pop %v6954
  %v6956 = vmul.f32 %v6382, 1.442695
  %v6957 = vpow.pop %v6956
  %v6958 = vmul.f32 %v6383, 1.442695
  %v6959 = vpow.pop %v6958
  %v6960 = vsel %vm1259, %v6385, 0.0
  %v6961 = vsel %vm1259, %v6417, 0.0
  %v6962 = vadd.f32 %v6960, %v6961
  %v6963 = vsel %vm1259, %v6449, 0.0
  %v6964 = vadd.f32 %v6962, %v6963
  %v6965 = vsel %vm1259, %v6481, 0.0
  %v6966 = vadd.f32 %v6964, %v6965
  %v6967 = vsel %vm1259, %v6513, 0.0
  %v6968 = vadd.f32 %v6966, %v6967
  %v6969 = vsel %vm1259, %v6545, 0.0
  %v6970 = vadd.f32 %v6968, %v6969
  %v6971 = vsel %vm1259, %v6577, 0.0
  %v6972 = vadd.f32 %v6970, %v6971
  %v6973 = vsel %vm1259, %v6609, 0.0
  %v6974 = vadd.f32 %v6972, %v6973
  %v6975 = vsel %vm1259, %v6641, 0.0
  %v6976 = vadd.f32 %v6974, %v6975
  %v6977 = vsel %vm1259, %v6673, 0.0
  %v6978 = vadd.f32 %v6976, %v6977
  %v6979 = vsel %vm1259, %v6705, 0.0
  %v6980 = vadd.f32 %v6978, %v6979
  %v6981 = vsel %vm1259, %v6737, 0.0
  %v6982 = vadd.f32 %v6980, %v6981
  %v6983 = vsel %vm1259, %v6769, 0.0
  %v6984 = vadd.f32 %v6982, %v6983
  %v6985 = vsel %vm1259, %v6801, 0.0
  %v6986 = vadd.f32 %v6984, %v6985
  %v6987 = vsel %vm1259, %v6833, 0.0
  %v6988 = vadd.f32 %v6986, %v6987
  %v6989 = vsel %vm1259, %v6865, 0.0
  %v6990 = vadd.f32 %v6988, %v6989
  %v6991 = vsel %vm1259, %v6897, 0.0
  %v6992 = vadd.f32 %v6990, %v6991
  %v6993 = vsel %vm1259, %v6929, 0.0
  %v6994 = vadd.f32 %v6992, %v6993
  %v6995 = vsel %vm1259, %v6387, 0.0
  %v6996 = vsel %vm1259, %v6419, 0.0
  %v6997 = vadd.f32 %v6995, %v6996
  %v6998 = vsel %vm1259, %v6451, 0.0
  %v6999 = vadd.f32 %v6997, %v6998
  %v7000 = vsel %vm1259, %v6483, 0.0
  %v7001 = vadd.f32 %v6999, %v7000
  %v7002 = vsel %vm1259, %v6515, 0.0
  %v7003 = vadd.f32 %v7001, %v7002
  %v7004 = vsel %vm1259, %v6547, 0.0
  %v7005 = vadd.f32 %v7003, %v7004
  %v7006 = vsel %vm1259, %v6579, 0.0
  %v7007 = vadd.f32 %v7005, %v7006
  %v7008 = vsel %vm1259, %v6611, 0.0
  %v7009 = vadd.f32 %v7007, %v7008
  %v7010 = vsel %vm1259, %v6643, 0.0
  %v7011 = vadd.f32 %v7009, %v7010
  %v7012 = vsel %vm1259, %v6675, 0.0
  %v7013 = vadd.f32 %v7011, %v7012
  %v7014 = vsel %vm1259, %v6707, 0.0
  %v7015 = vadd.f32 %v7013, %v7014
  %v7016 = vsel %vm1259, %v6739, 0.0
  %v7017 = vadd.f32 %v7015, %v7016
  %v7018 = vsel %vm1259, %v6771, 0.0
  %v7019 = vadd.f32 %v7017, %v7018
  %v7020 = vsel %vm1259, %v6803, 0.0
  %v7021 = vadd.f32 %v7019, %v7020
  %v7022 = vsel %vm1259, %v6835, 0.0
  %v7023 = vadd.f32 %v7021, %v7022
  %v7024 = vsel %vm1259, %v6867, 0.0
  %v7025 = vadd.f32 %v7023, %v7024
  %v7026 = vsel %vm1259, %v6899, 0.0
  %v7027 = vadd.f32 %v7025, %v7026
  %v7028 = vsel %vm1259, %v6931, 0.0
  %v7029 = vadd.f32 %v7027, %v7028
  %v7030 = vsel %vm1259, %v6389, 0.0
  %v7031 = vsel %vm1259, %v6421, 0.0
  %v7032 = vadd.f32 %v7030, %v7031
  %v7033 = vsel %vm1259, %v6453, 0.0
  %v7034 = vadd.f32 %v7032, %v7033
  %v7035 = vsel %vm1259, %v6485, 0.0
  %v7036 = vadd.f32 %v7034, %v7035
  %v7037 = vsel %vm1259, %v6517, 0.0
  %v7038 = vadd.f32 %v7036, %v7037
  %v7039 = vsel %vm1259, %v6549, 0.0
  %v7040 = vadd.f32 %v7038, %v7039
  %v7041 = vsel %vm1259, %v6581, 0.0
  %v7042 = vadd.f32 %v7040, %v7041
  %v7043 = vsel %vm1259, %v6613, 0.0
  %v7044 = vadd.f32 %v7042, %v7043
  %v7045 = vsel %vm1259, %v6645, 0.0
  %v7046 = vadd.f32 %v7044, %v7045
  %v7047 = vsel %vm1259, %v6677, 0.0
  %v7048 = vadd.f32 %v7046, %v7047
  %v7049 = vsel %vm1259, %v6709, 0.0
  %v7050 = vadd.f32 %v7048, %v7049
  %v7051 = vsel %vm1259, %v6741, 0.0
  %v7052 = vadd.f32 %v7050, %v7051
  %v7053 = vsel %vm1259, %v6773, 0.0
  %v7054 = vadd.f32 %v7052, %v7053
  %v7055 = vsel %vm1259, %v6805, 0.0
  %v7056 = vadd.f32 %v7054, %v7055
  %v7057 = vsel %vm1259, %v6837, 0.0
  %v7058 = vadd.f32 %v7056, %v7057
  %v7059 = vsel %vm1259, %v6869, 0.0
  %v7060 = vadd.f32 %v7058, %v7059
  %v7061 = vsel %vm1259, %v6901, 0.0
  %v7062 = vadd.f32 %v7060, %v7061
  %v7063 = vsel %vm1259, %v6933, 0.0
  %v7064 = vadd.f32 %v7062, %v7063
  %v7065 = vsel %vm1259, %v6391, 0.0
  %v7066 = vsel %vm1259, %v6423, 0.0
  %v7067 = vadd.f32 %v7065, %v7066
  %v7068 = vsel %vm1259, %v6455, 0.0
  %v7069 = vadd.f32 %v7067, %v7068
  %v7070 = vsel %vm1259, %v6487, 0.0
  %v7071 = vadd.f32 %v7069, %v7070
  %v7072 = vsel %vm1259, %v6519, 0.0
  %v7073 = vadd.f32 %v7071, %v7072
  %v7074 = vsel %vm1259, %v6551, 0.0
  %v7075 = vadd.f32 %v7073, %v7074
  %v7076 = vsel %vm1259, %v6583, 0.0
  %v7077 = vadd.f32 %v7075, %v7076
  %v7078 = vsel %vm1259, %v6615, 0.0
  %v7079 = vadd.f32 %v7077, %v7078
  %v7080 = vsel %vm1259, %v6647, 0.0
  %v7081 = vadd.f32 %v7079, %v7080
  %v7082 = vsel %vm1259, %v6679, 0.0
  %v7083 = vadd.f32 %v7081, %v7082
  %v7084 = vsel %vm1259, %v6711, 0.0
  %v7085 = vadd.f32 %v7083, %v7084
  %v7086 = vsel %vm1259, %v6743, 0.0
  %v7087 = vadd.f32 %v7085, %v7086
  %v7088 = vsel %vm1259, %v6775, 0.0
  %v7089 = vadd.f32 %v7087, %v7088
  %v7090 = vsel %vm1259, %v6807, 0.0
  %v7091 = vadd.f32 %v7089, %v7090
  %v7092 = vsel %vm1259, %v6839, 0.0
  %v7093 = vadd.f32 %v7091, %v7092
  %v7094 = vsel %vm1259, %v6871, 0.0
  %v7095 = vadd.f32 %v7093, %v7094
  %v7096 = vsel %vm1259, %v6903, 0.0
  %v7097 = vadd.f32 %v7095, %v7096
  %v7098 = vsel %vm1259, %v6935, 0.0
  %v7099 = vadd.f32 %v7097, %v7098
  %v7100 = vsel %vm1259, %v6393, 0.0
  %v7101 = vsel %vm1259, %v6425, 0.0
  %v7102 = vadd.f32 %v7100, %v7101
  %v7103 = vsel %vm1259, %v6457, 0.0
  %v7104 = vadd.f32 %v7102, %v7103
  %v7105 = vsel %vm1259, %v6489, 0.0
  %v7106 = vadd.f32 %v7104, %v7105
  %v7107 = vsel %vm1259, %v6521, 0.0
  %v7108 = vadd.f32 %v7106, %v7107
  %v7109 = vsel %vm1259, %v6553, 0.0
  %v7110 = vadd.f32 %v7108, %v7109
  %v7111 = vsel %vm1259, %v6585, 0.0
  %v7112 = vadd.f32 %v7110, %v7111
  %v7113 = vsel %vm1259, %v6617, 0.0
  %v7114 = vadd.f32 %v7112, %v7113
  %v7115 = vsel %vm1259, %v6649, 0.0
  %v7116 = vadd.f32 %v7114, %v7115
  %v7117 = vsel %vm1259, %v6681, 0.0
  %v7118 = vadd.f32 %v7116, %v7117
  %v7119 = vsel %vm1259, %v6713, 0.0
  %v7120 = vadd.f32 %v7118, %v7119
  %v7121 = vsel %vm1259, %v6745, 0.0
  %v7122 = vadd.f32 %v7120, %v7121
  %v7123 = vsel %vm1259, %v6777, 0.0
  %v7124 = vadd.f32 %v7122, %v7123
  %v7125 = vsel %vm1259, %v6809, 0.0
  %v7126 = vadd.f32 %v7124, %v7125
  %v7127 = vsel %vm1259, %v6841, 0.0
  %v7128 = vadd.f32 %v7126, %v7127
  %v7129 = vsel %vm1259, %v6873, 0.0
  %v7130 = vadd.f32 %v7128, %v7129
  %v7131 = vsel %vm1259, %v6905, 0.0
  %v7132 = vadd.f32 %v7130, %v7131
  %v7133 = vsel %vm1259, %v6937, 0.0
  %v7134 = vadd.f32 %v7132, %v7133
  %v7135 = vsel %vm1259, %v6395, 0.0
  %v7136 = vsel %vm1259, %v6427, 0.0
  %v7137 = vadd.f32 %v7135, %v7136
  %v7138 = vsel %vm1259, %v6459, 0.0
  %v7139 = vadd.f32 %v7137, %v7138
  %v7140 = vsel %vm1259, %v6491, 0.0
  %v7141 = vadd.f32 %v7139, %v7140
  %v7142 = vsel %vm1259, %v6523, 0.0
  %v7143 = vadd.f32 %v7141, %v7142
  %v7144 = vsel %vm1259, %v6555, 0.0
  %v7145 = vadd.f32 %v7143, %v7144
  %v7146 = vsel %vm1259, %v6587, 0.0
  %v7147 = vadd.f32 %v7145, %v7146
  %v7148 = vsel %vm1259, %v6619, 0.0
  %v7149 = vadd.f32 %v7147, %v7148
  %v7150 = vsel %vm1259, %v6651, 0.0
  %v7151 = vadd.f32 %v7149, %v7150
  %v7152 = vsel %vm1259, %v6683, 0.0
  %v7153 = vadd.f32 %v7151, %v7152
  %v7154 = vsel %vm1259, %v6715, 0.0
  %v7155 = vadd.f32 %v7153, %v7154
  %v7156 = vsel %vm1259, %v6747, 0.0
  %v7157 = vadd.f32 %v7155, %v7156
  %v7158 = vsel %vm1259, %v6779, 0.0
  %v7159 = vadd.f32 %v7157, %v7158
  %v7160 = vsel %vm1259, %v6811, 0.0
  %v7161 = vadd.f32 %v7159, %v7160
  %v7162 = vsel %vm1259, %v6843, 0.0
  %v7163 = vadd.f32 %v7161, %v7162
  %v7164 = vsel %vm1259, %v6875, 0.0
  %v7165 = vadd.f32 %v7163, %v7164
  %v7166 = vsel %vm1259, %v6907, 0.0
  %v7167 = vadd.f32 %v7165, %v7166
  %v7168 = vsel %vm1259, %v6939, 0.0
  %v7169 = vadd.f32 %v7167, %v7168
  %v7170 = vsel %vm1259, %v6397, 0.0
  %v7171 = vsel %vm1259, %v6429, 0.0
  %v7172 = vadd.f32 %v7170, %v7171
  %v7173 = vsel %vm1259, %v6461, 0.0
  %v7174 = vadd.f32 %v7172, %v7173
  %v7175 = vsel %vm1259, %v6493, 0.0
  %v7176 = vadd.f32 %v7174, %v7175
  %v7177 = vsel %vm1259, %v6525, 0.0
  %v7178 = vadd.f32 %v7176, %v7177
  %v7179 = vsel %vm1259, %v6557, 0.0
  %v7180 = vadd.f32 %v7178, %v7179
  %v7181 = vsel %vm1259, %v6589, 0.0
  %v7182 = vadd.f32 %v7180, %v7181
  %v7183 = vsel %vm1259, %v6621, 0.0
  %v7184 = vadd.f32 %v7182, %v7183
  %v7185 = vsel %vm1259, %v6653, 0.0
  %v7186 = vadd.f32 %v7184, %v7185
  %v7187 = vsel %vm1259, %v6685, 0.0
  %v7188 = vadd.f32 %v7186, %v7187
  %v7189 = vsel %vm1259, %v6717, 0.0
  %v7190 = vadd.f32 %v7188, %v7189
  %v7191 = vsel %vm1259, %v6749, 0.0
  %v7192 = vadd.f32 %v7190, %v7191
  %v7193 = vsel %vm1259, %v6781, 0.0
  %v7194 = vadd.f32 %v7192, %v7193
  %v7195 = vsel %vm1259, %v6813, 0.0
  %v7196 = vadd.f32 %v7194, %v7195
  %v7197 = vsel %vm1259, %v6845, 0.0
  %v7198 = vadd.f32 %v7196, %v7197
  %v7199 = vsel %vm1259, %v6877, 0.0
  %v7200 = vadd.f32 %v7198, %v7199
  %v7201 = vsel %vm1259, %v6909, 0.0
  %v7202 = vadd.f32 %v7200, %v7201
  %v7203 = vsel %vm1259, %v6941, 0.0
  %v7204 = vadd.f32 %v7202, %v7203
  %v7205 = vsel %vm1259, %v6399, 0.0
  %v7206 = vsel %vm1259, %v6431, 0.0
  %v7207 = vadd.f32 %v7205, %v7206
  %v7208 = vsel %vm1259, %v6463, 0.0
  %v7209 = vadd.f32 %v7207, %v7208
  %v7210 = vsel %vm1259, %v6495, 0.0
  %v7211 = vadd.f32 %v7209, %v7210
  %v7212 = vsel %vm1259, %v6527, 0.0
  %v7213 = vadd.f32 %v7211, %v7212
  %v7214 = vsel %vm1259, %v6559, 0.0
  %v7215 = vadd.f32 %v7213, %v7214
  %v7216 = vsel %vm1259, %v6591, 0.0
  %v7217 = vadd.f32 %v7215, %v7216
  %v7218 = vsel %vm1259, %v6623, 0.0
  %v7219 = vadd.f32 %v7217, %v7218
  %v7220 = vsel %vm1259, %v6655, 0.0
  %v7221 = vadd.f32 %v7219, %v7220
  %v7222 = vsel %vm1259, %v6687, 0.0
  %v7223 = vadd.f32 %v7221, %v7222
  %v7224 = vsel %vm1259, %v6719, 0.0
  %v7225 = vadd.f32 %v7223, %v7224
  %v7226 = vsel %vm1259, %v6751, 0.0
  %v7227 = vadd.f32 %v7225, %v7226
  %v7228 = vsel %vm1259, %v6783, 0.0
  %v7229 = vadd.f32 %v7227, %v7228
  %v7230 = vsel %vm1259, %v6815, 0.0
  %v7231 = vadd.f32 %v7229, %v7230
  %v7232 = vsel %vm1259, %v6847, 0.0
  %v7233 = vadd.f32 %v7231, %v7232
  %v7234 = vsel %vm1259, %v6879, 0.0
  %v7235 = vadd.f32 %v7233, %v7234
  %v7236 = vsel %vm1259, %v6911, 0.0
  %v7237 = vadd.f32 %v7235, %v7236
  %v7238 = vsel %vm1259, %v6943, 0.0
  %v7239 = vadd.f32 %v7237, %v7238
  %v7240 = vsel %vm1259, %v6401, 0.0
  %v7241 = vsel %vm1259, %v6433, 0.0
  %v7242 = vadd.f32 %v7240, %v7241
  %v7243 = vsel %vm1259, %v6465, 0.0
  %v7244 = vadd.f32 %v7242, %v7243
  %v7245 = vsel %vm1259, %v6497, 0.0
  %v7246 = vadd.f32 %v7244, %v7245
  %v7247 = vsel %vm1259, %v6529, 0.0
  %v7248 = vadd.f32 %v7246, %v7247
  %v7249 = vsel %vm1259, %v6561, 0.0
  %v7250 = vadd.f32 %v7248, %v7249
  %v7251 = vsel %vm1259, %v6593, 0.0
  %v7252 = vadd.f32 %v7250, %v7251
  %v7253 = vsel %vm1259, %v6625, 0.0
  %v7254 = vadd.f32 %v7252, %v7253
  %v7255 = vsel %vm1259, %v6657, 0.0
  %v7256 = vadd.f32 %v7254, %v7255
  %v7257 = vsel %vm1259, %v6689, 0.0
  %v7258 = vadd.f32 %v7256, %v7257
  %v7259 = vsel %vm1259, %v6721, 0.0
  %v7260 = vadd.f32 %v7258, %v7259
  %v7261 = vsel %vm1259, %v6753, 0.0
  %v7262 = vadd.f32 %v7260, %v7261
  %v7263 = vsel %vm1259, %v6785, 0.0
  %v7264 = vadd.f32 %v7262, %v7263
  %v7265 = vsel %vm1259, %v6817, 0.0
  %v7266 = vadd.f32 %v7264, %v7265
  %v7267 = vsel %vm1259, %v6849, 0.0
  %v7268 = vadd.f32 %v7266, %v7267
  %v7269 = vsel %vm1259, %v6881, 0.0
  %v7270 = vadd.f32 %v7268, %v7269
  %v7271 = vsel %vm1259, %v6913, 0.0
  %v7272 = vadd.f32 %v7270, %v7271
  %v7273 = vsel %vm1259, %v6945, 0.0
  %v7274 = vadd.f32 %v7272, %v7273
  %v7275 = vsel %vm1259, %v6403, 0.0
  %v7276 = vsel %vm1259, %v6435, 0.0
  %v7277 = vadd.f32 %v7275, %v7276
  %v7278 = vsel %vm1259, %v6467, 0.0
  %v7279 = vadd.f32 %v7277, %v7278
  %v7280 = vsel %vm1259, %v6499, 0.0
  %v7281 = vadd.f32 %v7279, %v7280
  %v7282 = vsel %vm1259, %v6531, 0.0
  %v7283 = vadd.f32 %v7281, %v7282
  %v7284 = vsel %vm1259, %v6563, 0.0
  %v7285 = vadd.f32 %v7283, %v7284
  %v7286 = vsel %vm1259, %v6595, 0.0
  %v7287 = vadd.f32 %v7285, %v7286
  %v7288 = vsel %vm1259, %v6627, 0.0
  %v7289 = vadd.f32 %v7287, %v7288
  %v7290 = vsel %vm1259, %v6659, 0.0
  %v7291 = vadd.f32 %v7289, %v7290
  %v7292 = vsel %vm1259, %v6691, 0.0
  %v7293 = vadd.f32 %v7291, %v7292
  %v7294 = vsel %vm1259, %v6723, 0.0
  %v7295 = vadd.f32 %v7293, %v7294
  %v7296 = vsel %vm1259, %v6755, 0.0
  %v7297 = vadd.f32 %v7295, %v7296
  %v7298 = vsel %vm1259, %v6787, 0.0
  %v7299 = vadd.f32 %v7297, %v7298
  %v7300 = vsel %vm1259, %v6819, 0.0
  %v7301 = vadd.f32 %v7299, %v7300
  %v7302 = vsel %vm1259, %v6851, 0.0
  %v7303 = vadd.f32 %v7301, %v7302
  %v7304 = vsel %vm1259, %v6883, 0.0
  %v7305 = vadd.f32 %v7303, %v7304
  %v7306 = vsel %vm1259, %v6915, 0.0
  %v7307 = vadd.f32 %v7305, %v7306
  %v7308 = vsel %vm1259, %v6947, 0.0
  %v7309 = vadd.f32 %v7307, %v7308
  %v7310 = vsel %vm1259, %v6405, 0.0
  %v7311 = vsel %vm1259, %v6437, 0.0
  %v7312 = vadd.f32 %v7310, %v7311
  %v7313 = vsel %vm1259, %v6469, 0.0
  %v7314 = vadd.f32 %v7312, %v7313
  %v7315 = vsel %vm1259, %v6501, 0.0
  %v7316 = vadd.f32 %v7314, %v7315
  %v7317 = vsel %vm1259, %v6533, 0.0
  %v7318 = vadd.f32 %v7316, %v7317
  %v7319 = vsel %vm1259, %v6565, 0.0
  %v7320 = vadd.f32 %v7318, %v7319
  %v7321 = vsel %vm1259, %v6597, 0.0
  %v7322 = vadd.f32 %v7320, %v7321
  %v7323 = vsel %vm1259, %v6629, 0.0
  %v7324 = vadd.f32 %v7322, %v7323
  %v7325 = vsel %vm1259, %v6661, 0.0
  %v7326 = vadd.f32 %v7324, %v7325
  %v7327 = vsel %vm1259, %v6693, 0.0
  %v7328 = vadd.f32 %v7326, %v7327
  %v7329 = vsel %vm1259, %v6725, 0.0
  %v7330 = vadd.f32 %v7328, %v7329
  %v7331 = vsel %vm1259, %v6757, 0.0
  %v7332 = vadd.f32 %v7330, %v7331
  %v7333 = vsel %vm1259, %v6789, 0.0
  %v7334 = vadd.f32 %v7332, %v7333
  %v7335 = vsel %vm1259, %v6821, 0.0
  %v7336 = vadd.f32 %v7334, %v7335
  %v7337 = vsel %vm1259, %v6853, 0.0
  %v7338 = vadd.f32 %v7336, %v7337
  %v7339 = vsel %vm1259, %v6885, 0.0
  %v7340 = vadd.f32 %v7338, %v7339
  %v7341 = vsel %vm1259, %v6917, 0.0
  %v7342 = vadd.f32 %v7340, %v7341
  %v7343 = vsel %vm1259, %v6949, 0.0
  %v7344 = vadd.f32 %v7342, %v7343
  %v7345 = vsel %vm1259, %v6407, 0.0
  %v7346 = vsel %vm1259, %v6439, 0.0
  %v7347 = vadd.f32 %v7345, %v7346
  %v7348 = vsel %vm1259, %v6471, 0.0
  %v7349 = vadd.f32 %v7347, %v7348
  %v7350 = vsel %vm1259, %v6503, 0.0
  %v7351 = vadd.f32 %v7349, %v7350
  %v7352 = vsel %vm1259, %v6535, 0.0
  %v7353 = vadd.f32 %v7351, %v7352
  %v7354 = vsel %vm1259, %v6567, 0.0
  %v7355 = vadd.f32 %v7353, %v7354
  %v7356 = vsel %vm1259, %v6599, 0.0
  %v7357 = vadd.f32 %v7355, %v7356
  %v7358 = vsel %vm1259, %v6631, 0.0
  %v7359 = vadd.f32 %v7357, %v7358
  %v7360 = vsel %vm1259, %v6663, 0.0
  %v7361 = vadd.f32 %v7359, %v7360
  %v7362 = vsel %vm1259, %v6695, 0.0
  %v7363 = vadd.f32 %v7361, %v7362
  %v7364 = vsel %vm1259, %v6727, 0.0
  %v7365 = vadd.f32 %v7363, %v7364
  %v7366 = vsel %vm1259, %v6759, 0.0
  %v7367 = vadd.f32 %v7365, %v7366
  %v7368 = vsel %vm1259, %v6791, 0.0
  %v7369 = vadd.f32 %v7367, %v7368
  %v7370 = vsel %vm1259, %v6823, 0.0
  %v7371 = vadd.f32 %v7369, %v7370
  %v7372 = vsel %vm1259, %v6855, 0.0
  %v7373 = vadd.f32 %v7371, %v7372
  %v7374 = vsel %vm1259, %v6887, 0.0
  %v7375 = vadd.f32 %v7373, %v7374
  %v7376 = vsel %vm1259, %v6919, 0.0
  %v7377 = vadd.f32 %v7375, %v7376
  %v7378 = vsel %vm1259, %v6951, 0.0
  %v7379 = vadd.f32 %v7377, %v7378
  %v7380 = vsel %vm1259, %v6409, 0.0
  %v7381 = vsel %vm1259, %v6441, 0.0
  %v7382 = vadd.f32 %v7380, %v7381
  %v7383 = vsel %vm1259, %v6473, 0.0
  %v7384 = vadd.f32 %v7382, %v7383
  %v7385 = vsel %vm1259, %v6505, 0.0
  %v7386 = vadd.f32 %v7384, %v7385
  %v7387 = vsel %vm1259, %v6537, 0.0
  %v7388 = vadd.f32 %v7386, %v7387
  %v7389 = vsel %vm1259, %v6569, 0.0
  %v7390 = vadd.f32 %v7388, %v7389
  %v7391 = vsel %vm1259, %v6601, 0.0
  %v7392 = vadd.f32 %v7390, %v7391
  %v7393 = vsel %vm1259, %v6633, 0.0
  %v7394 = vadd.f32 %v7392, %v7393
  %v7395 = vsel %vm1259, %v6665, 0.0
  %v7396 = vadd.f32 %v7394, %v7395
  %v7397 = vsel %vm1259, %v6697, 0.0
  %v7398 = vadd.f32 %v7396, %v7397
  %v7399 = vsel %vm1259, %v6729, 0.0
  %v7400 = vadd.f32 %v7398, %v7399
  %v7401 = vsel %vm1259, %v6761, 0.0
  %v7402 = vadd.f32 %v7400, %v7401
  %v7403 = vsel %vm1259, %v6793, 0.0
  %v7404 = vadd.f32 %v7402, %v7403
  %v7405 = vsel %vm1259, %v6825, 0.0
  %v7406 = vadd.f32 %v7404, %v7405
  %v7407 = vsel %vm1259, %v6857, 0.0
  %v7408 = vadd.f32 %v7406, %v7407
  %v7409 = vsel %vm1259, %v6889, 0.0
  %v7410 = vadd.f32 %v7408, %v7409
  %v7411 = vsel %vm1259, %v6921, 0.0
  %v7412 = vadd.f32 %v7410, %v7411
  %v7413 = vsel %vm1259, %v6953, 0.0
  %v7414 = vadd.f32 %v7412, %v7413
  %v7415 = vsel %vm1259, %v6411, 0.0
  %v7416 = vsel %vm1259, %v6443, 0.0
  %v7417 = vadd.f32 %v7415, %v7416
  %v7418 = vsel %vm1259, %v6475, 0.0
  %v7419 = vadd.f32 %v7417, %v7418
  %v7420 = vsel %vm1259, %v6507, 0.0
  %v7421 = vadd.f32 %v7419, %v7420
  %v7422 = vsel %vm1259, %v6539, 0.0
  %v7423 = vadd.f32 %v7421, %v7422
  %v7424 = vsel %vm1259, %v6571, 0.0
  %v7425 = vadd.f32 %v7423, %v7424
  %v7426 = vsel %vm1259, %v6603, 0.0
  %v7427 = vadd.f32 %v7425, %v7426
  %v7428 = vsel %vm1259, %v6635, 0.0
  %v7429 = vadd.f32 %v7427, %v7428
  %v7430 = vsel %vm1259, %v6667, 0.0
  %v7431 = vadd.f32 %v7429, %v7430
  %v7432 = vsel %vm1259, %v6699, 0.0
  %v7433 = vadd.f32 %v7431, %v7432
  %v7434 = vsel %vm1259, %v6731, 0.0
  %v7435 = vadd.f32 %v7433, %v7434
  %v7436 = vsel %vm1259, %v6763, 0.0
  %v7437 = vadd.f32 %v7435, %v7436
  %v7438 = vsel %vm1259, %v6795, 0.0
  %v7439 = vadd.f32 %v7437, %v7438
  %v7440 = vsel %vm1259, %v6827, 0.0
  %v7441 = vadd.f32 %v7439, %v7440
  %v7442 = vsel %vm1259, %v6859, 0.0
  %v7443 = vadd.f32 %v7441, %v7442
  %v7444 = vsel %vm1259, %v6891, 0.0
  %v7445 = vadd.f32 %v7443, %v7444
  %v7446 = vsel %vm1259, %v6923, 0.0
  %v7447 = vadd.f32 %v7445, %v7446
  %v7448 = vsel %vm1259, %v6955, 0.0
  %v7449 = vadd.f32 %v7447, %v7448
  %v7450 = vsel %vm1259, %v6413, 0.0
  %v7451 = vsel %vm1259, %v6445, 0.0
  %v7452 = vadd.f32 %v7450, %v7451
  %v7453 = vsel %vm1259, %v6477, 0.0
  %v7454 = vadd.f32 %v7452, %v7453
  %v7455 = vsel %vm1259, %v6509, 0.0
  %v7456 = vadd.f32 %v7454, %v7455
  %v7457 = vsel %vm1259, %v6541, 0.0
  %v7458 = vadd.f32 %v7456, %v7457
  %v7459 = vsel %vm1259, %v6573, 0.0
  %v7460 = vadd.f32 %v7458, %v7459
  %v7461 = vsel %vm1259, %v6605, 0.0
  %v7462 = vadd.f32 %v7460, %v7461
  %v7463 = vsel %vm1259, %v6637, 0.0
  %v7464 = vadd.f32 %v7462, %v7463
  %v7465 = vsel %vm1259, %v6669, 0.0
  %v7466 = vadd.f32 %v7464, %v7465
  %v7467 = vsel %vm1259, %v6701, 0.0
  %v7468 = vadd.f32 %v7466, %v7467
  %v7469 = vsel %vm1259, %v6733, 0.0
  %v7470 = vadd.f32 %v7468, %v7469
  %v7471 = vsel %vm1259, %v6765, 0.0
  %v7472 = vadd.f32 %v7470, %v7471
  %v7473 = vsel %vm1259, %v6797, 0.0
  %v7474 = vadd.f32 %v7472, %v7473
  %v7475 = vsel %vm1259, %v6829, 0.0
  %v7476 = vadd.f32 %v7474, %v7475
  %v7477 = vsel %vm1259, %v6861, 0.0
  %v7478 = vadd.f32 %v7476, %v7477
  %v7479 = vsel %vm1259, %v6893, 0.0
  %v7480 = vadd.f32 %v7478, %v7479
  %v7481 = vsel %vm1259, %v6925, 0.0
  %v7482 = vadd.f32 %v7480, %v7481
  %v7483 = vsel %vm1259, %v6957, 0.0
  %v7484 = vadd.f32 %v7482, %v7483
  %v7485 = vsel %vm1259, %v6415, 0.0
  %v7486 = vsel %vm1259, %v6447, 0.0
  %v7487 = vadd.f32 %v7485, %v7486
  %v7488 = vsel %vm1259, %v6479, 0.0
  %v7489 = vadd.f32 %v7487, %v7488
  %v7490 = vsel %vm1259, %v6511, 0.0
  %v7491 = vadd.f32 %v7489, %v7490
  %v7492 = vsel %vm1259, %v6543, 0.0
  %v7493 = vadd.f32 %v7491, %v7492
  %v7494 = vsel %vm1259, %v6575, 0.0
  %v7495 = vadd.f32 %v7493, %v7494
  %v7496 = vsel %vm1259, %v6607, 0.0
  %v7497 = vadd.f32 %v7495, %v7496
  %v7498 = vsel %vm1259, %v6639, 0.0
  %v7499 = vadd.f32 %v7497, %v7498
  %v7500 = vsel %vm1259, %v6671, 0.0
  %v7501 = vadd.f32 %v7499, %v7500
  %v7502 = vsel %vm1259, %v6703, 0.0
  %v7503 = vadd.f32 %v7501, %v7502
  %v7504 = vsel %vm1259, %v6735, 0.0
  %v7505 = vadd.f32 %v7503, %v7504
  %v7506 = vsel %vm1259, %v6767, 0.0
  %v7507 = vadd.f32 %v7505, %v7506
  %v7508 = vsel %vm1259, %v6799, 0.0
  %v7509 = vadd.f32 %v7507, %v7508
  %v7510 = vsel %vm1259, %v6831, 0.0
  %v7511 = vadd.f32 %v7509, %v7510
  %v7512 = vsel %vm1259, %v6863, 0.0
  %v7513 = vadd.f32 %v7511, %v7512
  %v7514 = vsel %vm1259, %v6895, 0.0
  %v7515 = vadd.f32 %v7513, %v7514
  %v7516 = vsel %vm1259, %v6927, 0.0
  %v7517 = vadd.f32 %v7515, %v7516
  %v7518 = vsel %vm1259, %v6959, 0.0
  %v7519 = vadd.f32 %v7517, %v7518
  %v7520 = vrcp.pop %v6994
  %v7521 = vrcp.pop %v7029
  %v7522 = vrcp.pop %v7064
  %v7523 = vrcp.pop %v7099
  %v7524 = vrcp.pop %v7134
  %v7525 = vrcp.pop %v7169
  %v7526 = vrcp.pop %v7204
  %v7527 = vrcp.pop %v7239
  %v7528 = vrcp.pop %v7274
  %v7529 = vrcp.pop %v7309
  %v7530 = vrcp.pop %v7344
  %v7531 = vrcp.pop %v7379
  %v7532 = vrcp.pop %v7414
  %v7533 = vrcp.pop %v7449
  %v7534 = vrcp.pop %v7484
  %v7535 = vrcp.pop %v7519
  %v7536 = vmul.f32 %v6385, %v7520
  %v7537 = vmul.f32 %v6387, %v7521
  %v7538 = vmul.f32 %v6389, %v7522
  %v7539 = vmul.f32 %v6391, %v7523
  %v7540 = vmul.f32 %v6393, %v7524
  %v7541 = vmul.f32 %v6395, %v7525
  %v7542 = vmul.f32 %v6397, %v7526
  %v7543 = vmul.f32 %v6399, %v7527
  %v7544 = vmul.f32 %v6401, %v7528
  %v7545 = vmul.f32 %v6403, %v7529
  %v7546 = vmul.f32 %v6405, %v7530
  %v7547 = vmul.f32 %v6407, %v7531
  %v7548 = vmul.f32 %v6409, %v7532
  %v7549 = vmul.f32 %v6411, %v7533
  %v7550 = vmul.f32 %v6413, %v7534
  %v7551 = vmul.f32 %v6415, %v7535
  %v7552 = vmul.f32 %v6417, %v7520
  %v7553 = vmul.f32 %v6419, %v7521
  %v7554 = vmul.f32 %v6421, %v7522
  %v7555 = vmul.f32 %v6423, %v7523
  %v7556 = vmul.f32 %v6425, %v7524
  %v7557 = vmul.f32 %v6427, %v7525
  %v7558 = vmul.f32 %v6429, %v7526
  %v7559 = vmul.f32 %v6431, %v7527
  %v7560 = vmul.f32 %v6433, %v7528
  %v7561 = vmul.f32 %v6435, %v7529
  %v7562 = vmul.f32 %v6437, %v7530
  %v7563 = vmul.f32 %v6439, %v7531
  %v7564 = vmul.f32 %v6441, %v7532
  %v7565 = vmul.f32 %v6443, %v7533
  %v7566 = vmul.f32 %v6445, %v7534
  %v7567 = vmul.f32 %v6447, %v7535
  %v7568 = vmul.f32 %v6449, %v7520
  %v7569 = vmul.f32 %v6451, %v7521
  %v7570 = vmul.f32 %v6453, %v7522
  %v7571 = vmul.f32 %v6455, %v7523
  %v7572 = vmul.f32 %v6457, %v7524
  %v7573 = vmul.f32 %v6459, %v7525
  %v7574 = vmul.f32 %v6461, %v7526
  %v7575 = vmul.f32 %v6463, %v7527
  %v7576 = vmul.f32 %v6465, %v7528
  %v7577 = vmul.f32 %v6467, %v7529
  %v7578 = vmul.f32 %v6469, %v7530
  %v7579 = vmul.f32 %v6471, %v7531
  %v7580 = vmul.f32 %v6473, %v7532
  %v7581 = vmul.f32 %v6475, %v7533
  %v7582 = vmul.f32 %v6477, %v7534
  %v7583 = vmul.f32 %v6479, %v7535
  %v7584 = vmul.f32 %v6481, %v7520
  %v7585 = vmul.f32 %v6483, %v7521
  %v7586 = vmul.f32 %v6485, %v7522
  %v7587 = vmul.f32 %v6487, %v7523
  %v7588 = vmul.f32 %v6489, %v7524
  %v7589 = vmul.f32 %v6491, %v7525
  %v7590 = vmul.f32 %v6493, %v7526
  %v7591 = vmul.f32 %v6495, %v7527
  %v7592 = vmul.f32 %v6497, %v7528
  %v7593 = vmul.f32 %v6499, %v7529
  %v7594 = vmul.f32 %v6501, %v7530
  %v7595 = vmul.f32 %v6503, %v7531
  %v7596 = vmul.f32 %v6505, %v7532
  %v7597 = vmul.f32 %v6507, %v7533
  %v7598 = vmul.f32 %v6509, %v7534
  %v7599 = vmul.f32 %v6511, %v7535
  %v7600 = vmul.f32 %v6513, %v7520
  %v7601 = vmul.f32 %v6515, %v7521
  %v7602 = vmul.f32 %v6517, %v7522
  %v7603 = vmul.f32 %v6519, %v7523
  %v7604 = vmul.f32 %v6521, %v7524
  %v7605 = vmul.f32 %v6523, %v7525
  %v7606 = vmul.f32 %v6525, %v7526
  %v7607 = vmul.f32 %v6527, %v7527
  %v7608 = vmul.f32 %v6529, %v7528
  %v7609 = vmul.f32 %v6531, %v7529
  %v7610 = vmul.f32 %v6533, %v7530
  %v7611 = vmul.f32 %v6535, %v7531
  %v7612 = vmul.f32 %v6537, %v7532
  %v7613 = vmul.f32 %v6539, %v7533
  %v7614 = vmul.f32 %v6541, %v7534
  %v7615 = vmul.f32 %v6543, %v7535
  %v7616 = vmul.f32 %v6545, %v7520
  %v7617 = vmul.f32 %v6547, %v7521
  %v7618 = vmul.f32 %v6549, %v7522
  %v7619 = vmul.f32 %v6551, %v7523
  %v7620 = vmul.f32 %v6553, %v7524
  %v7621 = vmul.f32 %v6555, %v7525
  %v7622 = vmul.f32 %v6557, %v7526
  %v7623 = vmul.f32 %v6559, %v7527
  %v7624 = vmul.f32 %v6561, %v7528
  %v7625 = vmul.f32 %v6563, %v7529
  %v7626 = vmul.f32 %v6565, %v7530
  %v7627 = vmul.f32 %v6567, %v7531
  %v7628 = vmul.f32 %v6569, %v7532
  %v7629 = vmul.f32 %v6571, %v7533
  %v7630 = vmul.f32 %v6573, %v7534
  %v7631 = vmul.f32 %v6575, %v7535
  %v7632 = vmul.f32 %v6577, %v7520
  %v7633 = vmul.f32 %v6579, %v7521
  %v7634 = vmul.f32 %v6581, %v7522
  %v7635 = vmul.f32 %v6583, %v7523
  %v7636 = vmul.f32 %v6585, %v7524
  %v7637 = vmul.f32 %v6587, %v7525
  %v7638 = vmul.f32 %v6589, %v7526
  %v7639 = vmul.f32 %v6591, %v7527
  %v7640 = vmul.f32 %v6593, %v7528
  %v7641 = vmul.f32 %v6595, %v7529
  %v7642 = vmul.f32 %v6597, %v7530
  %v7643 = vmul.f32 %v6599, %v7531
  %v7644 = vmul.f32 %v6601, %v7532
  %v7645 = vmul.f32 %v6603, %v7533
  %v7646 = vmul.f32 %v6605, %v7534
  %v7647 = vmul.f32 %v6607, %v7535
  %v7648 = vmul.f32 %v6609, %v7520
  %v7649 = vmul.f32 %v6611, %v7521
  %v7650 = vmul.f32 %v6613, %v7522
  %v7651 = vmul.f32 %v6615, %v7523
  %v7652 = vmul.f32 %v6617, %v7524
  %v7653 = vmul.f32 %v6619, %v7525
  %v7654 = vmul.f32 %v6621, %v7526
  %v7655 = vmul.f32 %v6623, %v7527
  %v7656 = vmul.f32 %v6625, %v7528
  %v7657 = vmul.f32 %v6627, %v7529
  %v7658 = vmul.f32 %v6629, %v7530
  %v7659 = vmul.f32 %v6631, %v7531
  %v7660 = vmul.f32 %v6633, %v7532
  %v7661 = vmul.f32 %v6635, %v7533
  %v7662 = vmul.f32 %v6637, %v7534
  %v7663 = vmul.f32 %v6639, %v7535
  %v7664 = vmul.f32 %v6641, %v7520
  %v7665 = vmul.f32 %v6643, %v7521
  %v7666 = vmul.f32 %v6645, %v7522
  %v7667 = vmul.f32 %v6647, %v7523
  %v7668 = vmul.f32 %v6649, %v7524
  %v7669 = vmul.f32 %v6651, %v7525
  %v7670 = vmul.f32 %v6653, %v7526
  %v7671 = vmul.f32 %v6655, %v7527
  %v7672 = vmul.f32 %v6657, %v7528
  %v7673 = vmul.f32 %v6659, %v7529
  %v7674 = vmul.f32 %v6661, %v7530
  %v7675 = vmul.f32 %v6663, %v7531
  %v7676 = vmul.f32 %v6665, %v7532
  %v7677 = vmul.f32 %v6667, %v7533
  %v7678 = vmul.f32 %v6669, %v7534
  %v7679 = vmul.f32 %v6671, %v7535
  %v7680 = vmul.f32 %v6673, %v7520
  %v7681 = vmul.f32 %v6675, %v7521
  %v7682 = vmul.f32 %v6677, %v7522
  %v7683 = vmul.f32 %v6679, %v7523
  %v7684 = vmul.f32 %v6681, %v7524
  %v7685 = vmul.f32 %v6683, %v7525
  %v7686 = vmul.f32 %v6685, %v7526
  %v7687 = vmul.f32 %v6687, %v7527
  %v7688 = vmul.f32 %v6689, %v7528
  %v7689 = vmul.f32 %v6691, %v7529
  %v7690 = vmul.f32 %v6693, %v7530
  %v7691 = vmul.f32 %v6695, %v7531
  %v7692 = vmul.f32 %v6697, %v7532
  %v7693 = vmul.f32 %v6699, %v7533
  %v7694 = vmul.f32 %v6701, %v7534
  %v7695 = vmul.f32 %v6703, %v7535
  %v7696 = vmul.f32 %v6705, %v7520
  %v7697 = vmul.f32 %v6707, %v7521
  %v7698 = vmul.f32 %v6709, %v7522
  %v7699 = vmul.f32 %v6711, %v7523
  %v7700 = vmul.f32 %v6713, %v7524
  %v7701 = vmul.f32 %v6715, %v7525
  %v7702 = vmul.f32 %v6717, %v7526
  %v7703 = vmul.f32 %v6719, %v7527
  %v7704 = vmul.f32 %v6721, %v7528
  %v7705 = vmul.f32 %v6723, %v7529
  %v7706 = vmul.f32 %v6725, %v7530
  %v7707 = vmul.f32 %v6727, %v7531
  %v7708 = vmul.f32 %v6729, %v7532
  %v7709 = vmul.f32 %v6731, %v7533
  %v7710 = vmul.f32 %v6733, %v7534
  %v7711 = vmul.f32 %v6735, %v7535
  %v7712 = vmul.f32 %v6737, %v7520
  %v7713 = vmul.f32 %v6739, %v7521
  %v7714 = vmul.f32 %v6741, %v7522
  %v7715 = vmul.f32 %v6743, %v7523
  %v7716 = vmul.f32 %v6745, %v7524
  %v7717 = vmul.f32 %v6747, %v7525
  %v7718 = vmul.f32 %v6749, %v7526
  %v7719 = vmul.f32 %v6751, %v7527
  %v7720 = vmul.f32 %v6753, %v7528
  %v7721 = vmul.f32 %v6755, %v7529
  %v7722 = vmul.f32 %v6757, %v7530
  %v7723 = vmul.f32 %v6759, %v7531
  %v7724 = vmul.f32 %v6761, %v7532
  %v7725 = vmul.f32 %v6763, %v7533
  %v7726 = vmul.f32 %v6765, %v7534
  %v7727 = vmul.f32 %v6767, %v7535
  %v7728 = vmul.f32 %v6769, %v7520
  %v7729 = vmul.f32 %v6771, %v7521
  %v7730 = vmul.f32 %v6773, %v7522
  %v7731 = vmul.f32 %v6775, %v7523
  %v7732 = vmul.f32 %v6777, %v7524
  %v7733 = vmul.f32 %v6779, %v7525
  %v7734 = vmul.f32 %v6781, %v7526
  %v7735 = vmul.f32 %v6783, %v7527
  %v7736 = vmul.f32 %v6785, %v7528
  %v7737 = vmul.f32 %v6787, %v7529
  %v7738 = vmul.f32 %v6789, %v7530
  %v7739 = vmul.f32 %v6791, %v7531
  %v7740 = vmul.f32 %v6793, %v7532
  %v7741 = vmul.f32 %v6795, %v7533
  %v7742 = vmul.f32 %v6797, %v7534
  %v7743 = vmul.f32 %v6799, %v7535
  %v7744 = vmul.f32 %v6801, %v7520
  %v7745 = vmul.f32 %v6803, %v7521
  %v7746 = vmul.f32 %v6805, %v7522
  %v7747 = vmul.f32 %v6807, %v7523
  %v7748 = vmul.f32 %v6809, %v7524
  %v7749 = vmul.f32 %v6811, %v7525
  %v7750 = vmul.f32 %v6813, %v7526
  %v7751 = vmul.f32 %v6815, %v7527
  %v7752 = vmul.f32 %v6817, %v7528
  %v7753 = vmul.f32 %v6819, %v7529
  %v7754 = vmul.f32 %v6821, %v7530
  %v7755 = vmul.f32 %v6823, %v7531
  %v7756 = vmul.f32 %v6825, %v7532
  %v7757 = vmul.f32 %v6827, %v7533
  %v7758 = vmul.f32 %v6829, %v7534
  %v7759 = vmul.f32 %v6831, %v7535
  %v7760 = vmul.f32 %v6833, %v7520
  %v7761 = vmul.f32 %v6835, %v7521
  %v7762 = vmul.f32 %v6837, %v7522
  %v7763 = vmul.f32 %v6839, %v7523
  %v7764 = vmul.f32 %v6841, %v7524
  %v7765 = vmul.f32 %v6843, %v7525
  %v7766 = vmul.f32 %v6845, %v7526
  %v7767 = vmul.f32 %v6847, %v7527
  %v7768 = vmul.f32 %v6849, %v7528
  %v7769 = vmul.f32 %v6851, %v7529
  %v7770 = vmul.f32 %v6853, %v7530
  %v7771 = vmul.f32 %v6855, %v7531
  %v7772 = vmul.f32 %v6857, %v7532
  %v7773 = vmul.f32 %v6859, %v7533
  %v7774 = vmul.f32 %v6861, %v7534
  %v7775 = vmul.f32 %v6863, %v7535
  %v7776 = vmul.f32 %v6865, %v7520
  %v7777 = vmul.f32 %v6867, %v7521
  %v7778 = vmul.f32 %v6869, %v7522
  %v7779 = vmul.f32 %v6871, %v7523
  %v7780 = vmul.f32 %v6873, %v7524
  %v7781 = vmul.f32 %v6875, %v7525
  %v7782 = vmul.f32 %v6877, %v7526
  %v7783 = vmul.f32 %v6879, %v7527
  %v7784 = vmul.f32 %v6881, %v7528
  %v7785 = vmul.f32 %v6883, %v7529
  %v7786 = vmul.f32 %v6885, %v7530
  %v7787 = vmul.f32 %v6887, %v7531
  %v7788 = vmul.f32 %v6889, %v7532
  %v7789 = vmul.f32 %v6891, %v7533
  %v7790 = vmul.f32 %v6893, %v7534
  %v7791 = vmul.f32 %v6895, %v7535
  %v7792 = vmul.f32 %v6897, %v7520
  %v7793 = vmul.f32 %v6899, %v7521
  %v7794 = vmul.f32 %v6901, %v7522
  %v7795 = vmul.f32 %v6903, %v7523
  %v7796 = vmul.f32 %v6905, %v7524
  %v7797 = vmul.f32 %v6907, %v7525
  %v7798 = vmul.f32 %v6909, %v7526
  %v7799 = vmul.f32 %v6911, %v7527
  %v7800 = vmul.f32 %v6913, %v7528
  %v7801 = vmul.f32 %v6915, %v7529
  %v7802 = vmul.f32 %v6917, %v7530
  %v7803 = vmul.f32 %v6919, %v7531
  %v7804 = vmul.f32 %v6921, %v7532
  %v7805 = vmul.f32 %v6923, %v7533
  %v7806 = vmul.f32 %v6925, %v7534
  %v7807 = vmul.f32 %v6927, %v7535
  %v7808 = vmul.f32 %v6929, %v7520
  %v7809 = vmul.f32 %v6931, %v7521
  %v7810 = vmul.f32 %v6933, %v7522
  %v7811 = vmul.f32 %v6935, %v7523
  %v7812 = vmul.f32 %v6937, %v7524
  %v7813 = vmul.f32 %v6939, %v7525
  %v7814 = vmul.f32 %v6941, %v7526
  %v7815 = vmul.f32 %v6943, %v7527
  %v7816 = vmul.f32 %v6945, %v7528
  %v7817 = vmul.f32 %v6947, %v7529
  %v7818 = vmul.f32 %v6949, %v7530
  %v7819 = vmul.f32 %v6951, %v7531
  %v7820 = vmul.f32 %v6953, %v7532
  %v7821 = vmul.f32 %v6955, %v7533
  %v7822 = vmul.f32 %v6957, %v7534
  %v7823 = vmul.f32 %v6959, %v7535
  %8112 = vrot.lane.b32.xlu0 %v1727, 112
  %v8113 = vpop.permute.xlu0 %8112
  %8114 = vrot.lane.b32.xlu0 %v1730, 112
  %v8115 = vpop.permute.xlu0 %8114
  %8116 = vrot.lane.b32.xlu0 %v1735, 112
  %v8117 = vpop.permute.xlu0 %8116
  %8118 = vrot.lane.b32.xlu0 %v1738, 112
  %v8119 = vpop.permute.xlu0 %8118
  %8120 = vrot.lane.b32.xlu0 %v1743, 112
  %v8121 = vpop.permute.xlu0 %8120
  %8122 = vrot.lane.b32.xlu0 %v1746, 112
  %v8123 = vpop.permute.xlu0 %8122
  %8124 = vrot.lane.b32.xlu0 %v1751, 112
  %v8125 = vpop.permute.xlu0 %8124
  %8126 = vrot.lane.b32.xlu0 %v1754, 112
  %v8127 = vpop.permute.xlu0 %8126
  %8128 = vrot.lane.b32.xlu0 %v1759, 112
  %v8129 = vpop.permute.xlu0 %8128
  %8130 = vrot.lane.b32.xlu0 %v1762, 112
  %v8131 = vpop.permute.xlu0 %8130
  %8132 = vrot.lane.b32.xlu0 %v1767, 112
  %v8133 = vpop.permute.xlu0 %8132
  %8134 = vrot.lane.b32.xlu0 %v1770, 112
  %v8135 = vpop.permute.xlu0 %8134
  %8136 = vrot.lane.b32.xlu0 %v1775, 112
  %v8137 = vpop.permute.xlu0 %8136
  %8138 = vrot.lane.b32.xlu0 %v1778, 112
  %v8139 = vpop.permute.xlu0 %8138
  %8140 = vrot.lane.b32.xlu0 %v1783, 112
  %v8141 = vpop.permute.xlu0 %8140
  %8142 = vrot.lane.b32.xlu0 %v1786, 112
  %v8143 = vpop.permute.xlu0 %8142
  %8144 = vrot.lane.b32.xlu0 %v1791, 112
  %v8145 = vpop.permute.xlu0 %8144
  %8146 = vrot.lane.b32.xlu0 %v1794, 112
  %v8147 = vpop.permute.xlu0 %8146
  %8148 = vrot.lane.b32.xlu0 %v1799, 112
  %v8149 = vpop.permute.xlu0 %8148
  %8150 = vrot.lane.b32.xlu0 %v1802, 112
  %v8151 = vpop.permute.xlu0 %8150
  %8152 = vrot.lane.b32.xlu0 %v1807, 112
  %v8153 = vpop.permute.xlu0 %8152
  %8154 = vrot.lane.b32.xlu0 %v1810, 112
  %v8155 = vpop.permute.xlu0 %8154
  %8156 = vrot.lane.b32.xlu0 %v1815, 112
  %v8157 = vpop.permute.xlu0 %8156
  %8158 = vrot.lane.b32.xlu0 %v1818, 112
  %v8159 = vpop.permute.xlu0 %8158
  %8160 = vrot.lane.b32.xlu0 %v1823, 112
  %v8161 = vpop.permute.xlu0 %8160
  %8162 = vrot.lane.b32.xlu0 %v1826, 112
  %v8163 = vpop.permute.xlu0 %8162
  %8164 = vrot.lane.b32.xlu0 %v1831, 112
  %v8165 = vpop.permute.xlu0 %8164
  %8166 = vrot.lane.b32.xlu0 %v1834, 112
  %v8167 = vpop.permute.xlu0 %8166
  %8168 = vrot.lane.b32.xlu0 %v1839, 112
  %v8169 = vpop.permute.xlu0 %8168
  %8170 = vrot.lane.b32.xlu0 %v1842, 112
  %v8171 = vpop.permute.xlu0 %8170
  %8172 = vrot.lane.b32.xlu0 %v1847, 112
  %v8173 = vpop.permute.xlu0 %8172
  %8174 = vrot.lane.b32.xlu0 %v1850, 112
  %v8175 = vpop.permute.xlu0 %8174
  %8176 = vrot.lane.b32.xlu0 %v1855, 112
  %v8177 = vpop.permute.xlu0 %8176
  %8178 = vrot.lane.b32.xlu0 %v1858, 112
  %v8179 = vpop.permute.xlu0 %8178
  %8180 = vrot.lane.b32.xlu0 %v1863, 112
  %v8181 = vpop.permute.xlu0 %8180
  %8182 = vrot.lane.b32.xlu0 %v1866, 112
  %v8183 = vpop.permute.xlu0 %8182
  %8184 = vrot.lane.b32.xlu0 %v1871, 112
  %v8185 = vpop.permute.xlu0 %8184
  %8186 = vrot.lane.b32.xlu0 %v1874, 112
  %v8187 = vpop.permute.xlu0 %8186
  %8188 = vrot.lane.b32.xlu0 %v1879, 112
  %v8189 = vpop.permute.xlu0 %8188
  %8190 = vrot.lane.b32.xlu0 %v1882, 112
  %v8191 = vpop.permute.xlu0 %8190
  %8192 = vrot.lane.b32.xlu0 %v1887, 112
  %v8193 = vpop.permute.xlu0 %8192
  %8194 = vrot.lane.b32.xlu0 %v1890, 112
  %v8195 = vpop.permute.xlu0 %8194
  %8196 = vrot.lane.b32.xlu0 %v1895, 112
  %v8197 = vpop.permute.xlu0 %8196
  %8198 = vrot.lane.b32.xlu0 %v1898, 112
  %v8199 = vpop.permute.xlu0 %8198
  %8200 = vrot.lane.b32.xlu0 %v1903, 112
  %v8201 = vpop.permute.xlu0 %8200
  %8202 = vrot.lane.b32.xlu0 %v1906, 112
  %v8203 = vpop.permute.xlu0 %8202
  %8204 = vrot.lane.b32.xlu0 %v1911, 112
  %v8205 = vpop.permute.xlu0 %8204
  %8206 = vrot.lane.b32.xlu0 %v1914, 112
  %v8207 = vpop.permute.xlu0 %8206
  %8208 = vrot.lane.b32.xlu0 %v1919, 112
  %v8209 = vpop.permute.xlu0 %8208
  %8210 = vrot.lane.b32.xlu0 %v1922, 112
  %v8211 = vpop.permute.xlu0 %8210
  %8212 = vrot.lane.b32.xlu0 %v1927, 112
  %v8213 = vpop.permute.xlu0 %8212
  %8214 = vrot.lane.b32.xlu0 %v1930, 112
  %v8215 = vpop.permute.xlu0 %8214
  %8216 = vrot.lane.b32.xlu0 %v1935, 112
  %v8217 = vpop.permute.xlu0 %8216
  %8218 = vrot.lane.b32.xlu0 %v1938, 112
  %v8219 = vpop.permute.xlu0 %8218
  %8220 = vrot.lane.b32.xlu0 %v1943, 112
  %v8221 = vpop.permute.xlu0 %8220
  %8222 = vrot.lane.b32.xlu0 %v1946, 112
  %v8223 = vpop.permute.xlu0 %8222
  %8224 = vrot.lane.b32.xlu0 %v1951, 112
  %v8225 = vpop.permute.xlu0 %8224
  %8226 = vrot.lane.b32.xlu0 %v1954, 112
  %v8227 = vpop.permute.xlu0 %8226
  %8228 = vrot.lane.b32.xlu0 %v1959, 112
  %v8229 = vpop.permute.xlu0 %8228
  %8230 = vrot.lane.b32.xlu0 %v1962, 112
  %v8231 = vpop.permute.xlu0 %8230
  %8232 = vrot.lane.b32.xlu0 %v1967, 112
  %v8233 = vpop.permute.xlu0 %8232
  %8234 = vrot.lane.b32.xlu0 %v1970, 112
  %v8235 = vpop.permute.xlu0 %8234
  %8236 = vrot.lane.b32.xlu0 %v1975, 112
  %v8237 = vpop.permute.xlu0 %8236
  %8238 = vrot.lane.b32.xlu0 %v1978, 112
  %v8239 = vpop.permute.xlu0 %8238
  %8240 = vrot.lane.b32.xlu0 %v1983, 112
  %v8241 = vpop.permute.xlu0 %8240
  %8242 = vrot.lane.b32.xlu0 %v1986, 112
  %v8243 = vpop.permute.xlu0 %8242
  %8244 = vrot.lane.b32.xlu0 %v1991, 112
  %v8245 = vpop.permute.xlu0 %8244
  %8246 = vrot.lane.b32.xlu0 %v1994, 112
  %v8247 = vpop.permute.xlu0 %8246
  %8248 = vrot.lane.b32.xlu0 %v1999, 112
  %v8249 = vpop.permute.xlu0 %8248
  %8250 = vrot.lane.b32.xlu0 %v2002, 112
  %v8251 = vpop.permute.xlu0 %8250
  %8252 = vrot.lane.b32.xlu0 %v2007, 112
  %v8253 = vpop.permute.xlu0 %8252
  %8254 = vrot.lane.b32.xlu0 %v2010, 112
  %v8255 = vpop.permute.xlu0 %8254
  %8256 = vrot.lane.b32.xlu0 %v2015, 112
  %v8257 = vpop.permute.xlu0 %8256
  %8258 = vrot.lane.b32.xlu0 %v2018, 112
  %v8259 = vpop.permute.xlu0 %8258
  %8260 = vrot.lane.b32.xlu0 %v2023, 112
  %v8261 = vpop.permute.xlu0 %8260
  %8262 = vrot.lane.b32.xlu0 %v2026, 112
  %v8263 = vpop.permute.xlu0 %8262
  %8264 = vrot.lane.b32.xlu0 %v2031, 112
  %v8265 = vpop.permute.xlu0 %8264
  %8266 = vrot.lane.b32.xlu0 %v2034, 112
  %v8267 = vpop.permute.xlu0 %8266
  %8268 = vrot.lane.b32.xlu0 %v2039, 112
  %v8269 = vpop.permute.xlu0 %8268
  %8270 = vrot.lane.b32.xlu0 %v2042, 112
  %v8271 = vpop.permute.xlu0 %8270
  %8272 = vrot.lane.b32.xlu0 %v2047, 112
  %v8273 = vpop.permute.xlu0 %8272
  %8274 = vrot.lane.b32.xlu0 %v2050, 112
  %v8275 = vpop.permute.xlu0 %8274
  %8276 = vrot.lane.b32.xlu0 %v2055, 112
  %v8277 = vpop.permute.xlu0 %8276
  %8278 = vrot.lane.b32.xlu0 %v2058, 112
  %v8279 = vpop.permute.xlu0 %8278
  %8280 = vrot.lane.b32.xlu0 %v2063, 112
  %v8281 = vpop.permute.xlu0 %8280
  %8282 = vrot.lane.b32.xlu0 %v2066, 112
  %v8283 = vpop.permute.xlu0 %8282
  %8284 = vrot.lane.b32.xlu0 %v2071, 112
  %v8285 = vpop.permute.xlu0 %8284
  %8286 = vrot.lane.b32.xlu0 %v2074, 112
  %v8287 = vpop.permute.xlu0 %8286
  %8288 = vrot.lane.b32.xlu0 %v2079, 112
  %v8289 = vpop.permute.xlu0 %8288
  %8290 = vrot.lane.b32.xlu0 %v2082, 112
  %v8291 = vpop.permute.xlu0 %8290
  %8292 = vrot.lane.b32.xlu0 %v2087, 112
  %v8293 = vpop.permute.xlu0 %8292
  %8294 = vrot.lane.b32.xlu0 %v2090, 112
  %v8295 = vpop.permute.xlu0 %8294
  %8296 = vrot.lane.b32.xlu0 %v2095, 112
  %v8297 = vpop.permute.xlu0 %8296
  %8298 = vrot.lane.b32.xlu0 %v2098, 112
  %v8299 = vpop.permute.xlu0 %8298
  %8300 = vrot.lane.b32.xlu0 %v2103, 112
  %v8301 = vpop.permute.xlu0 %8300
  %8302 = vrot.lane.b32.xlu0 %v2106, 112
  %v8303 = vpop.permute.xlu0 %8302
  %8304 = vrot.lane.b32.xlu0 %v2111, 112
  %v8305 = vpop.permute.xlu0 %8304
  %8306 = vrot.lane.b32.xlu0 %v2114, 112
  %v8307 = vpop.permute.xlu0 %8306
  %8308 = vrot.lane.b32.xlu0 %v2119, 112
  %v8309 = vpop.permute.xlu0 %8308
  %8310 = vrot.lane.b32.xlu0 %v2122, 112
  %v8311 = vpop.permute.xlu0 %8310
  %8312 = vrot.lane.b32.xlu0 %v2127, 112
  %v8313 = vpop.permute.xlu0 %8312
  %8314 = vrot.lane.b32.xlu0 %v2130, 112
  %v8315 = vpop.permute.xlu0 %8314
  %8316 = vrot.lane.b32.xlu0 %v2135, 112
  %v8317 = vpop.permute.xlu0 %8316
  %8318 = vrot.lane.b32.xlu0 %v2138, 112
  %v8319 = vpop.permute.xlu0 %8318
  %8320 = vrot.lane.b32.xlu0 %v2143, 112
  %v8321 = vpop.permute.xlu0 %8320
  %8322 = vrot.lane.b32.xlu0 %v2146, 112
  %v8323 = vpop.permute.xlu0 %8322
  %8324 = vrot.lane.b32.xlu0 %v2151, 112
  %v8325 = vpop.permute.xlu0 %8324
  %8326 = vrot.lane.b32.xlu0 %v2154, 112
  %v8327 = vpop.permute.xlu0 %8326
  %8328 = vrot.lane.b32.xlu0 %v2159, 112
  %v8329 = vpop.permute.xlu0 %8328
  %8330 = vrot.lane.b32.xlu0 %v2162, 112
  %v8331 = vpop.permute.xlu0 %8330
  %8332 = vrot.lane.b32.xlu0 %v2167, 112
  %v8333 = vpop.permute.xlu0 %8332
  %8334 = vrot.lane.b32.xlu0 %v2170, 112
  %v8335 = vpop.permute.xlu0 %8334
  %8336 = vrot.lane.b32.xlu0 %v2175, 112
  %v8337 = vpop.permute.xlu0 %8336
  %8338 = vrot.lane.b32.xlu0 %v2178, 112
  %v8339 = vpop.permute.xlu0 %8338
  %8340 = vrot.lane.b32.xlu0 %v2183, 112
  %v8341 = vpop.permute.xlu0 %8340
  %8342 = vrot.lane.b32.xlu0 %v2186, 112
  %v8343 = vpop.permute.xlu0 %8342
  %8344 = vrot.lane.b32.xlu0 %v2191, 112
  %v8345 = vpop.permute.xlu0 %8344
  %8346 = vrot.lane.b32.xlu0 %v2194, 112
  %v8347 = vpop.permute.xlu0 %8346
  %8348 = vrot.lane.b32.xlu0 %v2199, 112
  %v8349 = vpop.permute.xlu0 %8348
  %8350 = vrot.lane.b32.xlu0 %v2202, 112
  %v8351 = vpop.permute.xlu0 %8350
  %8352 = vrot.lane.b32.xlu0 %v2207, 112
  %v8353 = vpop.permute.xlu0 %8352
  %8354 = vrot.lane.b32.xlu0 %v2210, 112
  %v8355 = vpop.permute.xlu0 %8354
  %8356 = vrot.lane.b32.xlu0 %v2215, 112
  %v8357 = vpop.permute.xlu0 %8356
  %8358 = vrot.lane.b32.xlu0 %v2218, 112
  %v8359 = vpop.permute.xlu0 %8358
  %8360 = vrot.lane.b32.xlu0 %v2223, 112
  %v8361 = vpop.permute.xlu0 %8360
  %8362 = vrot.lane.b32.xlu0 %v2226, 112
  %v8363 = vpop.permute.xlu0 %8362
  %8364 = vrot.lane.b32.xlu0 %v2231, 112
  %v8365 = vpop.permute.xlu0 %8364
  %8366 = vrot.lane.b32.xlu0 %v2234, 112
  %v8367 = vpop.permute.xlu0 %8366
  %8368 = vrot.lane.b32.xlu0 %v2239, 112
  %v8369 = vpop.permute.xlu0 %8368
  %8370 = vrot.lane.b32.xlu0 %v2242, 112
  %v8371 = vpop.permute.xlu0 %8370
  %8372 = vrot.lane.b32.xlu0 %v2247, 112
  %v8373 = vpop.permute.xlu0 %8372
  %8374 = vrot.lane.b32.xlu0 %v2250, 112
  %v8375 = vpop.permute.xlu0 %8374
  %8376 = vrot.lane.b32.xlu0 %v2255, 112
  %v8377 = vpop.permute.xlu0 %8376
  %8378 = vrot.lane.b32.xlu0 %v2258, 112
  %v8379 = vpop.permute.xlu0 %8378
  %8380 = vrot.lane.b32.xlu0 %v2263, 112
  %v8381 = vpop.permute.xlu0 %8380
  %8382 = vrot.lane.b32.xlu0 %v2266, 112
  %v8383 = vpop.permute.xlu0 %8382
  %8384 = vrot.lane.b32.xlu0 %v2271, 112
  %v8385 = vpop.permute.xlu0 %8384
  %8386 = vrot.lane.b32.xlu0 %v2274, 112
  %v8387 = vpop.permute.xlu0 %8386
  %8388 = vrot.lane.b32.xlu0 %v2279, 112
  %v8389 = vpop.permute.xlu0 %8388
  %8390 = vrot.lane.b32.xlu0 %v2282, 112
  %v8391 = vpop.permute.xlu0 %8390
  %8392 = vrot.lane.b32.xlu0 %v2287, 112
  %v8393 = vpop.permute.xlu0 %8392
  %8394 = vrot.lane.b32.xlu0 %v2290, 112
  %v8395 = vpop.permute.xlu0 %8394
  %8396 = vrot.lane.b32.xlu0 %v2295, 112
  %v8397 = vpop.permute.xlu0 %8396
  %8398 = vrot.lane.b32.xlu0 %v2298, 112
  %v8399 = vpop.permute.xlu0 %8398
  %8400 = vrot.lane.b32.xlu0 %v2303, 112
  %v8401 = vpop.permute.xlu0 %8400
  %8402 = vrot.lane.b32.xlu0 %v2306, 112
  %v8403 = vpop.permute.xlu0 %8402
  %8404 = vrot.lane.b32.xlu0 %v2311, 112
  %v8405 = vpop.permute.xlu0 %8404
  %8406 = vrot.lane.b32.xlu0 %v2314, 112
  %v8407 = vpop.permute.xlu0 %8406
  %8408 = vrot.lane.b32.xlu0 %v2319, 112
  %v8409 = vpop.permute.xlu0 %8408
  %8410 = vrot.lane.b32.xlu0 %v2322, 112
  %v8411 = vpop.permute.xlu0 %8410
  %8412 = vrot.lane.b32.xlu0 %v2327, 112
  %v8413 = vpop.permute.xlu0 %8412
  %8414 = vrot.lane.b32.xlu0 %v2330, 112
  %v8415 = vpop.permute.xlu0 %8414
  %8416 = vrot.lane.b32.xlu0 %v2335, 112
  %v8417 = vpop.permute.xlu0 %8416
  %8418 = vrot.lane.b32.xlu0 %v2338, 112
  %v8419 = vpop.permute.xlu0 %8418
  %8420 = vrot.lane.b32.xlu0 %v2343, 112
  %v8421 = vpop.permute.xlu0 %8420
  %8422 = vrot.lane.b32.xlu0 %v2346, 112
  %v8423 = vpop.permute.xlu0 %8422
  %8424 = vrot.lane.b32.xlu0 %v2351, 112
  %v8425 = vpop.permute.xlu0 %8424
  %8426 = vrot.lane.b32.xlu0 %v2354, 112
  %v8427 = vpop.permute.xlu0 %8426
  %8428 = vrot.lane.b32.xlu0 %v2359, 112
  %v8429 = vpop.permute.xlu0 %8428
  %8430 = vrot.lane.b32.xlu0 %v2362, 112
  %v8431 = vpop.permute.xlu0 %8430
  %8432 = vrot.lane.b32.xlu0 %v2367, 112
  %v8433 = vpop.permute.xlu0 %8432
  %8434 = vrot.lane.b32.xlu0 %v2370, 112
  %v8435 = vpop.permute.xlu0 %8434
  %8436 = vrot.lane.b32.xlu0 %v2375, 112
  %v8437 = vpop.permute.xlu0 %8436
  %8438 = vrot.lane.b32.xlu0 %v2378, 112
  %v8439 = vpop.permute.xlu0 %8438
  %8440 = vrot.lane.b32.xlu0 %v2383, 112
  %v8441 = vpop.permute.xlu0 %8440
  %8442 = vrot.lane.b32.xlu0 %v2386, 112
  %v8443 = vpop.permute.xlu0 %8442
  %8444 = vrot.lane.b32.xlu0 %v2391, 112
  %v8445 = vpop.permute.xlu0 %8444
  %8446 = vrot.lane.b32.xlu0 %v2394, 112
  %v8447 = vpop.permute.xlu0 %8446
  %8448 = vrot.lane.b32.xlu0 %v2399, 112
  %v8449 = vpop.permute.xlu0 %8448
  %8450 = vrot.lane.b32.xlu0 %v2402, 112
  %v8451 = vpop.permute.xlu0 %8450
  %8452 = vrot.lane.b32.xlu0 %v2407, 112
  %v8453 = vpop.permute.xlu0 %8452
  %8454 = vrot.lane.b32.xlu0 %v2410, 112
  %v8455 = vpop.permute.xlu0 %8454
  %8456 = vrot.lane.b32.xlu0 %v2415, 112
  %v8457 = vpop.permute.xlu0 %8456
  %8458 = vrot.lane.b32.xlu0 %v2418, 112
  %v8459 = vpop.permute.xlu0 %8458
  %8460 = vrot.lane.b32.xlu0 %v2423, 112
  %v8461 = vpop.permute.xlu0 %8460
  %8462 = vrot.lane.b32.xlu0 %v2426, 112
  %v8463 = vpop.permute.xlu0 %8462
  %8464 = vrot.lane.b32.xlu0 %v2431, 112
  %v8465 = vpop.permute.xlu0 %8464
  %8466 = vrot.lane.b32.xlu0 %v2434, 112
  %v8467 = vpop.permute.xlu0 %8466
  %8468 = vrot.lane.b32.xlu0 %v2439, 112
  %v8469 = vpop.permute.xlu0 %8468
  %8470 = vrot.lane.b32.xlu0 %v2442, 112
  %v8471 = vpop.permute.xlu0 %8470
  %8472 = vrot.lane.b32.xlu0 %v2447, 112
  %v8473 = vpop.permute.xlu0 %8472
  %8474 = vrot.lane.b32.xlu0 %v2450, 112
  %v8475 = vpop.permute.xlu0 %8474
  %8476 = vrot.lane.b32.xlu0 %v2455, 112
  %v8477 = vpop.permute.xlu0 %8476
  %8478 = vrot.lane.b32.xlu0 %v2458, 112
  %v8479 = vpop.permute.xlu0 %8478
  %8480 = vrot.lane.b32.xlu0 %v2463, 112
  %v8481 = vpop.permute.xlu0 %8480
  %8482 = vrot.lane.b32.xlu0 %v2466, 112
  %v8483 = vpop.permute.xlu0 %8482
  %8484 = vrot.lane.b32.xlu0 %v2471, 112
  %v8485 = vpop.permute.xlu0 %8484
  %8486 = vrot.lane.b32.xlu0 %v2474, 112
  %v8487 = vpop.permute.xlu0 %8486
  %8488 = vrot.lane.b32.xlu0 %v2479, 112
  %v8489 = vpop.permute.xlu0 %8488
  %8490 = vrot.lane.b32.xlu0 %v2482, 112
  %v8491 = vpop.permute.xlu0 %8490
  %8492 = vrot.lane.b32.xlu0 %v2487, 112
  %v8493 = vpop.permute.xlu0 %8492
  %8494 = vrot.lane.b32.xlu0 %v2490, 112
  %v8495 = vpop.permute.xlu0 %8494
  %8496 = vrot.lane.b32.xlu0 %v2495, 112
  %v8497 = vpop.permute.xlu0 %8496
  %8498 = vrot.lane.b32.xlu0 %v2498, 112
  %v8499 = vpop.permute.xlu0 %8498
  %8500 = vrot.lane.b32.xlu0 %v2503, 112
  %v8501 = vpop.permute.xlu0 %8500
  %8502 = vrot.lane.b32.xlu0 %v2506, 112
  %v8503 = vpop.permute.xlu0 %8502
  %8504 = vrot.lane.b32.xlu0 %v2511, 112
  %v8505 = vpop.permute.xlu0 %8504
  %8506 = vrot.lane.b32.xlu0 %v2514, 112
  %v8507 = vpop.permute.xlu0 %8506
  %8508 = vrot.lane.b32.xlu0 %v2519, 112
  %v8509 = vpop.permute.xlu0 %8508
  %8510 = vrot.lane.b32.xlu0 %v2522, 112
  %v8511 = vpop.permute.xlu0 %8510
  %8512 = vrot.lane.b32.xlu0 %v2527, 112
  %v8513 = vpop.permute.xlu0 %8512
  %8514 = vrot.lane.b32.xlu0 %v2530, 112
  %v8515 = vpop.permute.xlu0 %8514
  %8516 = vrot.lane.b32.xlu0 %v2535, 112
  %v8517 = vpop.permute.xlu0 %8516
  %8518 = vrot.lane.b32.xlu0 %v2538, 112
  %v8519 = vpop.permute.xlu0 %8518
  %8520 = vrot.lane.b32.xlu0 %v2543, 112
  %v8521 = vpop.permute.xlu0 %8520
  %8522 = vrot.lane.b32.xlu0 %v2546, 112
  %v8523 = vpop.permute.xlu0 %8522
  %8524 = vrot.lane.b32.xlu0 %v2551, 112
  %v8525 = vpop.permute.xlu0 %8524
  %8526 = vrot.lane.b32.xlu0 %v2554, 112
  %v8527 = vpop.permute.xlu0 %8526
  %8528 = vrot.lane.b32.xlu0 %v2559, 112
  %v8529 = vpop.permute.xlu0 %8528
  %8530 = vrot.lane.b32.xlu0 %v2562, 112
  %v8531 = vpop.permute.xlu0 %8530
  %8532 = vrot.lane.b32.xlu0 %v2567, 112
  %v8533 = vpop.permute.xlu0 %8532
  %8534 = vrot.lane.b32.xlu0 %v2570, 112
  %v8535 = vpop.permute.xlu0 %8534
  %8536 = vrot.lane.b32.xlu0 %v2575, 112
  %v8537 = vpop.permute.xlu0 %8536
  %8538 = vrot.lane.b32.xlu0 %v2578, 112
  %v8539 = vpop.permute.xlu0 %8538
  %8540 = vrot.lane.b32.xlu0 %v2583, 112
  %v8541 = vpop.permute.xlu0 %8540
  %8542 = vrot.lane.b32.xlu0 %v2586, 112
  %v8543 = vpop.permute.xlu0 %8542
  %8544 = vrot.lane.b32.xlu0 %v2591, 112
  %v8545 = vpop.permute.xlu0 %8544
  %8546 = vrot.lane.b32.xlu0 %v2594, 112
  %v8547 = vpop.permute.xlu0 %8546
  %8548 = vrot.lane.b32.xlu0 %v2599, 112
  %v8549 = vpop.permute.xlu0 %8548
  %8550 = vrot.lane.b32.xlu0 %v2602, 112
  %v8551 = vpop.permute.xlu0 %8550
  %8552 = vrot.lane.b32.xlu0 %v2607, 112
  %v8553 = vpop.permute.xlu0 %8552
  %8554 = vrot.lane.b32.xlu0 %v2610, 112
  %v8555 = vpop.permute.xlu0 %8554
  %8556 = vrot.lane.b32.xlu0 %v2615, 112
  %v8557 = vpop.permute.xlu0 %8556
  %8558 = vrot.lane.b32.xlu0 %v2618, 112
  %v8559 = vpop.permute.xlu0 %8558
  %8560 = vrot.lane.b32.xlu0 %v2623, 112
  %v8561 = vpop.permute.xlu0 %8560
  %8562 = vrot.lane.b32.xlu0 %v2626, 112
  %v8563 = vpop.permute.xlu0 %8562
  %8564 = vrot.lane.b32.xlu0 %v2631, 112
  %v8565 = vpop.permute.xlu0 %8564
  %8566 = vrot.lane.b32.xlu0 %v2634, 112
  %v8567 = vpop.permute.xlu0 %8566
  %8568 = vrot.lane.b32.xlu0 %v2639, 112
  %v8569 = vpop.permute.xlu0 %8568
  %8570 = vrot.lane.b32.xlu0 %v2642, 112
  %v8571 = vpop.permute.xlu0 %8570
  %8572 = vrot.lane.b32.xlu0 %v2647, 112
  %v8573 = vpop.permute.xlu0 %8572
  %8574 = vrot.lane.b32.xlu0 %v2650, 112
  %v8575 = vpop.permute.xlu0 %8574
  %8576 = vrot.lane.b32.xlu0 %v2655, 112
  %v8577 = vpop.permute.xlu0 %8576
  %8578 = vrot.lane.b32.xlu0 %v2658, 112
  %v8579 = vpop.permute.xlu0 %8578
  %8580 = vrot.lane.b32.xlu0 %v2663, 112
  %v8581 = vpop.permute.xlu0 %8580
  %8582 = vrot.lane.b32.xlu0 %v2666, 112
  %v8583 = vpop.permute.xlu0 %8582
  %8584 = vrot.lane.b32.xlu0 %v2671, 112
  %v8585 = vpop.permute.xlu0 %8584
  %8586 = vrot.lane.b32.xlu0 %v2674, 112
  %v8587 = vpop.permute.xlu0 %8586
  %8588 = vrot.lane.b32.xlu0 %v2679, 112
  %v8589 = vpop.permute.xlu0 %8588
  %8590 = vrot.lane.b32.xlu0 %v2682, 112
  %v8591 = vpop.permute.xlu0 %8590
  %8592 = vrot.lane.b32.xlu0 %v2687, 112
  %v8593 = vpop.permute.xlu0 %8592
  %8594 = vrot.lane.b32.xlu0 %v2690, 112
  %v8595 = vpop.permute.xlu0 %8594
  %8596 = vrot.lane.b32.xlu0 %v2695, 112
  %v8597 = vpop.permute.xlu0 %8596
  %8598 = vrot.lane.b32.xlu0 %v2698, 112
  %v8599 = vpop.permute.xlu0 %8598
  %8600 = vrot.lane.b32.xlu0 %v2703, 112
  %v8601 = vpop.permute.xlu0 %8600
  %8602 = vrot.lane.b32.xlu0 %v2706, 112
  %v8603 = vpop.permute.xlu0 %8602
  %8604 = vrot.lane.b32.xlu0 %v2711, 112
  %v8605 = vpop.permute.xlu0 %8604
  %8606 = vrot.lane.b32.xlu0 %v2714, 112
  %v8607 = vpop.permute.xlu0 %8606
  %8608 = vrot.lane.b32.xlu0 %v2719, 112
  %v8609 = vpop.permute.xlu0 %8608
  %8610 = vrot.lane.b32.xlu0 %v2722, 112
  %v8611 = vpop.permute.xlu0 %8610
  %8612 = vrot.lane.b32.xlu0 %v2727, 112
  %v8613 = vpop.permute.xlu0 %8612
  %8614 = vrot.lane.b32.xlu0 %v2730, 112
  %v8615 = vpop.permute.xlu0 %8614
  %8616 = vrot.lane.b32.xlu0 %v2735, 112
  %v8617 = vpop.permute.xlu0 %8616
  %8618 = vrot.lane.b32.xlu0 %v2738, 112
  %v8619 = vpop.permute.xlu0 %8618
  %8620 = vrot.lane.b32.xlu0 %v2743, 112
  %v8621 = vpop.permute.xlu0 %8620
  %8622 = vrot.lane.b32.xlu0 %v2746, 112
  %v8623 = vpop.permute.xlu0 %8622
  %8624 = vrot.lane.b32.xlu0 %v2751, 112
  %v8625 = vpop.permute.xlu0 %8624
  %8626 = vrot.lane.b32.xlu0 %v2754, 112
  %v8627 = vpop.permute.xlu0 %8626
  %8628 = vrot.lane.b32.xlu0 %v2759, 112
  %v8629 = vpop.permute.xlu0 %8628
  %8630 = vrot.lane.b32.xlu0 %v2762, 112
  %v8631 = vpop.permute.xlu0 %8630
  %8632 = vrot.lane.b32.xlu0 %v2767, 112
  %v8633 = vpop.permute.xlu0 %8632
  %8634 = vrot.lane.b32.xlu0 %v2770, 112
  %v8635 = vpop.permute.xlu0 %8634
  %8636 = vrot.lane.b32.xlu0 %v2775, 112
  %v8637 = vpop.permute.xlu0 %8636
  %8638 = vrot.lane.b32.xlu0 %v2778, 112
  %v8639 = vpop.permute.xlu0 %8638
  %8640 = vrot.lane.b32.xlu0 %v2783, 112
  %v8641 = vpop.permute.xlu0 %8640
  %8642 = vrot.lane.b32.xlu0 %v2786, 112
  %v8643 = vpop.permute.xlu0 %8642
  %8644 = vrot.lane.b32.xlu0 %v2791, 112
  %v8645 = vpop.permute.xlu0 %8644
  %8646 = vrot.lane.b32.xlu0 %v2794, 112
  %v8647 = vpop.permute.xlu0 %8646
  %8648 = vrot.lane.b32.xlu0 %v2799, 112
  %v8649 = vpop.permute.xlu0 %8648
  %8650 = vrot.lane.b32.xlu0 %v2802, 112
  %v8651 = vpop.permute.xlu0 %8650
  %8652 = vrot.lane.b32.xlu0 %v2807, 112
  %v8653 = vpop.permute.xlu0 %8652
  %8654 = vrot.lane.b32.xlu0 %v2810, 112
  %v8655 = vpop.permute.xlu0 %8654
  %8656 = vrot.lane.b32.xlu0 %v2815, 112
  %v8657 = vpop.permute.xlu0 %8656
  %8658 = vrot.lane.b32.xlu0 %v2818, 112
  %v8659 = vpop.permute.xlu0 %8658
  %8660 = vrot.lane.b32.xlu0 %v2823, 112
  %v8661 = vpop.permute.xlu0 %8660
  %8662 = vrot.lane.b32.xlu0 %v2826, 112
  %v8663 = vpop.permute.xlu0 %8662
  %8664 = vrot.lane.b32.xlu0 %v2831, 112
  %v8665 = vpop.permute.xlu0 %8664
  %8666 = vrot.lane.b32.xlu0 %v2834, 112
  %v8667 = vpop.permute.xlu0 %8666
  %8668 = vrot.lane.b32.xlu0 %v2839, 112
  %v8669 = vpop.permute.xlu0 %8668
  %8670 = vrot.lane.b32.xlu0 %v2842, 112
  %v8671 = vpop.permute.xlu0 %8670
  %8672 = vrot.lane.b32.xlu0 %v2847, 112
  %v8673 = vpop.permute.xlu0 %8672
  %8674 = vrot.lane.b32.xlu0 %v2850, 112
  %v8675 = vpop.permute.xlu0 %8674
  %8676 = vrot.lane.b32.xlu0 %v2855, 112
  %v8677 = vpop.permute.xlu0 %8676
  %8678 = vrot.lane.b32.xlu0 %v2858, 112
  %v8679 = vpop.permute.xlu0 %8678
  %8680 = vrot.lane.b32.xlu0 %v2863, 112
  %v8681 = vpop.permute.xlu0 %8680
  %8682 = vrot.lane.b32.xlu0 %v2866, 112
  %v8683 = vpop.permute.xlu0 %8682
  %8684 = vrot.lane.b32.xlu0 %v2871, 112
  %v8685 = vpop.permute.xlu0 %8684
  %8686 = vrot.lane.b32.xlu0 %v2874, 112
  %v8687 = vpop.permute.xlu0 %8686
  %v8976 = vmul.f32 %v7536, %v8113
  %v8977 = vmul.f32 %v7537, %v8115
  %v8978 = vmul.f32 %v7538, %v8117
  %v8979 = vmul.f32 %v7539, %v8119
  %v8980 = vmul.f32 %v7540, %v8121
  %v8981 = vmul.f32 %v7541, %v8123
  %v8982 = vmul.f32 %v7542, %v8125
  %v8983 = vmul.f32 %v7543, %v8127
  %v8984 = vmul.f32 %v7544, %v8129
  %v8985 = vmul.f32 %v7545, %v8131
  %v8986 = vmul.f32 %v7546, %v8133
  %v8987 = vmul.f32 %v7547, %v8135
  %v8988 = vmul.f32 %v7548, %v8137
  %v8989 = vmul.f32 %v7549, %v8139
  %v8990 = vmul.f32 %v7550, %v8141
  %v8991 = vmul.f32 %v7551, %v8143
  %v8992 = vmul.f32 %v7552, %v8145
  %v8993 = vmul.f32 %v7553, %v8147
  %v8994 = vmul.f32 %v7554, %v8149
  %v8995 = vmul.f32 %v7555, %v8151
  %v8996 = vmul.f32 %v7556, %v8153
  %v8997 = vmul.f32 %v7557, %v8155
  %v8998 = vmul.f32 %v7558, %v8157
  %v8999 = vmul.f32 %v7559, %v8159
  %v9000 = vmul.f32 %v7560, %v8161
  %v9001 = vmul.f32 %v7561, %v8163
  %v9002 = vmul.f32 %v7562, %v8165
  %v9003 = vmul.f32 %v7563, %v8167
  %v9004 = vmul.f32 %v7564, %v8169
  %v9005 = vmul.f32 %v7565, %v8171
  %v9006 = vmul.f32 %v7566, %v8173
  %v9007 = vmul.f32 %v7567, %v8175
  %v9008 = vmul.f32 %v7568, %v8177
  %v9009 = vmul.f32 %v7569, %v8179
  %v9010 = vmul.f32 %v7570, %v8181
  %v9011 = vmul.f32 %v7571, %v8183
  %v9012 = vmul.f32 %v7572, %v8185
  %v9013 = vmul.f32 %v7573, %v8187
  %v9014 = vmul.f32 %v7574, %v8189
  %v9015 = vmul.f32 %v7575, %v8191
  %v9016 = vmul.f32 %v7576, %v8193
  %v9017 = vmul.f32 %v7577, %v8195
  %v9018 = vmul.f32 %v7578, %v8197
  %v9019 = vmul.f32 %v7579, %v8199
  %v9020 = vmul.f32 %v7580, %v8201
  %v9021 = vmul.f32 %v7581, %v8203
  %v9022 = vmul.f32 %v7582, %v8205
  %v9023 = vmul.f32 %v7583, %v8207
  %v9024 = vmul.f32 %v7584, %v8209
  %v9025 = vmul.f32 %v7585, %v8211
  %v9026 = vmul.f32 %v7586, %v8213
  %v9027 = vmul.f32 %v7587, %v8215
  %v9028 = vmul.f32 %v7588, %v8217
  %v9029 = vmul.f32 %v7589, %v8219
  %v9030 = vmul.f32 %v7590, %v8221
  %v9031 = vmul.f32 %v7591, %v8223
  %v9032 = vmul.f32 %v7592, %v8225
  %v9033 = vmul.f32 %v7593, %v8227
  %v9034 = vmul.f32 %v7594, %v8229
  %v9035 = vmul.f32 %v7595, %v8231
  %v9036 = vmul.f32 %v7596, %v8233
  %v9037 = vmul.f32 %v7597, %v8235
  %v9038 = vmul.f32 %v7598, %v8237
  %v9039 = vmul.f32 %v7599, %v8239
  %v9040 = vmul.f32 %v7600, %v8241
  %v9041 = vmul.f32 %v7601, %v8243
  %v9042 = vmul.f32 %v7602, %v8245
  %v9043 = vmul.f32 %v7603, %v8247
  %v9044 = vmul.f32 %v7604, %v8249
  %v9045 = vmul.f32 %v7605, %v8251
  %v9046 = vmul.f32 %v7606, %v8253
  %v9047 = vmul.f32 %v7607, %v8255
  %v9048 = vmul.f32 %v7608, %v8257
  %v9049 = vmul.f32 %v7609, %v8259
  %v9050 = vmul.f32 %v7610, %v8261
  %v9051 = vmul.f32 %v7611, %v8263
  %v9052 = vmul.f32 %v7612, %v8265
  %v9053 = vmul.f32 %v7613, %v8267
  %v9054 = vmul.f32 %v7614, %v8269
  %v9055 = vmul.f32 %v7615, %v8271
  %v9056 = vmul.f32 %v7616, %v8273
  %v9057 = vmul.f32 %v7617, %v8275
  %v9058 = vmul.f32 %v7618, %v8277
  %v9059 = vmul.f32 %v7619, %v8279
  %v9060 = vmul.f32 %v7620, %v8281
  %v9061 = vmul.f32 %v7621, %v8283
  %v9062 = vmul.f32 %v7622, %v8285
  %v9063 = vmul.f32 %v7623, %v8287
  %v9064 = vmul.f32 %v7624, %v8289
  %v9065 = vmul.f32 %v7625, %v8291
  %v9066 = vmul.f32 %v7626, %v8293
  %v9067 = vmul.f32 %v7627, %v8295
  %v9068 = vmul.f32 %v7628, %v8297
  %v9069 = vmul.f32 %v7629, %v8299
  %v9070 = vmul.f32 %v7630, %v8301
  %v9071 = vmul.f32 %v7631, %v8303
  %v9072 = vmul.f32 %v7632, %v8305
  %v9073 = vmul.f32 %v7633, %v8307
  %v9074 = vmul.f32 %v7634, %v8309
  %v9075 = vmul.f32 %v7635, %v8311
  %v9076 = vmul.f32 %v7636, %v8313
  %v9077 = vmul.f32 %v7637, %v8315
  %v9078 = vmul.f32 %v7638, %v8317
  %v9079 = vmul.f32 %v7639, %v8319
  %v9080 = vmul.f32 %v7640, %v8321
  %v9081 = vmul.f32 %v7641, %v8323
  %v9082 = vmul.f32 %v7642, %v8325
  %v9083 = vmul.f32 %v7643, %v8327
  %v9084 = vmul.f32 %v7644, %v8329
  %v9085 = vmul.f32 %v7645, %v8331
  %v9086 = vmul.f32 %v7646, %v8333
  %v9087 = vmul.f32 %v7647, %v8335
  %v9088 = vmul.f32 %v7648, %v8337
  %v9089 = vmul.f32 %v7649, %v8339
  %v9090 = vmul.f32 %v7650, %v8341
  %v9091 = vmul.f32 %v7651, %v8343
  %v9092 = vmul.f32 %v7652, %v8345
  %v9093 = vmul.f32 %v7653, %v8347
  %v9094 = vmul.f32 %v7654, %v8349
  %v9095 = vmul.f32 %v7655, %v8351
  %v9096 = vmul.f32 %v7656, %v8353
  %v9097 = vmul.f32 %v7657, %v8355
  %v9098 = vmul.f32 %v7658, %v8357
  %v9099 = vmul.f32 %v7659, %v8359
  %v9100 = vmul.f32 %v7660, %v8361
  %v9101 = vmul.f32 %v7661, %v8363
  %v9102 = vmul.f32 %v7662, %v8365
  %v9103 = vmul.f32 %v7663, %v8367
  %v9104 = vmul.f32 %v7664, %v8369
  %v9105 = vmul.f32 %v7665, %v8371
  %v9106 = vmul.f32 %v7666, %v8373
  %v9107 = vmul.f32 %v7667, %v8375
  %v9108 = vmul.f32 %v7668, %v8377
  %v9109 = vmul.f32 %v7669, %v8379
  %v9110 = vmul.f32 %v7670, %v8381
  %v9111 = vmul.f32 %v7671, %v8383
  %v9112 = vmul.f32 %v7672, %v8385
  %v9113 = vmul.f32 %v7673, %v8387
  %v9114 = vmul.f32 %v7674, %v8389
  %v9115 = vmul.f32 %v7675, %v8391
  %v9116 = vmul.f32 %v7676, %v8393
  %v9117 = vmul.f32 %v7677, %v8395
  %v9118 = vmul.f32 %v7678, %v8397
  %v9119 = vmul.f32 %v7679, %v8399
  %v9120 = vmul.f32 %v7680, %v8401
  %v9121 = vmul.f32 %v7681, %v8403
  %v9122 = vmul.f32 %v7682, %v8405
  %v9123 = vmul.f32 %v7683, %v8407
  %v9124 = vmul.f32 %v7684, %v8409
  %v9125 = vmul.f32 %v7685, %v8411
  %v9126 = vmul.f32 %v7686, %v8413
  %v9127 = vmul.f32 %v7687, %v8415
  %v9128 = vmul.f32 %v7688, %v8417
  %v9129 = vmul.f32 %v7689, %v8419
  %v9130 = vmul.f32 %v7690, %v8421
  %v9131 = vmul.f32 %v7691, %v8423
  %v9132 = vmul.f32 %v7692, %v8425
  %v9133 = vmul.f32 %v7693, %v8427
  %v9134 = vmul.f32 %v7694, %v8429
  %v9135 = vmul.f32 %v7695, %v8431
  %v9136 = vmul.f32 %v7696, %v8433
  %v9137 = vmul.f32 %v7697, %v8435
  %v9138 = vmul.f32 %v7698, %v8437
  %v9139 = vmul.f32 %v7699, %v8439
  %v9140 = vmul.f32 %v7700, %v8441
  %v9141 = vmul.f32 %v7701, %v8443
  %v9142 = vmul.f32 %v7702, %v8445
  %v9143 = vmul.f32 %v7703, %v8447
  %v9144 = vmul.f32 %v7704, %v8449
  %v9145 = vmul.f32 %v7705, %v8451
  %v9146 = vmul.f32 %v7706, %v8453
  %v9147 = vmul.f32 %v7707, %v8455
  %v9148 = vmul.f32 %v7708, %v8457
  %v9149 = vmul.f32 %v7709, %v8459
  %v9150 = vmul.f32 %v7710, %v8461
  %v9151 = vmul.f32 %v7711, %v8463
  %v9152 = vmul.f32 %v7712, %v8465
  %v9153 = vmul.f32 %v7713, %v8467
  %v9154 = vmul.f32 %v7714, %v8469
  %v9155 = vmul.f32 %v7715, %v8471
  %v9156 = vmul.f32 %v7716, %v8473
  %v9157 = vmul.f32 %v7717, %v8475
  %v9158 = vmul.f32 %v7718, %v8477
  %v9159 = vmul.f32 %v7719, %v8479
  %v9160 = vmul.f32 %v7720, %v8481
  %v9161 = vmul.f32 %v7721, %v8483
  %v9162 = vmul.f32 %v7722, %v8485
  %v9163 = vmul.f32 %v7723, %v8487
  %v9164 = vmul.f32 %v7724, %v8489
  %v9165 = vmul.f32 %v7725, %v8491
  %v9166 = vmul.f32 %v7726, %v8493
  %v9167 = vmul.f32 %v7727, %v8495
  %v9168 = vmul.f32 %v7728, %v8497
  %v9169 = vmul.f32 %v7729, %v8499
  %v9170 = vmul.f32 %v7730, %v8501
  %v9171 = vmul.f32 %v7731, %v8503
  %v9172 = vmul.f32 %v7732, %v8505
  %v9173 = vmul.f32 %v7733, %v8507
  %v9174 = vmul.f32 %v7734, %v8509
  %v9175 = vmul.f32 %v7735, %v8511
  %v9176 = vmul.f32 %v7736, %v8513
  %v9177 = vmul.f32 %v7737, %v8515
  %v9178 = vmul.f32 %v7738, %v8517
  %v9179 = vmul.f32 %v7739, %v8519
  %v9180 = vmul.f32 %v7740, %v8521
  %v9181 = vmul.f32 %v7741, %v8523
  %v9182 = vmul.f32 %v7742, %v8525
  %v9183 = vmul.f32 %v7743, %v8527
  %v9184 = vmul.f32 %v7744, %v8529
  %v9185 = vmul.f32 %v7745, %v8531
  %v9186 = vmul.f32 %v7746, %v8533
  %v9187 = vmul.f32 %v7747, %v8535
  %v9188 = vmul.f32 %v7748, %v8537
  %v9189 = vmul.f32 %v7749, %v8539
  %v9190 = vmul.f32 %v7750, %v8541
  %v9191 = vmul.f32 %v7751, %v8543
  %v9192 = vmul.f32 %v7752, %v8545
  %v9193 = vmul.f32 %v7753, %v8547
  %v9194 = vmul.f32 %v7754, %v8549
  %v9195 = vmul.f32 %v7755, %v8551
  %v9196 = vmul.f32 %v7756, %v8553
  %v9197 = vmul.f32 %v7757, %v8555
  %v9198 = vmul.f32 %v7758, %v8557
  %v9199 = vmul.f32 %v7759, %v8559
  %v9200 = vmul.f32 %v7760, %v8561
  %v9201 = vmul.f32 %v7761, %v8563
  %v9202 = vmul.f32 %v7762, %v8565
  %v9203 = vmul.f32 %v7763, %v8567
  %v9204 = vmul.f32 %v7764, %v8569
  %v9205 = vmul.f32 %v7765, %v8571
  %v9206 = vmul.f32 %v7766, %v8573
  %v9207 = vmul.f32 %v7767, %v8575
  %v9208 = vmul.f32 %v7768, %v8577
  %v9209 = vmul.f32 %v7769, %v8579
  %v9210 = vmul.f32 %v7770, %v8581
  %v9211 = vmul.f32 %v7771, %v8583
  %v9212 = vmul.f32 %v7772, %v8585
  %v9213 = vmul.f32 %v7773, %v8587
  %v9214 = vmul.f32 %v7774, %v8589
  %v9215 = vmul.f32 %v7775, %v8591
  %v9216 = vmul.f32 %v7776, %v8593
  %v9217 = vmul.f32 %v7777, %v8595
  %v9218 = vmul.f32 %v7778, %v8597
  %v9219 = vmul.f32 %v7779, %v8599
  %v9220 = vmul.f32 %v7780, %v8601
  %v9221 = vmul.f32 %v7781, %v8603
  %v9222 = vmul.f32 %v7782, %v8605
  %v9223 = vmul.f32 %v7783, %v8607
  %v9224 = vmul.f32 %v7784, %v8609
  %v9225 = vmul.f32 %v7785, %v8611
  %v9226 = vmul.f32 %v7786, %v8613
  %v9227 = vmul.f32 %v7787, %v8615
  %v9228 = vmul.f32 %v7788, %v8617
  %v9229 = vmul.f32 %v7789, %v8619
  %v9230 = vmul.f32 %v7790, %v8621
  %v9231 = vmul.f32 %v7791, %v8623
  %v9232 = vmul.f32 %v7792, %v8625
  %v9233 = vmul.f32 %v7793, %v8627
  %v9234 = vmul.f32 %v7794, %v8629
  %v9235 = vmul.f32 %v7795, %v8631
  %v9236 = vmul.f32 %v7796, %v8633
  %v9237 = vmul.f32 %v7797, %v8635
  %v9238 = vmul.f32 %v7798, %v8637
  %v9239 = vmul.f32 %v7799, %v8639
  %v9240 = vmul.f32 %v7800, %v8641
  %v9241 = vmul.f32 %v7801, %v8643
  %v9242 = vmul.f32 %v7802, %v8645
  %v9243 = vmul.f32 %v7803, %v8647
  %v9244 = vmul.f32 %v7804, %v8649
  %v9245 = vmul.f32 %v7805, %v8651
  %v9246 = vmul.f32 %v7806, %v8653
  %v9247 = vmul.f32 %v7807, %v8655
  %v9248 = vmul.f32 %v7808, %v8657
  %v9249 = vmul.f32 %v7809, %v8659
  %v9250 = vmul.f32 %v7810, %v8661
  %v9251 = vmul.f32 %v7811, %v8663
  %v9252 = vmul.f32 %v7812, %v8665
  %v9253 = vmul.f32 %v7813, %v8667
  %v9254 = vmul.f32 %v7814, %v8669
  %v9255 = vmul.f32 %v7815, %v8671
  %v9256 = vmul.f32 %v7816, %v8673
  %v9257 = vmul.f32 %v7817, %v8675
  %v9258 = vmul.f32 %v7818, %v8677
  %v9259 = vmul.f32 %v7819, %v8679
  %v9260 = vmul.f32 %v7820, %v8681
  %v9261 = vmul.f32 %v7821, %v8683
  %v9262 = vmul.f32 %v7822, %v8685
  %v9263 = vmul.f32 %v7823, %v8687
  %v9264 = vsel %vm1259, %v8976, 0.0
  %v9265 = vsel %vm1259, %v8992, 0.0
  %v9266 = vadd.f32 %v9264, %v9265
  %v9267 = vsel %vm1259, %v9008, 0.0
  %v9268 = vadd.f32 %v9266, %v9267
  %v9269 = vsel %vm1259, %v9024, 0.0
  %v9270 = vadd.f32 %v9268, %v9269
  %v9271 = vsel %vm1259, %v9040, 0.0
  %v9272 = vadd.f32 %v9270, %v9271
  %v9273 = vsel %vm1259, %v9056, 0.0
  %v9274 = vadd.f32 %v9272, %v9273
  %v9275 = vsel %vm1259, %v9072, 0.0
  %v9276 = vadd.f32 %v9274, %v9275
  %v9277 = vsel %vm1259, %v9088, 0.0
  %v9278 = vadd.f32 %v9276, %v9277
  %v9279 = vsel %vm1259, %v9104, 0.0
  %v9280 = vadd.f32 %v9278, %v9279
  %v9281 = vsel %vm1259, %v9120, 0.0
  %v9282 = vadd.f32 %v9280, %v9281
  %v9283 = vsel %vm1259, %v9136, 0.0
  %v9284 = vadd.f32 %v9282, %v9283
  %v9285 = vsel %vm1259, %v9152, 0.0
  %v9286 = vadd.f32 %v9284, %v9285
  %v9287 = vsel %vm1259, %v9168, 0.0
  %v9288 = vadd.f32 %v9286, %v9287
  %v9289 = vsel %vm1259, %v9184, 0.0
  %v9290 = vadd.f32 %v9288, %v9289
  %v9291 = vsel %vm1259, %v9200, 0.0
  %v9292 = vadd.f32 %v9290, %v9291
  %v9293 = vsel %vm1259, %v9216, 0.0
  %v9294 = vadd.f32 %v9292, %v9293
  %v9295 = vsel %vm1259, %v9232, 0.0
  %v9296 = vadd.f32 %v9294, %v9295
  %v9297 = vsel %vm1259, %v9248, 0.0
  %v9298 = vadd.f32 %v9296, %v9297
  %v9299 = vsel %vm1259, %v8977, 0.0
  %v9300 = vsel %vm1259, %v8993, 0.0
  %v9301 = vadd.f32 %v9299, %v9300
  %v9302 = vsel %vm1259, %v9009, 0.0
  %v9303 = vadd.f32 %v9301, %v9302
  %v9304 = vsel %vm1259, %v9025, 0.0
  %v9305 = vadd.f32 %v9303, %v9304
  %v9306 = vsel %vm1259, %v9041, 0.0
  %v9307 = vadd.f32 %v9305, %v9306
  %v9308 = vsel %vm1259, %v9057, 0.0
  %v9309 = vadd.f32 %v9307, %v9308
  %v9310 = vsel %vm1259, %v9073, 0.0
  %v9311 = vadd.f32 %v9309, %v9310
  %v9312 = vsel %vm1259, %v9089, 0.0
  %v9313 = vadd.f32 %v9311, %v9312
  %v9314 = vsel %vm1259, %v9105, 0.0
  %v9315 = vadd.f32 %v9313, %v9314
  %v9316 = vsel %vm1259, %v9121, 0.0
  %v9317 = vadd.f32 %v9315, %v9316
  %v9318 = vsel %vm1259, %v9137, 0.0
  %v9319 = vadd.f32 %v9317, %v9318
  %v9320 = vsel %vm1259, %v9153, 0.0
  %v9321 = vadd.f32 %v9319, %v9320
  %v9322 = vsel %vm1259, %v9169, 0.0
  %v9323 = vadd.f32 %v9321, %v9322
  %v9324 = vsel %vm1259, %v9185, 0.0
  %v9325 = vadd.f32 %v9323, %v9324
  %v9326 = vsel %vm1259, %v9201, 0.0
  %v9327 = vadd.f32 %v9325, %v9326
  %v9328 = vsel %vm1259, %v9217, 0.0
  %v9329 = vadd.f32 %v9327, %v9328
  %v9330 = vsel %vm1259, %v9233, 0.0
  %v9331 = vadd.f32 %v9329, %v9330
  %v9332 = vsel %vm1259, %v9249, 0.0
  %v9333 = vadd.f32 %v9331, %v9332
  %v9334 = vsel %vm1259, %v8978, 0.0
  %v9335 = vsel %vm1259, %v8994, 0.0
  %v9336 = vadd.f32 %v9334, %v9335
  %v9337 = vsel %vm1259, %v9010, 0.0
  %v9338 = vadd.f32 %v9336, %v9337
  %v9339 = vsel %vm1259, %v9026, 0.0
  %v9340 = vadd.f32 %v9338, %v9339
  %v9341 = vsel %vm1259, %v9042, 0.0
  %v9342 = vadd.f32 %v9340, %v9341
  %v9343 = vsel %vm1259, %v9058, 0.0
  %v9344 = vadd.f32 %v9342, %v9343
  %v9345 = vsel %vm1259, %v9074, 0.0
  %v9346 = vadd.f32 %v9344, %v9345
  %v9347 = vsel %vm1259, %v9090, 0.0
  %v9348 = vadd.f32 %v9346, %v9347
  %v9349 = vsel %vm1259, %v9106, 0.0
  %v9350 = vadd.f32 %v9348, %v9349
  %v9351 = vsel %vm1259, %v9122, 0.0
  %v9352 = vadd.f32 %v9350, %v9351
  %v9353 = vsel %vm1259, %v9138, 0.0
  %v9354 = vadd.f32 %v9352, %v9353
  %v9355 = vsel %vm1259, %v9154, 0.0
  %v9356 = vadd.f32 %v9354, %v9355
  %v9357 = vsel %vm1259, %v9170, 0.0
  %v9358 = vadd.f32 %v9356, %v9357
  %v9359 = vsel %vm1259, %v9186, 0.0
  %v9360 = vadd.f32 %v9358, %v9359
  %v9361 = vsel %vm1259, %v9202, 0.0
  %v9362 = vadd.f32 %v9360, %v9361
  %v9363 = vsel %vm1259, %v9218, 0.0
  %v9364 = vadd.f32 %v9362, %v9363
  %v9365 = vsel %vm1259, %v9234, 0.0
  %v9366 = vadd.f32 %v9364, %v9365
  %v9367 = vsel %vm1259, %v9250, 0.0
  %v9368 = vadd.f32 %v9366, %v9367
  %v9369 = vsel %vm1259, %v8979, 0.0
  %v9370 = vsel %vm1259, %v8995, 0.0
  %v9371 = vadd.f32 %v9369, %v9370
  %v9372 = vsel %vm1259, %v9011, 0.0
  %v9373 = vadd.f32 %v9371, %v9372
  %v9374 = vsel %vm1259, %v9027, 0.0
  %v9375 = vadd.f32 %v9373, %v9374
  %v9376 = vsel %vm1259, %v9043, 0.0
  %v9377 = vadd.f32 %v9375, %v9376
  %v9378 = vsel %vm1259, %v9059, 0.0
  %v9379 = vadd.f32 %v9377, %v9378
  %v9380 = vsel %vm1259, %v9075, 0.0
  %v9381 = vadd.f32 %v9379, %v9380
  %v9382 = vsel %vm1259, %v9091, 0.0
  %v9383 = vadd.f32 %v9381, %v9382
  %v9384 = vsel %vm1259, %v9107, 0.0
  %v9385 = vadd.f32 %v9383, %v9384
  %v9386 = vsel %vm1259, %v9123, 0.0
  %v9387 = vadd.f32 %v9385, %v9386
  %v9388 = vsel %vm1259, %v9139, 0.0
  %v9389 = vadd.f32 %v9387, %v9388
  %v9390 = vsel %vm1259, %v9155, 0.0
  %v9391 = vadd.f32 %v9389, %v9390
  %v9392 = vsel %vm1259, %v9171, 0.0
  %v9393 = vadd.f32 %v9391, %v9392
  %v9394 = vsel %vm1259, %v9187, 0.0
  %v9395 = vadd.f32 %v9393, %v9394
  %v9396 = vsel %vm1259, %v9203, 0.0
  %v9397 = vadd.f32 %v9395, %v9396
  %v9398 = vsel %vm1259, %v9219, 0.0
  %v9399 = vadd.f32 %v9397, %v9398
  %v9400 = vsel %vm1259, %v9235, 0.0
  %v9401 = vadd.f32 %v9399, %v9400
  %v9402 = vsel %vm1259, %v9251, 0.0
  %v9403 = vadd.f32 %v9401, %v9402
  %v9404 = vsel %vm1259, %v8980, 0.0
  %v9405 = vsel %vm1259, %v8996, 0.0
  %v9406 = vadd.f32 %v9404, %v9405
  %v9407 = vsel %vm1259, %v9012, 0.0
  %v9408 = vadd.f32 %v9406, %v9407
  %v9409 = vsel %vm1259, %v9028, 0.0
  %v9410 = vadd.f32 %v9408, %v9409
  %v9411 = vsel %vm1259, %v9044, 0.0
  %v9412 = vadd.f32 %v9410, %v9411
  %v9413 = vsel %vm1259, %v9060, 0.0
  %v9414 = vadd.f32 %v9412, %v9413
  %v9415 = vsel %vm1259, %v9076, 0.0
  %v9416 = vadd.f32 %v9414, %v9415
  %v9417 = vsel %vm1259, %v9092, 0.0
  %v9418 = vadd.f32 %v9416, %v9417
  %v9419 = vsel %vm1259, %v9108, 0.0
  %v9420 = vadd.f32 %v9418, %v9419
  %v9421 = vsel %vm1259, %v9124, 0.0
  %v9422 = vadd.f32 %v9420, %v9421
  %v9423 = vsel %vm1259, %v9140, 0.0
  %v9424 = vadd.f32 %v9422, %v9423
  %v9425 = vsel %vm1259, %v9156, 0.0
  %v9426 = vadd.f32 %v9424, %v9425
  %v9427 = vsel %vm1259, %v9172, 0.0
  %v9428 = vadd.f32 %v9426, %v9427
  %v9429 = vsel %vm1259, %v9188, 0.0
  %v9430 = vadd.f32 %v9428, %v9429
  %v9431 = vsel %vm1259, %v9204, 0.0
  %v9432 = vadd.f32 %v9430, %v9431
  %v9433 = vsel %vm1259, %v9220, 0.0
  %v9434 = vadd.f32 %v9432, %v9433
  %v9435 = vsel %vm1259, %v9236, 0.0
  %v9436 = vadd.f32 %v9434, %v9435
  %v9437 = vsel %vm1259, %v9252, 0.0
  %v9438 = vadd.f32 %v9436, %v9437
  %v9439 = vsel %vm1259, %v8981, 0.0
  %v9440 = vsel %vm1259, %v8997, 0.0
  %v9441 = vadd.f32 %v9439, %v9440
  %v9442 = vsel %vm1259, %v9013, 0.0
  %v9443 = vadd.f32 %v9441, %v9442
  %v9444 = vsel %vm1259, %v9029, 0.0
  %v9445 = vadd.f32 %v9443, %v9444
  %v9446 = vsel %vm1259, %v9045, 0.0
  %v9447 = vadd.f32 %v9445, %v9446
  %v9448 = vsel %vm1259, %v9061, 0.0
  %v9449 = vadd.f32 %v9447, %v9448
  %v9450 = vsel %vm1259, %v9077, 0.0
  %v9451 = vadd.f32 %v9449, %v9450
  %v9452 = vsel %vm1259, %v9093, 0.0
  %v9453 = vadd.f32 %v9451, %v9452
  %v9454 = vsel %vm1259, %v9109, 0.0
  %v9455 = vadd.f32 %v9453, %v9454
  %v9456 = vsel %vm1259, %v9125, 0.0
  %v9457 = vadd.f32 %v9455, %v9456
  %v9458 = vsel %vm1259, %v9141, 0.0
  %v9459 = vadd.f32 %v9457, %v9458
  %v9460 = vsel %vm1259, %v9157, 0.0
  %v9461 = vadd.f32 %v9459, %v9460
  %v9462 = vsel %vm1259, %v9173, 0.0
  %v9463 = vadd.f32 %v9461, %v9462
  %v9464 = vsel %vm1259, %v9189, 0.0
  %v9465 = vadd.f32 %v9463, %v9464
  %v9466 = vsel %vm1259, %v9205, 0.0
  %v9467 = vadd.f32 %v9465, %v9466
  %v9468 = vsel %vm1259, %v9221, 0.0
  %v9469 = vadd.f32 %v9467, %v9468
  %v9470 = vsel %vm1259, %v9237, 0.0
  %v9471 = vadd.f32 %v9469, %v9470
  %v9472 = vsel %vm1259, %v9253, 0.0
  %v9473 = vadd.f32 %v9471, %v9472
  %v9474 = vsel %vm1259, %v8982, 0.0
  %v9475 = vsel %vm1259, %v8998, 0.0
  %v9476 = vadd.f32 %v9474, %v9475
  %v9477 = vsel %vm1259, %v9014, 0.0
  %v9478 = vadd.f32 %v9476, %v9477
  %v9479 = vsel %vm1259, %v9030, 0.0
  %v9480 = vadd.f32 %v9478, %v9479
  %v9481 = vsel %vm1259, %v9046, 0.0
  %v9482 = vadd.f32 %v9480, %v9481
  %v9483 = vsel %vm1259, %v9062, 0.0
  %v9484 = vadd.f32 %v9482, %v9483
  %v9485 = vsel %vm1259, %v9078, 0.0
  %v9486 = vadd.f32 %v9484, %v9485
  %v9487 = vsel %vm1259, %v9094, 0.0
  %v9488 = vadd.f32 %v9486, %v9487
  %v9489 = vsel %vm1259, %v9110, 0.0
  %v9490 = vadd.f32 %v9488, %v9489
  %v9491 = vsel %vm1259, %v9126, 0.0
  %v9492 = vadd.f32 %v9490, %v9491
  %v9493 = vsel %vm1259, %v9142, 0.0
  %v9494 = vadd.f32 %v9492, %v9493
  %v9495 = vsel %vm1259, %v9158, 0.0
  %v9496 = vadd.f32 %v9494, %v9495
  %v9497 = vsel %vm1259, %v9174, 0.0
  %v9498 = vadd.f32 %v9496, %v9497
  %v9499 = vsel %vm1259, %v9190, 0.0
  %v9500 = vadd.f32 %v9498, %v9499
  %v9501 = vsel %vm1259, %v9206, 0.0
  %v9502 = vadd.f32 %v9500, %v9501
  %v9503 = vsel %vm1259, %v9222, 0.0
  %v9504 = vadd.f32 %v9502, %v9503
  %v9505 = vsel %vm1259, %v9238, 0.0
  %v9506 = vadd.f32 %v9504, %v9505
  %v9507 = vsel %vm1259, %v9254, 0.0
  %v9508 = vadd.f32 %v9506, %v9507
  %v9509 = vsel %vm1259, %v8983, 0.0
  %v9510 = vsel %vm1259, %v8999, 0.0
  %v9511 = vadd.f32 %v9509, %v9510
  %v9512 = vsel %vm1259, %v9015, 0.0
  %v9513 = vadd.f32 %v9511, %v9512
  %v9514 = vsel %vm1259, %v9031, 0.0
  %v9515 = vadd.f32 %v9513, %v9514
  %v9516 = vsel %vm1259, %v9047, 0.0
  %v9517 = vadd.f32 %v9515, %v9516
  %v9518 = vsel %vm1259, %v9063, 0.0
  %v9519 = vadd.f32 %v9517, %v9518
  %v9520 = vsel %vm1259, %v9079, 0.0
  %v9521 = vadd.f32 %v9519, %v9520
  %v9522 = vsel %vm1259, %v9095, 0.0
  %v9523 = vadd.f32 %v9521, %v9522
  %v9524 = vsel %vm1259, %v9111, 0.0
  %v9525 = vadd.f32 %v9523, %v9524
  %v9526 = vsel %vm1259, %v9127, 0.0
  %v9527 = vadd.f32 %v9525, %v9526
  %v9528 = vsel %vm1259, %v9143, 0.0
  %v9529 = vadd.f32 %v9527, %v9528
  %v9530 = vsel %vm1259, %v9159, 0.0
  %v9531 = vadd.f32 %v9529, %v9530
  %v9532 = vsel %vm1259, %v9175, 0.0
  %v9533 = vadd.f32 %v9531, %v9532
  %v9534 = vsel %vm1259, %v9191, 0.0
  %v9535 = vadd.f32 %v9533, %v9534
  %v9536 = vsel %vm1259, %v9207, 0.0
  %v9537 = vadd.f32 %v9535, %v9536
  %v9538 = vsel %vm1259, %v9223, 0.0
  %v9539 = vadd.f32 %v9537, %v9538
  %v9540 = vsel %vm1259, %v9239, 0.0
  %v9541 = vadd.f32 %v9539, %v9540
  %v9542 = vsel %vm1259, %v9255, 0.0
  %v9543 = vadd.f32 %v9541, %v9542
  %v9544 = vsel %vm1259, %v8984, 0.0
  %v9545 = vsel %vm1259, %v9000, 0.0
  %v9546 = vadd.f32 %v9544, %v9545
  %v9547 = vsel %vm1259, %v9016, 0.0
  %v9548 = vadd.f32 %v9546, %v9547
  %v9549 = vsel %vm1259, %v9032, 0.0
  %v9550 = vadd.f32 %v9548, %v9549
  %v9551 = vsel %vm1259, %v9048, 0.0
  %v9552 = vadd.f32 %v9550, %v9551
  %v9553 = vsel %vm1259, %v9064, 0.0
  %v9554 = vadd.f32 %v9552, %v9553
  %v9555 = vsel %vm1259, %v9080, 0.0
  %v9556 = vadd.f32 %v9554, %v9555
  %v9557 = vsel %vm1259, %v9096, 0.0
  %v9558 = vadd.f32 %v9556, %v9557
  %v9559 = vsel %vm1259, %v9112, 0.0
  %v9560 = vadd.f32 %v9558, %v9559
  %v9561 = vsel %vm1259, %v9128, 0.0
  %v9562 = vadd.f32 %v9560, %v9561
  %v9563 = vsel %vm1259, %v9144, 0.0
  %v9564 = vadd.f32 %v9562, %v9563
  %v9565 = vsel %vm1259, %v9160, 0.0
  %v9566 = vadd.f32 %v9564, %v9565
  %v9567 = vsel %vm1259, %v9176, 0.0
  %v9568 = vadd.f32 %v9566, %v9567
  %v9569 = vsel %vm1259, %v9192, 0.0
  %v9570 = vadd.f32 %v9568, %v9569
  %v9571 = vsel %vm1259, %v9208, 0.0
  %v9572 = vadd.f32 %v9570, %v9571
  %v9573 = vsel %vm1259, %v9224, 0.0
  %v9574 = vadd.f32 %v9572, %v9573
  %v9575 = vsel %vm1259, %v9240, 0.0
  %v9576 = vadd.f32 %v9574, %v9575
  %v9577 = vsel %vm1259, %v9256, 0.0
  %v9578 = vadd.f32 %v9576, %v9577
  %v9579 = vsel %vm1259, %v8985, 0.0
  %v9580 = vsel %vm1259, %v9001, 0.0
  %v9581 = vadd.f32 %v9579, %v9580
  %v9582 = vsel %vm1259, %v9017, 0.0
  %v9583 = vadd.f32 %v9581, %v9582
  %v9584 = vsel %vm1259, %v9033, 0.0
  %v9585 = vadd.f32 %v9583, %v9584
  %v9586 = vsel %vm1259, %v9049, 0.0
  %v9587 = vadd.f32 %v9585, %v9586
  %v9588 = vsel %vm1259, %v9065, 0.0
  %v9589 = vadd.f32 %v9587, %v9588
  %v9590 = vsel %vm1259, %v9081, 0.0
  %v9591 = vadd.f32 %v9589, %v9590
  %v9592 = vsel %vm1259, %v9097, 0.0
  %v9593 = vadd.f32 %v9591, %v9592
  %v9594 = vsel %vm1259, %v9113, 0.0
  %v9595 = vadd.f32 %v9593, %v9594
  %v9596 = vsel %vm1259, %v9129, 0.0
  %v9597 = vadd.f32 %v9595, %v9596
  %v9598 = vsel %vm1259, %v9145, 0.0
  %v9599 = vadd.f32 %v9597, %v9598
  %v9600 = vsel %vm1259, %v9161, 0.0
  %v9601 = vadd.f32 %v9599, %v9600
  %v9602 = vsel %vm1259, %v9177, 0.0
  %v9603 = vadd.f32 %v9601, %v9602
  %v9604 = vsel %vm1259, %v9193, 0.0
  %v9605 = vadd.f32 %v9603, %v9604
  %v9606 = vsel %vm1259, %v9209, 0.0
  %v9607 = vadd.f32 %v9605, %v9606
  %v9608 = vsel %vm1259, %v9225, 0.0
  %v9609 = vadd.f32 %v9607, %v9608
  %v9610 = vsel %vm1259, %v9241, 0.0
  %v9611 = vadd.f32 %v9609, %v9610
  %v9612 = vsel %vm1259, %v9257, 0.0
  %v9613 = vadd.f32 %v9611, %v9612
  %v9614 = vsel %vm1259, %v8986, 0.0
  %v9615 = vsel %vm1259, %v9002, 0.0
  %v9616 = vadd.f32 %v9614, %v9615
  %v9617 = vsel %vm1259, %v9018, 0.0
  %v9618 = vadd.f32 %v9616, %v9617
  %v9619 = vsel %vm1259, %v9034, 0.0
  %v9620 = vadd.f32 %v9618, %v9619
  %v9621 = vsel %vm1259, %v9050, 0.0
  %v9622 = vadd.f32 %v9620, %v9621
  %v9623 = vsel %vm1259, %v9066, 0.0
  %v9624 = vadd.f32 %v9622, %v9623
  %v9625 = vsel %vm1259, %v9082, 0.0
  %v9626 = vadd.f32 %v9624, %v9625
  %v9627 = vsel %vm1259, %v9098, 0.0
  %v9628 = vadd.f32 %v9626, %v9627
  %v9629 = vsel %vm1259, %v9114, 0.0
  %v9630 = vadd.f32 %v9628, %v9629
  %v9631 = vsel %vm1259, %v9130, 0.0
  %v9632 = vadd.f32 %v9630, %v9631
  %v9633 = vsel %vm1259, %v9146, 0.0
  %v9634 = vadd.f32 %v9632, %v9633
  %v9635 = vsel %vm1259, %v9162, 0.0
  %v9636 = vadd.f32 %v9634, %v9635
  %v9637 = vsel %vm1259, %v9178, 0.0
  %v9638 = vadd.f32 %v9636, %v9637
  %v9639 = vsel %vm1259, %v9194, 0.0
  %v9640 = vadd.f32 %v9638, %v9639
  %v9641 = vsel %vm1259, %v9210, 0.0
  %v9642 = vadd.f32 %v9640, %v9641
  %v9643 = vsel %vm1259, %v9226, 0.0
  %v9644 = vadd.f32 %v9642, %v9643
  %v9645 = vsel %vm1259, %v9242, 0.0
  %v9646 = vadd.f32 %v9644, %v9645
  %v9647 = vsel %vm1259, %v9258, 0.0
  %v9648 = vadd.f32 %v9646, %v9647
  %v9649 = vsel %vm1259, %v8987, 0.0
  %v9650 = vsel %vm1259, %v9003, 0.0
  %v9651 = vadd.f32 %v9649, %v9650
  %v9652 = vsel %vm1259, %v9019, 0.0
  %v9653 = vadd.f32 %v9651, %v9652
  %v9654 = vsel %vm1259, %v9035, 0.0
  %v9655 = vadd.f32 %v9653, %v9654
  %v9656 = vsel %vm1259, %v9051, 0.0
  %v9657 = vadd.f32 %v9655, %v9656
  %v9658 = vsel %vm1259, %v9067, 0.0
  %v9659 = vadd.f32 %v9657, %v9658
  %v9660 = vsel %vm1259, %v9083, 0.0
  %v9661 = vadd.f32 %v9659, %v9660
  %v9662 = vsel %vm1259, %v9099, 0.0
  %v9663 = vadd.f32 %v9661, %v9662
  %v9664 = vsel %vm1259, %v9115, 0.0
  %v9665 = vadd.f32 %v9663, %v9664
  %v9666 = vsel %vm1259, %v9131, 0.0
  %v9667 = vadd.f32 %v9665, %v9666
  %v9668 = vsel %vm1259, %v9147, 0.0
  %v9669 = vadd.f32 %v9667, %v9668
  %v9670 = vsel %vm1259, %v9163, 0.0
  %v9671 = vadd.f32 %v9669, %v9670
  %v9672 = vsel %vm1259, %v9179, 0.0
  %v9673 = vadd.f32 %v9671, %v9672
  %v9674 = vsel %vm1259, %v9195, 0.0
  %v9675 = vadd.f32 %v9673, %v9674
  %v9676 = vsel %vm1259, %v9211, 0.0
  %v9677 = vadd.f32 %v9675, %v9676
  %v9678 = vsel %vm1259, %v9227, 0.0
  %v9679 = vadd.f32 %v9677, %v9678
  %v9680 = vsel %vm1259, %v9243, 0.0
  %v9681 = vadd.f32 %v9679, %v9680
  %v9682 = vsel %vm1259, %v9259, 0.0
  %v9683 = vadd.f32 %v9681, %v9682
  %v9684 = vsel %vm1259, %v8988, 0.0
  %v9685 = vsel %vm1259, %v9004, 0.0
  %v9686 = vadd.f32 %v9684, %v9685
  %v9687 = vsel %vm1259, %v9020, 0.0
  %v9688 = vadd.f32 %v9686, %v9687
  %v9689 = vsel %vm1259, %v9036, 0.0
  %v9690 = vadd.f32 %v9688, %v9689
  %v9691 = vsel %vm1259, %v9052, 0.0
  %v9692 = vadd.f32 %v9690, %v9691
  %v9693 = vsel %vm1259, %v9068, 0.0
  %v9694 = vadd.f32 %v9692, %v9693
  %v9695 = vsel %vm1259, %v9084, 0.0
  %v9696 = vadd.f32 %v9694, %v9695
  %v9697 = vsel %vm1259, %v9100, 0.0
  %v9698 = vadd.f32 %v9696, %v9697
  %v9699 = vsel %vm1259, %v9116, 0.0
  %v9700 = vadd.f32 %v9698, %v9699
  %v9701 = vsel %vm1259, %v9132, 0.0
  %v9702 = vadd.f32 %v9700, %v9701
  %v9703 = vsel %vm1259, %v9148, 0.0
  %v9704 = vadd.f32 %v9702, %v9703
  %v9705 = vsel %vm1259, %v9164, 0.0
  %v9706 = vadd.f32 %v9704, %v9705
  %v9707 = vsel %vm1259, %v9180, 0.0
  %v9708 = vadd.f32 %v9706, %v9707
  %v9709 = vsel %vm1259, %v9196, 0.0
  %v9710 = vadd.f32 %v9708, %v9709
  %v9711 = vsel %vm1259, %v9212, 0.0
  %v9712 = vadd.f32 %v9710, %v9711
  %v9713 = vsel %vm1259, %v9228, 0.0
  %v9714 = vadd.f32 %v9712, %v9713
  %v9715 = vsel %vm1259, %v9244, 0.0
  %v9716 = vadd.f32 %v9714, %v9715
  %v9717 = vsel %vm1259, %v9260, 0.0
  %v9718 = vadd.f32 %v9716, %v9717
  %v9719 = vsel %vm1259, %v8989, 0.0
  %v9720 = vsel %vm1259, %v9005, 0.0
  %v9721 = vadd.f32 %v9719, %v9720
  %v9722 = vsel %vm1259, %v9021, 0.0
  %v9723 = vadd.f32 %v9721, %v9722
  %v9724 = vsel %vm1259, %v9037, 0.0
  %v9725 = vadd.f32 %v9723, %v9724
  %v9726 = vsel %vm1259, %v9053, 0.0
  %v9727 = vadd.f32 %v9725, %v9726
  %v9728 = vsel %vm1259, %v9069, 0.0
  %v9729 = vadd.f32 %v9727, %v9728
  %v9730 = vsel %vm1259, %v9085, 0.0
  %v9731 = vadd.f32 %v9729, %v9730
  %v9732 = vsel %vm1259, %v9101, 0.0
  %v9733 = vadd.f32 %v9731, %v9732
  %v9734 = vsel %vm1259, %v9117, 0.0
  %v9735 = vadd.f32 %v9733, %v9734
  %v9736 = vsel %vm1259, %v9133, 0.0
  %v9737 = vadd.f32 %v9735, %v9736
  %v9738 = vsel %vm1259, %v9149, 0.0
  %v9739 = vadd.f32 %v9737, %v9738
  %v9740 = vsel %vm1259, %v9165, 0.0
  %v9741 = vadd.f32 %v9739, %v9740
  %v9742 = vsel %vm1259, %v9181, 0.0
  %v9743 = vadd.f32 %v9741, %v9742
  %v9744 = vsel %vm1259, %v9197, 0.0
  %v9745 = vadd.f32 %v9743, %v9744
  %v9746 = vsel %vm1259, %v9213, 0.0
  %v9747 = vadd.f32 %v9745, %v9746
  %v9748 = vsel %vm1259, %v9229, 0.0
  %v9749 = vadd.f32 %v9747, %v9748
  %v9750 = vsel %vm1259, %v9245, 0.0
  %v9751 = vadd.f32 %v9749, %v9750
  %v9752 = vsel %vm1259, %v9261, 0.0
  %v9753 = vadd.f32 %v9751, %v9752
  %v9754 = vsel %vm1259, %v8990, 0.0
  %v9755 = vsel %vm1259, %v9006, 0.0
  %v9756 = vadd.f32 %v9754, %v9755
  %v9757 = vsel %vm1259, %v9022, 0.0
  %v9758 = vadd.f32 %v9756, %v9757
  %v9759 = vsel %vm1259, %v9038, 0.0
  %v9760 = vadd.f32 %v9758, %v9759
  %v9761 = vsel %vm1259, %v9054, 0.0
  %v9762 = vadd.f32 %v9760, %v9761
  %v9763 = vsel %vm1259, %v9070, 0.0
  %v9764 = vadd.f32 %v9762, %v9763
  %v9765 = vsel %vm1259, %v9086, 0.0
  %v9766 = vadd.f32 %v9764, %v9765
  %v9767 = vsel %vm1259, %v9102, 0.0
  %v9768 = vadd.f32 %v9766, %v9767
  %v9769 = vsel %vm1259, %v9118, 0.0
  %v9770 = vadd.f32 %v9768, %v9769
  %v9771 = vsel %vm1259, %v9134, 0.0
  %v9772 = vadd.f32 %v9770, %v9771
  %v9773 = vsel %vm1259, %v9150, 0.0
  %v9774 = vadd.f32 %v9772, %v9773
  %v9775 = vsel %vm1259, %v9166, 0.0
  %v9776 = vadd.f32 %v9774, %v9775
  %v9777 = vsel %vm1259, %v9182, 0.0
  %v9778 = vadd.f32 %v9776, %v9777
  %v9779 = vsel %vm1259, %v9198, 0.0
  %v9780 = vadd.f32 %v9778, %v9779
  %v9781 = vsel %vm1259, %v9214, 0.0
  %v9782 = vadd.f32 %v9780, %v9781
  %v9783 = vsel %vm1259, %v9230, 0.0
  %v9784 = vadd.f32 %v9782, %v9783
  %v9785 = vsel %vm1259, %v9246, 0.0
  %v9786 = vadd.f32 %v9784, %v9785
  %v9787 = vsel %vm1259, %v9262, 0.0
  %v9788 = vadd.f32 %v9786, %v9787
  %v9789 = vsel %vm1259, %v8991, 0.0
  %v9790 = vsel %vm1259, %v9007, 0.0
  %v9791 = vadd.f32 %v9789, %v9790
  %v9792 = vsel %vm1259, %v9023, 0.0
  %v9793 = vadd.f32 %v9791, %v9792
  %v9794 = vsel %vm1259, %v9039, 0.0
  %v9795 = vadd.f32 %v9793, %v9794
  %v9796 = vsel %vm1259, %v9055, 0.0
  %v9797 = vadd.f32 %v9795, %v9796
  %v9798 = vsel %vm1259, %v9071, 0.0
  %v9799 = vadd.f32 %v9797, %v9798
  %v9800 = vsel %vm1259, %v9087, 0.0
  %v9801 = vadd.f32 %v9799, %v9800
  %v9802 = vsel %vm1259, %v9103, 0.0
  %v9803 = vadd.f32 %v9801, %v9802
  %v9804 = vsel %vm1259, %v9119, 0.0
  %v9805 = vadd.f32 %v9803, %v9804
  %v9806 = vsel %vm1259, %v9135, 0.0
  %v9807 = vadd.f32 %v9805, %v9806
  %v9808 = vsel %vm1259, %v9151, 0.0
  %v9809 = vadd.f32 %v9807, %v9808
  %v9810 = vsel %vm1259, %v9167, 0.0
  %v9811 = vadd.f32 %v9809, %v9810
  %v9812 = vsel %vm1259, %v9183, 0.0
  %v9813 = vadd.f32 %v9811, %v9812
  %v9814 = vsel %vm1259, %v9199, 0.0
  %v9815 = vadd.f32 %v9813, %v9814
  %v9816 = vsel %vm1259, %v9215, 0.0
  %v9817 = vadd.f32 %v9815, %v9816
  %v9818 = vsel %vm1259, %v9231, 0.0
  %v9819 = vadd.f32 %v9817, %v9818
  %v9820 = vsel %vm1259, %v9247, 0.0
  %v9821 = vadd.f32 %v9819, %v9820
  %v9822 = vsel %vm1259, %v9263, 0.0
  %v9823 = vadd.f32 %v9821, %v9822
  %v9824 = vpack.c.bf16 %v9333, %v9298
  %v9825 = vpack.c.bf16 %v9403, %v9368
  %v9826 = vpack.c.bf16 %v9473, %v9438
  %v9827 = vpack.c.bf16 %v9543, %v9508
  %v9828 = vpack.c.bf16 %v9613, %v9578
  %v9829 = vpack.c.bf16 %v9683, %v9648
  %v9830 = vpack.c.bf16 %v9753, %v9718
  %v9831 = vpack.c.bf16 %v9823, %v9788
  %v9832 = vld [vmem:[%s4] sm:$0xf]
  %v9833 = vld [vmem:[%s4 + $0x4] sm:$0xf]
  %v9834 = vlaneseq
  %v9835 = vshrl.u32 %v9834, 7
  %v9836 = vsub.s32 0, %v9835
  %v9837 = vrot.slane %v34, %v9836
  %v9840 = vunpack.c.l.b16 %v9832
  %v9841 = vunpack.c.l.b16 %v9833
  %v9842 = vpack.c.b16 %v9841, %v9840
  %v9845 = vsel %vm1259, %v9824, 0
  %v9848 = vsel %vm1259, %v9825, 0
  %v9851 = vsel %vm1259, %v9826, 0
  %v9854 = vsel %vm1259, %v9827, 0
  %v9857 = vsel %vm1259, %v9828, 0
  %v9860 = vsel %vm1259, %v9829, 0
  %v9863 = vsel %vm1259, %v9830, 0
  %v9866 = vsel %vm1259, %v9831, 0
  %9868 = vmatprep.subr.bf16.mxu0 0
  %9869 = vmatpush1.bf16.msra.mxu0 0
  %9870 = vmatprep.subr.bf16.mxu0 0
  %9871 = vmatpush1.bf16.msra.mxu0 0
  %9872 = vmatprep.subr.bf16.mxu0 0
  %9873 = vmatpush1.bf16.msra.mxu0 0
  %9874 = vmatprep.subr.bf16.mxu0 0
  %9875 = vmatpush1.bf16.msra.mxu0 0
  %9876 = vmatprep.subr.bf16.mxu0 0
  %9877 = vmatpush1.bf16.msra.mxu0 0
  %9878 = vmatprep.subr.bf16.mxu0 0
  %9879 = vmatpush1.bf16.msra.mxu0 0
  %9880 = vmatprep.subr.bf16.mxu0 0
  %9881 = vmatpush1.bf16.msra.mxu0 0
  %9882 = vmatprep.subr.bf16.mxu0 0
  %9883 = vmatpush1.bf16.msra.mxu0 %v9842
  %9884 = vmatprep.subr.bf16.mxu0 0
  %9885 = vmatpush2.bf16.msra.mxu0 0
  %9886 = vmatprep.subr.bf16.mxu0 0
  %9887 = vmatpush2.bf16.msra.mxu0 0
  %9888 = vmatprep.subr.bf16.mxu0 0
  %9889 = vmatpush2.bf16.msra.mxu0 0
  %9890 = vmatprep.subr.bf16.mxu0 0
  %9891 = vmatpush2.bf16.msra.mxu0 0
  %9892 = vmatprep.subr.bf16.mxu0 0
  %9893 = vmatpush2.bf16.msra.mxu0 0
  %9894 = vmatprep.subr.bf16.mxu0 0
  %9895 = vmatpush2.bf16.msra.mxu0 0
  %9896 = vmatprep.subr.bf16.mxu0 0
  %9897 = vmatpush2.bf16.msra.mxu0 0
  %9898 = vmatprep.subr.bf16.mxu0 0
  %9899 = vmatpush2.bf16.msra.mxu0 0
  %9900 = vmatprep.mubr.bf16.mxu0 0
  %9901 = vmatmul.mubr.bf16.gmra.mxu0 %v9845
  %v9902 = vpop.f32.mrf.mxu0
  %v9903 = vadd.f32 %v9837, %v9902
  %v9904 = vpop.f32.mrf.mxu0
  %v9905 = vpop.f32.mrf.mxu0
  %v9906 = vadd.f32 %v9837, %v9905
  %v9907 = vpop.f32.mrf.mxu0
  %9908 = vmatprep.mubr.bf16.mxu0 0
  %9909 = vmatmul.mubr.bf16.gmra.mxu0 %v9848
  %v9910 = vpop.f32.mrf.mxu0
  %v9911 = vadd.f32 %v9837, %v9910
  %v9912 = vpop.f32.mrf.mxu0
  %v9913 = vpop.f32.mrf.mxu0
  %v9914 = vadd.f32 %v9837, %v9913
  %v9915 = vpop.f32.mrf.mxu0
  %9916 = vmatprep.mubr.bf16.mxu0 0
  %9917 = vmatmul.mubr.bf16.gmra.mxu0 %v9851
  %v9918 = vpop.f32.mrf.mxu0
  %v9919 = vadd.f32 %v9837, %v9918
  %v9920 = vpop.f32.mrf.mxu0
  %v9921 = vpop.f32.mrf.mxu0
  %v9922 = vadd.f32 %v9837, %v9921
  %v9923 = vpop.f32.mrf.mxu0
  %9924 = vmatprep.mubr.bf16.mxu0 0
  %9925 = vmatmul.mubr.bf16.gmra.mxu0 %v9854
  %v9926 = vpop.f32.mrf.mxu0
  %v9927 = vadd.f32 %v9837, %v9926
  %v9928 = vpop.f32.mrf.mxu0
  %v9929 = vpop.f32.mrf.mxu0
  %v9930 = vadd.f32 %v9837, %v9929
  %v9931 = vpop.f32.mrf.mxu0
  %9932 = vmatprep.mubr.bf16.mxu0 0
  %9933 = vmatmul.mubr.bf16.gmra.mxu0 %v9857
  %v9934 = vpop.f32.mrf.mxu0
  %v9935 = vadd.f32 %v9837, %v9934
  %v9936 = vpop.f32.mrf.mxu0
  %v9937 = vpop.f32.mrf.mxu0
  %v9938 = vadd.f32 %v9837, %v9937
  %v9939 = vpop.f32.mrf.mxu0
  %9940 = vmatprep.mubr.bf16.mxu0 0
  %9941 = vmatmul.mubr.bf16.gmra.mxu0 %v9860
  %v9942 = vpop.f32.mrf.mxu0
  %v9943 = vadd.f32 %v9837, %v9942
  %v9944 = vpop.f32.mrf.mxu0
  %v9945 = vpop.f32.mrf.mxu0
  %v9946 = vadd.f32 %v9837, %v9945
  %v9947 = vpop.f32.mrf.mxu0
  %9948 = vmatprep.mubr.bf16.mxu0 0
  %9949 = vmatmul.mubr.bf16.gmra.mxu0 %v9863
  %v9950 = vpop.f32.mrf.mxu0
  %v9951 = vadd.f32 %v9837, %v9950
  %v9952 = vpop.f32.mrf.mxu0
  %v9953 = vpop.f32.mrf.mxu0
  %v9954 = vadd.f32 %v9837, %v9953
  %v9955 = vpop.f32.mrf.mxu0
  %9956 = vmatprep.mubr.bf16.mxu0 0
  %9957 = vmatmul.mubr.bf16.gmra.mxu0 %v9866
  %v9958 = vpop.f32.mrf.mxu0
  %v9959 = vadd.f32 %v9837, %v9958
  %v9960 = vpop.f32.mrf.mxu0
  %v9961 = vpop.f32.mrf.mxu0
  %v9962 = vadd.f32 %v9837, %v9961
  %v9963 = vpop.f32.mrf.mxu0
  %9964 = vdwg.mxu0
  %v9965 = vpack.c.bf16 %v9906, %v9903
  %v9966 = vpack.c.bf16 %v9914, %v9911
  %v9967 = vpack.c.bf16 %v9922, %v9919
  %v9968 = vpack.c.bf16 %v9930, %v9927
  %v9969 = vpack.c.bf16 %v9938, %v9935
  %v9970 = vpack.c.bf16 %v9946, %v9943
  %v9971 = vpack.c.bf16 %v9954, %v9951
  %v9972 = vpack.c.bf16 %v9962, %v9959
  %v9973 = vld [vmem:[%s5] sm:$0xf]
  %v9974 = vld [vmem:[%s5 + $0x4] sm:$0xf]
  %v9975 = vlaneseq
  %v9976 = vshrl.u32 %v9975, 7
  %v9977 = vsub.s32 0, %v9976
  %v9978 = vrot.slane %v35, %v9977
  %v9981 = vunpack.c.l.b16 %v9973
  %v9982 = vunpack.c.l.b16 %v9974
  %v9983 = vpack.c.b16 %v9982, %v9981
  %v9986 = vsel %vm1259, %v9965, 0
  %v9989 = vsel %vm1259, %v9966, 0
  %v9992 = vsel %vm1259, %v9967, 0
  %v9995 = vsel %vm1259, %v9968, 0
  %v9998 = vsel %vm1259, %v9969, 0
  %v10001 = vsel %vm1259, %v9970, 0
  %v10004 = vsel %vm1259, %v9971, 0
  %v10007 = vsel %vm1259, %v9972, 0
  %10009 = vmatprep.subr.bf16.mxu0 0
  %10010 = vmatpush1.bf16.msra.mxu0 0
  %10011 = vmatprep.subr.bf16.mxu0 0
  %10012 = vmatpush1.bf16.msra.mxu0 0
  %10013 = vmatprep.subr.bf16.mxu0 0
  %10014 = vmatpush1.bf16.msra.mxu0 0
  %10015 = vmatprep.subr.bf16.mxu0 0
  %10016 = vmatpush1.bf16.msra.mxu0 0
  %10017 = vmatprep.subr.bf16.mxu0 0
  %10018 = vmatpush1.bf16.msra.mxu0 0
  %10019 = vmatprep.subr.bf16.mxu0 0
  %10020 = vmatpush1.bf16.msra.mxu0 0
  %10021 = vmatprep.subr.bf16.mxu0 0
  %10022 = vmatpush1.bf16.msra.mxu0 0
  %10023 = vmatprep.subr.bf16.mxu0 0
  %10024 = vmatpush1.bf16.msra.mxu0 %v9983
  %10025 = vmatprep.subr.bf16.mxu0 0
  %10026 = vmatpush2.bf16.msra.mxu0 0
  %10027 = vmatprep.subr.bf16.mxu0 0
  %10028 = vmatpush2.bf16.msra.mxu0 0
  %10029 = vmatprep.subr.bf16.mxu0 0
  %10030 = vmatpush2.bf16.msra.mxu0 0
  %10031 = vmatprep.subr.bf16.mxu0 0
  %10032 = vmatpush2.bf16.msra.mxu0 0
  %10033 = vmatprep.subr.bf16.mxu0 0
  %10034 = vmatpush2.bf16.msra.mxu0 0
  %10035 = vmatprep.subr.bf16.mxu0 0
  %10036 = vmatpush2.bf16.msra.mxu0 0
  %10037 = vmatprep.subr.bf16.mxu0 0
  %10038 = vmatpush2.bf16.msra.mxu0 0
  %10039 = vmatprep.subr.bf16.mxu0 0
  %10040 = vmatpush2.bf16.msra.mxu0 0
  %10041 = vmatprep.mubr.bf16.mxu0 0
  %10042 = vmatmul.mubr.bf16.gmra.mxu0 %v9986
  %v10043 = vpop.f32.mrf.mxu0
  %v10044 = vadd.f32 %v9978, %v10043
  %v10045 = vpop.f32.mrf.mxu0
  %v10046 = vpop.f32.mrf.mxu0
  %v10047 = vadd.f32 %v9978, %v10046
  %v10048 = vpop.f32.mrf.mxu0
  %10049 = vmatprep.mubr.bf16.mxu0 0
  %10050 = vmatmul.mubr.bf16.gmra.mxu0 %v9989
  %v10051 = vpop.f32.mrf.mxu0
  %v10052 = vadd.f32 %v9978, %v10051
  %v10053 = vpop.f32.mrf.mxu0
  %v10054 = vpop.f32.mrf.mxu0
  %v10055 = vadd.f32 %v9978, %v10054
  %v10056 = vpop.f32.mrf.mxu0
  %10057 = vmatprep.mubr.bf16.mxu0 0
  %10058 = vmatmul.mubr.bf16.gmra.mxu0 %v9992
  %v10059 = vpop.f32.mrf.mxu0
  %v10060 = vadd.f32 %v9978, %v10059
  %v10061 = vpop.f32.mrf.mxu0
  %v10062 = vpop.f32.mrf.mxu0
  %v10063 = vadd.f32 %v9978, %v10062
  %v10064 = vpop.f32.mrf.mxu0
  %10065 = vmatprep.mubr.bf16.mxu0 0
  %10066 = vmatmul.mubr.bf16.gmra.mxu0 %v9995
  %v10067 = vpop.f32.mrf.mxu0
  %v10068 = vadd.f32 %v9978, %v10067
  %v10069 = vpop.f32.mrf.mxu0
  %v10070 = vpop.f32.mrf.mxu0
  %v10071 = vadd.f32 %v9978, %v10070
  %v10072 = vpop.f32.mrf.mxu0
  %10073 = vmatprep.mubr.bf16.mxu0 0
  %10074 = vmatmul.mubr.bf16.gmra.mxu0 %v9998
  %v10075 = vpop.f32.mrf.mxu0
  %v10076 = vadd.f32 %v9978, %v10075
  %v10077 = vpop.f32.mrf.mxu0
  %v10078 = vpop.f32.mrf.mxu0
  %v10079 = vadd.f32 %v9978, %v10078
  %v10080 = vpop.f32.mrf.mxu0
  %10081 = vmatprep.mubr.bf16.mxu0 0
  %10082 = vmatmul.mubr.bf16.gmra.mxu0 %v10001
  %v10083 = vpop.f32.mrf.mxu0
  %v10084 = vadd.f32 %v9978, %v10083
  %v10085 = vpop.f32.mrf.mxu0
  %v10086 = vpop.f32.mrf.mxu0
  %v10087 = vadd.f32 %v9978, %v10086
  %v10088 = vpop.f32.mrf.mxu0
  %10089 = vmatprep.mubr.bf16.mxu0 0
  %10090 = vmatmul.mubr.bf16.gmra.mxu0 %v10004
  %v10091 = vpop.f32.mrf.mxu0
  %v10092 = vadd.f32 %v9978, %v10091
  %v10093 = vpop.f32.mrf.mxu0
  %v10094 = vpop.f32.mrf.mxu0
  %v10095 = vadd.f32 %v9978, %v10094
  %v10096 = vpop.f32.mrf.mxu0
  %10097 = vmatprep.mubr.bf16.mxu0 0
  %10098 = vmatmul.mubr.bf16.gmra.mxu0 %v10007
  %v10099 = vpop.f32.mrf.mxu0
  %v10100 = vadd.f32 %v9978, %v10099
  %v10101 = vpop.f32.mrf.mxu0
  %v10102 = vpop.f32.mrf.mxu0
  %v10103 = vadd.f32 %v9978, %v10102
  %v10104 = vpop.f32.mrf.mxu0
  %10105 = vdwg.mxu0
  %v10106 = vmul.f32 %v10044, %v10044
  %v10107 = vmul.f32 %v10047, %v10047
  %v10108 = vmul.f32 %v10052, %v10052
  %v10109 = vmul.f32 %v10055, %v10055
  %v10110 = vmul.f32 %v10060, %v10060
  %v10111 = vmul.f32 %v10063, %v10063
  %v10112 = vmul.f32 %v10068, %v10068
  %v10113 = vmul.f32 %v10071, %v10071
  %v10114 = vmul.f32 %v10076, %v10076
  %v10115 = vmul.f32 %v10079, %v10079
  %v10116 = vmul.f32 %v10084, %v10084
  %v10117 = vmul.f32 %v10087, %v10087
  %v10118 = vmul.f32 %v10092, %v10092
  %v10119 = vmul.f32 %v10095, %v10095
  %v10120 = vmul.f32 %v10100, %v10100
  %v10121 = vmul.f32 %v10103, %v10103
  %v10122 = vmul.f32 %v10044, %v10106
  %v10123 = vmul.f32 %v10047, %v10107
  %v10124 = vmul.f32 %v10052, %v10108
  %v10125 = vmul.f32 %v10055, %v10109
  %v10126 = vmul.f32 %v10060, %v10110
  %v10127 = vmul.f32 %v10063, %v10111
  %v10128 = vmul.f32 %v10068, %v10112
  %v10129 = vmul.f32 %v10071, %v10113
  %v10130 = vmul.f32 %v10076, %v10114
  %v10131 = vmul.f32 %v10079, %v10115
  %v10132 = vmul.f32 %v10084, %v10116
  %v10133 = vmul.f32 %v10087, %v10117
  %v10134 = vmul.f32 %v10092, %v10118
  %v10135 = vmul.f32 %v10095, %v10119
  %v10136 = vmul.f32 %v10100, %v10120
  %v10137 = vmul.f32 %v10103, %v10121
  %v10138 = vmul.f32 %v10122, 0.044715
  %v10139 = vmul.f32 %v10123, 0.044715
  %v10140 = vmul.f32 %v10124, 0.044715
  %v10141 = vmul.f32 %v10125, 0.044715
  %v10142 = vmul.f32 %v10126, 0.044715
  %v10143 = vmul.f32 %v10127, 0.044715
  %v10144 = vmul.f32 %v10128, 0.044715
  %v10145 = vmul.f32 %v10129, 0.044715
  %v10146 = vmul.f32 %v10130, 0.044715
  %v10147 = vmul.f32 %v10131, 0.044715
  %v10148 = vmul.f32 %v10132, 0.044715
  %v10149 = vmul.f32 %v10133, 0.044715
  %v10150 = vmul.f32 %v10134, 0.044715
  %v10151 = vmul.f32 %v10135, 0.044715
  %v10152 = vmul.f32 %v10136, 0.044715
  %v10153 = vmul.f32 %v10137, 0.044715
  %v10154 = vadd.f32 %v10044, %v10138
  %v10155 = vadd.f32 %v10047, %v10139
  %v10156 = vadd.f32 %v10052, %v10140
  %v10157 = vadd.f32 %v10055, %v10141
  %v10158 = vadd.f32 %v10060, %v10142
  %v10159 = vadd.f32 %v10063, %v10143
  %v10160 = vadd.f32 %v10068, %v10144
  %v10161 = vadd.f32 %v10071, %v10145
  %v10162 = vadd.f32 %v10076, %v10146
  %v10163 = vadd.f32 %v10079, %v10147
  %v10164 = vadd.f32 %v10084, %v10148
  %v10165 = vadd.f32 %v10087, %v10149
  %v10166 = vadd.f32 %v10092, %v10150
  %v10167 = vadd.f32 %v10095, %v10151
  %v10168 = vadd.f32 %v10100, %v10152
  %v10169 = vadd.f32 %v10103, %v10153
  %v10170 = vmul.f32 %v10154, 0.7978846
  %v10171 = vmul.f32 %v10155, 0.7978846
  %v10172 = vmul.f32 %v10156, 0.7978846
  %v10173 = vmul.f32 %v10157, 0.7978846
  %v10174 = vmul.f32 %v10158, 0.7978846
  %v10175 = vmul.f32 %v10159, 0.7978846
  %v10176 = vmul.f32 %v10160, 0.7978846
  %v10177 = vmul.f32 %v10161, 0.7978846
  %v10178 = vmul.f32 %v10162, 0.7978846
  %v10179 = vmul.f32 %v10163, 0.7978846
  %v10180 = vmul.f32 %v10164, 0.7978846
  %v10181 = vmul.f32 %v10165, 0.7978846
  %v10182 = vmul.f32 %v10166, 0.7978846
  %v10183 = vmul.f32 %v10167, 0.7978846
  %v10184 = vmul.f32 %v10168, 0.7978846
  %v10185 = vmul.f32 %v10169, 0.7978846
  %v10186 = vtanh.pop %v10170
  %v10187 = vtanh.pop %v10171
  %v10188 = vtanh.pop %v10172
  %v10189 = vtanh.pop %v10173
  %v10190 = vtanh.pop %v10174
  %v10191 = vtanh.pop %v10175
  %v10192 = vtanh.pop %v10176
  %v10193 = vtanh.pop %v10177
  %v10194 = vtanh.pop %v10178
  %v10195 = vtanh.pop %v10179
  %v10196 = vtanh.pop %v10180
  %v10197 = vtanh.pop %v10181
  %v10198 = vtanh.pop %v10182
  %v10199 = vtanh.pop %v10183
  %v10200 = vtanh.pop %v10184
  %v10201 = vtanh.pop %v10185
  %v10202 = vadd.f32 %v10186, 1.0
  %v10203 = vadd.f32 %v10187, 1.0
  %v10204 = vadd.f32 %v10188, 1.0
  %v10205 = vadd.f32 %v10189, 1.0
  %v10206 = vadd.f32 %v10190, 1.0
  %v10207 = vadd.f32 %v10191, 1.0
  %v10208 = vadd.f32 %v10192, 1.0
  %v10209 = vadd.f32 %v10193, 1.0
  %v10210 = vadd.f32 %v10194, 1.0
  %v10211 = vadd.f32 %v10195, 1.0
  %v10212 = vadd.f32 %v10196, 1.0
  %v10213 = vadd.f32 %v10197, 1.0
  %v10214 = vadd.f32 %v10198, 1.0
  %v10215 = vadd.f32 %v10199, 1.0
  %v10216 = vadd.f32 %v10200, 1.0
  %v10217 = vadd.f32 %v10201, 1.0
  %v10218 = vmul.f32 %v10202, 0.5
  %v10219 = vmul.f32 %v10203, 0.5
  %v10220 = vmul.f32 %v10204, 0.5
  %v10221 = vmul.f32 %v10205, 0.5
  %v10222 = vmul.f32 %v10206, 0.5
  %v10223 = vmul.f32 %v10207, 0.5
  %v10224 = vmul.f32 %v10208, 0.5
  %v10225 = vmul.f32 %v10209, 0.5
  %v10226 = vmul.f32 %v10210, 0.5
  %v10227 = vmul.f32 %v10211, 0.5
  %v10228 = vmul.f32 %v10212, 0.5
  %v10229 = vmul.f32 %v10213, 0.5
  %v10230 = vmul.f32 %v10214, 0.5
  %v10231 = vmul.f32 %v10215, 0.5
  %v10232 = vmul.f32 %v10216, 0.5
  %v10233 = vmul.f32 %v10217, 0.5
  %v10234 = vmul.f32 %v10044, %v10218
  %v10235 = vmul.f32 %v10047, %v10219
  %v10236 = vmul.f32 %v10052, %v10220
  %v10237 = vmul.f32 %v10055, %v10221
  %v10238 = vmul.f32 %v10060, %v10222
  %v10239 = vmul.f32 %v10063, %v10223
  %v10240 = vmul.f32 %v10068, %v10224
  %v10241 = vmul.f32 %v10071, %v10225
  %v10242 = vmul.f32 %v10076, %v10226
  %v10243 = vmul.f32 %v10079, %v10227
  %v10244 = vmul.f32 %v10084, %v10228
  %v10245 = vmul.f32 %v10087, %v10229
  %v10246 = vmul.f32 %v10092, %v10230
  %v10247 = vmul.f32 %v10095, %v10231
  %v10248 = vmul.f32 %v10100, %v10232
  %v10249 = vmul.f32 %v10103, %v10233
  %v10250 = vpack.c.bf16 %v10235, %v10234
  %v10251 = vpack.c.bf16 %v10237, %v10236
  %v10252 = vpack.c.bf16 %v10239, %v10238
  %v10253 = vpack.c.bf16 %v10241, %v10240
  %v10254 = vpack.c.bf16 %v10243, %v10242
  %v10255 = vpack.c.bf16 %v10245, %v10244
  %v10256 = vpack.c.bf16 %v10247, %v10246
  %v10257 = vpack.c.bf16 %v10249, %v10248
  %v10258 = vld [vmem:[%s6] sm:$0xf]
  %v10259 = vld [vmem:[%s6 + $0x4] sm:$0xf]
  %v10260 = vld [vmem:[%s6 + $0x8] sm:$0xf]
  %v10261 = vld [vmem:[%s6 + $0xc] sm:$0xf]
  %v10262 = vlaneseq
  %v10263 = vshrl.u32 %v10262, 7
  %v10264 = vsub.s32 0, %v10263
  %v10265 = vrot.slane %v36, %v10264
  %v10270 = vunpack.c.l.b16 %v10258
  %v10271 = vunpack.c.l.b16 %v10259
  %v10272 = vunpack.c.l.b16 %v10260
  %v10273 = vunpack.c.l.b16 %v10261
  %v10274 = vpack.c.b16 %v10271, %v10270
  %v10275 = vpack.c.b16 %v10273, %v10272
  %vm10278 = vcmask 261120
  %v10280 = vsel %vm10278, %v10250, 0
  %v10283 = vsel %vm10278, %v10251, 0
  %v10286 = vsel %vm10278, %v10252, 0
  %v10289 = vsel %vm10278, %v10253, 0
  %v10292 = vsel %vm10278, %v10254, 0
  %v10295 = vsel %vm10278, %v10255, 0
  %v10298 = vsel %vm10278, %v10256, 0
  %v10301 = vsel %vm10278, %v10257, 0
  %10303 = vmatprep.subr.bf16.mxu0 0
  %10304 = vmatpush1.bf16.msra.mxu0 0
  %10305 = vmatprep.subr.bf16.mxu0 0
  %10306 = vmatpush1.bf16.msra.mxu0 0
  %10307 = vmatprep.subr.bf16.mxu0 0
  %10308 = vmatpush1.bf16.msra.mxu0 0
  %10309 = vmatprep.subr.bf16.mxu0 0
  %10310 = vmatpush1.bf16.msra.mxu0 0
  %10311 = vmatprep.subr.bf16.mxu0 0
  %10312 = vmatpush1.bf16.msra.mxu0 0
  %10313 = vmatprep.subr.bf16.mxu0 0
  %10314 = vmatpush1.bf16.msra.mxu0 0
  %10315 = vmatprep.subr.bf16.mxu0 0
  %10316 = vmatpush1.bf16.msra.mxu0 %v10275
  %10317 = vmatprep.subr.bf16.mxu0 0
  %10318 = vmatpush1.bf16.msra.mxu0 %v10274
  %10319 = vmatprep.subr.bf16.mxu0 0
  %10320 = vmatpush2.bf16.msra.mxu0 0
  %10321 = vmatprep.subr.bf16.mxu0 0
  %10322 = vmatpush2.bf16.msra.mxu0 0
  %10323 = vmatprep.subr.bf16.mxu0 0
  %10324 = vmatpush2.bf16.msra.mxu0 0
  %10325 = vmatprep.subr.bf16.mxu0 0
  %10326 = vmatpush2.bf16.msra.mxu0 0
  %10327 = vmatprep.subr.bf16.mxu0 0
  %10328 = vmatpush2.bf16.msra.mxu0 0
  %10329 = vmatprep.subr.bf16.mxu0 0
  %10330 = vmatpush2.bf16.msra.mxu0 0
  %10331 = vmatprep.subr.bf16.mxu0 0
  %10332 = vmatpush2.bf16.msra.mxu0 0
  %10333 = vmatprep.subr.bf16.mxu0 0
  %10334 = vmatpush2.bf16.msra.mxu0 0
  %10335 = vmatprep.mubr.bf16.mxu0 0
  %10336 = vmatmul.mubr.bf16.gmra.mxu0 %v10280
  %v10337 = vpop.f32.mrf.mxu0
  %v10338 = vadd.f32 %v10265, %v10337
  %v10339 = vpop.f32.mrf.mxu0
  %v10340 = vpop.f32.mrf.mxu0
  %v10341 = vadd.f32 %v10265, %v10340
  %v10342 = vpop.f32.mrf.mxu0
  %10343 = vmatprep.mubr.bf16.mxu0 0
  %10344 = vmatmul.mubr.bf16.gmra.mxu0 %v10283
  %v10345 = vpop.f32.mrf.mxu0
  %v10346 = vadd.f32 %v10265, %v10345
  %v10347 = vpop.f32.mrf.mxu0
  %v10348 = vpop.f32.mrf.mxu0
  %v10349 = vadd.f32 %v10265, %v10348
  %v10350 = vpop.f32.mrf.mxu0
  %10351 = vmatprep.mubr.bf16.mxu0 0
  %10352 = vmatmul.mubr.bf16.gmra.mxu0 %v10286
  %v10353 = vpop.f32.mrf.mxu0
  %v10354 = vadd.f32 %v10265, %v10353
  %v10355 = vpop.f32.mrf.mxu0
  %v10356 = vpop.f32.mrf.mxu0
  %v10357 = vadd.f32 %v10265, %v10356
  %v10358 = vpop.f32.mrf.mxu0
  %10359 = vmatprep.mubr.bf16.mxu0 0
  %10360 = vmatmul.mubr.bf16.gmra.mxu0 %v10289
  %v10361 = vpop.f32.mrf.mxu0
  %v10362 = vadd.f32 %v10265, %v10361
  %v10363 = vpop.f32.mrf.mxu0
  %v10364 = vpop.f32.mrf.mxu0
  %v10365 = vadd.f32 %v10265, %v10364
  %v10366 = vpop.f32.mrf.mxu0
  %10367 = vmatprep.mubr.bf16.mxu0 0
  %10368 = vmatmul.mubr.bf16.gmra.mxu0 %v10292
  %v10369 = vpop.f32.mrf.mxu0
  %v10370 = vadd.f32 %v10265, %v10369
  %v10371 = vpop.f32.mrf.mxu0
  %v10372 = vpop.f32.mrf.mxu0
  %v10373 = vadd.f32 %v10265, %v10372
  %v10374 = vpop.f32.mrf.mxu0
  %10375 = vmatprep.mubr.bf16.mxu0 0
  %10376 = vmatmul.mubr.bf16.gmra.mxu0 %v10295
  %v10377 = vpop.f32.mrf.mxu0
  %v10378 = vadd.f32 %v10265, %v10377
  %v10379 = vpop.f32.mrf.mxu0
  %v10380 = vpop.f32.mrf.mxu0
  %v10381 = vadd.f32 %v10265, %v10380
  %v10382 = vpop.f32.mrf.mxu0
  %10383 = vmatprep.mubr.bf16.mxu0 0
  %10384 = vmatmul.mubr.bf16.gmra.mxu0 %v10298
  %v10385 = vpop.f32.mrf.mxu0
  %v10386 = vadd.f32 %v10265, %v10385
  %v10387 = vpop.f32.mrf.mxu0
  %v10388 = vpop.f32.mrf.mxu0
  %v10389 = vadd.f32 %v10265, %v10388
  %v10390 = vpop.f32.mrf.mxu0
  %10391 = vmatprep.mubr.bf16.mxu0 0
  %10392 = vmatmul.mubr.bf16.gmra.mxu0 %v10301
  %v10393 = vpop.f32.mrf.mxu0
  %v10394 = vadd.f32 %v10265, %v10393
  %v10395 = vpop.f32.mrf.mxu0
  %v10396 = vpop.f32.mrf.mxu0
  %v10397 = vadd.f32 %v10265, %v10396
  %v10398 = vpop.f32.mrf.mxu0
  %10399 = vdwg.mxu0
  %v10400 = vadd.f32 %v9903, %v10338
  %v10401 = vadd.f32 %v9906, %v10341
  %v10402 = vadd.f32 %v9911, %v10346
  %v10403 = vadd.f32 %v9914, %v10349
  %v10404 = vadd.f32 %v9919, %v10354
  %v10405 = vadd.f32 %v9922, %v10357
  %v10406 = vadd.f32 %v9927, %v10362
  %v10407 = vadd.f32 %v9930, %v10365
  %v10408 = vadd.f32 %v9935, %v10370
  %v10409 = vadd.f32 %v9938, %v10373
  %v10410 = vadd.f32 %v9943, %v10378
  %v10411 = vadd.f32 %v9946, %v10381
  %v10412 = vadd.f32 %v9951, %v10386
  %v10413 = vadd.f32 %v9954, %v10389
  %v10414 = vadd.f32 %v9959, %v10394
  %v10415 = vadd.f32 %v9962, %v10397
  %10416 = vxpose.xlu0.b32.start [1/16] %v10400, 128
  %10417 = vxpose.xlu0.b32.cont [2/16] %v10401, 128
  %10418 = vxpose.xlu0.b32.cont [3/16] %v10402, 128
  %10419 = vxpose.xlu0.b32.cont [4/16] %v10403, 128
  %10420 = vxpose.xlu0.b32.cont [5/16] %v10404, 128
  %10421 = vxpose.xlu0.b32.cont [6/16] %v10405, 128
  %10422 = vxpose.xlu0.b32.cont [7/16] %v10406, 128
  %10423 = vxpose.xlu0.b32.cont [8/16] %v10407, 128
  %10424 = vxpose.xlu0.b32.cont [9/16] %v10408, 128
  %10425 = vxpose.xlu0.b32.cont [10/16] %v10409, 128
  %10426 = vxpose.xlu0.b32.cont [11/16] %v10410, 128
  %10427 = vxpose.xlu0.b32.cont [12/16] %v10411, 128
  %10428 = vxpose.xlu0.b32.cont [13/16] %v10412, 128
  %10429 = vxpose.xlu0.b32.cont [14/16] %v10413, 128
  %10430 = vxpose.xlu0.b32.cont [15/16] %v10414, 128
  %10431 = vxpose.xlu0.b32.end [16/16] %v10415, 128
  %v10432 = vpop.trf.xlu0
  %v10433 = vpop.trf.xlu0
  %v10434 = vpop.trf.xlu0
  %v10435 = vpop.trf.xlu0
  %v10436 = vpop.trf.xlu0
  %v10437 = vpop.trf.xlu0
  %v10438 = vpop.trf.xlu0
  %v10439 = vpop.trf.xlu0
  %v10440 = vpop.trf.xlu0
  %v10441 = vpop.trf.xlu0
  %v10442 = vpop.trf.xlu0
  %v10443 = vpop.trf.xlu0
  %v10444 = vpop.trf.xlu0
  %v10445 = vpop.trf.xlu0
  %v10446 = vpop.trf.xlu0
  %v10447 = vpop.trf.xlu0
  %10448 = vst [vmem:[%s9] sm:$0xff] %v10432
  %10449 = vst [vmem:[%s9 + $0x8] sm:$0xff] %v10433
  // Predicated region
  $region38: #{forward.1} parent=0 // pred_check
    _
  $region39: #{forward.1} parent=0 // pred_check_branch
    %10451 = sbr.rel (0) target = $region41
  $region40: #{forward.1} parent=0 // pred_region
    _
  $region41: #{forward.1} parent=0 // pred_fallthru
    _
  // Predicated region
  $region42: #{forward.1} parent=0 // pred_check
    _
  $region43: #{forward.1} parent=0 // pred_check_branch
    %10453 = sbr.rel (0) target = $region45
  $region44: #{forward.1} parent=0 // pred_region
    _
  $region45: #{forward.1} parent=0 // pred_fallthru
    _

</llo_original>
